<compile_context>
chip_gen: v7x
topology: tpu7x:2x2x1
jax: 0.10.0
libtpu: 0.0.40
codegen_flags: <defaults>
</compile_context>

<pallas_src>
import functools

import jax
import jax.numpy as jnp
from jax import lax
from jax.experimental import pallas as pl
from jax.experimental.pallas import tpu as pltpu

_NEG_BIG = 1e9  # finite "-inf" for max-pool padding (f32, inputs are O(1))


# ----------------------------------------------------------------------------
# Fused kernel: branches + concat + BatchNorm(batch stats) + ReLU.
# Row packing everywhere: row = b * c4 + co  (batch-major, out-channel minor).
# ----------------------------------------------------------------------------
def _mcm_fused_kernel(vf_ref, xbc_ref, xneg_ref,
                      w1c_ref, b1c_ref, wpc_ref, bpc_ref,
                      w3c_ref, b3c_ref, w5c_ref, b5c_ref,
                      gammac_ref, betac_ref,
                      w31_s, b31_s, w51_s, b51_s,
                      o_ref,
                      t3bc_ref, t5bc_ref,
                      *, n, cin, c4, base, out_len, wstride, count, eps):
    rows = n * c4
    inv_count = 1.0 / count

    vf = vf_ref[...]                                    # (1, frame_len)
    v_out = vf_ref[:, base:base + out_len]              # (1, out_len), 128-aligned

    def valid(ref, ch):                                 # aligned valid-window load
        return ref[ch, :, base:base + out_len]          # (rows, out_len)

    # ---- framed 1x1 outputs feeding the 3x3 / 5x5 convs ---------------------
    # Written once per mid-channel in the (rows = b*c4 + co) broadcast layout so
    # the kxk tap loops below are pure (rows, out_len) slice loads.  (Computing
    # each at (rows, frame) costs the same vreg issues as (n, frame): same lane
    # tiles, fuller sublanes.)
    for cm in range(c4):
        xf0 = xbc_ref[0]
        acc3 = w31_s[cm * cin] * xf0
        acc5 = w51_s[cm * cin] * xf0
        for ci in range(1, cin):
            xf = xbc_ref[ci]
            acc3 = acc3 + w31_s[cm * cin + ci] * xf
            acc5 = acc5 + w51_s[cm * cin + ci] * xf
        t3bc_ref[cm] = (acc3 + b31_s[cm]) * vf          # exact zeros at pads/gaps
        t5bc_ref[cm] = (acc5 + b51_s[cm]) * vf

    # ---- fused BN (training-mode batch stats) + ReLU, fully packed -----------
    def finalize(br, slab):
        m = slab * v_out                                # gap/junk columns -> 0
        msq = m * m
        r = jnp.sum(m, axis=1, keepdims=True)           # (rows, 1) per-row sums
        q = jnp.sum(msq, axis=1, keepdims=True)

        def chan_total(v):                              # combine the n batch rows
            tot = v[0:c4]                               # of each output channel
            for b in range(1, n):
                tot = tot + v[b * c4:(b + 1) * c4]
            return jnp.concatenate([tot] * n, axis=0)   # (rows, 1), replicated

        mean = chan_total(r) * inv_count
        ex2 = chan_total(q) * inv_count
        inv = lax.rsqrt(ex2 - mean * mean + eps)
        a = inv * gammac_ref[br]                        # (rows, 1)
        b_ = betac_ref[br] - mean * a                   # (rows, 1)
        o_ref[br] = jnp.maximum(slab * a + b_, 0.0)     # unmasked aligned store

    # ---- branch 1: 1x1 conv --------------------------------------------------
    slab = w1c_ref[0] * valid(xbc_ref, 0)
    for ci in range(1, cin):
        slab = slab + w1c_ref[ci] * valid(xbc_ref, ci)
    finalize(0, slab + b1c_ref[...])

    # ---- branches 2/3: 1x1 -> k x k conv (zero padding k//2) ------------------
    def kxk_branch(src_ref, wc_ref, bc_ref, k, br):
        p = k // 2
        slab = None
        for cm in range(c4):                            # independent chains per cm
            part = None
            for dy in range(k):
                for dx in range(k):
                    off = (dy - p) * wstride + (dx - p)
                    win = src_ref[cm, :, base + off: base + off + out_len]
                    t = wc_ref[cm * k * k + dy * k + dx] * win
                    part = t if part is None else part + t
            slab = part if slab is None else slab + part
        finalize(br, slab + bc_ref[...])

    kxk_branch(t3bc_ref, w3c_ref, b3c_ref, 3, 1)
    kxk_branch(t5bc_ref, w5c_ref, b5c_ref, 5, 2)

    # ---- branch 4: 3x3 max pool (stride 1, pad 1) -> 1x1 conv ------------------
    slab = None
    for ci in range(cin):
        pool = None
        for dy in range(3):
            for dx in range(3):
                off = (dy - 1) * wstride + (dx - 1)
                win = xneg_ref[ci, :, base + off: base + off + out_len]
                pool = win if pool is None else jnp.maximum(pool, win)
        pool = pool * v_out                             # keep -BIG pads out of the 1x1
        t = wpc_ref[ci] * pool
        slab = t if slab is None else slab + t
    finalize(3, slab + bpc_ref[...])


# ----------------------------------------------------------------------------
# Parameter init (deterministic, PyTorch-like uniform).
# ----------------------------------------------------------------------------
def init_params(key, in_channels, out_channels):
    c4 = out_channels // 4
    keys = jax.random.split(key, 6)

    def conv(k, cout_, cin_, kh, kw):
        kw_, kb_ = jax.random.split(k)
        bound = 1.0 / float(cin_ * kh * kw) ** 0.5
        weight = jax.random.uniform(kw_, (cout_, cin_, kh, kw), jnp.float32,
                                    -bound, bound)
        bias = jax.random.uniform(kb_, (cout_,), jnp.float32, -bound, bound)
        return weight, bias

    w1, b1 = conv(keys[0], c4, in_channels, 1, 1)
    w31, b31 = conv(keys[1], c4, in_channels, 1, 1)
    w3, b3 = conv(keys[2], c4, c4, 3, 3)
    w51, b51 = conv(keys[3], c4, in_channels, 1, 1)
    w5, b5 = conv(keys[4], c4, c4, 5, 5)
    wp, bp = conv(keys[5], c4, in_channels, 1, 1)
    return dict(w1=w1, b1=b1, w31=w31, b31=b31, w3=w3, b3=b3,
                w51=w51, b51=b51, w5=w5, b5=b5, wp=wp, bp=bp,
                gamma=jnp.ones((out_channels,), jnp.float32),
                beta=jnp.zeros((out_channels,), jnp.float32))


# ----------------------------------------------------------------------------
# Forward wrapper.
# ----------------------------------------------------------------------------
def mcm_forward(x, params):
    n, cin, h, w = x.shape
    c4 = params['w1'].shape[0]
    cout = 4 * c4
    rows = n * c4

    padmax = 2                                  # largest conv padding (5x5)
    # 128-aligned lane framing: grow wstride until h*wstride is a lane-tile multiple.
    wstride = w + 2 * padmax
    while (h * wstride) % 128 != 0:
        wstride += 1                            # H=W=16 -> wstride=24, out_len=384
    out_len = h * wstride
    reach = padmax * wstride + padmax           # largest |tap offset|
    base = ((reach + 127) // 128) * 128         # 128-aligned valid-window start
    frame_len = base + out_len + base           # multiple of 128, tail >= reach

    # --- framed inputs (zero padded / -BIG padded), pre-broadcast over co -----
    xw = jnp.pad(x, ((0, 0), (0, 0), (0, 0), (0, wstride - w)))
    frames = jnp.pad(xw.reshape(n, cin, out_len),
                     ((0, 0), (0, 0), (base, frame_len - base - out_len)))

    vmask = jnp.pad(jnp.ones((h, w), jnp.float32),
                    ((0, 0), (0, wstride - w))).reshape(out_len)
    v_frame = jnp.pad(vmask, (base, frame_len - base - out_len))     # (frame_len,)
    vf = v_frame.reshape(1, frame_len)

    neg_frames = frames + (v_frame - 1.0) * _NEG_BIG                  # -BIG at pads

    def bcast_batch(a):        # (n, cin, F) -> (cin, rows, F), row = b*c4 + co
        a = jnp.transpose(a, (1, 0, 2))
        a = jnp.broadcast_to(a[:, :, None, :], (cin, n, c4, frame_len))
        return a.reshape(cin, rows, frame_len)

    xbc = bcast_batch(frames)
    xneg = bcast_batch(neg_frames)

    # --- weight / bias / gamma / beta columns in the packed row layout --------
    def col_of(vec_c4):        # (c4,) -> (rows, 1), row b*c4+co -> vec[co]
        return jnp.tile(vec_c4, n).reshape(rows, 1)

    def cols_1x1(wgt):         # (c4, cin, 1, 1) -> (cin, rows, 1)
        wt = jnp.transpose(wgt[:, :, 0, 0], (1, 0))                  # (cin, c4)
        return jnp.tile(wt, (1, n)).reshape(cin, rows, 1)

    def cols_kxk(wgt, k):      # (c4, c4, k, k) -> (c4*k*k, rows, 1)
        wt = jnp.transpose(wgt, (1, 2, 3, 0)).reshape(c4 * k * k, c4)
        return jnp.tile(wt, (1, n)).reshape(c4 * k * k, rows, 1)

    w1c = cols_1x1(params['w1']);   b1c = col_of(params['b1'])
    wpc = cols_1x1(params['wp']);   bpc = col_of(params['bp'])
    w3c = cols_kxk(params['w3'], 3); b3c = col_of(params['b3'])
    w5c = cols_kxk(params['w5'], 5); b5c = col_of(params['b5'])
    gammac = jnp.tile(params['gamma'].reshape(4, c4), (1, n)).reshape(4, rows, 1)
    betac = jnp.tile(params['beta'].reshape(4, c4), (1, n)).reshape(4, rows, 1)

    # SMEM scalars for the framed mid-channel fills (PyTorch OIHW, row-major).
    smem_args = (params['w31'].reshape(-1), params['b31'],
                 params['w51'].reshape(-1), params['b51'])

    vmem = pl.BlockSpec(memory_space=pltpu.MemorySpace.VMEM)
    smem = pl.BlockSpec(memory_space=pltpu.MemorySpace.SMEM)

    kernel = functools.partial(
        _mcm_fused_kernel, n=n, cin=cin, c4=c4, base=base, out_len=out_len,
        wstride=wstride, count=float(n * h * w), eps=1e-3)

    out = pl.pallas_call(
        kernel,
        out_shape=jax.ShapeDtypeStruct((4, rows, out_len), jnp.float32),
        in_specs=[vmem] * 13 + [smem] * 4,
        out_specs=vmem,
        scratch_shapes=[
            pltpu.VMEM((c4, rows, frame_len), jnp.float32),   # framed 1x1->3x3 input
            pltpu.VMEM((c4, rows, frame_len), jnp.float32),   # framed 1x1->5x5 input
        ],
    )(vf, xbc, xneg,
      w1c, b1c, wpc, bpc, w3c, b3c, w5c, b5c, gammac, betac,
      *smem_args)

    # (branch, b*c4+co, h*wstride) -> (n, cout, h, w); strip the gap columns.
    out = out.reshape(4, n, c4, h, wstride)[:, :, :, :, :w]
    out = jnp.transpose(out, (1, 0, 2, 3, 4)).reshape(n, cout, h, w)
    return out


# ----------------------------------------------------------------------------
# Pure-JAX reference (for validation only).
# ----------------------------------------------------------------------------
def mcm_reference(x, p):
    def conv(x_, wgt, b, pad):
        y = lax.conv_general_dilated(
            x_, wgt, (1, 1), [(pad, pad), (pad, pad)],
            dimension_numbers=('NCHW', 'OIHW', 'NCHW'),
            precision=lax.Precision.HIGHEST)
        return y + b[None, :, None, None]

    b1 = conv(x, p['w1'], p['b1'], 0)
    b2 = conv(conv(x, p['w31'], p['b31'], 0), p['w3'], p['b3'], 1)
    b3 = conv(conv(x, p['w51'], p['b51'], 0), p['w5'], p['b5'], 2)
    pooled = lax.reduce_window(x, -jnp.inf, lax.max, (1, 1, 3, 3), (1, 1, 1, 1),
                               [(0, 0), (0, 0), (1, 1), (1, 1)])
    b4 = conv(pooled, p['wp'], p['bp'], 0)
    y = jnp.concatenate([b1, b2, b3, b4], axis=1)
    mean = jnp.mean(y, axis=(0, 2, 3), keepdims=True)
    var = jnp.mean((y - mean) ** 2, axis=(0, 2, 3), keepdims=True)
    yhat = (y - mean) / jnp.sqrt(var + 1e-3)
    yhat = yhat * p['gamma'][None, :, None, None] + p['beta'][None, :, None, None]
    return jnp.maximum(yhat, 0.0)


if __name__ == "__main__":
    key = jax.random.PRNGKey(0)
    kx, kp = jax.random.split(key)

    N, Cin, H, W = 2, 4, 16, 16
    Cout = 16

    x = jax.random.normal(kx, (N, Cin, H, W), jnp.float32)
    params = init_params(kp, Cin, Cout)

    out = mcm_forward(x, params)
    out = jax.block_until_ready(out)
    assert out.shape == (N, Cout, H, W)

    ref = mcm_reference(x, params)
    max_err = float(jnp.max(jnp.abs(out - ref)))
    if max_err > 1e-3:
        raise AssertionError(f"Pallas output mismatch vs reference: {max_err}")

    print("KERNEL_OK")
</pallas_src>

<mosaic_0001>
module attributes {stable_mosaic.version = 11 : i64} {
  func.func @_mcm_fused_kernel(%arg0: memref<1x640xf32, #tpu.memory_space<vmem>>, %arg1: memref<4x8x640xf32, #tpu.memory_space<vmem>>, %arg2: memref<4x8x640xf32, #tpu.memory_space<vmem>>, %arg3: memref<4x8x1xf32, #tpu.memory_space<vmem>>, %arg4: memref<8x1xf32, #tpu.memory_space<vmem>>, %arg5: memref<4x8x1xf32, #tpu.memory_space<vmem>>, %arg6: memref<8x1xf32, #tpu.memory_space<vmem>>, %arg7: memref<36x8x1xf32, #tpu.memory_space<vmem>>, %arg8: memref<8x1xf32, #tpu.memory_space<vmem>>, %arg9: memref<100x8x1xf32, #tpu.memory_space<vmem>>, %arg10: memref<8x1xf32, #tpu.memory_space<vmem>>, %arg11: memref<4x8x1xf32, #tpu.memory_space<vmem>>, %arg12: memref<4x8x1xf32, #tpu.memory_space<vmem>>, %arg13: memref<16xf32, #tpu.memory_space<smem>>, %arg14: memref<4xf32, #tpu.memory_space<smem>>, %arg15: memref<16xf32, #tpu.memory_space<smem>>, %arg16: memref<4xf32, #tpu.memory_space<smem>>, %arg17: memref<4x8x384xf32, #tpu.memory_space<vmem>>, %arg18: memref<4x8x640xf32, #tpu.memory_space<vmem>>, %arg19: memref<4x8x640xf32, #tpu.memory_space<vmem>>) attributes {dimension_semantics = [], scalar_prefetch = 0 : i64, scratch_operands = 2 : i64, tpu.core_type = #tpu.core_type<tc>} {
    %c0 = arith.constant 0 : index
    %c0_0 = arith.constant 0 : index
    %0 = vector.load %arg0[%c0, %c0_0] : memref<1x640xf32, #tpu.memory_space<vmem>>, vector<1x640xf32>
    %c0_1 = arith.constant 0 : index
    %c128 = arith.constant 128 : index
    %1 = vector.load %arg0[%c0_1, %c128] : memref<1x640xf32, #tpu.memory_space<vmem>>, vector<1x384xf32>
    %c0_2 = arith.constant 0 : index
    %c0_3 = arith.constant 0 : index
    %c0_4 = arith.constant 0 : index
    %2 = vector.load %arg1[%c0_2, %c0_3, %c0_4] : memref<4x8x640xf32, #tpu.memory_space<vmem>>, vector<1x8x640xf32>
    %3 = vector.shape_cast %2 : vector<1x8x640xf32> to vector<8x640xf32>
    %c0_5 = arith.constant 0 : index
    %4 = memref.load %arg13[%c0_5] : memref<16xf32, #tpu.memory_space<smem>>
    %5 = vector.broadcast %4 : f32 to vector<8x640xf32>
    %6 = arith.mulf %5, %3 : vector<8x640xf32>
    %c0_6 = arith.constant 0 : index
    %7 = memref.load %arg15[%c0_6] : memref<16xf32, #tpu.memory_space<smem>>
    %8 = vector.broadcast %7 : f32 to vector<8x640xf32>
    %9 = arith.mulf %8, %3 : vector<8x640xf32>
    %c1 = arith.constant 1 : index
    %c0_7 = arith.constant 0 : index
    %c0_8 = arith.constant 0 : index
    %10 = vector.load %arg1[%c1, %c0_7, %c0_8] : memref<4x8x640xf32, #tpu.memory_space<vmem>>, vector<1x8x640xf32>
    %11 = vector.shape_cast %10 : vector<1x8x640xf32> to vector<8x640xf32>
    %c1_9 = arith.constant 1 : index
    %12 = memref.load %arg13[%c1_9] : memref<16xf32, #tpu.memory_space<smem>>
    %13 = vector.broadcast %12 : f32 to vector<8x640xf32>
    %14 = arith.mulf %13, %11 : vector<8x640xf32>
    %15 = arith.addf %6, %14 : vector<8x640xf32>
    %c1_10 = arith.constant 1 : index
    %16 = memref.load %arg15[%c1_10] : memref<16xf32, #tpu.memory_space<smem>>
    %17 = vector.broadcast %16 : f32 to vector<8x640xf32>
    %18 = arith.mulf %17, %11 : vector<8x640xf32>
    %19 = arith.addf %9, %18 : vector<8x640xf32>
    %c2 = arith.constant 2 : index
    %c0_11 = arith.constant 0 : index
    %c0_12 = arith.constant 0 : index
    %20 = vector.load %arg1[%c2, %c0_11, %c0_12] : memref<4x8x640xf32, #tpu.memory_space<vmem>>, vector<1x8x640xf32>
    %21 = vector.shape_cast %20 : vector<1x8x640xf32> to vector<8x640xf32>
    %c2_13 = arith.constant 2 : index
    %22 = memref.load %arg13[%c2_13] : memref<16xf32, #tpu.memory_space<smem>>
    %23 = vector.broadcast %22 : f32 to vector<8x640xf32>
    %24 = arith.mulf %23, %21 : vector<8x640xf32>
    %25 = arith.addf %15, %24 : vector<8x640xf32>
    %c2_14 = arith.constant 2 : index
    %26 = memref.load %arg15[%c2_14] : memref<16xf32, #tpu.memory_space<smem>>
    %27 = vector.broadcast %26 : f32 to vector<8x640xf32>
    %28 = arith.mulf %27, %21 : vector<8x640xf32>
    %29 = arith.addf %19, %28 : vector<8x640xf32>
    %c3 = arith.constant 3 : index
    %c0_15 = arith.constant 0 : index
    %c0_16 = arith.constant 0 : index
    %30 = vector.load %arg1[%c3, %c0_15, %c0_16] : memref<4x8x640xf32, #tpu.memory_space<vmem>>, vector<1x8x640xf32>
    %31 = vector.shape_cast %30 : vector<1x8x640xf32> to vector<8x640xf32>
    %c3_17 = arith.constant 3 : index
    %32 = memref.load %arg13[%c3_17] : memref<16xf32, #tpu.memory_space<smem>>
    %33 = vector.broadcast %32 : f32 to vector<8x640xf32>
    %34 = arith.mulf %33, %31 : vector<8x640xf32>
    %35 = arith.addf %25, %34 : vector<8x640xf32>
    %c3_18 = arith.constant 3 : index
    %36 = memref.load %arg15[%c3_18] : memref<16xf32, #tpu.memory_space<smem>>
    %37 = vector.broadcast %36 : f32 to vector<8x640xf32>
    %38 = arith.mulf %37, %31 : vector<8x640xf32>
    %39 = arith.addf %29, %38 : vector<8x640xf32>
    %c0_19 = arith.constant 0 : index
    %40 = memref.load %arg14[%c0_19] : memref<4xf32, #tpu.memory_space<smem>>
    %41 = vector.broadcast %40 : f32 to vector<8x640xf32>
    %42 = arith.addf %35, %41 : vector<8x640xf32>
    %43 = vector.broadcast %0 : vector<1x640xf32> to vector<8x640xf32>
    %44 = arith.mulf %42, %43 : vector<8x640xf32>
    %c0_20 = arith.constant 0 : index
    %c0_21 = arith.constant 0 : index
    %c0_22 = arith.constant 0 : index
    %45 = vector.load %arg18[%c0_20, %c0_21, %c0_22] : memref<4x8x640xf32, #tpu.memory_space<vmem>>, vector<1x8x640xf32>
    %46 = vector.shape_cast %45 : vector<1x8x640xf32> to vector<8x640xf32>
    %47 = vector.shape_cast %44 : vector<8x640xf32> to vector<1x8x640xf32>
    tpu.vector_store %arg18[%c0_20, %c0_21, %c0_22], %47 {strides = array<i32>} : memref<4x8x640xf32, #tpu.memory_space<vmem>>, vector<1x8x640xf32>,
    %c0_23 = arith.constant 0 : index
    %48 = memref.load %arg16[%c0_23] : memref<4xf32, #tpu.memory_space<smem>>
    %49 = vector.broadcast %48 : f32 to vector<8x640xf32>
    %50 = arith.addf %39, %49 : vector<8x640xf32>
    %51 = vector.broadcast %0 : vector<1x640xf32> to vector<8x640xf32>
    %52 = arith.mulf %50, %51 : vector<8x640xf32>
    %c0_24 = arith.constant 0 : index
    %c0_25 = arith.constant 0 : index
    %c0_26 = arith.constant 0 : index
    %53 = vector.load %arg19[%c0_24, %c0_25, %c0_26] : memref<4x8x640xf32, #tpu.memory_space<vmem>>, vector<1x8x640xf32>
    %54 = vector.shape_cast %53 : vector<1x8x640xf32> to vector<8x640xf32>
    %55 = vector.shape_cast %52 : vector<8x640xf32> to vector<1x8x640xf32>
    tpu.vector_store %arg19[%c0_24, %c0_25, %c0_26], %55 {strides = array<i32>} : memref<4x8x640xf32, #tpu.memory_space<vmem>>, vector<1x8x640xf32>,
    %c0_27 = arith.constant 0 : index
    %c0_28 = arith.constant 0 : index
    %c0_29 = arith.constant 0 : index
    %56 = vector.load %arg1[%c0_27, %c0_28, %c0_29] : memref<4x8x640xf32, #tpu.memory_space<vmem>>, vector<1x8x640xf32>
    %57 = vector.shape_cast %56 : vector<1x8x640xf32> to vector<8x640xf32>
    %c4 = arith.constant 4 : index
    %58 = memref.load %arg13[%c4] : memref<16xf32, #tpu.memory_space<smem>>
    %59 = vector.broadcast %58 : f32 to vector<8x640xf32>
    %60 = arith.mulf %59, %57 : vector<8x640xf32>
    %c4_30 = arith.constant 4 : index
    %61 = memref.load %arg15[%c4_30] : memref<16xf32, #tpu.memory_space<smem>>
    %62 = vector.broadcast %61 : f32 to vector<8x640xf32>
    %63 = arith.mulf %62, %57 : vector<8x640xf32>
    %c1_31 = arith.constant 1 : index
    %c0_32 = arith.constant 0 : index
    %c0_33 = arith.constant 0 : index
    %64 = vector.load %arg1[%c1_31, %c0_32, %c0_33] : memref<4x8x640xf32, #tpu.memory_space<vmem>>, vector<1x8x640xf32>
    %65 = vector.shape_cast %64 : vector<1x8x640xf32> to vector<8x640xf32>
    %c5 = arith.constant 5 : index
    %66 = memref.load %arg13[%c5] : memref<16xf32, #tpu.memory_space<smem>>
    %67 = vector.broadcast %66 : f32 to vector<8x640xf32>
    %68 = arith.mulf %67, %65 : vector<8x640xf32>
    %69 = arith.addf %60, %68 : vector<8x640xf32>
    %c5_34 = arith.constant 5 : index
    %70 = memref.load %arg15[%c5_34] : memref<16xf32, #tpu.memory_space<smem>>
    %71 = vector.broadcast %70 : f32 to vector<8x640xf32>
    %72 = arith.mulf %71, %65 : vector<8x640xf32>
    %73 = arith.addf %63, %72 : vector<8x640xf32>
    %c2_35 = arith.constant 2 : index
    %c0_36 = arith.constant 0 : index
    %c0_37 = arith.constant 0 : index
    %74 = vector.load %arg1[%c2_35, %c0_36, %c0_37] : memref<4x8x640xf32, #tpu.memory_space<vmem>>, vector<1x8x640xf32>
    %75 = vector.shape_cast %74 : vector<1x8x640xf32> to vector<8x640xf32>
    %c6 = arith.constant 6 : index
    %76 = memref.load %arg13[%c6] : memref<16xf32, #tpu.memory_space<smem>>
    %77 = vector.broadcast %76 : f32 to vector<8x640xf32>
    %78 = arith.mulf %77, %75 : vector<8x640xf32>
    %79 = arith.addf %69, %78 : vector<8x640xf32>
    %c6_38 = arith.constant 6 : index
    %80 = memref.load %arg15[%c6_38] : memref<16xf32, #tpu.memory_space<smem>>
    %81 = vector.broadcast %80 : f32 to vector<8x640xf32>
    %82 = arith.mulf %81, %75 : vector<8x640xf32>
    %83 = arith.addf %73, %82 : vector<8x640xf32>
    %c3_39 = arith.constant 3 : index
    %c0_40 = arith.constant 0 : index
    %c0_41 = arith.constant 0 : index
    %84 = vector.load %arg1[%c3_39, %c0_40, %c0_41] : memref<4x8x640xf32, #tpu.memory_space<vmem>>, vector<1x8x640xf32>
    %85 = vector.shape_cast %84 : vector<1x8x640xf32> to vector<8x640xf32>
    %c7 = arith.constant 7 : index
    %86 = memref.load %arg13[%c7] : memref<16xf32, #tpu.memory_space<smem>>
    %87 = vector.broadcast %86 : f32 to vector<8x640xf32>
    %88 = arith.mulf %87, %85 : vector<8x640xf32>
    %89 = arith.addf %79, %88 : vector<8x640xf32>
    %c7_42 = arith.constant 7 : index
    %90 = memref.load %arg15[%c7_42] : memref<16xf32, #tpu.memory_space<smem>>
    %91 = vector.broadcast %90 : f32 to vector<8x640xf32>
    %92 = arith.mulf %91, %85 : vector<8x640xf32>
    %93 = arith.addf %83, %92 : vector<8x640xf32>
    %c1_43 = arith.constant 1 : index
    %94 = memref.load %arg14[%c1_43] : memref<4xf32, #tpu.memory_space<smem>>
    %95 = vector.broadcast %94 : f32 to vector<8x640xf32>
    %96 = arith.addf %89, %95 : vector<8x640xf32>
    %97 = vector.broadcast %0 : vector<1x640xf32> to vector<8x640xf32>
    %98 = arith.mulf %96, %97 : vector<8x640xf32>
    %c1_44 = arith.constant 1 : index
    %c0_45 = arith.constant 0 : index
    %c0_46 = arith.constant 0 : index
    %99 = vector.load %arg18[%c1_44, %c0_45, %c0_46] : memref<4x8x640xf32, #tpu.memory_space<vmem>>, vector<1x8x640xf32>
    %100 = vector.shape_cast %99 : vector<1x8x640xf32> to vector<8x640xf32>
    %101 = vector.shape_cast %98 : vector<8x640xf32> to vector<1x8x640xf32>
    tpu.vector_store %arg18[%c1_44, %c0_45, %c0_46], %101 {strides = array<i32>} : memref<4x8x640xf32, #tpu.memory_space<vmem>>, vector<1x8x640xf32>,
    %c1_47 = arith.constant 1 : index
    %102 = memref.load %arg16[%c1_47] : memref<4xf32, #tpu.memory_space<smem>>
    %103 = vector.broadcast %102 : f32 to vector<8x640xf32>
    %104 = arith.addf %93, %103 : vector<8x640xf32>
    %105 = vector.broadcast %0 : vector<1x640xf32> to vector<8x640xf32>
    %106 = arith.mulf %104, %105 : vector<8x640xf32>
    %c1_48 = arith.constant 1 : index
    %c0_49 = arith.constant 0 : index
    %c0_50 = arith.constant 0 : index
    %107 = vector.load %arg19[%c1_48, %c0_49, %c0_50] : memref<4x8x640xf32, #tpu.memory_space<vmem>>, vector<1x8x640xf32>
    %108 = vector.shape_cast %107 : vector<1x8x640xf32> to vector<8x640xf32>
    %109 = vector.shape_cast %106 : vector<8x640xf32> to vector<1x8x640xf32>
    tpu.vector_store %arg19[%c1_48, %c0_49, %c0_50], %109 {strides = array<i32>} : memref<4x8x640xf32, #tpu.memory_space<vmem>>, vector<1x8x640xf32>,
    %c0_51 = arith.constant 0 : index
    %c0_52 = arith.constant 0 : index
    %c0_53 = arith.constant 0 : index
    %110 = vector.load %arg1[%c0_51, %c0_52, %c0_53] : memref<4x8x640xf32, #tpu.memory_space<vmem>>, vector<1x8x640xf32>
    %111 = vector.shape_cast %110 : vector<1x8x640xf32> to vector<8x640xf32>
    %c8 = arith.constant 8 : index
    %112 = memref.load %arg13[%c8] : memref<16xf32, #tpu.memory_space<smem>>
    %113 = vector.broadcast %112 : f32 to vector<8x640xf32>
    %114 = arith.mulf %113, %111 : vector<8x640xf32>
    %c8_54 = arith.constant 8 : index
    %115 = memref.load %arg15[%c8_54] : memref<16xf32, #tpu.memory_space<smem>>
    %116 = vector.broadcast %115 : f32 to vector<8x640xf32>
    %117 = arith.mulf %116, %111 : vector<8x640xf32>
    %c1_55 = arith.constant 1 : index
    %c0_56 = arith.constant 0 : index
    %c0_57 = arith.constant 0 : index
    %118 = vector.load %arg1[%c1_55, %c0_56, %c0_57] : memref<4x8x640xf32, #tpu.memory_space<vmem>>, vector<1x8x640xf32>
    %119 = vector.shape_cast %118 : vector<1x8x640xf32> to vector<8x640xf32>
    %c9 = arith.constant 9 : index
    %120 = memref.load %arg13[%c9] : memref<16xf32, #tpu.memory_space<smem>>
    %121 = vector.broadcast %120 : f32 to vector<8x640xf32>
    %122 = arith.mulf %121, %119 : vector<8x640xf32>
    %123 = arith.addf %114, %122 : vector<8x640xf32>
    %c9_58 = arith.constant 9 : index
    %124 = memref.load %arg15[%c9_58] : memref<16xf32, #tpu.memory_space<smem>>
    %125 = vector.broadcast %124 : f32 to vector<8x640xf32>
    %126 = arith.mulf %125, %119 : vector<8x640xf32>
    %127 = arith.addf %117, %126 : vector<8x640xf32>
    %c2_59 = arith.constant 2 : index
    %c0_60 = arith.constant 0 : index
    %c0_61 = arith.constant 0 : index
    %128 = vector.load %arg1[%c2_59, %c0_60, %c0_61] : memref<4x8x640xf32, #tpu.memory_space<vmem>>, vector<1x8x640xf32>
    %129 = vector.shape_cast %128 : vector<1x8x640xf32> to vector<8x640xf32>
    %c10 = arith.constant 10 : index
    %130 = memref.load %arg13[%c10] : memref<16xf32, #tpu.memory_space<smem>>
    %131 = vector.broadcast %130 : f32 to vector<8x640xf32>
    %132 = arith.mulf %131, %129 : vector<8x640xf32>
    %133 = arith.addf %123, %132 : vector<8x640xf32>
    %c10_62 = arith.constant 10 : index
    %134 = memref.load %arg15[%c10_62] : memref<16xf32, #tpu.memory_space<smem>>
    %135 = vector.broadcast %134 : f32 to vector<8x640xf32>
    %136 = arith.mulf %135, %129 : vector<8x640xf32>
    %137 = arith.addf %127, %136 : vector<8x640xf32>
    %c3_63 = arith.constant 3 : index
    %c0_64 = arith.constant 0 : index
    %c0_65 = arith.constant 0 : index
    %138 = vector.load %arg1[%c3_63, %c0_64, %c0_65] : memref<4x8x640xf32, #tpu.memory_space<vmem>>, vector<1x8x640xf32>
    %139 = vector.shape_cast %138 : vector<1x8x640xf32> to vector<8x640xf32>
    %c11 = arith.constant 11 : index
    %140 = memref.load %arg13[%c11] : memref<16xf32, #tpu.memory_space<smem>>
    %141 = vector.broadcast %140 : f32 to vector<8x640xf32>
    %142 = arith.mulf %141, %139 : vector<8x640xf32>
    %143 = arith.addf %133, %142 : vector<8x640xf32>
    %c11_66 = arith.constant 11 : index
    %144 = memref.load %arg15[%c11_66] : memref<16xf32, #tpu.memory_space<smem>>
    %145 = vector.broadcast %144 : f32 to vector<8x640xf32>
    %146 = arith.mulf %145, %139 : vector<8x640xf32>
    %147 = arith.addf %137, %146 : vector<8x640xf32>
    %c2_67 = arith.constant 2 : index
    %148 = memref.load %arg14[%c2_67] : memref<4xf32, #tpu.memory_space<smem>>
    %149 = vector.broadcast %148 : f32 to vector<8x640xf32>
    %150 = arith.addf %143, %149 : vector<8x640xf32>
    %151 = vector.broadcast %0 : vector<1x640xf32> to vector<8x640xf32>
    %152 = arith.mulf %150, %151 : vector<8x640xf32>
    %c2_68 = arith.constant 2 : index
    %c0_69 = arith.constant 0 : index
    %c0_70 = arith.constant 0 : index
    %153 = vector.load %arg18[%c2_68, %c0_69, %c0_70] : memref<4x8x640xf32, #tpu.memory_space<vmem>>, vector<1x8x640xf32>
    %154 = vector.shape_cast %153 : vector<1x8x640xf32> to vector<8x640xf32>
    %155 = vector.shape_cast %152 : vector<8x640xf32> to vector<1x8x640xf32>
    tpu.vector_store %arg18[%c2_68, %c0_69, %c0_70], %155 {strides = array<i32>} : memref<4x8x640xf32, #tpu.memory_space<vmem>>, vector<1x8x640xf32>,
    %c2_71 = arith.constant 2 : index
    %156 = memref.load %arg16[%c2_71] : memref<4xf32, #tpu.memory_space<smem>>
    %157 = vector.broadcast %156 : f32 to vector<8x640xf32>
    %158 = arith.addf %147, %157 : vector<8x640xf32>
    %159 = vector.broadcast %0 : vector<1x640xf32> to vector<8x640xf32>
    %160 = arith.mulf %158, %159 : vector<8x640xf32>
    %c2_72 = arith.constant 2 : index
    %c0_73 = arith.constant 0 : index
    %c0_74 = arith.constant 0 : index
    %161 = vector.load %arg19[%c2_72, %c0_73, %c0_74] : memref<4x8x640xf32, #tpu.memory_space<vmem>>, vector<1x8x640xf32>
    %162 = vector.shape_cast %161 : vector<1x8x640xf32> to vector<8x640xf32>
    %163 = vector.shape_cast %160 : vector<8x640xf32> to vector<1x8x640xf32>
    tpu.vector_store %arg19[%c2_72, %c0_73, %c0_74], %163 {strides = array<i32>} : memref<4x8x640xf32, #tpu.memory_space<vmem>>, vector<1x8x640xf32>,
    %c0_75 = arith.constant 0 : index
    %c0_76 = arith.constant 0 : index
    %c0_77 = arith.constant 0 : index
    %164 = vector.load %arg1[%c0_75, %c0_76, %c0_77] : memref<4x8x640xf32, #tpu.memory_space<vmem>>, vector<1x8x640xf32>
    %165 = vector.shape_cast %164 : vector<1x8x640xf32> to vector<8x640xf32>
    %c12 = arith.constant 12 : index
    %166 = memref.load %arg13[%c12] : memref<16xf32, #tpu.memory_space<smem>>
    %167 = vector.broadcast %166 : f32 to vector<8x640xf32>
    %168 = arith.mulf %167, %165 : vector<8x640xf32>
    %c12_78 = arith.constant 12 : index
    %169 = memref.load %arg15[%c12_78] : memref<16xf32, #tpu.memory_space<smem>>
    %170 = vector.broadcast %169 : f32 to vector<8x640xf32>
    %171 = arith.mulf %170, %165 : vector<8x640xf32>
    %c1_79 = arith.constant 1 : index
    %c0_80 = arith.constant 0 : index
    %c0_81 = arith.constant 0 : index
    %172 = vector.load %arg1[%c1_79, %c0_80, %c0_81] : memref<4x8x640xf32, #tpu.memory_space<vmem>>, vector<1x8x640xf32>
    %173 = vector.shape_cast %172 : vector<1x8x640xf32> to vector<8x640xf32>
    %c13 = arith.constant 13 : index
    %174 = memref.load %arg13[%c13] : memref<16xf32, #tpu.memory_space<smem>>
    %175 = vector.broadcast %174 : f32 to vector<8x640xf32>
    %176 = arith.mulf %175, %173 : vector<8x640xf32>
    %177 = arith.addf %168, %176 : vector<8x640xf32>
    %c13_82 = arith.constant 13 : index
    %178 = memref.load %arg15[%c13_82] : memref<16xf32, #tpu.memory_space<smem>>
    %179 = vector.broadcast %178 : f32 to vector<8x640xf32>
    %180 = arith.mulf %179, %173 : vector<8x640xf32>
    %181 = arith.addf %171, %180 : vector<8x640xf32>
    %c2_83 = arith.constant 2 : index
    %c0_84 = arith.constant 0 : index
    %c0_85 = arith.constant 0 : index
    %182 = vector.load %arg1[%c2_83, %c0_84, %c0_85] : memref<4x8x640xf32, #tpu.memory_space<vmem>>, vector<1x8x640xf32>
    %183 = vector.shape_cast %182 : vector<1x8x640xf32> to vector<8x640xf32>
    %c14 = arith.constant 14 : index
    %184 = memref.load %arg13[%c14] : memref<16xf32, #tpu.memory_space<smem>>
    %185 = vector.broadcast %184 : f32 to vector<8x640xf32>
    %186 = arith.mulf %185, %183 : vector<8x640xf32>
    %187 = arith.addf %177, %186 : vector<8x640xf32>
    %c14_86 = arith.constant 14 : index
    %188 = memref.load %arg15[%c14_86] : memref<16xf32, #tpu.memory_space<smem>>
    %189 = vector.broadcast %188 : f32 to vector<8x640xf32>
    %190 = arith.mulf %189, %183 : vector<8x640xf32>
    %191 = arith.addf %181, %190 : vector<8x640xf32>
    %c3_87 = arith.constant 3 : index
    %c0_88 = arith.constant 0 : index
    %c0_89 = arith.constant 0 : index
    %192 = vector.load %arg1[%c3_87, %c0_88, %c0_89] : memref<4x8x640xf32, #tpu.memory_space<vmem>>, vector<1x8x640xf32>
    %193 = vector.shape_cast %192 : vector<1x8x640xf32> to vector<8x640xf32>
    %c15 = arith.constant 15 : index
    %194 = memref.load %arg13[%c15] : memref<16xf32, #tpu.memory_space<smem>>
    %195 = vector.broadcast %194 : f32 to vector<8x640xf32>
    %196 = arith.mulf %195, %193 : vector<8x640xf32>
    %197 = arith.addf %187, %196 : vector<8x640xf32>
    %c15_90 = arith.constant 15 : index
    %198 = memref.load %arg15[%c15_90] : memref<16xf32, #tpu.memory_space<smem>>
    %199 = vector.broadcast %198 : f32 to vector<8x640xf32>
    %200 = arith.mulf %199, %193 : vector<8x640xf32>
    %201 = arith.addf %191, %200 : vector<8x640xf32>
    %c3_91 = arith.constant 3 : index
    %202 = memref.load %arg14[%c3_91] : memref<4xf32, #tpu.memory_space<smem>>
    %203 = vector.broadcast %202 : f32 to vector<8x640xf32>
    %204 = arith.addf %197, %203 : vector<8x640xf32>
    %205 = vector.broadcast %0 : vector<1x640xf32> to vector<8x640xf32>
    %206 = arith.mulf %204, %205 : vector<8x640xf32>
    %c3_92 = arith.constant 3 : index
    %c0_93 = arith.constant 0 : index
    %c0_94 = arith.constant 0 : index
    %207 = vector.load %arg18[%c3_92, %c0_93, %c0_94] : memref<4x8x640xf32, #tpu.memory_space<vmem>>, vector<1x8x640xf32>
    %208 = vector.shape_cast %207 : vector<1x8x640xf32> to vector<8x640xf32>
    %209 = vector.shape_cast %206 : vector<8x640xf32> to vector<1x8x640xf32>
    tpu.vector_store %arg18[%c3_92, %c0_93, %c0_94], %209 {strides = array<i32>} : memref<4x8x640xf32, #tpu.memory_space<vmem>>, vector<1x8x640xf32>,
    %c3_95 = arith.constant 3 : index
    %210 = memref.load %arg16[%c3_95] : memref<4xf32, #tpu.memory_space<smem>>
    %211 = vector.broadcast %210 : f32 to vector<8x640xf32>
    %212 = arith.addf %201, %211 : vector<8x640xf32>
    %213 = vector.broadcast %0 : vector<1x640xf32> to vector<8x640xf32>
    %214 = arith.mulf %212, %213 : vector<8x640xf32>
    %c3_96 = arith.constant 3 : index
    %c0_97 = arith.constant 0 : index
    %c0_98 = arith.constant 0 : index
    %215 = vector.load %arg19[%c3_96, %c0_97, %c0_98] : memref<4x8x640xf32, #tpu.memory_space<vmem>>, vector<1x8x640xf32>
    %216 = vector.shape_cast %215 : vector<1x8x640xf32> to vector<8x640xf32>
    %217 = vector.shape_cast %214 : vector<8x640xf32> to vector<1x8x640xf32>
    tpu.vector_store %arg19[%c3_96, %c0_97, %c0_98], %217 {strides = array<i32>} : memref<4x8x640xf32, #tpu.memory_space<vmem>>, vector<1x8x640xf32>,
    %c0_99 = arith.constant 0 : index
    %c0_100 = arith.constant 0 : index
    %c0_101 = arith.constant 0 : index
    %218 = vector.load %arg3[%c0_99, %c0_100, %c0_101] : memref<4x8x1xf32, #tpu.memory_space<vmem>>, vector<1x8x1xf32>
    %219 = vector.shape_cast %218 : vector<1x8x1xf32> to vector<8x1xf32>
    %c0_102 = arith.constant 0 : index
    %c0_103 = arith.constant 0 : index
    %c128_104 = arith.constant 128 : index
    %220 = vector.load %arg1[%c0_102, %c0_103, %c128_104] : memref<4x8x640xf32, #tpu.memory_space<vmem>>, vector<1x8x384xf32>
    %221 = vector.shape_cast %220 : vector<1x8x384xf32> to vector<8x384xf32>
    %222 = vector.broadcast %219 : vector<8x1xf32> to vector<8x384xf32>
    %223 = arith.mulf %222, %221 : vector<8x384xf32>
    %c1_105 = arith.constant 1 : index
    %c0_106 = arith.constant 0 : index
    %c0_107 = arith.constant 0 : index
    %224 = vector.load %arg3[%c1_105, %c0_106, %c0_107] : memref<4x8x1xf32, #tpu.memory_space<vmem>>, vector<1x8x1xf32>
    %225 = vector.shape_cast %224 : vector<1x8x1xf32> to vector<8x1xf32>
    %c1_108 = arith.constant 1 : index
    %c0_109 = arith.constant 0 : index
    %c128_110 = arith.constant 128 : index
    %226 = vector.load %arg1[%c1_108, %c0_109, %c128_110] : memref<4x8x640xf32, #tpu.memory_space<vmem>>, vector<1x8x384xf32>
    %227 = vector.shape_cast %226 : vector<1x8x384xf32> to vector<8x384xf32>
    %228 = vector.broadcast %225 : vector<8x1xf32> to vector<8x384xf32>
    %229 = arith.mulf %228, %227 : vector<8x384xf32>
    %230 = arith.addf %223, %229 : vector<8x384xf32>
    %c2_111 = arith.constant 2 : index
    %c0_112 = arith.constant 0 : index
    %c0_113 = arith.constant 0 : index
    %231 = vector.load %arg3[%c2_111, %c0_112, %c0_113] : memref<4x8x1xf32, #tpu.memory_space<vmem>>, vector<1x8x1xf32>
    %232 = vector.shape_cast %231 : vector<1x8x1xf32> to vector<8x1xf32>
    %c2_114 = arith.constant 2 : index
    %c0_115 = arith.constant 0 : index
    %c128_116 = arith.constant 128 : index
    %233 = vector.load %arg1[%c2_114, %c0_115, %c128_116] : memref<4x8x640xf32, #tpu.memory_space<vmem>>, vector<1x8x384xf32>
    %234 = vector.shape_cast %233 : vector<1x8x384xf32> to vector<8x384xf32>
    %235 = vector.broadcast %232 : vector<8x1xf32> to vector<8x384xf32>
    %236 = arith.mulf %235, %234 : vector<8x384xf32>
    %237 = arith.addf %230, %236 : vector<8x384xf32>
    %c3_117 = arith.constant 3 : index
    %c0_118 = arith.constant 0 : index
    %c0_119 = arith.constant 0 : index
    %238 = vector.load %arg3[%c3_117, %c0_118, %c0_119] : memref<4x8x1xf32, #tpu.memory_space<vmem>>, vector<1x8x1xf32>
    %239 = vector.shape_cast %238 : vector<1x8x1xf32> to vector<8x1xf32>
    %c3_120 = arith.constant 3 : index
    %c0_121 = arith.constant 0 : index
    %c128_122 = arith.constant 128 : index
    %240 = vector.load %arg1[%c3_120, %c0_121, %c128_122] : memref<4x8x640xf32, #tpu.memory_space<vmem>>, vector<1x8x384xf32>
    %241 = vector.shape_cast %240 : vector<1x8x384xf32> to vector<8x384xf32>
    %242 = vector.broadcast %239 : vector<8x1xf32> to vector<8x384xf32>
    %243 = arith.mulf %242, %241 : vector<8x384xf32>
    %244 = arith.addf %237, %243 : vector<8x384xf32>
    %c0_123 = arith.constant 0 : index
    %c0_124 = arith.constant 0 : index
    %245 = vector.load %arg4[%c0_123, %c0_124] : memref<8x1xf32, #tpu.memory_space<vmem>>, vector<8x1xf32>
    %246 = vector.broadcast %245 : vector<8x1xf32> to vector<8x384xf32>
    %247 = arith.addf %244, %246 : vector<8x384xf32>
    %248 = vector.broadcast %1 : vector<1x384xf32> to vector<8x384xf32>
    %249 = arith.mulf %247, %248 : vector<8x384xf32>
    %250 = arith.mulf %249, %249 : vector<8x384xf32>
    %cst = arith.constant dense<0.000000e+00> : vector<8xf32>
    %251 = vector.multi_reduction <add>, %249, %cst [1] : vector<8x384xf32> to vector<8xf32>
    %252 = vector.shape_cast %251 : vector<8xf32> to vector<8x1xf32>
    %cst_125 = arith.constant dense<0.000000e+00> : vector<8xf32>
    %253 = vector.multi_reduction <add>, %250, %cst_125 [1] : vector<8x384xf32> to vector<8xf32>
    %254 = vector.shape_cast %253 : vector<8xf32> to vector<8x1xf32>
    %255 = vector.extract_strided_slice %252 {offsets = [0, 0], sizes = [4, 1], strides = [1, 1]} : vector<8x1xf32> to vector<4x1xf32>
    %256 = vector.extract_strided_slice %252 {offsets = [4, 0], sizes = [4, 1], strides = [1, 1]} : vector<8x1xf32> to vector<4x1xf32>
    %257 = arith.addf %255, %256 : vector<4x1xf32>
    %258 = tpu.concatenate %257, %257 in 0 : vector<4x1xf32>, vector<4x1xf32> -> vector<8x1xf32>
    %cst_126 = arith.constant 0.001953125 : f32
    %259 = vector.broadcast %cst_126 : f32 to vector<8x1xf32>
    %260 = arith.mulf %258, %259 : vector<8x1xf32>
    %261 = vector.extract_strided_slice %254 {offsets = [0, 0], sizes = [4, 1], strides = [1, 1]} : vector<8x1xf32> to vector<4x1xf32>
    %262 = vector.extract_strided_slice %254 {offsets = [4, 0], sizes = [4, 1], strides = [1, 1]} : vector<8x1xf32> to vector<4x1xf32>
    %263 = arith.addf %261, %262 : vector<4x1xf32>
    %264 = tpu.concatenate %263, %263 in 0 : vector<4x1xf32>, vector<4x1xf32> -> vector<8x1xf32>
    %cst_127 = arith.constant 0.001953125 : f32
    %265 = vector.broadcast %cst_127 : f32 to vector<8x1xf32>
    %266 = arith.mulf %264, %265 : vector<8x1xf32>
    %267 = arith.mulf %260, %260 : vector<8x1xf32>
    %268 = arith.subf %266, %267 : vector<8x1xf32>
    %cst_128 = arith.constant 1.000000e-03 : f32
    %269 = vector.broadcast %cst_128 : f32 to vector<8x1xf32>
    %270 = arith.addf %268, %269 : vector<8x1xf32>
    %271 = math.rsqrt %270 : vector<8x1xf32>
    %c0_129 = arith.constant 0 : index
    %c0_130 = arith.constant 0 : index
    %c0_131 = arith.constant 0 : index
    %272 = vector.load %arg11[%c0_129, %c0_130, %c0_131] : memref<4x8x1xf32, #tpu.memory_space<vmem>>, vector<1x8x1xf32>
    %273 = vector.shape_cast %272 : vector<1x8x1xf32> to vector<8x1xf32>
    %274 = arith.mulf %271, %273 : vector<8x1xf32>
    %c0_132 = arith.constant 0 : index
    %c0_133 = arith.constant 0 : index
    %c0_134 = arith.constant 0 : index
    %275 = vector.load %arg12[%c0_132, %c0_133, %c0_134] : memref<4x8x1xf32, #tpu.memory_space<vmem>>, vector<1x8x1xf32>
    %276 = vector.shape_cast %275 : vector<1x8x1xf32> to vector<8x1xf32>
    %277 = arith.mulf %260, %274 : vector<8x1xf32>
    %278 = arith.subf %276, %277 : vector<8x1xf32>
    %279 = vector.broadcast %274 : vector<8x1xf32> to vector<8x384xf32>
    %280 = arith.mulf %247, %279 : vector<8x384xf32>
    %281 = vector.broadcast %278 : vector<8x1xf32> to vector<8x384xf32>
    %282 = arith.addf %280, %281 : vector<8x384xf32>
    %cst_135 = arith.constant 0.000000e+00 : f32
    %283 = vector.broadcast %cst_135 : f32 to vector<8x384xf32>
    %284 = arith.maximumf %282, %283 : vector<8x384xf32>
    %c0_136 = arith.constant 0 : index
    %c0_137 = arith.constant 0 : index
    %c0_138 = arith.constant 0 : index
    %285 = vector.load %arg17[%c0_136, %c0_137, %c0_138] : memref<4x8x384xf32, #tpu.memory_space<vmem>>, vector<1x8x384xf32>
    %286 = vector.shape_cast %285 : vector<1x8x384xf32> to vector<8x384xf32>
    %287 = vector.shape_cast %284 : vector<8x384xf32> to vector<1x8x384xf32>
    tpu.vector_store %arg17[%c0_136, %c0_137, %c0_138], %287 {strides = array<i32>} : memref<4x8x384xf32, #tpu.memory_space<vmem>>, vector<1x8x384xf32>,
    %c0_139 = arith.constant 0 : index
    %c0_140 = arith.constant 0 : index
    %c103 = arith.constant 103 : index
    %288 = vector.load %arg18[%c0_139, %c0_140, %c103] : memref<4x8x640xf32, #tpu.memory_space<vmem>>, vector<1x8x384xf32>
    %289 = vector.shape_cast %288 : vector<1x8x384xf32> to vector<8x384xf32>
    %c0_141 = arith.constant 0 : index
    %c0_142 = arith.constant 0 : index
    %c0_143 = arith.constant 0 : index
    %290 = vector.load %arg7[%c0_141, %c0_142, %c0_143] : memref<36x8x1xf32, #tpu.memory_space<vmem>>, vector<1x8x1xf32>
    %291 = vector.shape_cast %290 : vector<1x8x1xf32> to vector<8x1xf32>
    %292 = vector.broadcast %291 : vector<8x1xf32> to vector<8x384xf32>
    %293 = arith.mulf %292, %289 : vector<8x384xf32>
    %c0_144 = arith.constant 0 : index
    %c0_145 = arith.constant 0 : index
    %c104 = arith.constant 104 : index
    %294 = vector.load %arg18[%c0_144, %c0_145, %c104] : memref<4x8x640xf32, #tpu.memory_space<vmem>>, vector<1x8x384xf32>
    %295 = vector.shape_cast %294 : vector<1x8x384xf32> to vector<8x384xf32>
    %c1_146 = arith.constant 1 : index
    %c0_147 = arith.constant 0 : index
    %c0_148 = arith.constant 0 : index
    %296 = vector.load %arg7[%c1_146, %c0_147, %c0_148] : memref<36x8x1xf32, #tpu.memory_space<vmem>>, vector<1x8x1xf32>
    %297 = vector.shape_cast %296 : vector<1x8x1xf32> to vector<8x1xf32>
    %298 = vector.broadcast %297 : vector<8x1xf32> to vector<8x384xf32>
    %299 = arith.mulf %298, %295 : vector<8x384xf32>
    %300 = arith.addf %293, %299 : vector<8x384xf32>
    %c0_149 = arith.constant 0 : index
    %c0_150 = arith.constant 0 : index
    %c105 = arith.constant 105 : index
    %301 = vector.load %arg18[%c0_149, %c0_150, %c105] : memref<4x8x640xf32, #tpu.memory_space<vmem>>, vector<1x8x384xf32>
    %302 = vector.shape_cast %301 : vector<1x8x384xf32> to vector<8x384xf32>
    %c2_151 = arith.constant 2 : index
    %c0_152 = arith.constant 0 : index
    %c0_153 = arith.constant 0 : index
    %303 = vector.load %arg7[%c2_151, %c0_152, %c0_153] : memref<36x8x1xf32, #tpu.memory_space<vmem>>, vector<1x8x1xf32>
    %304 = vector.shape_cast %303 : vector<1x8x1xf32> to vector<8x1xf32>
    %305 = vector.broadcast %304 : vector<8x1xf32> to vector<8x384xf32>
    %306 = arith.mulf %305, %302 : vector<8x384xf32>
    %307 = arith.addf %300, %306 : vector<8x384xf32>
    %c0_154 = arith.constant 0 : index
    %c0_155 = arith.constant 0 : index
    %c127 = arith.constant 127 : index
    %308 = vector.load %arg18[%c0_154, %c0_155, %c127] : memref<4x8x640xf32, #tpu.memory_space<vmem>>, vector<1x8x384xf32>
    %309 = vector.shape_cast %308 : vector<1x8x384xf32> to vector<8x384xf32>
    %c3_156 = arith.constant 3 : index
    %c0_157 = arith.constant 0 : index
    %c0_158 = arith.constant 0 : index
    %310 = vector.load %arg7[%c3_156, %c0_157, %c0_158] : memref<36x8x1xf32, #tpu.memory_space<vmem>>, vector<1x8x1xf32>
    %311 = vector.shape_cast %310 : vector<1x8x1xf32> to vector<8x1xf32>
    %312 = vector.broadcast %311 : vector<8x1xf32> to vector<8x384xf32>
    %313 = arith.mulf %312, %309 : vector<8x384xf32>
    %314 = arith.addf %307, %313 : vector<8x384xf32>
    %c0_159 = arith.constant 0 : index
    %c0_160 = arith.constant 0 : index
    %c128_161 = arith.constant 128 : index
    %315 = vector.load %arg18[%c0_159, %c0_160, %c128_161] : memref<4x8x640xf32, #tpu.memory_space<vmem>>, vector<1x8x384xf32>
    %316 = vector.shape_cast %315 : vector<1x8x384xf32> to vector<8x384xf32>
    %c4_162 = arith.constant 4 : index
    %c0_163 = arith.constant 0 : index
    %c0_164 = arith.constant 0 : index
    %317 = vector.load %arg7[%c4_162, %c0_163, %c0_164] : memref<36x8x1xf32, #tpu.memory_space<vmem>>, vector<1x8x1xf32>
    %318 = vector.shape_cast %317 : vector<1x8x1xf32> to vector<8x1xf32>
    %319 = vector.broadcast %318 : vector<8x1xf32> to vector<8x384xf32>
    %320 = arith.mulf %319, %316 : vector<8x384xf32>
    %321 = arith.addf %314, %320 : vector<8x384xf32>
    %c0_165 = arith.constant 0 : index
    %c0_166 = arith.constant 0 : index
    %c129 = arith.constant 129 : index
    %322 = vector.load %arg18[%c0_165, %c0_166, %c129] : memref<4x8x640xf32, #tpu.memory_space<vmem>>, vector<1x8x384xf32>
    %323 = vector.shape_cast %322 : vector<1x8x384xf32> to vector<8x384xf32>
    %c5_167 = arith.constant 5 : index
    %c0_168 = arith.constant 0 : index
    %c0_169 = arith.constant 0 : index
    %324 = vector.load %arg7[%c5_167, %c0_168, %c0_169] : memref<36x8x1xf32, #tpu.memory_space<vmem>>, vector<1x8x1xf32>
    %325 = vector.shape_cast %324 : vector<1x8x1xf32> to vector<8x1xf32>
    %326 = vector.broadcast %325 : vector<8x1xf32> to vector<8x384xf32>
    %327 = arith.mulf %326, %323 : vector<8x384xf32>
    %328 = arith.addf %321, %327 : vector<8x384xf32>
    %c0_170 = arith.constant 0 : index
    %c0_171 = arith.constant 0 : index
    %c151 = arith.constant 151 : index
    %329 = vector.load %arg18[%c0_170, %c0_171, %c151] : memref<4x8x640xf32, #tpu.memory_space<vmem>>, vector<1x8x384xf32>
    %330 = vector.shape_cast %329 : vector<1x8x384xf32> to vector<8x384xf32>
    %c6_172 = arith.constant 6 : index
    %c0_173 = arith.constant 0 : index
    %c0_174 = arith.constant 0 : index
    %331 = vector.load %arg7[%c6_172, %c0_173, %c0_174] : memref<36x8x1xf32, #tpu.memory_space<vmem>>, vector<1x8x1xf32>
    %332 = vector.shape_cast %331 : vector<1x8x1xf32> to vector<8x1xf32>
    %333 = vector.broadcast %332 : vector<8x1xf32> to vector<8x384xf32>
    %334 = arith.mulf %333, %330 : vector<8x384xf32>
    %335 = arith.addf %328, %334 : vector<8x384xf32>
    %c0_175 = arith.constant 0 : index
    %c0_176 = arith.constant 0 : index
    %c152 = arith.constant 152 : index
    %336 = vector.load %arg18[%c0_175, %c0_176, %c152] : memref<4x8x640xf32, #tpu.memory_space<vmem>>, vector<1x8x384xf32>
    %337 = vector.shape_cast %336 : vector<1x8x384xf32> to vector<8x384xf32>
    %c7_177 = arith.constant 7 : index
    %c0_178 = arith.constant 0 : index
    %c0_179 = arith.constant 0 : index
    %338 = vector.load %arg7[%c7_177, %c0_178, %c0_179] : memref<36x8x1xf32, #tpu.memory_space<vmem>>, vector<1x8x1xf32>
    %339 = vector.shape_cast %338 : vector<1x8x1xf32> to vector<8x1xf32>
    %340 = vector.broadcast %339 : vector<8x1xf32> to vector<8x384xf32>
    %341 = arith.mulf %340, %337 : vector<8x384xf32>
    %342 = arith.addf %335, %341 : vector<8x384xf32>
    %c0_180 = arith.constant 0 : index
    %c0_181 = arith.constant 0 : index
    %c153 = arith.constant 153 : index
    %343 = vector.load %arg18[%c0_180, %c0_181, %c153] : memref<4x8x640xf32, #tpu.memory_space<vmem>>, vector<1x8x384xf32>
    %344 = vector.shape_cast %343 : vector<1x8x384xf32> to vector<8x384xf32>
    %c8_182 = arith.constant 8 : index
    %c0_183 = arith.constant 0 : index
    %c0_184 = arith.constant 0 : index
    %345 = vector.load %arg7[%c8_182, %c0_183, %c0_184] : memref<36x8x1xf32, #tpu.memory_space<vmem>>, vector<1x8x1xf32>
    %346 = vector.shape_cast %345 : vector<1x8x1xf32> to vector<8x1xf32>
    %347 = vector.broadcast %346 : vector<8x1xf32> to vector<8x384xf32>
    %348 = arith.mulf %347, %344 : vector<8x384xf32>
    %349 = arith.addf %342, %348 : vector<8x384xf32>
    %c1_185 = arith.constant 1 : index
    %c0_186 = arith.constant 0 : index
    %c103_187 = arith.constant 103 : index
    %350 = vector.load %arg18[%c1_185, %c0_186, %c103_187] : memref<4x8x640xf32, #tpu.memory_space<vmem>>, vector<1x8x384xf32>
    %351 = vector.shape_cast %350 : vector<1x8x384xf32> to vector<8x384xf32>
    %c9_188 = arith.constant 9 : index
    %c0_189 = arith.constant 0 : index
    %c0_190 = arith.constant 0 : index
    %352 = vector.load %arg7[%c9_188, %c0_189, %c0_190] : memref<36x8x1xf32, #tpu.memory_space<vmem>>, vector<1x8x1xf32>
    %353 = vector.shape_cast %352 : vector<1x8x1xf32> to vector<8x1xf32>
    %354 = vector.broadcast %353 : vector<8x1xf32> to vector<8x384xf32>
    %355 = arith.mulf %354, %351 : vector<8x384xf32>
    %c1_191 = arith.constant 1 : index
    %c0_192 = arith.constant 0 : index
    %c104_193 = arith.constant 104 : index
    %356 = vector.load %arg18[%c1_191, %c0_192, %c104_193] : memref<4x8x640xf32, #tpu.memory_space<vmem>>, vector<1x8x384xf32>
    %357 = vector.shape_cast %356 : vector<1x8x384xf32> to vector<8x384xf32>
    %c10_194 = arith.constant 10 : index
    %c0_195 = arith.constant 0 : index
    %c0_196 = arith.constant 0 : index
    %358 = vector.load %arg7[%c10_194, %c0_195, %c0_196] : memref<36x8x1xf32, #tpu.memory_space<vmem>>, vector<1x8x1xf32>
    %359 = vector.shape_cast %358 : vector<1x8x1xf32> to vector<8x1xf32>
    %360 = vector.broadcast %359 : vector<8x1xf32> to vector<8x384xf32>
    %361 = arith.mulf %360, %357 : vector<8x384xf32>
    %362 = arith.addf %355, %361 : vector<8x384xf32>
    %c1_197 = arith.constant 1 : index
    %c0_198 = arith.constant 0 : index
    %c105_199 = arith.constant 105 : index
    %363 = vector.load %arg18[%c1_197, %c0_198, %c105_199] : memref<4x8x640xf32, #tpu.memory_space<vmem>>, vector<1x8x384xf32>
    %364 = vector.shape_cast %363 : vector<1x8x384xf32> to vector<8x384xf32>
    %c11_200 = arith.constant 11 : index
    %c0_201 = arith.constant 0 : index
    %c0_202 = arith.constant 0 : index
    %365 = vector.load %arg7[%c11_200, %c0_201, %c0_202] : memref<36x8x1xf32, #tpu.memory_space<vmem>>, vector<1x8x1xf32>
    %366 = vector.shape_cast %365 : vector<1x8x1xf32> to vector<8x1xf32>
    %367 = vector.broadcast %366 : vector<8x1xf32> to vector<8x384xf32>
    %368 = arith.mulf %367, %364 : vector<8x384xf32>
    %369 = arith.addf %362, %368 : vector<8x384xf32>
    %c1_203 = arith.constant 1 : index
    %c0_204 = arith.constant 0 : index
    %c127_205 = arith.constant 127 : index
    %370 = vector.load %arg18[%c1_203, %c0_204, %c127_205] : memref<4x8x640xf32, #tpu.memory_space<vmem>>, vector<1x8x384xf32>
    %371 = vector.shape_cast %370 : vector<1x8x384xf32> to vector<8x384xf32>
    %c12_206 = arith.constant 12 : index
    %c0_207 = arith.constant 0 : index
    %c0_208 = arith.constant 0 : index
    %372 = vector.load %arg7[%c12_206, %c0_207, %c0_208] : memref<36x8x1xf32, #tpu.memory_space<vmem>>, vector<1x8x1xf32>
    %373 = vector.shape_cast %372 : vector<1x8x1xf32> to vector<8x1xf32>
    %374 = vector.broadcast %373 : vector<8x1xf32> to vector<8x384xf32>
    %375 = arith.mulf %374, %371 : vector<8x384xf32>
    %376 = arith.addf %369, %375 : vector<8x384xf32>
    %c1_209 = arith.constant 1 : index
    %c0_210 = arith.constant 0 : index
    %c128_211 = arith.constant 128 : index
    %377 = vector.load %arg18[%c1_209, %c0_210, %c128_211] : memref<4x8x640xf32, #tpu.memory_space<vmem>>, vector<1x8x384xf32>
    %378 = vector.shape_cast %377 : vector<1x8x384xf32> to vector<8x384xf32>
    %c13_212 = arith.constant 13 : index
    %c0_213 = arith.constant 0 : index
    %c0_214 = arith.constant 0 : index
    %379 = vector.load %arg7[%c13_212, %c0_213, %c0_214] : memref<36x8x1xf32, #tpu.memory_space<vmem>>, vector<1x8x1xf32>
    %380 = vector.shape_cast %379 : vector<1x8x1xf32> to vector<8x1xf32>
    %381 = vector.broadcast %380 : vector<8x1xf32> to vector<8x384xf32>
    %382 = arith.mulf %381, %378 : vector<8x384xf32>
    %383 = arith.addf %376, %382 : vector<8x384xf32>
    %c1_215 = arith.constant 1 : index
    %c0_216 = arith.constant 0 : index
    %c129_217 = arith.constant 129 : index
    %384 = vector.load %arg18[%c1_215, %c0_216, %c129_217] : memref<4x8x640xf32, #tpu.memory_space<vmem>>, vector<1x8x384xf32>
    %385 = vector.shape_cast %384 : vector<1x8x384xf32> to vector<8x384xf32>
    %c14_218 = arith.constant 14 : index
    %c0_219 = arith.constant 0 : index
    %c0_220 = arith.constant 0 : index
    %386 = vector.load %arg7[%c14_218, %c0_219, %c0_220] : memref<36x8x1xf32, #tpu.memory_space<vmem>>, vector<1x8x1xf32>
    %387 = vector.shape_cast %386 : vector<1x8x1xf32> to vector<8x1xf32>
    %388 = vector.broadcast %387 : vector<8x1xf32> to vector<8x384xf32>
    %389 = arith.mulf %388, %385 : vector<8x384xf32>
    %390 = arith.addf %383, %389 : vector<8x384xf32>
    %c1_221 = arith.constant 1 : index
    %c0_222 = arith.constant 0 : index
    %c151_223 = arith.constant 151 : index
    %391 = vector.load %arg18[%c1_221, %c0_222, %c151_223] : memref<4x8x640xf32, #tpu.memory_space<vmem>>, vector<1x8x384xf32>
    %392 = vector.shape_cast %391 : vector<1x8x384xf32> to vector<8x384xf32>
    %c15_224 = arith.constant 15 : index
    %c0_225 = arith.constant 0 : index
    %c0_226 = arith.constant 0 : index
    %393 = vector.load %arg7[%c15_224, %c0_225, %c0_226] : memref<36x8x1xf32, #tpu.memory_space<vmem>>, vector<1x8x1xf32>
    %394 = vector.shape_cast %393 : vector<1x8x1xf32> to vector<8x1xf32>
    %395 = vector.broadcast %394 : vector<8x1xf32> to vector<8x384xf32>
    %396 = arith.mulf %395, %392 : vector<8x384xf32>
    %397 = arith.addf %390, %396 : vector<8x384xf32>
    %c1_227 = arith.constant 1 : index
    %c0_228 = arith.constant 0 : index
    %c152_229 = arith.constant 152 : index
    %398 = vector.load %arg18[%c1_227, %c0_228, %c152_229] : memref<4x8x640xf32, #tpu.memory_space<vmem>>, vector<1x8x384xf32>
    %399 = vector.shape_cast %398 : vector<1x8x384xf32> to vector<8x384xf32>
    %c16 = arith.constant 16 : index
    %c0_230 = arith.constant 0 : index
    %c0_231 = arith.constant 0 : index
    %400 = vector.load %arg7[%c16, %c0_230, %c0_231] : memref<36x8x1xf32, #tpu.memory_space<vmem>>, vector<1x8x1xf32>
    %401 = vector.shape_cast %400 : vector<1x8x1xf32> to vector<8x1xf32>
    %402 = vector.broadcast %401 : vector<8x1xf32> to vector<8x384xf32>
    %403 = arith.mulf %402, %399 : vector<8x384xf32>
    %404 = arith.addf %397, %403 : vector<8x384xf32>
    %c1_232 = arith.constant 1 : index
    %c0_233 = arith.constant 0 : index
    %c153_234 = arith.constant 153 : index
    %405 = vector.load %arg18[%c1_232, %c0_233, %c153_234] : memref<4x8x640xf32, #tpu.memory_space<vmem>>, vector<1x8x384xf32>
    %406 = vector.shape_cast %405 : vector<1x8x384xf32> to vector<8x384xf32>
    %c17 = arith.constant 17 : index
    %c0_235 = arith.constant 0 : index
    %c0_236 = arith.constant 0 : index
    %407 = vector.load %arg7[%c17, %c0_235, %c0_236] : memref<36x8x1xf32, #tpu.memory_space<vmem>>, vector<1x8x1xf32>
    %408 = vector.shape_cast %407 : vector<1x8x1xf32> to vector<8x1xf32>
    %409 = vector.broadcast %408 : vector<8x1xf32> to vector<8x384xf32>
    %410 = arith.mulf %409, %406 : vector<8x384xf32>
    %411 = arith.addf %404, %410 : vector<8x384xf32>
    %412 = arith.addf %349, %411 : vector<8x384xf32>
    %c2_237 = arith.constant 2 : index
    %c0_238 = arith.constant 0 : index
    %c103_239 = arith.constant 103 : index
    %413 = vector.load %arg18[%c2_237, %c0_238, %c103_239] : memref<4x8x640xf32, #tpu.memory_space<vmem>>, vector<1x8x384xf32>
    %414 = vector.shape_cast %413 : vector<1x8x384xf32> to vector<8x384xf32>
    %c18 = arith.constant 18 : index
    %c0_240 = arith.constant 0 : index
    %c0_241 = arith.constant 0 : index
    %415 = vector.load %arg7[%c18, %c0_240, %c0_241] : memref<36x8x1xf32, #tpu.memory_space<vmem>>, vector<1x8x1xf32>
    %416 = vector.shape_cast %415 : vector<1x8x1xf32> to vector<8x1xf32>
    %417 = vector.broadcast %416 : vector<8x1xf32> to vector<8x384xf32>
    %418 = arith.mulf %417, %414 : vector<8x384xf32>
    %c2_242 = arith.constant 2 : index
    %c0_243 = arith.constant 0 : index
    %c104_244 = arith.constant 104 : index
    %419 = vector.load %arg18[%c2_242, %c0_243, %c104_244] : memref<4x8x640xf32, #tpu.memory_space<vmem>>, vector<1x8x384xf32>
    %420 = vector.shape_cast %419 : vector<1x8x384xf32> to vector<8x384xf32>
    %c19 = arith.constant 19 : index
    %c0_245 = arith.constant 0 : index
    %c0_246 = arith.constant 0 : index
    %421 = vector.load %arg7[%c19, %c0_245, %c0_246] : memref<36x8x1xf32, #tpu.memory_space<vmem>>, vector<1x8x1xf32>
    %422 = vector.shape_cast %421 : vector<1x8x1xf32> to vector<8x1xf32>
    %423 = vector.broadcast %422 : vector<8x1xf32> to vector<8x384xf32>
    %424 = arith.mulf %423, %420 : vector<8x384xf32>
    %425 = arith.addf %418, %424 : vector<8x384xf32>
    %c2_247 = arith.constant 2 : index
    %c0_248 = arith.constant 0 : index
    %c105_249 = arith.constant 105 : index
    %426 = vector.load %arg18[%c2_247, %c0_248, %c105_249] : memref<4x8x640xf32, #tpu.memory_space<vmem>>, vector<1x8x384xf32>
    %427 = vector.shape_cast %426 : vector<1x8x384xf32> to vector<8x384xf32>
    %c20 = arith.constant 20 : index
    %c0_250 = arith.constant 0 : index
    %c0_251 = arith.constant 0 : index
    %428 = vector.load %arg7[%c20, %c0_250, %c0_251] : memref<36x8x1xf32, #tpu.memory_space<vmem>>, vector<1x8x1xf32>
    %429 = vector.shape_cast %428 : vector<1x8x1xf32> to vector<8x1xf32>
    %430 = vector.broadcast %429 : vector<8x1xf32> to vector<8x384xf32>
    %431 = arith.mulf %430, %427 : vector<8x384xf32>
    %432 = arith.addf %425, %431 : vector<8x384xf32>
    %c2_252 = arith.constant 2 : index
    %c0_253 = arith.constant 0 : index
    %c127_254 = arith.constant 127 : index
    %433 = vector.load %arg18[%c2_252, %c0_253, %c127_254] : memref<4x8x640xf32, #tpu.memory_space<vmem>>, vector<1x8x384xf32>
    %434 = vector.shape_cast %433 : vector<1x8x384xf32> to vector<8x384xf32>
    %c21 = arith.constant 21 : index
    %c0_255 = arith.constant 0 : index
    %c0_256 = arith.constant 0 : index
    %435 = vector.load %arg7[%c21, %c0_255, %c0_256] : memref<36x8x1xf32, #tpu.memory_space<vmem>>, vector<1x8x1xf32>
    %436 = vector.shape_cast %435 : vector<1x8x1xf32> to vector<8x1xf32>
    %437 = vector.broadcast %436 : vector<8x1xf32> to vector<8x384xf32>
    %438 = arith.mulf %437, %434 : vector<8x384xf32>
    %439 = arith.addf %432, %438 : vector<8x384xf32>
    %c2_257 = arith.constant 2 : index
    %c0_258 = arith.constant 0 : index
    %c128_259 = arith.constant 128 : index
    %440 = vector.load %arg18[%c2_257, %c0_258, %c128_259] : memref<4x8x640xf32, #tpu.memory_space<vmem>>, vector<1x8x384xf32>
    %441 = vector.shape_cast %440 : vector<1x8x384xf32> to vector<8x384xf32>
    %c22 = arith.constant 22 : index
    %c0_260 = arith.constant 0 : index
    %c0_261 = arith.constant 0 : index
    %442 = vector.load %arg7[%c22, %c0_260, %c0_261] : memref<36x8x1xf32, #tpu.memory_space<vmem>>, vector<1x8x1xf32>
    %443 = vector.shape_cast %442 : vector<1x8x1xf32> to vector<8x1xf32>
    %444 = vector.broadcast %443 : vector<8x1xf32> to vector<8x384xf32>
    %445 = arith.mulf %444, %441 : vector<8x384xf32>
    %446 = arith.addf %439, %445 : vector<8x384xf32>
    %c2_262 = arith.constant 2 : index
    %c0_263 = arith.constant 0 : index
    %c129_264 = arith.constant 129 : index
    %447 = vector.load %arg18[%c2_262, %c0_263, %c129_264] : memref<4x8x640xf32, #tpu.memory_space<vmem>>, vector<1x8x384xf32>
    %448 = vector.shape_cast %447 : vector<1x8x384xf32> to vector<8x384xf32>
    %c23 = arith.constant 23 : index
    %c0_265 = arith.constant 0 : index
    %c0_266 = arith.constant 0 : index
    %449 = vector.load %arg7[%c23, %c0_265, %c0_266] : memref<36x8x1xf32, #tpu.memory_space<vmem>>, vector<1x8x1xf32>
    %450 = vector.shape_cast %449 : vector<1x8x1xf32> to vector<8x1xf32>
    %451 = vector.broadcast %450 : vector<8x1xf32> to vector<8x384xf32>
    %452 = arith.mulf %451, %448 : vector<8x384xf32>
    %453 = arith.addf %446, %452 : vector<8x384xf32>
    %c2_267 = arith.constant 2 : index
    %c0_268 = arith.constant 0 : index
    %c151_269 = arith.constant 151 : index
    %454 = vector.load %arg18[%c2_267, %c0_268, %c151_269] : memref<4x8x640xf32, #tpu.memory_space<vmem>>, vector<1x8x384xf32>
    %455 = vector.shape_cast %454 : vector<1x8x384xf32> to vector<8x384xf32>
    %c24 = arith.constant 24 : index
    %c0_270 = arith.constant 0 : index
    %c0_271 = arith.constant 0 : index
    %456 = vector.load %arg7[%c24, %c0_270, %c0_271] : memref<36x8x1xf32, #tpu.memory_space<vmem>>, vector<1x8x1xf32>
    %457 = vector.shape_cast %456 : vector<1x8x1xf32> to vector<8x1xf32>
    %458 = vector.broadcast %457 : vector<8x1xf32> to vector<8x384xf32>
    %459 = arith.mulf %458, %455 : vector<8x384xf32>
    %460 = arith.addf %453, %459 : vector<8x384xf32>
    %c2_272 = arith.constant 2 : index
    %c0_273 = arith.constant 0 : index
    %c152_274 = arith.constant 152 : index
    %461 = vector.load %arg18[%c2_272, %c0_273, %c152_274] : memref<4x8x640xf32, #tpu.memory_space<vmem>>, vector<1x8x384xf32>
    %462 = vector.shape_cast %461 : vector<1x8x384xf32> to vector<8x384xf32>
    %c25 = arith.constant 25 : index
    %c0_275 = arith.constant 0 : index
    %c0_276 = arith.constant 0 : index
    %463 = vector.load %arg7[%c25, %c0_275, %c0_276] : memref<36x8x1xf32, #tpu.memory_space<vmem>>, vector<1x8x1xf32>
    %464 = vector.shape_cast %463 : vector<1x8x1xf32> to vector<8x1xf32>
    %465 = vector.broadcast %464 : vector<8x1xf32> to vector<8x384xf32>
    %466 = arith.mulf %465, %462 : vector<8x384xf32>
    %467 = arith.addf %460, %466 : vector<8x384xf32>
    %c2_277 = arith.constant 2 : index
    %c0_278 = arith.constant 0 : index
    %c153_279 = arith.constant 153 : index
    %468 = vector.load %arg18[%c2_277, %c0_278, %c153_279] : memref<4x8x640xf32, #tpu.memory_space<vmem>>, vector<1x8x384xf32>
    %469 = vector.shape_cast %468 : vector<1x8x384xf32> to vector<8x384xf32>
    %c26 = arith.constant 26 : index
    %c0_280 = arith.constant 0 : index
    %c0_281 = arith.constant 0 : index
    %470 = vector.load %arg7[%c26, %c0_280, %c0_281] : memref<36x8x1xf32, #tpu.memory_space<vmem>>, vector<1x8x1xf32>
    %471 = vector.shape_cast %470 : vector<1x8x1xf32> to vector<8x1xf32>
    %472 = vector.broadcast %471 : vector<8x1xf32> to vector<8x384xf32>
    %473 = arith.mulf %472, %469 : vector<8x384xf32>
    %474 = arith.addf %467, %473 : vector<8x384xf32>
    %475 = arith.addf %412, %474 : vector<8x384xf32>
    %c3_282 = arith.constant 3 : index
    %c0_283 = arith.constant 0 : index
    %c103_284 = arith.constant 103 : index
    %476 = vector.load %arg18[%c3_282, %c0_283, %c103_284] : memref<4x8x640xf32, #tpu.memory_space<vmem>>, vector<1x8x384xf32>
    %477 = vector.shape_cast %476 : vector<1x8x384xf32> to vector<8x384xf32>
    %c27 = arith.constant 27 : index
    %c0_285 = arith.constant 0 : index
    %c0_286 = arith.constant 0 : index
    %478 = vector.load %arg7[%c27, %c0_285, %c0_286] : memref<36x8x1xf32, #tpu.memory_space<vmem>>, vector<1x8x1xf32>
    %479 = vector.shape_cast %478 : vector<1x8x1xf32> to vector<8x1xf32>
    %480 = vector.broadcast %479 : vector<8x1xf32> to vector<8x384xf32>
    %481 = arith.mulf %480, %477 : vector<8x384xf32>
    %c3_287 = arith.constant 3 : index
    %c0_288 = arith.constant 0 : index
    %c104_289 = arith.constant 104 : index
    %482 = vector.load %arg18[%c3_287, %c0_288, %c104_289] : memref<4x8x640xf32, #tpu.memory_space<vmem>>, vector<1x8x384xf32>
    %483 = vector.shape_cast %482 : vector<1x8x384xf32> to vector<8x384xf32>
    %c28 = arith.constant 28 : index
    %c0_290 = arith.constant 0 : index
    %c0_291 = arith.constant 0 : index
    %484 = vector.load %arg7[%c28, %c0_290, %c0_291] : memref<36x8x1xf32, #tpu.memory_space<vmem>>, vector<1x8x1xf32>
    %485 = vector.shape_cast %484 : vector<1x8x1xf32> to vector<8x1xf32>
    %486 = vector.broadcast %485 : vector<8x1xf32> to vector<8x384xf32>
    %487 = arith.mulf %486, %483 : vector<8x384xf32>
    %488 = arith.addf %481, %487 : vector<8x384xf32>
    %c3_292 = arith.constant 3 : index
    %c0_293 = arith.constant 0 : index
    %c105_294 = arith.constant 105 : index
    %489 = vector.load %arg18[%c3_292, %c0_293, %c105_294] : memref<4x8x640xf32, #tpu.memory_space<vmem>>, vector<1x8x384xf32>
    %490 = vector.shape_cast %489 : vector<1x8x384xf32> to vector<8x384xf32>
    %c29 = arith.constant 29 : index
    %c0_295 = arith.constant 0 : index
    %c0_296 = arith.constant 0 : index
    %491 = vector.load %arg7[%c29, %c0_295, %c0_296] : memref<36x8x1xf32, #tpu.memory_space<vmem>>, vector<1x8x1xf32>
    %492 = vector.shape_cast %491 : vector<1x8x1xf32> to vector<8x1xf32>
    %493 = vector.broadcast %492 : vector<8x1xf32> to vector<8x384xf32>
    %494 = arith.mulf %493, %490 : vector<8x384xf32>
    %495 = arith.addf %488, %494 : vector<8x384xf32>
    %c3_297 = arith.constant 3 : index
    %c0_298 = arith.constant 0 : index
    %c127_299 = arith.constant 127 : index
    %496 = vector.load %arg18[%c3_297, %c0_298, %c127_299] : memref<4x8x640xf32, #tpu.memory_space<vmem>>, vector<1x8x384xf32>
    %497 = vector.shape_cast %496 : vector<1x8x384xf32> to vector<8x384xf32>
    %c30 = arith.constant 30 : index
    %c0_300 = arith.constant 0 : index
    %c0_301 = arith.constant 0 : index
    %498 = vector.load %arg7[%c30, %c0_300, %c0_301] : memref<36x8x1xf32, #tpu.memory_space<vmem>>, vector<1x8x1xf32>
    %499 = vector.shape_cast %498 : vector<1x8x1xf32> to vector<8x1xf32>
    %500 = vector.broadcast %499 : vector<8x1xf32> to vector<8x384xf32>
    %501 = arith.mulf %500, %497 : vector<8x384xf32>
    %502 = arith.addf %495, %501 : vector<8x384xf32>
    %c3_302 = arith.constant 3 : index
    %c0_303 = arith.constant 0 : index
    %c128_304 = arith.constant 128 : index
    %503 = vector.load %arg18[%c3_302, %c0_303, %c128_304] : memref<4x8x640xf32, #tpu.memory_space<vmem>>, vector<1x8x384xf32>
    %504 = vector.shape_cast %503 : vector<1x8x384xf32> to vector<8x384xf32>
    %c31 = arith.constant 31 : index
    %c0_305 = arith.constant 0 : index
    %c0_306 = arith.constant 0 : index
    %505 = vector.load %arg7[%c31, %c0_305, %c0_306] : memref<36x8x1xf32, #tpu.memory_space<vmem>>, vector<1x8x1xf32>
    %506 = vector.shape_cast %505 : vector<1x8x1xf32> to vector<8x1xf32>
    %507 = vector.broadcast %506 : vector<8x1xf32> to vector<8x384xf32>
    %508 = arith.mulf %507, %504 : vector<8x384xf32>
    %509 = arith.addf %502, %508 : vector<8x384xf32>
    %c3_307 = arith.constant 3 : index
    %c0_308 = arith.constant 0 : index
    %c129_309 = arith.constant 129 : index
    %510 = vector.load %arg18[%c3_307, %c0_308, %c129_309] : memref<4x8x640xf32, #tpu.memory_space<vmem>>, vector<1x8x384xf32>
    %511 = vector.shape_cast %510 : vector<1x8x384xf32> to vector<8x384xf32>
    %c32 = arith.constant 32 : index
    %c0_310 = arith.constant 0 : index
    %c0_311 = arith.constant 0 : index
    %512 = vector.load %arg7[%c32, %c0_310, %c0_311] : memref<36x8x1xf32, #tpu.memory_space<vmem>>, vector<1x8x1xf32>
    %513 = vector.shape_cast %512 : vector<1x8x1xf32> to vector<8x1xf32>
    %514 = vector.broadcast %513 : vector<8x1xf32> to vector<8x384xf32>
    %515 = arith.mulf %514, %511 : vector<8x384xf32>
    %516 = arith.addf %509, %515 : vector<8x384xf32>
    %c3_312 = arith.constant 3 : index
    %c0_313 = arith.constant 0 : index
    %c151_314 = arith.constant 151 : index
    %517 = vector.load %arg18[%c3_312, %c0_313, %c151_314] : memref<4x8x640xf32, #tpu.memory_space<vmem>>, vector<1x8x384xf32>
    %518 = vector.shape_cast %517 : vector<1x8x384xf32> to vector<8x384xf32>
    %c33 = arith.constant 33 : index
    %c0_315 = arith.constant 0 : index
    %c0_316 = arith.constant 0 : index
    %519 = vector.load %arg7[%c33, %c0_315, %c0_316] : memref<36x8x1xf32, #tpu.memory_space<vmem>>, vector<1x8x1xf32>
    %520 = vector.shape_cast %519 : vector<1x8x1xf32> to vector<8x1xf32>
    %521 = vector.broadcast %520 : vector<8x1xf32> to vector<8x384xf32>
    %522 = arith.mulf %521, %518 : vector<8x384xf32>
    %523 = arith.addf %516, %522 : vector<8x384xf32>
    %c3_317 = arith.constant 3 : index
    %c0_318 = arith.constant 0 : index
    %c152_319 = arith.constant 152 : index
    %524 = vector.load %arg18[%c3_317, %c0_318, %c152_319] : memref<4x8x640xf32, #tpu.memory_space<vmem>>, vector<1x8x384xf32>
    %525 = vector.shape_cast %524 : vector<1x8x384xf32> to vector<8x384xf32>
    %c34 = arith.constant 34 : index
    %c0_320 = arith.constant 0 : index
    %c0_321 = arith.constant 0 : index
    %526 = vector.load %arg7[%c34, %c0_320, %c0_321] : memref<36x8x1xf32, #tpu.memory_space<vmem>>, vector<1x8x1xf32>
    %527 = vector.shape_cast %526 : vector<1x8x1xf32> to vector<8x1xf32>
    %528 = vector.broadcast %527 : vector<8x1xf32> to vector<8x384xf32>
    %529 = arith.mulf %528, %525 : vector<8x384xf32>
    %530 = arith.addf %523, %529 : vector<8x384xf32>
    %c3_322 = arith.constant 3 : index
    %c0_323 = arith.constant 0 : index
    %c153_324 = arith.constant 153 : index
    %531 = vector.load %arg18[%c3_322, %c0_323, %c153_324] : memref<4x8x640xf32, #tpu.memory_space<vmem>>, vector<1x8x384xf32>
    %532 = vector.shape_cast %531 : vector<1x8x384xf32> to vector<8x384xf32>
    %c35 = arith.constant 35 : index
    %c0_325 = arith.constant 0 : index
    %c0_326 = arith.constant 0 : index
    %533 = vector.load %arg7[%c35, %c0_325, %c0_326] : memref<36x8x1xf32, #tpu.memory_space<vmem>>, vector<1x8x1xf32>
    %534 = vector.shape_cast %533 : vector<1x8x1xf32> to vector<8x1xf32>
    %535 = vector.broadcast %534 : vector<8x1xf32> to vector<8x384xf32>
    %536 = arith.mulf %535, %532 : vector<8x384xf32>
    %537 = arith.addf %530, %536 : vector<8x384xf32>
    %538 = arith.addf %475, %537 : vector<8x384xf32>
    %c0_327 = arith.constant 0 : index
    %c0_328 = arith.constant 0 : index
    %539 = vector.load %arg8[%c0_327, %c0_328] : memref<8x1xf32, #tpu.memory_space<vmem>>, vector<8x1xf32>
    %540 = vector.broadcast %539 : vector<8x1xf32> to vector<8x384xf32>
    %541 = arith.addf %538, %540 : vector<8x384xf32>
    %542 = vector.broadcast %1 : vector<1x384xf32> to vector<8x384xf32>
    %543 = arith.mulf %541, %542 : vector<8x384xf32>
    %544 = arith.mulf %543, %543 : vector<8x384xf32>
    %cst_329 = arith.constant dense<0.000000e+00> : vector<8xf32>
    %545 = vector.multi_reduction <add>, %543, %cst_329 [1] : vector<8x384xf32> to vector<8xf32>
    %546 = vector.shape_cast %545 : vector<8xf32> to vector<8x1xf32>
    %cst_330 = arith.constant dense<0.000000e+00> : vector<8xf32>
    %547 = vector.multi_reduction <add>, %544, %cst_330 [1] : vector<8x384xf32> to vector<8xf32>
    %548 = vector.shape_cast %547 : vector<8xf32> to vector<8x1xf32>
    %549 = vector.extract_strided_slice %546 {offsets = [0, 0], sizes = [4, 1], strides = [1, 1]} : vector<8x1xf32> to vector<4x1xf32>
    %550 = vector.extract_strided_slice %546 {offsets = [4, 0], sizes = [4, 1], strides = [1, 1]} : vector<8x1xf32> to vector<4x1xf32>
    %551 = arith.addf %549, %550 : vector<4x1xf32>
    %552 = tpu.concatenate %551, %551 in 0 : vector<4x1xf32>, vector<4x1xf32> -> vector<8x1xf32>
    %cst_331 = arith.constant 0.001953125 : f32
    %553 = vector.broadcast %cst_331 : f32 to vector<8x1xf32>
    %554 = arith.mulf %552, %553 : vector<8x1xf32>
    %555 = vector.extract_strided_slice %548 {offsets = [0, 0], sizes = [4, 1], strides = [1, 1]} : vector<8x1xf32> to vector<4x1xf32>
    %556 = vector.extract_strided_slice %548 {offsets = [4, 0], sizes = [4, 1], strides = [1, 1]} : vector<8x1xf32> to vector<4x1xf32>
    %557 = arith.addf %555, %556 : vector<4x1xf32>
    %558 = tpu.concatenate %557, %557 in 0 : vector<4x1xf32>, vector<4x1xf32> -> vector<8x1xf32>
    %cst_332 = arith.constant 0.001953125 : f32
    %559 = vector.broadcast %cst_332 : f32 to vector<8x1xf32>
    %560 = arith.mulf %558, %559 : vector<8x1xf32>
    %561 = arith.mulf %554, %554 : vector<8x1xf32>
    %562 = arith.subf %560, %561 : vector<8x1xf32>
    %cst_333 = arith.constant 1.000000e-03 : f32
    %563 = vector.broadcast %cst_333 : f32 to vector<8x1xf32>
    %564 = arith.addf %562, %563 : vector<8x1xf32>
    %565 = math.rsqrt %564 : vector<8x1xf32>
    %c1_334 = arith.constant 1 : index
    %c0_335 = arith.constant 0 : index
    %c0_336 = arith.constant 0 : index
    %566 = vector.load %arg11[%c1_334, %c0_335, %c0_336] : memref<4x8x1xf32, #tpu.memory_space<vmem>>, vector<1x8x1xf32>
    %567 = vector.shape_cast %566 : vector<1x8x1xf32> to vector<8x1xf32>
    %568 = arith.mulf %565, %567 : vector<8x1xf32>
    %c1_337 = arith.constant 1 : index
    %c0_338 = arith.constant 0 : index
    %c0_339 = arith.constant 0 : index
    %569 = vector.load %arg12[%c1_337, %c0_338, %c0_339] : memref<4x8x1xf32, #tpu.memory_space<vmem>>, vector<1x8x1xf32>
    %570 = vector.shape_cast %569 : vector<1x8x1xf32> to vector<8x1xf32>
    %571 = arith.mulf %554, %568 : vector<8x1xf32>
    %572 = arith.subf %570, %571 : vector<8x1xf32>
    %573 = vector.broadcast %568 : vector<8x1xf32> to vector<8x384xf32>
    %574 = arith.mulf %541, %573 : vector<8x384xf32>
    %575 = vector.broadcast %572 : vector<8x1xf32> to vector<8x384xf32>
    %576 = arith.addf %574, %575 : vector<8x384xf32>
    %cst_340 = arith.constant 0.000000e+00 : f32
    %577 = vector.broadcast %cst_340 : f32 to vector<8x384xf32>
    %578 = arith.maximumf %576, %577 : vector<8x384xf32>
    %c1_341 = arith.constant 1 : index
    %c0_342 = arith.constant 0 : index
    %c0_343 = arith.constant 0 : index
    %579 = vector.load %arg17[%c1_341, %c0_342, %c0_343] : memref<4x8x384xf32, #tpu.memory_space<vmem>>, vector<1x8x384xf32>
    %580 = vector.shape_cast %579 : vector<1x8x384xf32> to vector<8x384xf32>
    %581 = vector.shape_cast %578 : vector<8x384xf32> to vector<1x8x384xf32>
    tpu.vector_store %arg17[%c1_341, %c0_342, %c0_343], %581 {strides = array<i32>} : memref<4x8x384xf32, #tpu.memory_space<vmem>>, vector<1x8x384xf32>,
    %c0_344 = arith.constant 0 : index
    %c0_345 = arith.constant 0 : index
    %c78 = arith.constant 78 : index
    %582 = vector.load %arg19[%c0_344, %c0_345, %c78] : memref<4x8x640xf32, #tpu.memory_space<vmem>>, vector<1x8x384xf32>
    %583 = vector.shape_cast %582 : vector<1x8x384xf32> to vector<8x384xf32>
    %c0_346 = arith.constant 0 : index
    %c0_347 = arith.constant 0 : index
    %c0_348 = arith.constant 0 : index
    %584 = vector.load %arg9[%c0_346, %c0_347, %c0_348] : memref<100x8x1xf32, #tpu.memory_space<vmem>>, vector<1x8x1xf32>
    %585 = vector.shape_cast %584 : vector<1x8x1xf32> to vector<8x1xf32>
    %586 = vector.broadcast %585 : vector<8x1xf32> to vector<8x384xf32>
    %587 = arith.mulf %586, %583 : vector<8x384xf32>
    %c0_349 = arith.constant 0 : index
    %c0_350 = arith.constant 0 : index
    %c79 = arith.constant 79 : index
    %588 = vector.load %arg19[%c0_349, %c0_350, %c79] : memref<4x8x640xf32, #tpu.memory_space<vmem>>, vector<1x8x384xf32>
    %589 = vector.shape_cast %588 : vector<1x8x384xf32> to vector<8x384xf32>
    %c1_351 = arith.constant 1 : index
    %c0_352 = arith.constant 0 : index
    %c0_353 = arith.constant 0 : index
    %590 = vector.load %arg9[%c1_351, %c0_352, %c0_353] : memref<100x8x1xf32, #tpu.memory_space<vmem>>, vector<1x8x1xf32>
    %591 = vector.shape_cast %590 : vector<1x8x1xf32> to vector<8x1xf32>
    %592 = vector.broadcast %591 : vector<8x1xf32> to vector<8x384xf32>
    %593 = arith.mulf %592, %589 : vector<8x384xf32>
    %594 = arith.addf %587, %593 : vector<8x384xf32>
    %c0_354 = arith.constant 0 : index
    %c0_355 = arith.constant 0 : index
    %c80 = arith.constant 80 : index
    %595 = vector.load %arg19[%c0_354, %c0_355, %c80] : memref<4x8x640xf32, #tpu.memory_space<vmem>>, vector<1x8x384xf32>
    %596 = vector.shape_cast %595 : vector<1x8x384xf32> to vector<8x384xf32>
    %c2_356 = arith.constant 2 : index
    %c0_357 = arith.constant 0 : index
    %c0_358 = arith.constant 0 : index
    %597 = vector.load %arg9[%c2_356, %c0_357, %c0_358] : memref<100x8x1xf32, #tpu.memory_space<vmem>>, vector<1x8x1xf32>
    %598 = vector.shape_cast %597 : vector<1x8x1xf32> to vector<8x1xf32>
    %599 = vector.broadcast %598 : vector<8x1xf32> to vector<8x384xf32>
    %600 = arith.mulf %599, %596 : vector<8x384xf32>
    %601 = arith.addf %594, %600 : vector<8x384xf32>
    %c0_359 = arith.constant 0 : index
    %c0_360 = arith.constant 0 : index
    %c81 = arith.constant 81 : index
    %602 = vector.load %arg19[%c0_359, %c0_360, %c81] : memref<4x8x640xf32, #tpu.memory_space<vmem>>, vector<1x8x384xf32>
    %603 = vector.shape_cast %602 : vector<1x8x384xf32> to vector<8x384xf32>
    %c3_361 = arith.constant 3 : index
    %c0_362 = arith.constant 0 : index
    %c0_363 = arith.constant 0 : index
    %604 = vector.load %arg9[%c3_361, %c0_362, %c0_363] : memref<100x8x1xf32, #tpu.memory_space<vmem>>, vector<1x8x1xf32>
    %605 = vector.shape_cast %604 : vector<1x8x1xf32> to vector<8x1xf32>
    %606 = vector.broadcast %605 : vector<8x1xf32> to vector<8x384xf32>
    %607 = arith.mulf %606, %603 : vector<8x384xf32>
    %608 = arith.addf %601, %607 : vector<8x384xf32>
    %c0_364 = arith.constant 0 : index
    %c0_365 = arith.constant 0 : index
    %c82 = arith.constant 82 : index
    %609 = vector.load %arg19[%c0_364, %c0_365, %c82] : memref<4x8x640xf32, #tpu.memory_space<vmem>>, vector<1x8x384xf32>
    %610 = vector.shape_cast %609 : vector<1x8x384xf32> to vector<8x384xf32>
    %c4_366 = arith.constant 4 : index
    %c0_367 = arith.constant 0 : index
    %c0_368 = arith.constant 0 : index
    %611 = vector.load %arg9[%c4_366, %c0_367, %c0_368] : memref<100x8x1xf32, #tpu.memory_space<vmem>>, vector<1x8x1xf32>
    %612 = vector.shape_cast %611 : vector<1x8x1xf32> to vector<8x1xf32>
    %613 = vector.broadcast %612 : vector<8x1xf32> to vector<8x384xf32>
    %614 = arith.mulf %613, %610 : vector<8x384xf32>
    %615 = arith.addf %608, %614 : vector<8x384xf32>
    %c0_369 = arith.constant 0 : index
    %c0_370 = arith.constant 0 : index
    %c102 = arith.constant 102 : index
    %616 = vector.load %arg19[%c0_369, %c0_370, %c102] : memref<4x8x640xf32, #tpu.memory_space<vmem>>, vector<1x8x384xf32>
    %617 = vector.shape_cast %616 : vector<1x8x384xf32> to vector<8x384xf32>
    %c5_371 = arith.constant 5 : index
    %c0_372 = arith.constant 0 : index
    %c0_373 = arith.constant 0 : index
    %618 = vector.load %arg9[%c5_371, %c0_372, %c0_373] : memref<100x8x1xf32, #tpu.memory_space<vmem>>, vector<1x8x1xf32>
    %619 = vector.shape_cast %618 : vector<1x8x1xf32> to vector<8x1xf32>
    %620 = vector.broadcast %619 : vector<8x1xf32> to vector<8x384xf32>
    %621 = arith.mulf %620, %617 : vector<8x384xf32>
    %622 = arith.addf %615, %621 : vector<8x384xf32>
    %c0_374 = arith.constant 0 : index
    %c0_375 = arith.constant 0 : index
    %c103_376 = arith.constant 103 : index
    %623 = vector.load %arg19[%c0_374, %c0_375, %c103_376] : memref<4x8x640xf32, #tpu.memory_space<vmem>>, vector<1x8x384xf32>
    %624 = vector.shape_cast %623 : vector<1x8x384xf32> to vector<8x384xf32>
    %c6_377 = arith.constant 6 : index
    %c0_378 = arith.constant 0 : index
    %c0_379 = arith.constant 0 : index
    %625 = vector.load %arg9[%c6_377, %c0_378, %c0_379] : memref<100x8x1xf32, #tpu.memory_space<vmem>>, vector<1x8x1xf32>
    %626 = vector.shape_cast %625 : vector<1x8x1xf32> to vector<8x1xf32>
    %627 = vector.broadcast %626 : vector<8x1xf32> to vector<8x384xf32>
    %628 = arith.mulf %627, %624 : vector<8x384xf32>
    %629 = arith.addf %622, %628 : vector<8x384xf32>
    %c0_380 = arith.constant 0 : index
    %c0_381 = arith.constant 0 : index
    %c104_382 = arith.constant 104 : index
    %630 = vector.load %arg19[%c0_380, %c0_381, %c104_382] : memref<4x8x640xf32, #tpu.memory_space<vmem>>, vector<1x8x384xf32>
    %631 = vector.shape_cast %630 : vector<1x8x384xf32> to vector<8x384xf32>
    %c7_383 = arith.constant 7 : index
    %c0_384 = arith.constant 0 : index
    %c0_385 = arith.constant 0 : index
    %632 = vector.load %arg9[%c7_383, %c0_384, %c0_385] : memref<100x8x1xf32, #tpu.memory_space<vmem>>, vector<1x8x1xf32>
    %633 = vector.shape_cast %632 : vector<1x8x1xf32> to vector<8x1xf32>
    %634 = vector.broadcast %633 : vector<8x1xf32> to vector<8x384xf32>
    %635 = arith.mulf %634, %631 : vector<8x384xf32>
    %636 = arith.addf %629, %635 : vector<8x384xf32>
    %c0_386 = arith.constant 0 : index
    %c0_387 = arith.constant 0 : index
    %c105_388 = arith.constant 105 : index
    %637 = vector.load %arg19[%c0_386, %c0_387, %c105_388] : memref<4x8x640xf32, #tpu.memory_space<vmem>>, vector<1x8x384xf32>
    %638 = vector.shape_cast %637 : vector<1x8x384xf32> to vector<8x384xf32>
    %c8_389 = arith.constant 8 : index
    %c0_390 = arith.constant 0 : index
    %c0_391 = arith.constant 0 : index
    %639 = vector.load %arg9[%c8_389, %c0_390, %c0_391] : memref<100x8x1xf32, #tpu.memory_space<vmem>>, vector<1x8x1xf32>
    %640 = vector.shape_cast %639 : vector<1x8x1xf32> to vector<8x1xf32>
    %641 = vector.broadcast %640 : vector<8x1xf32> to vector<8x384xf32>
    %642 = arith.mulf %641, %638 : vector<8x384xf32>
    %643 = arith.addf %636, %642 : vector<8x384xf32>
    %c0_392 = arith.constant 0 : index
    %c0_393 = arith.constant 0 : index
    %c106 = arith.constant 106 : index
    %644 = vector.load %arg19[%c0_392, %c0_393, %c106] : memref<4x8x640xf32, #tpu.memory_space<vmem>>, vector<1x8x384xf32>
    %645 = vector.shape_cast %644 : vector<1x8x384xf32> to vector<8x384xf32>
    %c9_394 = arith.constant 9 : index
    %c0_395 = arith.constant 0 : index
    %c0_396 = arith.constant 0 : index
    %646 = vector.load %arg9[%c9_394, %c0_395, %c0_396] : memref<100x8x1xf32, #tpu.memory_space<vmem>>, vector<1x8x1xf32>
    %647 = vector.shape_cast %646 : vector<1x8x1xf32> to vector<8x1xf32>
    %648 = vector.broadcast %647 : vector<8x1xf32> to vector<8x384xf32>
    %649 = arith.mulf %648, %645 : vector<8x384xf32>
    %650 = arith.addf %643, %649 : vector<8x384xf32>
    %c0_397 = arith.constant 0 : index
    %c0_398 = arith.constant 0 : index
    %c126 = arith.constant 126 : index
    %651 = vector.load %arg19[%c0_397, %c0_398, %c126] : memref<4x8x640xf32, #tpu.memory_space<vmem>>, vector<1x8x384xf32>
    %652 = vector.shape_cast %651 : vector<1x8x384xf32> to vector<8x384xf32>
    %c10_399 = arith.constant 10 : index
    %c0_400 = arith.constant 0 : index
    %c0_401 = arith.constant 0 : index
    %653 = vector.load %arg9[%c10_399, %c0_400, %c0_401] : memref<100x8x1xf32, #tpu.memory_space<vmem>>, vector<1x8x1xf32>
    %654 = vector.shape_cast %653 : vector<1x8x1xf32> to vector<8x1xf32>
    %655 = vector.broadcast %654 : vector<8x1xf32> to vector<8x384xf32>
    %656 = arith.mulf %655, %652 : vector<8x384xf32>
    %657 = arith.addf %650, %656 : vector<8x384xf32>
    %c0_402 = arith.constant 0 : index
    %c0_403 = arith.constant 0 : index
    %c127_404 = arith.constant 127 : index
    %658 = vector.load %arg19[%c0_402, %c0_403, %c127_404] : memref<4x8x640xf32, #tpu.memory_space<vmem>>, vector<1x8x384xf32>
    %659 = vector.shape_cast %658 : vector<1x8x384xf32> to vector<8x384xf32>
    %c11_405 = arith.constant 11 : index
    %c0_406 = arith.constant 0 : index
    %c0_407 = arith.constant 0 : index
    %660 = vector.load %arg9[%c11_405, %c0_406, %c0_407] : memref<100x8x1xf32, #tpu.memory_space<vmem>>, vector<1x8x1xf32>
    %661 = vector.shape_cast %660 : vector<1x8x1xf32> to vector<8x1xf32>
    %662 = vector.broadcast %661 : vector<8x1xf32> to vector<8x384xf32>
    %663 = arith.mulf %662, %659 : vector<8x384xf32>
    %664 = arith.addf %657, %663 : vector<8x384xf32>
    %c0_408 = arith.constant 0 : index
    %c0_409 = arith.constant 0 : index
    %c128_410 = arith.constant 128 : index
    %665 = vector.load %arg19[%c0_408, %c0_409, %c128_410] : memref<4x8x640xf32, #tpu.memory_space<vmem>>, vector<1x8x384xf32>
    %666 = vector.shape_cast %665 : vector<1x8x384xf32> to vector<8x384xf32>
    %c12_411 = arith.constant 12 : index
    %c0_412 = arith.constant 0 : index
    %c0_413 = arith.constant 0 : index
    %667 = vector.load %arg9[%c12_411, %c0_412, %c0_413] : memref<100x8x1xf32, #tpu.memory_space<vmem>>, vector<1x8x1xf32>
    %668 = vector.shape_cast %667 : vector<1x8x1xf32> to vector<8x1xf32>
    %669 = vector.broadcast %668 : vector<8x1xf32> to vector<8x384xf32>
    %670 = arith.mulf %669, %666 : vector<8x384xf32>
    %671 = arith.addf %664, %670 : vector<8x384xf32>
    %c0_414 = arith.constant 0 : index
    %c0_415 = arith.constant 0 : index
    %c129_416 = arith.constant 129 : index
    %672 = vector.load %arg19[%c0_414, %c0_415, %c129_416] : memref<4x8x640xf32, #tpu.memory_space<vmem>>, vector<1x8x384xf32>
    %673 = vector.shape_cast %672 : vector<1x8x384xf32> to vector<8x384xf32>
    %c13_417 = arith.constant 13 : index
    %c0_418 = arith.constant 0 : index
    %c0_419 = arith.constant 0 : index
    %674 = vector.load %arg9[%c13_417, %c0_418, %c0_419] : memref<100x8x1xf32, #tpu.memory_space<vmem>>, vector<1x8x1xf32>
    %675 = vector.shape_cast %674 : vector<1x8x1xf32> to vector<8x1xf32>
    %676 = vector.broadcast %675 : vector<8x1xf32> to vector<8x384xf32>
    %677 = arith.mulf %676, %673 : vector<8x384xf32>
    %678 = arith.addf %671, %677 : vector<8x384xf32>
    %c0_420 = arith.constant 0 : index
    %c0_421 = arith.constant 0 : index
    %c130 = arith.constant 130 : index
    %679 = vector.load %arg19[%c0_420, %c0_421, %c130] : memref<4x8x640xf32, #tpu.memory_space<vmem>>, vector<1x8x384xf32>
    %680 = vector.shape_cast %679 : vector<1x8x384xf32> to vector<8x384xf32>
    %c14_422 = arith.constant 14 : index
    %c0_423 = arith.constant 0 : index
    %c0_424 = arith.constant 0 : index
    %681 = vector.load %arg9[%c14_422, %c0_423, %c0_424] : memref<100x8x1xf32, #tpu.memory_space<vmem>>, vector<1x8x1xf32>
    %682 = vector.shape_cast %681 : vector<1x8x1xf32> to vector<8x1xf32>
    %683 = vector.broadcast %682 : vector<8x1xf32> to vector<8x384xf32>
    %684 = arith.mulf %683, %680 : vector<8x384xf32>
    %685 = arith.addf %678, %684 : vector<8x384xf32>
    %c0_425 = arith.constant 0 : index
    %c0_426 = arith.constant 0 : index
    %c150 = arith.constant 150 : index
    %686 = vector.load %arg19[%c0_425, %c0_426, %c150] : memref<4x8x640xf32, #tpu.memory_space<vmem>>, vector<1x8x384xf32>
    %687 = vector.shape_cast %686 : vector<1x8x384xf32> to vector<8x384xf32>
    %c15_427 = arith.constant 15 : index
    %c0_428 = arith.constant 0 : index
    %c0_429 = arith.constant 0 : index
    %688 = vector.load %arg9[%c15_427, %c0_428, %c0_429] : memref<100x8x1xf32, #tpu.memory_space<vmem>>, vector<1x8x1xf32>
    %689 = vector.shape_cast %688 : vector<1x8x1xf32> to vector<8x1xf32>
    %690 = vector.broadcast %689 : vector<8x1xf32> to vector<8x384xf32>
    %691 = arith.mulf %690, %687 : vector<8x384xf32>
    %692 = arith.addf %685, %691 : vector<8x384xf32>
    %c0_430 = arith.constant 0 : index
    %c0_431 = arith.constant 0 : index
    %c151_432 = arith.constant 151 : index
    %693 = vector.load %arg19[%c0_430, %c0_431, %c151_432] : memref<4x8x640xf32, #tpu.memory_space<vmem>>, vector<1x8x384xf32>
    %694 = vector.shape_cast %693 : vector<1x8x384xf32> to vector<8x384xf32>
    %c16_433 = arith.constant 16 : index
    %c0_434 = arith.constant 0 : index
    %c0_435 = arith.constant 0 : index
    %695 = vector.load %arg9[%c16_433, %c0_434, %c0_435] : memref<100x8x1xf32, #tpu.memory_space<vmem>>, vector<1x8x1xf32>
    %696 = vector.shape_cast %695 : vector<1x8x1xf32> to vector<8x1xf32>
    %697 = vector.broadcast %696 : vector<8x1xf32> to vector<8x384xf32>
    %698 = arith.mulf %697, %694 : vector<8x384xf32>
    %699 = arith.addf %692, %698 : vector<8x384xf32>
    %c0_436 = arith.constant 0 : index
    %c0_437 = arith.constant 0 : index
    %c152_438 = arith.constant 152 : index
    %700 = vector.load %arg19[%c0_436, %c0_437, %c152_438] : memref<4x8x640xf32, #tpu.memory_space<vmem>>, vector<1x8x384xf32>
    %701 = vector.shape_cast %700 : vector<1x8x384xf32> to vector<8x384xf32>
    %c17_439 = arith.constant 17 : index
    %c0_440 = arith.constant 0 : index
    %c0_441 = arith.constant 0 : index
    %702 = vector.load %arg9[%c17_439, %c0_440, %c0_441] : memref<100x8x1xf32, #tpu.memory_space<vmem>>, vector<1x8x1xf32>
    %703 = vector.shape_cast %702 : vector<1x8x1xf32> to vector<8x1xf32>
    %704 = vector.broadcast %703 : vector<8x1xf32> to vector<8x384xf32>
    %705 = arith.mulf %704, %701 : vector<8x384xf32>
    %706 = arith.addf %699, %705 : vector<8x384xf32>
    %c0_442 = arith.constant 0 : index
    %c0_443 = arith.constant 0 : index
    %c153_444 = arith.constant 153 : index
    %707 = vector.load %arg19[%c0_442, %c0_443, %c153_444] : memref<4x8x640xf32, #tpu.memory_space<vmem>>, vector<1x8x384xf32>
    %708 = vector.shape_cast %707 : vector<1x8x384xf32> to vector<8x384xf32>
    %c18_445 = arith.constant 18 : index
    %c0_446 = arith.constant 0 : index
    %c0_447 = arith.constant 0 : index
    %709 = vector.load %arg9[%c18_445, %c0_446, %c0_447] : memref<100x8x1xf32, #tpu.memory_space<vmem>>, vector<1x8x1xf32>
    %710 = vector.shape_cast %709 : vector<1x8x1xf32> to vector<8x1xf32>
    %711 = vector.broadcast %710 : vector<8x1xf32> to vector<8x384xf32>
    %712 = arith.mulf %711, %708 : vector<8x384xf32>
    %713 = arith.addf %706, %712 : vector<8x384xf32>
    %c0_448 = arith.constant 0 : index
    %c0_449 = arith.constant 0 : index
    %c154 = arith.constant 154 : index
    %714 = vector.load %arg19[%c0_448, %c0_449, %c154] : memref<4x8x640xf32, #tpu.memory_space<vmem>>, vector<1x8x384xf32>
    %715 = vector.shape_cast %714 : vector<1x8x384xf32> to vector<8x384xf32>
    %c19_450 = arith.constant 19 : index
    %c0_451 = arith.constant 0 : index
    %c0_452 = arith.constant 0 : index
    %716 = vector.load %arg9[%c19_450, %c0_451, %c0_452] : memref<100x8x1xf32, #tpu.memory_space<vmem>>, vector<1x8x1xf32>
    %717 = vector.shape_cast %716 : vector<1x8x1xf32> to vector<8x1xf32>
    %718 = vector.broadcast %717 : vector<8x1xf32> to vector<8x384xf32>
    %719 = arith.mulf %718, %715 : vector<8x384xf32>
    %720 = arith.addf %713, %719 : vector<8x384xf32>
    %c0_453 = arith.constant 0 : index
    %c0_454 = arith.constant 0 : index
    %c174 = arith.constant 174 : index
    %721 = vector.load %arg19[%c0_453, %c0_454, %c174] : memref<4x8x640xf32, #tpu.memory_space<vmem>>, vector<1x8x384xf32>
    %722 = vector.shape_cast %721 : vector<1x8x384xf32> to vector<8x384xf32>
    %c20_455 = arith.constant 20 : index
    %c0_456 = arith.constant 0 : index
    %c0_457 = arith.constant 0 : index
    %723 = vector.load %arg9[%c20_455, %c0_456, %c0_457] : memref<100x8x1xf32, #tpu.memory_space<vmem>>, vector<1x8x1xf32>
    %724 = vector.shape_cast %723 : vector<1x8x1xf32> to vector<8x1xf32>
    %725 = vector.broadcast %724 : vector<8x1xf32> to vector<8x384xf32>
    %726 = arith.mulf %725, %722 : vector<8x384xf32>
    %727 = arith.addf %720, %726 : vector<8x384xf32>
    %c0_458 = arith.constant 0 : index
    %c0_459 = arith.constant 0 : index
    %c175 = arith.constant 175 : index
    %728 = vector.load %arg19[%c0_458, %c0_459, %c175] : memref<4x8x640xf32, #tpu.memory_space<vmem>>, vector<1x8x384xf32>
    %729 = vector.shape_cast %728 : vector<1x8x384xf32> to vector<8x384xf32>
    %c21_460 = arith.constant 21 : index
    %c0_461 = arith.constant 0 : index
    %c0_462 = arith.constant 0 : index
    %730 = vector.load %arg9[%c21_460, %c0_461, %c0_462] : memref<100x8x1xf32, #tpu.memory_space<vmem>>, vector<1x8x1xf32>
    %731 = vector.shape_cast %730 : vector<1x8x1xf32> to vector<8x1xf32>
    %732 = vector.broadcast %731 : vector<8x1xf32> to vector<8x384xf32>
    %733 = arith.mulf %732, %729 : vector<8x384xf32>
    %734 = arith.addf %727, %733 : vector<8x384xf32>
    %c0_463 = arith.constant 0 : index
    %c0_464 = arith.constant 0 : index
    %c176 = arith.constant 176 : index
    %735 = vector.load %arg19[%c0_463, %c0_464, %c176] : memref<4x8x640xf32, #tpu.memory_space<vmem>>, vector<1x8x384xf32>
    %736 = vector.shape_cast %735 : vector<1x8x384xf32> to vector<8x384xf32>
    %c22_465 = arith.constant 22 : index
    %c0_466 = arith.constant 0 : index
    %c0_467 = arith.constant 0 : index
    %737 = vector.load %arg9[%c22_465, %c0_466, %c0_467] : memref<100x8x1xf32, #tpu.memory_space<vmem>>, vector<1x8x1xf32>
    %738 = vector.shape_cast %737 : vector<1x8x1xf32> to vector<8x1xf32>
    %739 = vector.broadcast %738 : vector<8x1xf32> to vector<8x384xf32>
    %740 = arith.mulf %739, %736 : vector<8x384xf32>
    %741 = arith.addf %734, %740 : vector<8x384xf32>
    %c0_468 = arith.constant 0 : index
    %c0_469 = arith.constant 0 : index
    %c177 = arith.constant 177 : index
    %742 = vector.load %arg19[%c0_468, %c0_469, %c177] : memref<4x8x640xf32, #tpu.memory_space<vmem>>, vector<1x8x384xf32>
    %743 = vector.shape_cast %742 : vector<1x8x384xf32> to vector<8x384xf32>
    %c23_470 = arith.constant 23 : index
    %c0_471 = arith.constant 0 : index
    %c0_472 = arith.constant 0 : index
    %744 = vector.load %arg9[%c23_470, %c0_471, %c0_472] : memref<100x8x1xf32, #tpu.memory_space<vmem>>, vector<1x8x1xf32>
    %745 = vector.shape_cast %744 : vector<1x8x1xf32> to vector<8x1xf32>
    %746 = vector.broadcast %745 : vector<8x1xf32> to vector<8x384xf32>
    %747 = arith.mulf %746, %743 : vector<8x384xf32>
    %748 = arith.addf %741, %747 : vector<8x384xf32>
    %c0_473 = arith.constant 0 : index
    %c0_474 = arith.constant 0 : index
    %c178 = arith.constant 178 : index
    %749 = vector.load %arg19[%c0_473, %c0_474, %c178] : memref<4x8x640xf32, #tpu.memory_space<vmem>>, vector<1x8x384xf32>
    %750 = vector.shape_cast %749 : vector<1x8x384xf32> to vector<8x384xf32>
    %c24_475 = arith.constant 24 : index
    %c0_476 = arith.constant 0 : index
    %c0_477 = arith.constant 0 : index
    %751 = vector.load %arg9[%c24_475, %c0_476, %c0_477] : memref<100x8x1xf32, #tpu.memory_space<vmem>>, vector<1x8x1xf32>
    %752 = vector.shape_cast %751 : vector<1x8x1xf32> to vector<8x1xf32>
    %753 = vector.broadcast %752 : vector<8x1xf32> to vector<8x384xf32>
    %754 = arith.mulf %753, %750 : vector<8x384xf32>
    %755 = arith.addf %748, %754 : vector<8x384xf32>
    %c1_478 = arith.constant 1 : index
    %c0_479 = arith.constant 0 : index
    %c78_480 = arith.constant 78 : index
    %756 = vector.load %arg19[%c1_478, %c0_479, %c78_480] : memref<4x8x640xf32, #tpu.memory_space<vmem>>, vector<1x8x384xf32>
    %757 = vector.shape_cast %756 : vector<1x8x384xf32> to vector<8x384xf32>
    %c25_481 = arith.constant 25 : index
    %c0_482 = arith.constant 0 : index
    %c0_483 = arith.constant 0 : index
    %758 = vector.load %arg9[%c25_481, %c0_482, %c0_483] : memref<100x8x1xf32, #tpu.memory_space<vmem>>, vector<1x8x1xf32>
    %759 = vector.shape_cast %758 : vector<1x8x1xf32> to vector<8x1xf32>
    %760 = vector.broadcast %759 : vector<8x1xf32> to vector<8x384xf32>
    %761 = arith.mulf %760, %757 : vector<8x384xf32>
    %c1_484 = arith.constant 1 : index
    %c0_485 = arith.constant 0 : index
    %c79_486 = arith.constant 79 : index
    %762 = vector.load %arg19[%c1_484, %c0_485, %c79_486] : memref<4x8x640xf32, #tpu.memory_space<vmem>>, vector<1x8x384xf32>
    %763 = vector.shape_cast %762 : vector<1x8x384xf32> to vector<8x384xf32>
    %c26_487 = arith.constant 26 : index
    %c0_488 = arith.constant 0 : index
    %c0_489 = arith.constant 0 : index
    %764 = vector.load %arg9[%c26_487, %c0_488, %c0_489] : memref<100x8x1xf32, #tpu.memory_space<vmem>>, vector<1x8x1xf32>
    %765 = vector.shape_cast %764 : vector<1x8x1xf32> to vector<8x1xf32>
    %766 = vector.broadcast %765 : vector<8x1xf32> to vector<8x384xf32>
    %767 = arith.mulf %766, %763 : vector<8x384xf32>
    %768 = arith.addf %761, %767 : vector<8x384xf32>
    %c1_490 = arith.constant 1 : index
    %c0_491 = arith.constant 0 : index
    %c80_492 = arith.constant 80 : index
    %769 = vector.load %arg19[%c1_490, %c0_491, %c80_492] : memref<4x8x640xf32, #tpu.memory_space<vmem>>, vector<1x8x384xf32>
    %770 = vector.shape_cast %769 : vector<1x8x384xf32> to vector<8x384xf32>
    %c27_493 = arith.constant 27 : index
    %c0_494 = arith.constant 0 : index
    %c0_495 = arith.constant 0 : index
    %771 = vector.load %arg9[%c27_493, %c0_494, %c0_495] : memref<100x8x1xf32, #tpu.memory_space<vmem>>, vector<1x8x1xf32>
    %772 = vector.shape_cast %771 : vector<1x8x1xf32> to vector<8x1xf32>
    %773 = vector.broadcast %772 : vector<8x1xf32> to vector<8x384xf32>
    %774 = arith.mulf %773, %770 : vector<8x384xf32>
    %775 = arith.addf %768, %774 : vector<8x384xf32>
    %c1_496 = arith.constant 1 : index
    %c0_497 = arith.constant 0 : index
    %c81_498 = arith.constant 81 : index
    %776 = vector.load %arg19[%c1_496, %c0_497, %c81_498] : memref<4x8x640xf32, #tpu.memory_space<vmem>>, vector<1x8x384xf32>
    %777 = vector.shape_cast %776 : vector<1x8x384xf32> to vector<8x384xf32>
    %c28_499 = arith.constant 28 : index
    %c0_500 = arith.constant 0 : index
    %c0_501 = arith.constant 0 : index
    %778 = vector.load %arg9[%c28_499, %c0_500, %c0_501] : memref<100x8x1xf32, #tpu.memory_space<vmem>>, vector<1x8x1xf32>
    %779 = vector.shape_cast %778 : vector<1x8x1xf32> to vector<8x1xf32>
    %780 = vector.broadcast %779 : vector<8x1xf32> to vector<8x384xf32>
    %781 = arith.mulf %780, %777 : vector<8x384xf32>
    %782 = arith.addf %775, %781 : vector<8x384xf32>
    %c1_502 = arith.constant 1 : index
    %c0_503 = arith.constant 0 : index
    %c82_504 = arith.constant 82 : index
    %783 = vector.load %arg19[%c1_502, %c0_503, %c82_504] : memref<4x8x640xf32, #tpu.memory_space<vmem>>, vector<1x8x384xf32>
    %784 = vector.shape_cast %783 : vector<1x8x384xf32> to vector<8x384xf32>
    %c29_505 = arith.constant 29 : index
    %c0_506 = arith.constant 0 : index
    %c0_507 = arith.constant 0 : index
    %785 = vector.load %arg9[%c29_505, %c0_506, %c0_507] : memref<100x8x1xf32, #tpu.memory_space<vmem>>, vector<1x8x1xf32>
    %786 = vector.shape_cast %785 : vector<1x8x1xf32> to vector<8x1xf32>
    %787 = vector.broadcast %786 : vector<8x1xf32> to vector<8x384xf32>
    %788 = arith.mulf %787, %784 : vector<8x384xf32>
    %789 = arith.addf %782, %788 : vector<8x384xf32>
    %c1_508 = arith.constant 1 : index
    %c0_509 = arith.constant 0 : index
    %c102_510 = arith.constant 102 : index
    %790 = vector.load %arg19[%c1_508, %c0_509, %c102_510] : memref<4x8x640xf32, #tpu.memory_space<vmem>>, vector<1x8x384xf32>
    %791 = vector.shape_cast %790 : vector<1x8x384xf32> to vector<8x384xf32>
    %c30_511 = arith.constant 30 : index
    %c0_512 = arith.constant 0 : index
    %c0_513 = arith.constant 0 : index
    %792 = vector.load %arg9[%c30_511, %c0_512, %c0_513] : memref<100x8x1xf32, #tpu.memory_space<vmem>>, vector<1x8x1xf32>
    %793 = vector.shape_cast %792 : vector<1x8x1xf32> to vector<8x1xf32>
    %794 = vector.broadcast %793 : vector<8x1xf32> to vector<8x384xf32>
    %795 = arith.mulf %794, %791 : vector<8x384xf32>
    %796 = arith.addf %789, %795 : vector<8x384xf32>
    %c1_514 = arith.constant 1 : index
    %c0_515 = arith.constant 0 : index
    %c103_516 = arith.constant 103 : index
    %797 = vector.load %arg19[%c1_514, %c0_515, %c103_516] : memref<4x8x640xf32, #tpu.memory_space<vmem>>, vector<1x8x384xf32>
    %798 = vector.shape_cast %797 : vector<1x8x384xf32> to vector<8x384xf32>
    %c31_517 = arith.constant 31 : index
    %c0_518 = arith.constant 0 : index
    %c0_519 = arith.constant 0 : index
    %799 = vector.load %arg9[%c31_517, %c0_518, %c0_519] : memref<100x8x1xf32, #tpu.memory_space<vmem>>, vector<1x8x1xf32>
    %800 = vector.shape_cast %799 : vector<1x8x1xf32> to vector<8x1xf32>
    %801 = vector.broadcast %800 : vector<8x1xf32> to vector<8x384xf32>
    %802 = arith.mulf %801, %798 : vector<8x384xf32>
    %803 = arith.addf %796, %802 : vector<8x384xf32>
    %c1_520 = arith.constant 1 : index
    %c0_521 = arith.constant 0 : index
    %c104_522 = arith.constant 104 : index
    %804 = vector.load %arg19[%c1_520, %c0_521, %c104_522] : memref<4x8x640xf32, #tpu.memory_space<vmem>>, vector<1x8x384xf32>
    %805 = vector.shape_cast %804 : vector<1x8x384xf32> to vector<8x384xf32>
    %c32_523 = arith.constant 32 : index
    %c0_524 = arith.constant 0 : index
    %c0_525 = arith.constant 0 : index
    %806 = vector.load %arg9[%c32_523, %c0_524, %c0_525] : memref<100x8x1xf32, #tpu.memory_space<vmem>>, vector<1x8x1xf32>
    %807 = vector.shape_cast %806 : vector<1x8x1xf32> to vector<8x1xf32>
    %808 = vector.broadcast %807 : vector<8x1xf32> to vector<8x384xf32>
    %809 = arith.mulf %808, %805 : vector<8x384xf32>
    %810 = arith.addf %803, %809 : vector<8x384xf32>
    %c1_526 = arith.constant 1 : index
    %c0_527 = arith.constant 0 : index
    %c105_528 = arith.constant 105 : index
    %811 = vector.load %arg19[%c1_526, %c0_527, %c105_528] : memref<4x8x640xf32, #tpu.memory_space<vmem>>, vector<1x8x384xf32>
    %812 = vector.shape_cast %811 : vector<1x8x384xf32> to vector<8x384xf32>
    %c33_529 = arith.constant 33 : index
    %c0_530 = arith.constant 0 : index
    %c0_531 = arith.constant 0 : index
    %813 = vector.load %arg9[%c33_529, %c0_530, %c0_531] : memref<100x8x1xf32, #tpu.memory_space<vmem>>, vector<1x8x1xf32>
    %814 = vector.shape_cast %813 : vector<1x8x1xf32> to vector<8x1xf32>
    %815 = vector.broadcast %814 : vector<8x1xf32> to vector<8x384xf32>
    %816 = arith.mulf %815, %812 : vector<8x384xf32>
    %817 = arith.addf %810, %816 : vector<8x384xf32>
    %c1_532 = arith.constant 1 : index
    %c0_533 = arith.constant 0 : index
    %c106_534 = arith.constant 106 : index
    %818 = vector.load %arg19[%c1_532, %c0_533, %c106_534] : memref<4x8x640xf32, #tpu.memory_space<vmem>>, vector<1x8x384xf32>
    %819 = vector.shape_cast %818 : vector<1x8x384xf32> to vector<8x384xf32>
    %c34_535 = arith.constant 34 : index
    %c0_536 = arith.constant 0 : index
    %c0_537 = arith.constant 0 : index
    %820 = vector.load %arg9[%c34_535, %c0_536, %c0_537] : memref<100x8x1xf32, #tpu.memory_space<vmem>>, vector<1x8x1xf32>
    %821 = vector.shape_cast %820 : vector<1x8x1xf32> to vector<8x1xf32>
    %822 = vector.broadcast %821 : vector<8x1xf32> to vector<8x384xf32>
    %823 = arith.mulf %822, %819 : vector<8x384xf32>
    %824 = arith.addf %817, %823 : vector<8x384xf32>
    %c1_538 = arith.constant 1 : index
    %c0_539 = arith.constant 0 : index
    %c126_540 = arith.constant 126 : index
    %825 = vector.load %arg19[%c1_538, %c0_539, %c126_540] : memref<4x8x640xf32, #tpu.memory_space<vmem>>, vector<1x8x384xf32>
    %826 = vector.shape_cast %825 : vector<1x8x384xf32> to vector<8x384xf32>
    %c35_541 = arith.constant 35 : index
    %c0_542 = arith.constant 0 : index
    %c0_543 = arith.constant 0 : index
    %827 = vector.load %arg9[%c35_541, %c0_542, %c0_543] : memref<100x8x1xf32, #tpu.memory_space<vmem>>, vector<1x8x1xf32>
    %828 = vector.shape_cast %827 : vector<1x8x1xf32> to vector<8x1xf32>
    %829 = vector.broadcast %828 : vector<8x1xf32> to vector<8x384xf32>
    %830 = arith.mulf %829, %826 : vector<8x384xf32>
    %831 = arith.addf %824, %830 : vector<8x384xf32>
    %c1_544 = arith.constant 1 : index
    %c0_545 = arith.constant 0 : index
    %c127_546 = arith.constant 127 : index
    %832 = vector.load %arg19[%c1_544, %c0_545, %c127_546] : memref<4x8x640xf32, #tpu.memory_space<vmem>>, vector<1x8x384xf32>
    %833 = vector.shape_cast %832 : vector<1x8x384xf32> to vector<8x384xf32>
    %c36 = arith.constant 36 : index
    %c0_547 = arith.constant 0 : index
    %c0_548 = arith.constant 0 : index
    %834 = vector.load %arg9[%c36, %c0_547, %c0_548] : memref<100x8x1xf32, #tpu.memory_space<vmem>>, vector<1x8x1xf32>
    %835 = vector.shape_cast %834 : vector<1x8x1xf32> to vector<8x1xf32>
    %836 = vector.broadcast %835 : vector<8x1xf32> to vector<8x384xf32>
    %837 = arith.mulf %836, %833 : vector<8x384xf32>
    %838 = arith.addf %831, %837 : vector<8x384xf32>
    %c1_549 = arith.constant 1 : index
    %c0_550 = arith.constant 0 : index
    %c128_551 = arith.constant 128 : index
    %839 = vector.load %arg19[%c1_549, %c0_550, %c128_551] : memref<4x8x640xf32, #tpu.memory_space<vmem>>, vector<1x8x384xf32>
    %840 = vector.shape_cast %839 : vector<1x8x384xf32> to vector<8x384xf32>
    %c37 = arith.constant 37 : index
    %c0_552 = arith.constant 0 : index
    %c0_553 = arith.constant 0 : index
    %841 = vector.load %arg9[%c37, %c0_552, %c0_553] : memref<100x8x1xf32, #tpu.memory_space<vmem>>, vector<1x8x1xf32>
    %842 = vector.shape_cast %841 : vector<1x8x1xf32> to vector<8x1xf32>
    %843 = vector.broadcast %842 : vector<8x1xf32> to vector<8x384xf32>
    %844 = arith.mulf %843, %840 : vector<8x384xf32>
    %845 = arith.addf %838, %844 : vector<8x384xf32>
    %c1_554 = arith.constant 1 : index
    %c0_555 = arith.constant 0 : index
    %c129_556 = arith.constant 129 : index
    %846 = vector.load %arg19[%c1_554, %c0_555, %c129_556] : memref<4x8x640xf32, #tpu.memory_space<vmem>>, vector<1x8x384xf32>
    %847 = vector.shape_cast %846 : vector<1x8x384xf32> to vector<8x384xf32>
    %c38 = arith.constant 38 : index
    %c0_557 = arith.constant 0 : index
    %c0_558 = arith.constant 0 : index
    %848 = vector.load %arg9[%c38, %c0_557, %c0_558] : memref<100x8x1xf32, #tpu.memory_space<vmem>>, vector<1x8x1xf32>
    %849 = vector.shape_cast %848 : vector<1x8x1xf32> to vector<8x1xf32>
    %850 = vector.broadcast %849 : vector<8x1xf32> to vector<8x384xf32>
    %851 = arith.mulf %850, %847 : vector<8x384xf32>
    %852 = arith.addf %845, %851 : vector<8x384xf32>
    %c1_559 = arith.constant 1 : index
    %c0_560 = arith.constant 0 : index
    %c130_561 = arith.constant 130 : index
    %853 = vector.load %arg19[%c1_559, %c0_560, %c130_561] : memref<4x8x640xf32, #tpu.memory_space<vmem>>, vector<1x8x384xf32>
    %854 = vector.shape_cast %853 : vector<1x8x384xf32> to vector<8x384xf32>
    %c39 = arith.constant 39 : index
    %c0_562 = arith.constant 0 : index
    %c0_563 = arith.constant 0 : index
    %855 = vector.load %arg9[%c39, %c0_562, %c0_563] : memref<100x8x1xf32, #tpu.memory_space<vmem>>, vector<1x8x1xf32>
    %856 = vector.shape_cast %855 : vector<1x8x1xf32> to vector<8x1xf32>
    %857 = vector.broadcast %856 : vector<8x1xf32> to vector<8x384xf32>
    %858 = arith.mulf %857, %854 : vector<8x384xf32>
    %859 = arith.addf %852, %858 : vector<8x384xf32>
    %c1_564 = arith.constant 1 : index
    %c0_565 = arith.constant 0 : index
    %c150_566 = arith.constant 150 : index
    %860 = vector.load %arg19[%c1_564, %c0_565, %c150_566] : memref<4x8x640xf32, #tpu.memory_space<vmem>>, vector<1x8x384xf32>
    %861 = vector.shape_cast %860 : vector<1x8x384xf32> to vector<8x384xf32>
    %c40 = arith.constant 40 : index
    %c0_567 = arith.constant 0 : index
    %c0_568 = arith.constant 0 : index
    %862 = vector.load %arg9[%c40, %c0_567, %c0_568] : memref<100x8x1xf32, #tpu.memory_space<vmem>>, vector<1x8x1xf32>
    %863 = vector.shape_cast %862 : vector<1x8x1xf32> to vector<8x1xf32>
    %864 = vector.broadcast %863 : vector<8x1xf32> to vector<8x384xf32>
    %865 = arith.mulf %864, %861 : vector<8x384xf32>
    %866 = arith.addf %859, %865 : vector<8x384xf32>
    %c1_569 = arith.constant 1 : index
    %c0_570 = arith.constant 0 : index
    %c151_571 = arith.constant 151 : index
    %867 = vector.load %arg19[%c1_569, %c0_570, %c151_571] : memref<4x8x640xf32, #tpu.memory_space<vmem>>, vector<1x8x384xf32>
    %868 = vector.shape_cast %867 : vector<1x8x384xf32> to vector<8x384xf32>
    %c41 = arith.constant 41 : index
    %c0_572 = arith.constant 0 : index
    %c0_573 = arith.constant 0 : index
    %869 = vector.load %arg9[%c41, %c0_572, %c0_573] : memref<100x8x1xf32, #tpu.memory_space<vmem>>, vector<1x8x1xf32>
    %870 = vector.shape_cast %869 : vector<1x8x1xf32> to vector<8x1xf32>
    %871 = vector.broadcast %870 : vector<8x1xf32> to vector<8x384xf32>
    %872 = arith.mulf %871, %868 : vector<8x384xf32>
    %873 = arith.addf %866, %872 : vector<8x384xf32>
    %c1_574 = arith.constant 1 : index
    %c0_575 = arith.constant 0 : index
    %c152_576 = arith.constant 152 : index
    %874 = vector.load %arg19[%c1_574, %c0_575, %c152_576] : memref<4x8x640xf32, #tpu.memory_space<vmem>>, vector<1x8x384xf32>
    %875 = vector.shape_cast %874 : vector<1x8x384xf32> to vector<8x384xf32>
    %c42 = arith.constant 42 : index
    %c0_577 = arith.constant 0 : index
    %c0_578 = arith.constant 0 : index
    %876 = vector.load %arg9[%c42, %c0_577, %c0_578] : memref<100x8x1xf32, #tpu.memory_space<vmem>>, vector<1x8x1xf32>
    %877 = vector.shape_cast %876 : vector<1x8x1xf32> to vector<8x1xf32>
    %878 = vector.broadcast %877 : vector<8x1xf32> to vector<8x384xf32>
    %879 = arith.mulf %878, %875 : vector<8x384xf32>
    %880 = arith.addf %873, %879 : vector<8x384xf32>
    %c1_579 = arith.constant 1 : index
    %c0_580 = arith.constant 0 : index
    %c153_581 = arith.constant 153 : index
    %881 = vector.load %arg19[%c1_579, %c0_580, %c153_581] : memref<4x8x640xf32, #tpu.memory_space<vmem>>, vector<1x8x384xf32>
    %882 = vector.shape_cast %881 : vector<1x8x384xf32> to vector<8x384xf32>
    %c43 = arith.constant 43 : index
    %c0_582 = arith.constant 0 : index
    %c0_583 = arith.constant 0 : index
    %883 = vector.load %arg9[%c43, %c0_582, %c0_583] : memref<100x8x1xf32, #tpu.memory_space<vmem>>, vector<1x8x1xf32>
    %884 = vector.shape_cast %883 : vector<1x8x1xf32> to vector<8x1xf32>
    %885 = vector.broadcast %884 : vector<8x1xf32> to vector<8x384xf32>
    %886 = arith.mulf %885, %882 : vector<8x384xf32>
    %887 = arith.addf %880, %886 : vector<8x384xf32>
    %c1_584 = arith.constant 1 : index
    %c0_585 = arith.constant 0 : index
    %c154_586 = arith.constant 154 : index
    %888 = vector.load %arg19[%c1_584, %c0_585, %c154_586] : memref<4x8x640xf32, #tpu.memory_space<vmem>>, vector<1x8x384xf32>
    %889 = vector.shape_cast %888 : vector<1x8x384xf32> to vector<8x384xf32>
    %c44 = arith.constant 44 : index
    %c0_587 = arith.constant 0 : index
    %c0_588 = arith.constant 0 : index
    %890 = vector.load %arg9[%c44, %c0_587, %c0_588] : memref<100x8x1xf32, #tpu.memory_space<vmem>>, vector<1x8x1xf32>
    %891 = vector.shape_cast %890 : vector<1x8x1xf32> to vector<8x1xf32>
    %892 = vector.broadcast %891 : vector<8x1xf32> to vector<8x384xf32>
    %893 = arith.mulf %892, %889 : vector<8x384xf32>
    %894 = arith.addf %887, %893 : vector<8x384xf32>
    %c1_589 = arith.constant 1 : index
    %c0_590 = arith.constant 0 : index
    %c174_591 = arith.constant 174 : index
    %895 = vector.load %arg19[%c1_589, %c0_590, %c174_591] : memref<4x8x640xf32, #tpu.memory_space<vmem>>, vector<1x8x384xf32>
    %896 = vector.shape_cast %895 : vector<1x8x384xf32> to vector<8x384xf32>
    %c45 = arith.constant 45 : index
    %c0_592 = arith.constant 0 : index
    %c0_593 = arith.constant 0 : index
    %897 = vector.load %arg9[%c45, %c0_592, %c0_593] : memref<100x8x1xf32, #tpu.memory_space<vmem>>, vector<1x8x1xf32>
    %898 = vector.shape_cast %897 : vector<1x8x1xf32> to vector<8x1xf32>
    %899 = vector.broadcast %898 : vector<8x1xf32> to vector<8x384xf32>
    %900 = arith.mulf %899, %896 : vector<8x384xf32>
    %901 = arith.addf %894, %900 : vector<8x384xf32>
    %c1_594 = arith.constant 1 : index
    %c0_595 = arith.constant 0 : index
    %c175_596 = arith.constant 175 : index
    %902 = vector.load %arg19[%c1_594, %c0_595, %c175_596] : memref<4x8x640xf32, #tpu.memory_space<vmem>>, vector<1x8x384xf32>
    %903 = vector.shape_cast %902 : vector<1x8x384xf32> to vector<8x384xf32>
    %c46 = arith.constant 46 : index
    %c0_597 = arith.constant 0 : index
    %c0_598 = arith.constant 0 : index
    %904 = vector.load %arg9[%c46, %c0_597, %c0_598] : memref<100x8x1xf32, #tpu.memory_space<vmem>>, vector<1x8x1xf32>
    %905 = vector.shape_cast %904 : vector<1x8x1xf32> to vector<8x1xf32>
    %906 = vector.broadcast %905 : vector<8x1xf32> to vector<8x384xf32>
    %907 = arith.mulf %906, %903 : vector<8x384xf32>
    %908 = arith.addf %901, %907 : vector<8x384xf32>
    %c1_599 = arith.constant 1 : index
    %c0_600 = arith.constant 0 : index
    %c176_601 = arith.constant 176 : index
    %909 = vector.load %arg19[%c1_599, %c0_600, %c176_601] : memref<4x8x640xf32, #tpu.memory_space<vmem>>, vector<1x8x384xf32>
    %910 = vector.shape_cast %909 : vector<1x8x384xf32> to vector<8x384xf32>
    %c47 = arith.constant 47 : index
    %c0_602 = arith.constant 0 : index
    %c0_603 = arith.constant 0 : index
    %911 = vector.load %arg9[%c47, %c0_602, %c0_603] : memref<100x8x1xf32, #tpu.memory_space<vmem>>, vector<1x8x1xf32>
    %912 = vector.shape_cast %911 : vector<1x8x1xf32> to vector<8x1xf32>
    %913 = vector.broadcast %912 : vector<8x1xf32> to vector<8x384xf32>
    %914 = arith.mulf %913, %910 : vector<8x384xf32>
    %915 = arith.addf %908, %914 : vector<8x384xf32>
    %c1_604 = arith.constant 1 : index
    %c0_605 = arith.constant 0 : index
    %c177_606 = arith.constant 177 : index
    %916 = vector.load %arg19[%c1_604, %c0_605, %c177_606] : memref<4x8x640xf32, #tpu.memory_space<vmem>>, vector<1x8x384xf32>
    %917 = vector.shape_cast %916 : vector<1x8x384xf32> to vector<8x384xf32>
    %c48 = arith.constant 48 : index
    %c0_607 = arith.constant 0 : index
    %c0_608 = arith.constant 0 : index
    %918 = vector.load %arg9[%c48, %c0_607, %c0_608] : memref<100x8x1xf32, #tpu.memory_space<vmem>>, vector<1x8x1xf32>
    %919 = vector.shape_cast %918 : vector<1x8x1xf32> to vector<8x1xf32>
    %920 = vector.broadcast %919 : vector<8x1xf32> to vector<8x384xf32>
    %921 = arith.mulf %920, %917 : vector<8x384xf32>
    %922 = arith.addf %915, %921 : vector<8x384xf32>
    %c1_609 = arith.constant 1 : index
    %c0_610 = arith.constant 0 : index
    %c178_611 = arith.constant 178 : index
    %923 = vector.load %arg19[%c1_609, %c0_610, %c178_611] : memref<4x8x640xf32, #tpu.memory_space<vmem>>, vector<1x8x384xf32>
    %924 = vector.shape_cast %923 : vector<1x8x384xf32> to vector<8x384xf32>
    %c49 = arith.constant 49 : index
    %c0_612 = arith.constant 0 : index
    %c0_613 = arith.constant 0 : index
    %925 = vector.load %arg9[%c49, %c0_612, %c0_613] : memref<100x8x1xf32, #tpu.memory_space<vmem>>, vector<1x8x1xf32>
    %926 = vector.shape_cast %925 : vector<1x8x1xf32> to vector<8x1xf32>
    %927 = vector.broadcast %926 : vector<8x1xf32> to vector<8x384xf32>
    %928 = arith.mulf %927, %924 : vector<8x384xf32>
    %929 = arith.addf %922, %928 : vector<8x384xf32>
    %930 = arith.addf %755, %929 : vector<8x384xf32>
    %c2_614 = arith.constant 2 : index
    %c0_615 = arith.constant 0 : index
    %c78_616 = arith.constant 78 : index
    %931 = vector.load %arg19[%c2_614, %c0_615, %c78_616] : memref<4x8x640xf32, #tpu.memory_space<vmem>>, vector<1x8x384xf32>
    %932 = vector.shape_cast %931 : vector<1x8x384xf32> to vector<8x384xf32>
    %c50 = arith.constant 50 : index
    %c0_617 = arith.constant 0 : index
    %c0_618 = arith.constant 0 : index
    %933 = vector.load %arg9[%c50, %c0_617, %c0_618] : memref<100x8x1xf32, #tpu.memory_space<vmem>>, vector<1x8x1xf32>
    %934 = vector.shape_cast %933 : vector<1x8x1xf32> to vector<8x1xf32>
    %935 = vector.broadcast %934 : vector<8x1xf32> to vector<8x384xf32>
    %936 = arith.mulf %935, %932 : vector<8x384xf32>
    %c2_619 = arith.constant 2 : index
    %c0_620 = arith.constant 0 : index
    %c79_621 = arith.constant 79 : index
    %937 = vector.load %arg19[%c2_619, %c0_620, %c79_621] : memref<4x8x640xf32, #tpu.memory_space<vmem>>, vector<1x8x384xf32>
    %938 = vector.shape_cast %937 : vector<1x8x384xf32> to vector<8x384xf32>
    %c51 = arith.constant 51 : index
    %c0_622 = arith.constant 0 : index
    %c0_623 = arith.constant 0 : index
    %939 = vector.load %arg9[%c51, %c0_622, %c0_623] : memref<100x8x1xf32, #tpu.memory_space<vmem>>, vector<1x8x1xf32>
    %940 = vector.shape_cast %939 : vector<1x8x1xf32> to vector<8x1xf32>
    %941 = vector.broadcast %940 : vector<8x1xf32> to vector<8x384xf32>
    %942 = arith.mulf %941, %938 : vector<8x384xf32>
    %943 = arith.addf %936, %942 : vector<8x384xf32>
    %c2_624 = arith.constant 2 : index
    %c0_625 = arith.constant 0 : index
    %c80_626 = arith.constant 80 : index
    %944 = vector.load %arg19[%c2_624, %c0_625, %c80_626] : memref<4x8x640xf32, #tpu.memory_space<vmem>>, vector<1x8x384xf32>
    %945 = vector.shape_cast %944 : vector<1x8x384xf32> to vector<8x384xf32>
    %c52 = arith.constant 52 : index
    %c0_627 = arith.constant 0 : index
    %c0_628 = arith.constant 0 : index
    %946 = vector.load %arg9[%c52, %c0_627, %c0_628] : memref<100x8x1xf32, #tpu.memory_space<vmem>>, vector<1x8x1xf32>
    %947 = vector.shape_cast %946 : vector<1x8x1xf32> to vector<8x1xf32>
    %948 = vector.broadcast %947 : vector<8x1xf32> to vector<8x384xf32>
    %949 = arith.mulf %948, %945 : vector<8x384xf32>
    %950 = arith.addf %943, %949 : vector<8x384xf32>
    %c2_629 = arith.constant 2 : index
    %c0_630 = arith.constant 0 : index
    %c81_631 = arith.constant 81 : index
    %951 = vector.load %arg19[%c2_629, %c0_630, %c81_631] : memref<4x8x640xf32, #tpu.memory_space<vmem>>, vector<1x8x384xf32>
    %952 = vector.shape_cast %951 : vector<1x8x384xf32> to vector<8x384xf32>
    %c53 = arith.constant 53 : index
    %c0_632 = arith.constant 0 : index
    %c0_633 = arith.constant 0 : index
    %953 = vector.load %arg9[%c53, %c0_632, %c0_633] : memref<100x8x1xf32, #tpu.memory_space<vmem>>, vector<1x8x1xf32>
    %954 = vector.shape_cast %953 : vector<1x8x1xf32> to vector<8x1xf32>
    %955 = vector.broadcast %954 : vector<8x1xf32> to vector<8x384xf32>
    %956 = arith.mulf %955, %952 : vector<8x384xf32>
    %957 = arith.addf %950, %956 : vector<8x384xf32>
    %c2_634 = arith.constant 2 : index
    %c0_635 = arith.constant 0 : index
    %c82_636 = arith.constant 82 : index
    %958 = vector.load %arg19[%c2_634, %c0_635, %c82_636] : memref<4x8x640xf32, #tpu.memory_space<vmem>>, vector<1x8x384xf32>
    %959 = vector.shape_cast %958 : vector<1x8x384xf32> to vector<8x384xf32>
    %c54 = arith.constant 54 : index
    %c0_637 = arith.constant 0 : index
    %c0_638 = arith.constant 0 : index
    %960 = vector.load %arg9[%c54, %c0_637, %c0_638] : memref<100x8x1xf32, #tpu.memory_space<vmem>>, vector<1x8x1xf32>
    %961 = vector.shape_cast %960 : vector<1x8x1xf32> to vector<8x1xf32>
    %962 = vector.broadcast %961 : vector<8x1xf32> to vector<8x384xf32>
    %963 = arith.mulf %962, %959 : vector<8x384xf32>
    %964 = arith.addf %957, %963 : vector<8x384xf32>
    %c2_639 = arith.constant 2 : index
    %c0_640 = arith.constant 0 : index
    %c102_641 = arith.constant 102 : index
    %965 = vector.load %arg19[%c2_639, %c0_640, %c102_641] : memref<4x8x640xf32, #tpu.memory_space<vmem>>, vector<1x8x384xf32>
    %966 = vector.shape_cast %965 : vector<1x8x384xf32> to vector<8x384xf32>
    %c55 = arith.constant 55 : index
    %c0_642 = arith.constant 0 : index
    %c0_643 = arith.constant 0 : index
    %967 = vector.load %arg9[%c55, %c0_642, %c0_643] : memref<100x8x1xf32, #tpu.memory_space<vmem>>, vector<1x8x1xf32>
    %968 = vector.shape_cast %967 : vector<1x8x1xf32> to vector<8x1xf32>
    %969 = vector.broadcast %968 : vector<8x1xf32> to vector<8x384xf32>
    %970 = arith.mulf %969, %966 : vector<8x384xf32>
    %971 = arith.addf %964, %970 : vector<8x384xf32>
    %c2_644 = arith.constant 2 : index
    %c0_645 = arith.constant 0 : index
    %c103_646 = arith.constant 103 : index
    %972 = vector.load %arg19[%c2_644, %c0_645, %c103_646] : memref<4x8x640xf32, #tpu.memory_space<vmem>>, vector<1x8x384xf32>
    %973 = vector.shape_cast %972 : vector<1x8x384xf32> to vector<8x384xf32>
    %c56 = arith.constant 56 : index
    %c0_647 = arith.constant 0 : index
    %c0_648 = arith.constant 0 : index
    %974 = vector.load %arg9[%c56, %c0_647, %c0_648] : memref<100x8x1xf32, #tpu.memory_space<vmem>>, vector<1x8x1xf32>
    %975 = vector.shape_cast %974 : vector<1x8x1xf32> to vector<8x1xf32>
    %976 = vector.broadcast %975 : vector<8x1xf32> to vector<8x384xf32>
    %977 = arith.mulf %976, %973 : vector<8x384xf32>
    %978 = arith.addf %971, %977 : vector<8x384xf32>
    %c2_649 = arith.constant 2 : index
    %c0_650 = arith.constant 0 : index
    %c104_651 = arith.constant 104 : index
    %979 = vector.load %arg19[%c2_649, %c0_650, %c104_651] : memref<4x8x640xf32, #tpu.memory_space<vmem>>, vector<1x8x384xf32>
    %980 = vector.shape_cast %979 : vector<1x8x384xf32> to vector<8x384xf32>
    %c57 = arith.constant 57 : index
    %c0_652 = arith.constant 0 : index
    %c0_653 = arith.constant 0 : index
    %981 = vector.load %arg9[%c57, %c0_652, %c0_653] : memref<100x8x1xf32, #tpu.memory_space<vmem>>, vector<1x8x1xf32>
    %982 = vector.shape_cast %981 : vector<1x8x1xf32> to vector<8x1xf32>
    %983 = vector.broadcast %982 : vector<8x1xf32> to vector<8x384xf32>
    %984 = arith.mulf %983, %980 : vector<8x384xf32>
    %985 = arith.addf %978, %984 : vector<8x384xf32>
    %c2_654 = arith.constant 2 : index
    %c0_655 = arith.constant 0 : index
    %c105_656 = arith.constant 105 : index
    %986 = vector.load %arg19[%c2_654, %c0_655, %c105_656] : memref<4x8x640xf32, #tpu.memory_space<vmem>>, vector<1x8x384xf32>
    %987 = vector.shape_cast %986 : vector<1x8x384xf32> to vector<8x384xf32>
    %c58 = arith.constant 58 : index
    %c0_657 = arith.constant 0 : index
    %c0_658 = arith.constant 0 : index
    %988 = vector.load %arg9[%c58, %c0_657, %c0_658] : memref<100x8x1xf32, #tpu.memory_space<vmem>>, vector<1x8x1xf32>
    %989 = vector.shape_cast %988 : vector<1x8x1xf32> to vector<8x1xf32>
    %990 = vector.broadcast %989 : vector<8x1xf32> to vector<8x384xf32>
    %991 = arith.mulf %990, %987 : vector<8x384xf32>
    %992 = arith.addf %985, %991 : vector<8x384xf32>
    %c2_659 = arith.constant 2 : index
    %c0_660 = arith.constant 0 : index
    %c106_661 = arith.constant 106 : index
    %993 = vector.load %arg19[%c2_659, %c0_660, %c106_661] : memref<4x8x640xf32, #tpu.memory_space<vmem>>, vector<1x8x384xf32>
    %994 = vector.shape_cast %993 : vector<1x8x384xf32> to vector<8x384xf32>
    %c59 = arith.constant 59 : index
    %c0_662 = arith.constant 0 : index
    %c0_663 = arith.constant 0 : index
    %995 = vector.load %arg9[%c59, %c0_662, %c0_663] : memref<100x8x1xf32, #tpu.memory_space<vmem>>, vector<1x8x1xf32>
    %996 = vector.shape_cast %995 : vector<1x8x1xf32> to vector<8x1xf32>
    %997 = vector.broadcast %996 : vector<8x1xf32> to vector<8x384xf32>
    %998 = arith.mulf %997, %994 : vector<8x384xf32>
    %999 = arith.addf %992, %998 : vector<8x384xf32>
    %c2_664 = arith.constant 2 : index
    %c0_665 = arith.constant 0 : index
    %c126_666 = arith.constant 126 : index
    %1000 = vector.load %arg19[%c2_664, %c0_665, %c126_666] : memref<4x8x640xf32, #tpu.memory_space<vmem>>, vector<1x8x384xf32>
    %1001 = vector.shape_cast %1000 : vector<1x8x384xf32> to vector<8x384xf32>
    %c60 = arith.constant 60 : index
    %c0_667 = arith.constant 0 : index
    %c0_668 = arith.constant 0 : index
    %1002 = vector.load %arg9[%c60, %c0_667, %c0_668] : memref<100x8x1xf32, #tpu.memory_space<vmem>>, vector<1x8x1xf32>
    %1003 = vector.shape_cast %1002 : vector<1x8x1xf32> to vector<8x1xf32>
    %1004 = vector.broadcast %1003 : vector<8x1xf32> to vector<8x384xf32>
    %1005 = arith.mulf %1004, %1001 : vector<8x384xf32>
    %1006 = arith.addf %999, %1005 : vector<8x384xf32>
    %c2_669 = arith.constant 2 : index
    %c0_670 = arith.constant 0 : index
    %c127_671 = arith.constant 127 : index
    %1007 = vector.load %arg19[%c2_669, %c0_670, %c127_671] : memref<4x8x640xf32, #tpu.memory_space<vmem>>, vector<1x8x384xf32>
    %1008 = vector.shape_cast %1007 : vector<1x8x384xf32> to vector<8x384xf32>
    %c61 = arith.constant 61 : index
    %c0_672 = arith.constant 0 : index
    %c0_673 = arith.constant 0 : index
    %1009 = vector.load %arg9[%c61, %c0_672, %c0_673] : memref<100x8x1xf32, #tpu.memory_space<vmem>>, vector<1x8x1xf32>
    %1010 = vector.shape_cast %1009 : vector<1x8x1xf32> to vector<8x1xf32>
    %1011 = vector.broadcast %1010 : vector<8x1xf32> to vector<8x384xf32>
    %1012 = arith.mulf %1011, %1008 : vector<8x384xf32>
    %1013 = arith.addf %1006, %1012 : vector<8x384xf32>
    %c2_674 = arith.constant 2 : index
    %c0_675 = arith.constant 0 : index
    %c128_676 = arith.constant 128 : index
    %1014 = vector.load %arg19[%c2_674, %c0_675, %c128_676] : memref<4x8x640xf32, #tpu.memory_space<vmem>>, vector<1x8x384xf32>
    %1015 = vector.shape_cast %1014 : vector<1x8x384xf32> to vector<8x384xf32>
    %c62 = arith.constant 62 : index
    %c0_677 = arith.constant 0 : index
    %c0_678 = arith.constant 0 : index
    %1016 = vector.load %arg9[%c62, %c0_677, %c0_678] : memref<100x8x1xf32, #tpu.memory_space<vmem>>, vector<1x8x1xf32>
    %1017 = vector.shape_cast %1016 : vector<1x8x1xf32> to vector<8x1xf32>
    %1018 = vector.broadcast %1017 : vector<8x1xf32> to vector<8x384xf32>
    %1019 = arith.mulf %1018, %1015 : vector<8x384xf32>
    %1020 = arith.addf %1013, %1019 : vector<8x384xf32>
    %c2_679 = arith.constant 2 : index
    %c0_680 = arith.constant 0 : index
    %c129_681 = arith.constant 129 : index
    %1021 = vector.load %arg19[%c2_679, %c0_680, %c129_681] : memref<4x8x640xf32, #tpu.memory_space<vmem>>, vector<1x8x384xf32>
    %1022 = vector.shape_cast %1021 : vector<1x8x384xf32> to vector<8x384xf32>
    %c63 = arith.constant 63 : index
    %c0_682 = arith.constant 0 : index
    %c0_683 = arith.constant 0 : index
    %1023 = vector.load %arg9[%c63, %c0_682, %c0_683] : memref<100x8x1xf32, #tpu.memory_space<vmem>>, vector<1x8x1xf32>
    %1024 = vector.shape_cast %1023 : vector<1x8x1xf32> to vector<8x1xf32>
    %1025 = vector.broadcast %1024 : vector<8x1xf32> to vector<8x384xf32>
    %1026 = arith.mulf %1025, %1022 : vector<8x384xf32>
    %1027 = arith.addf %1020, %1026 : vector<8x384xf32>
    %c2_684 = arith.constant 2 : index
    %c0_685 = arith.constant 0 : index
    %c130_686 = arith.constant 130 : index
    %1028 = vector.load %arg19[%c2_684, %c0_685, %c130_686] : memref<4x8x640xf32, #tpu.memory_space<vmem>>, vector<1x8x384xf32>
    %1029 = vector.shape_cast %1028 : vector<1x8x384xf32> to vector<8x384xf32>
    %c64 = arith.constant 64 : index
    %c0_687 = arith.constant 0 : index
    %c0_688 = arith.constant 0 : index
    %1030 = vector.load %arg9[%c64, %c0_687, %c0_688] : memref<100x8x1xf32, #tpu.memory_space<vmem>>, vector<1x8x1xf32>
    %1031 = vector.shape_cast %1030 : vector<1x8x1xf32> to vector<8x1xf32>
    %1032 = vector.broadcast %1031 : vector<8x1xf32> to vector<8x384xf32>
    %1033 = arith.mulf %1032, %1029 : vector<8x384xf32>
    %1034 = arith.addf %1027, %1033 : vector<8x384xf32>
    %c2_689 = arith.constant 2 : index
    %c0_690 = arith.constant 0 : index
    %c150_691 = arith.constant 150 : index
    %1035 = vector.load %arg19[%c2_689, %c0_690, %c150_691] : memref<4x8x640xf32, #tpu.memory_space<vmem>>, vector<1x8x384xf32>
    %1036 = vector.shape_cast %1035 : vector<1x8x384xf32> to vector<8x384xf32>
    %c65 = arith.constant 65 : index
    %c0_692 = arith.constant 0 : index
    %c0_693 = arith.constant 0 : index
    %1037 = vector.load %arg9[%c65, %c0_692, %c0_693] : memref<100x8x1xf32, #tpu.memory_space<vmem>>, vector<1x8x1xf32>
    %1038 = vector.shape_cast %1037 : vector<1x8x1xf32> to vector<8x1xf32>
    %1039 = vector.broadcast %1038 : vector<8x1xf32> to vector<8x384xf32>
    %1040 = arith.mulf %1039, %1036 : vector<8x384xf32>
    %1041 = arith.addf %1034, %1040 : vector<8x384xf32>
    %c2_694 = arith.constant 2 : index
    %c0_695 = arith.constant 0 : index
    %c151_696 = arith.constant 151 : index
    %1042 = vector.load %arg19[%c2_694, %c0_695, %c151_696] : memref<4x8x640xf32, #tpu.memory_space<vmem>>, vector<1x8x384xf32>
    %1043 = vector.shape_cast %1042 : vector<1x8x384xf32> to vector<8x384xf32>
    %c66 = arith.constant 66 : index
    %c0_697 = arith.constant 0 : index
    %c0_698 = arith.constant 0 : index
    %1044 = vector.load %arg9[%c66, %c0_697, %c0_698] : memref<100x8x1xf32, #tpu.memory_space<vmem>>, vector<1x8x1xf32>
    %1045 = vector.shape_cast %1044 : vector<1x8x1xf32> to vector<8x1xf32>
    %1046 = vector.broadcast %1045 : vector<8x1xf32> to vector<8x384xf32>
    %1047 = arith.mulf %1046, %1043 : vector<8x384xf32>
    %1048 = arith.addf %1041, %1047 : vector<8x384xf32>
    %c2_699 = arith.constant 2 : index
    %c0_700 = arith.constant 0 : index
    %c152_701 = arith.constant 152 : index
    %1049 = vector.load %arg19[%c2_699, %c0_700, %c152_701] : memref<4x8x640xf32, #tpu.memory_space<vmem>>, vector<1x8x384xf32>
    %1050 = vector.shape_cast %1049 : vector<1x8x384xf32> to vector<8x384xf32>
    %c67 = arith.constant 67 : index
    %c0_702 = arith.constant 0 : index
    %c0_703 = arith.constant 0 : index
    %1051 = vector.load %arg9[%c67, %c0_702, %c0_703] : memref<100x8x1xf32, #tpu.memory_space<vmem>>, vector<1x8x1xf32>
    %1052 = vector.shape_cast %1051 : vector<1x8x1xf32> to vector<8x1xf32>
    %1053 = vector.broadcast %1052 : vector<8x1xf32> to vector<8x384xf32>
    %1054 = arith.mulf %1053, %1050 : vector<8x384xf32>
    %1055 = arith.addf %1048, %1054 : vector<8x384xf32>
    %c2_704 = arith.constant 2 : index
    %c0_705 = arith.constant 0 : index
    %c153_706 = arith.constant 153 : index
    %1056 = vector.load %arg19[%c2_704, %c0_705, %c153_706] : memref<4x8x640xf32, #tpu.memory_space<vmem>>, vector<1x8x384xf32>
    %1057 = vector.shape_cast %1056 : vector<1x8x384xf32> to vector<8x384xf32>
    %c68 = arith.constant 68 : index
    %c0_707 = arith.constant 0 : index
    %c0_708 = arith.constant 0 : index
    %1058 = vector.load %arg9[%c68, %c0_707, %c0_708] : memref<100x8x1xf32, #tpu.memory_space<vmem>>, vector<1x8x1xf32>
    %1059 = vector.shape_cast %1058 : vector<1x8x1xf32> to vector<8x1xf32>
    %1060 = vector.broadcast %1059 : vector<8x1xf32> to vector<8x384xf32>
    %1061 = arith.mulf %1060, %1057 : vector<8x384xf32>
    %1062 = arith.addf %1055, %1061 : vector<8x384xf32>
    %c2_709 = arith.constant 2 : index
    %c0_710 = arith.constant 0 : index
    %c154_711 = arith.constant 154 : index
    %1063 = vector.load %arg19[%c2_709, %c0_710, %c154_711] : memref<4x8x640xf32, #tpu.memory_space<vmem>>, vector<1x8x384xf32>
    %1064 = vector.shape_cast %1063 : vector<1x8x384xf32> to vector<8x384xf32>
    %c69 = arith.constant 69 : index
    %c0_712 = arith.constant 0 : index
    %c0_713 = arith.constant 0 : index
    %1065 = vector.load %arg9[%c69, %c0_712, %c0_713] : memref<100x8x1xf32, #tpu.memory_space<vmem>>, vector<1x8x1xf32>
    %1066 = vector.shape_cast %1065 : vector<1x8x1xf32> to vector<8x1xf32>
    %1067 = vector.broadcast %1066 : vector<8x1xf32> to vector<8x384xf32>
    %1068 = arith.mulf %1067, %1064 : vector<8x384xf32>
    %1069 = arith.addf %1062, %1068 : vector<8x384xf32>
    %c2_714 = arith.constant 2 : index
    %c0_715 = arith.constant 0 : index
    %c174_716 = arith.constant 174 : index
    %1070 = vector.load %arg19[%c2_714, %c0_715, %c174_716] : memref<4x8x640xf32, #tpu.memory_space<vmem>>, vector<1x8x384xf32>
    %1071 = vector.shape_cast %1070 : vector<1x8x384xf32> to vector<8x384xf32>
    %c70 = arith.constant 70 : index
    %c0_717 = arith.constant 0 : index
    %c0_718 = arith.constant 0 : index
    %1072 = vector.load %arg9[%c70, %c0_717, %c0_718] : memref<100x8x1xf32, #tpu.memory_space<vmem>>, vector<1x8x1xf32>
    %1073 = vector.shape_cast %1072 : vector<1x8x1xf32> to vector<8x1xf32>
    %1074 = vector.broadcast %1073 : vector<8x1xf32> to vector<8x384xf32>
    %1075 = arith.mulf %1074, %1071 : vector<8x384xf32>
    %1076 = arith.addf %1069, %1075 : vector<8x384xf32>
    %c2_719 = arith.constant 2 : index
    %c0_720 = arith.constant 0 : index
    %c175_721 = arith.constant 175 : index
    %1077 = vector.load %arg19[%c2_719, %c0_720, %c175_721] : memref<4x8x640xf32, #tpu.memory_space<vmem>>, vector<1x8x384xf32>
    %1078 = vector.shape_cast %1077 : vector<1x8x384xf32> to vector<8x384xf32>
    %c71 = arith.constant 71 : index
    %c0_722 = arith.constant 0 : index
    %c0_723 = arith.constant 0 : index
    %1079 = vector.load %arg9[%c71, %c0_722, %c0_723] : memref<100x8x1xf32, #tpu.memory_space<vmem>>, vector<1x8x1xf32>
    %1080 = vector.shape_cast %1079 : vector<1x8x1xf32> to vector<8x1xf32>
    %1081 = vector.broadcast %1080 : vector<8x1xf32> to vector<8x384xf32>
    %1082 = arith.mulf %1081, %1078 : vector<8x384xf32>
    %1083 = arith.addf %1076, %1082 : vector<8x384xf32>
    %c2_724 = arith.constant 2 : index
    %c0_725 = arith.constant 0 : index
    %c176_726 = arith.constant 176 : index
    %1084 = vector.load %arg19[%c2_724, %c0_725, %c176_726] : memref<4x8x640xf32, #tpu.memory_space<vmem>>, vector<1x8x384xf32>
    %1085 = vector.shape_cast %1084 : vector<1x8x384xf32> to vector<8x384xf32>
    %c72 = arith.constant 72 : index
    %c0_727 = arith.constant 0 : index
    %c0_728 = arith.constant 0 : index
    %1086 = vector.load %arg9[%c72, %c0_727, %c0_728] : memref<100x8x1xf32, #tpu.memory_space<vmem>>, vector<1x8x1xf32>
    %1087 = vector.shape_cast %1086 : vector<1x8x1xf32> to vector<8x1xf32>
    %1088 = vector.broadcast %1087 : vector<8x1xf32> to vector<8x384xf32>
    %1089 = arith.mulf %1088, %1085 : vector<8x384xf32>
    %1090 = arith.addf %1083, %1089 : vector<8x384xf32>
    %c2_729 = arith.constant 2 : index
    %c0_730 = arith.constant 0 : index
    %c177_731 = arith.constant 177 : index
    %1091 = vector.load %arg19[%c2_729, %c0_730, %c177_731] : memref<4x8x640xf32, #tpu.memory_space<vmem>>, vector<1x8x384xf32>
    %1092 = vector.shape_cast %1091 : vector<1x8x384xf32> to vector<8x384xf32>
    %c73 = arith.constant 73 : index
    %c0_732 = arith.constant 0 : index
    %c0_733 = arith.constant 0 : index
    %1093 = vector.load %arg9[%c73, %c0_732, %c0_733] : memref<100x8x1xf32, #tpu.memory_space<vmem>>, vector<1x8x1xf32>
    %1094 = vector.shape_cast %1093 : vector<1x8x1xf32> to vector<8x1xf32>
    %1095 = vector.broadcast %1094 : vector<8x1xf32> to vector<8x384xf32>
    %1096 = arith.mulf %1095, %1092 : vector<8x384xf32>
    %1097 = arith.addf %1090, %1096 : vector<8x384xf32>
    %c2_734 = arith.constant 2 : index
    %c0_735 = arith.constant 0 : index
    %c178_736 = arith.constant 178 : index
    %1098 = vector.load %arg19[%c2_734, %c0_735, %c178_736] : memref<4x8x640xf32, #tpu.memory_space<vmem>>, vector<1x8x384xf32>
    %1099 = vector.shape_cast %1098 : vector<1x8x384xf32> to vector<8x384xf32>
    %c74 = arith.constant 74 : index
    %c0_737 = arith.constant 0 : index
    %c0_738 = arith.constant 0 : index
    %1100 = vector.load %arg9[%c74, %c0_737, %c0_738] : memref<100x8x1xf32, #tpu.memory_space<vmem>>, vector<1x8x1xf32>
    %1101 = vector.shape_cast %1100 : vector<1x8x1xf32> to vector<8x1xf32>
    %1102 = vector.broadcast %1101 : vector<8x1xf32> to vector<8x384xf32>
    %1103 = arith.mulf %1102, %1099 : vector<8x384xf32>
    %1104 = arith.addf %1097, %1103 : vector<8x384xf32>
    %1105 = arith.addf %930, %1104 : vector<8x384xf32>
    %c3_739 = arith.constant 3 : index
    %c0_740 = arith.constant 0 : index
    %c78_741 = arith.constant 78 : index
    %1106 = vector.load %arg19[%c3_739, %c0_740, %c78_741] : memref<4x8x640xf32, #tpu.memory_space<vmem>>, vector<1x8x384xf32>
    %1107 = vector.shape_cast %1106 : vector<1x8x384xf32> to vector<8x384xf32>
    %c75 = arith.constant 75 : index
    %c0_742 = arith.constant 0 : index
    %c0_743 = arith.constant 0 : index
    %1108 = vector.load %arg9[%c75, %c0_742, %c0_743] : memref<100x8x1xf32, #tpu.memory_space<vmem>>, vector<1x8x1xf32>
    %1109 = vector.shape_cast %1108 : vector<1x8x1xf32> to vector<8x1xf32>
    %1110 = vector.broadcast %1109 : vector<8x1xf32> to vector<8x384xf32>
    %1111 = arith.mulf %1110, %1107 : vector<8x384xf32>
    %c3_744 = arith.constant 3 : index
    %c0_745 = arith.constant 0 : index
    %c79_746 = arith.constant 79 : index
    %1112 = vector.load %arg19[%c3_744, %c0_745, %c79_746] : memref<4x8x640xf32, #tpu.memory_space<vmem>>, vector<1x8x384xf32>
    %1113 = vector.shape_cast %1112 : vector<1x8x384xf32> to vector<8x384xf32>
    %c76 = arith.constant 76 : index
    %c0_747 = arith.constant 0 : index
    %c0_748 = arith.constant 0 : index
    %1114 = vector.load %arg9[%c76, %c0_747, %c0_748] : memref<100x8x1xf32, #tpu.memory_space<vmem>>, vector<1x8x1xf32>
    %1115 = vector.shape_cast %1114 : vector<1x8x1xf32> to vector<8x1xf32>
    %1116 = vector.broadcast %1115 : vector<8x1xf32> to vector<8x384xf32>
    %1117 = arith.mulf %1116, %1113 : vector<8x384xf32>
    %1118 = arith.addf %1111, %1117 : vector<8x384xf32>
    %c3_749 = arith.constant 3 : index
    %c0_750 = arith.constant 0 : index
    %c80_751 = arith.constant 80 : index
    %1119 = vector.load %arg19[%c3_749, %c0_750, %c80_751] : memref<4x8x640xf32, #tpu.memory_space<vmem>>, vector<1x8x384xf32>
    %1120 = vector.shape_cast %1119 : vector<1x8x384xf32> to vector<8x384xf32>
    %c77 = arith.constant 77 : index
    %c0_752 = arith.constant 0 : index
    %c0_753 = arith.constant 0 : index
    %1121 = vector.load %arg9[%c77, %c0_752, %c0_753] : memref<100x8x1xf32, #tpu.memory_space<vmem>>, vector<1x8x1xf32>
    %1122 = vector.shape_cast %1121 : vector<1x8x1xf32> to vector<8x1xf32>
    %1123 = vector.broadcast %1122 : vector<8x1xf32> to vector<8x384xf32>
    %1124 = arith.mulf %1123, %1120 : vector<8x384xf32>
    %1125 = arith.addf %1118, %1124 : vector<8x384xf32>
    %c3_754 = arith.constant 3 : index
    %c0_755 = arith.constant 0 : index
    %c81_756 = arith.constant 81 : index
    %1126 = vector.load %arg19[%c3_754, %c0_755, %c81_756] : memref<4x8x640xf32, #tpu.memory_space<vmem>>, vector<1x8x384xf32>
    %1127 = vector.shape_cast %1126 : vector<1x8x384xf32> to vector<8x384xf32>
    %c78_757 = arith.constant 78 : index
    %c0_758 = arith.constant 0 : index
    %c0_759 = arith.constant 0 : index
    %1128 = vector.load %arg9[%c78_757, %c0_758, %c0_759] : memref<100x8x1xf32, #tpu.memory_space<vmem>>, vector<1x8x1xf32>
    %1129 = vector.shape_cast %1128 : vector<1x8x1xf32> to vector<8x1xf32>
    %1130 = vector.broadcast %1129 : vector<8x1xf32> to vector<8x384xf32>
    %1131 = arith.mulf %1130, %1127 : vector<8x384xf32>
    %1132 = arith.addf %1125, %1131 : vector<8x384xf32>
    %c3_760 = arith.constant 3 : index
    %c0_761 = arith.constant 0 : index
    %c82_762 = arith.constant 82 : index
    %1133 = vector.load %arg19[%c3_760, %c0_761, %c82_762] : memref<4x8x640xf32, #tpu.memory_space<vmem>>, vector<1x8x384xf32>
    %1134 = vector.shape_cast %1133 : vector<1x8x384xf32> to vector<8x384xf32>
    %c79_763 = arith.constant 79 : index
    %c0_764 = arith.constant 0 : index
    %c0_765 = arith.constant 0 : index
    %1135 = vector.load %arg9[%c79_763, %c0_764, %c0_765] : memref<100x8x1xf32, #tpu.memory_space<vmem>>, vector<1x8x1xf32>
    %1136 = vector.shape_cast %1135 : vector<1x8x1xf32> to vector<8x1xf32>
    %1137 = vector.broadcast %1136 : vector<8x1xf32> to vector<8x384xf32>
    %1138 = arith.mulf %1137, %1134 : vector<8x384xf32>
    %1139 = arith.addf %1132, %1138 : vector<8x384xf32>
    %c3_766 = arith.constant 3 : index
    %c0_767 = arith.constant 0 : index
    %c102_768 = arith.constant 102 : index
    %1140 = vector.load %arg19[%c3_766, %c0_767, %c102_768] : memref<4x8x640xf32, #tpu.memory_space<vmem>>, vector<1x8x384xf32>
    %1141 = vector.shape_cast %1140 : vector<1x8x384xf32> to vector<8x384xf32>
    %c80_769 = arith.constant 80 : index
    %c0_770 = arith.constant 0 : index
    %c0_771 = arith.constant 0 : index
    %1142 = vector.load %arg9[%c80_769, %c0_770, %c0_771] : memref<100x8x1xf32, #tpu.memory_space<vmem>>, vector<1x8x1xf32>
    %1143 = vector.shape_cast %1142 : vector<1x8x1xf32> to vector<8x1xf32>
    %1144 = vector.broadcast %1143 : vector<8x1xf32> to vector<8x384xf32>
    %1145 = arith.mulf %1144, %1141 : vector<8x384xf32>
    %1146 = arith.addf %1139, %1145 : vector<8x384xf32>
    %c3_772 = arith.constant 3 : index
    %c0_773 = arith.constant 0 : index
    %c103_774 = arith.constant 103 : index
    %1147 = vector.load %arg19[%c3_772, %c0_773, %c103_774] : memref<4x8x640xf32, #tpu.memory_space<vmem>>, vector<1x8x384xf32>
    %1148 = vector.shape_cast %1147 : vector<1x8x384xf32> to vector<8x384xf32>
    %c81_775 = arith.constant 81 : index
    %c0_776 = arith.constant 0 : index
    %c0_777 = arith.constant 0 : index
    %1149 = vector.load %arg9[%c81_775, %c0_776, %c0_777] : memref<100x8x1xf32, #tpu.memory_space<vmem>>, vector<1x8x1xf32>
    %1150 = vector.shape_cast %1149 : vector<1x8x1xf32> to vector<8x1xf32>
    %1151 = vector.broadcast %1150 : vector<8x1xf32> to vector<8x384xf32>
    %1152 = arith.mulf %1151, %1148 : vector<8x384xf32>
    %1153 = arith.addf %1146, %1152 : vector<8x384xf32>
    %c3_778 = arith.constant 3 : index
    %c0_779 = arith.constant 0 : index
    %c104_780 = arith.constant 104 : index
    %1154 = vector.load %arg19[%c3_778, %c0_779, %c104_780] : memref<4x8x640xf32, #tpu.memory_space<vmem>>, vector<1x8x384xf32>
    %1155 = vector.shape_cast %1154 : vector<1x8x384xf32> to vector<8x384xf32>
    %c82_781 = arith.constant 82 : index
    %c0_782 = arith.constant 0 : index
    %c0_783 = arith.constant 0 : index
    %1156 = vector.load %arg9[%c82_781, %c0_782, %c0_783] : memref<100x8x1xf32, #tpu.memory_space<vmem>>, vector<1x8x1xf32>
    %1157 = vector.shape_cast %1156 : vector<1x8x1xf32> to vector<8x1xf32>
    %1158 = vector.broadcast %1157 : vector<8x1xf32> to vector<8x384xf32>
    %1159 = arith.mulf %1158, %1155 : vector<8x384xf32>
    %1160 = arith.addf %1153, %1159 : vector<8x384xf32>
    %c3_784 = arith.constant 3 : index
    %c0_785 = arith.constant 0 : index
    %c105_786 = arith.constant 105 : index
    %1161 = vector.load %arg19[%c3_784, %c0_785, %c105_786] : memref<4x8x640xf32, #tpu.memory_space<vmem>>, vector<1x8x384xf32>
    %1162 = vector.shape_cast %1161 : vector<1x8x384xf32> to vector<8x384xf32>
    %c83 = arith.constant 83 : index
    %c0_787 = arith.constant 0 : index
    %c0_788 = arith.constant 0 : index
    %1163 = vector.load %arg9[%c83, %c0_787, %c0_788] : memref<100x8x1xf32, #tpu.memory_space<vmem>>, vector<1x8x1xf32>
    %1164 = vector.shape_cast %1163 : vector<1x8x1xf32> to vector<8x1xf32>
    %1165 = vector.broadcast %1164 : vector<8x1xf32> to vector<8x384xf32>
    %1166 = arith.mulf %1165, %1162 : vector<8x384xf32>
    %1167 = arith.addf %1160, %1166 : vector<8x384xf32>
    %c3_789 = arith.constant 3 : index
    %c0_790 = arith.constant 0 : index
    %c106_791 = arith.constant 106 : index
    %1168 = vector.load %arg19[%c3_789, %c0_790, %c106_791] : memref<4x8x640xf32, #tpu.memory_space<vmem>>, vector<1x8x384xf32>
    %1169 = vector.shape_cast %1168 : vector<1x8x384xf32> to vector<8x384xf32>
    %c84 = arith.constant 84 : index
    %c0_792 = arith.constant 0 : index
    %c0_793 = arith.constant 0 : index
    %1170 = vector.load %arg9[%c84, %c0_792, %c0_793] : memref<100x8x1xf32, #tpu.memory_space<vmem>>, vector<1x8x1xf32>
    %1171 = vector.shape_cast %1170 : vector<1x8x1xf32> to vector<8x1xf32>
    %1172 = vector.broadcast %1171 : vector<8x1xf32> to vector<8x384xf32>
    %1173 = arith.mulf %1172, %1169 : vector<8x384xf32>
    %1174 = arith.addf %1167, %1173 : vector<8x384xf32>
    %c3_794 = arith.constant 3 : index
    %c0_795 = arith.constant 0 : index
    %c126_796 = arith.constant 126 : index
    %1175 = vector.load %arg19[%c3_794, %c0_795, %c126_796] : memref<4x8x640xf32, #tpu.memory_space<vmem>>, vector<1x8x384xf32>
    %1176 = vector.shape_cast %1175 : vector<1x8x384xf32> to vector<8x384xf32>
    %c85 = arith.constant 85 : index
    %c0_797 = arith.constant 0 : index
    %c0_798 = arith.constant 0 : index
    %1177 = vector.load %arg9[%c85, %c0_797, %c0_798] : memref<100x8x1xf32, #tpu.memory_space<vmem>>, vector<1x8x1xf32>
    %1178 = vector.shape_cast %1177 : vector<1x8x1xf32> to vector<8x1xf32>
    %1179 = vector.broadcast %1178 : vector<8x1xf32> to vector<8x384xf32>
    %1180 = arith.mulf %1179, %1176 : vector<8x384xf32>
    %1181 = arith.addf %1174, %1180 : vector<8x384xf32>
    %c3_799 = arith.constant 3 : index
    %c0_800 = arith.constant 0 : index
    %c127_801 = arith.constant 127 : index
    %1182 = vector.load %arg19[%c3_799, %c0_800, %c127_801] : memref<4x8x640xf32, #tpu.memory_space<vmem>>, vector<1x8x384xf32>
    %1183 = vector.shape_cast %1182 : vector<1x8x384xf32> to vector<8x384xf32>
    %c86 = arith.constant 86 : index
    %c0_802 = arith.constant 0 : index
    %c0_803 = arith.constant 0 : index
    %1184 = vector.load %arg9[%c86, %c0_802, %c0_803] : memref<100x8x1xf32, #tpu.memory_space<vmem>>, vector<1x8x1xf32>
    %1185 = vector.shape_cast %1184 : vector<1x8x1xf32> to vector<8x1xf32>
    %1186 = vector.broadcast %1185 : vector<8x1xf32> to vector<8x384xf32>
    %1187 = arith.mulf %1186, %1183 : vector<8x384xf32>
    %1188 = arith.addf %1181, %1187 : vector<8x384xf32>
    %c3_804 = arith.constant 3 : index
    %c0_805 = arith.constant 0 : index
    %c128_806 = arith.constant 128 : index
    %1189 = vector.load %arg19[%c3_804, %c0_805, %c128_806] : memref<4x8x640xf32, #tpu.memory_space<vmem>>, vector<1x8x384xf32>
    %1190 = vector.shape_cast %1189 : vector<1x8x384xf32> to vector<8x384xf32>
    %c87 = arith.constant 87 : index
    %c0_807 = arith.constant 0 : index
    %c0_808 = arith.constant 0 : index
    %1191 = vector.load %arg9[%c87, %c0_807, %c0_808] : memref<100x8x1xf32, #tpu.memory_space<vmem>>, vector<1x8x1xf32>
    %1192 = vector.shape_cast %1191 : vector<1x8x1xf32> to vector<8x1xf32>
    %1193 = vector.broadcast %1192 : vector<8x1xf32> to vector<8x384xf32>
    %1194 = arith.mulf %1193, %1190 : vector<8x384xf32>
    %1195 = arith.addf %1188, %1194 : vector<8x384xf32>
    %c3_809 = arith.constant 3 : index
    %c0_810 = arith.constant 0 : index
    %c129_811 = arith.constant 129 : index
    %1196 = vector.load %arg19[%c3_809, %c0_810, %c129_811] : memref<4x8x640xf32, #tpu.memory_space<vmem>>, vector<1x8x384xf32>
    %1197 = vector.shape_cast %1196 : vector<1x8x384xf32> to vector<8x384xf32>
    %c88 = arith.constant 88 : index
    %c0_812 = arith.constant 0 : index
    %c0_813 = arith.constant 0 : index
    %1198 = vector.load %arg9[%c88, %c0_812, %c0_813] : memref<100x8x1xf32, #tpu.memory_space<vmem>>, vector<1x8x1xf32>
    %1199 = vector.shape_cast %1198 : vector<1x8x1xf32> to vector<8x1xf32>
    %1200 = vector.broadcast %1199 : vector<8x1xf32> to vector<8x384xf32>
    %1201 = arith.mulf %1200, %1197 : vector<8x384xf32>
    %1202 = arith.addf %1195, %1201 : vector<8x384xf32>
    %c3_814 = arith.constant 3 : index
    %c0_815 = arith.constant 0 : index
    %c130_816 = arith.constant 130 : index
    %1203 = vector.load %arg19[%c3_814, %c0_815, %c130_816] : memref<4x8x640xf32, #tpu.memory_space<vmem>>, vector<1x8x384xf32>
    %1204 = vector.shape_cast %1203 : vector<1x8x384xf32> to vector<8x384xf32>
    %c89 = arith.constant 89 : index
    %c0_817 = arith.constant 0 : index
    %c0_818 = arith.constant 0 : index
    %1205 = vector.load %arg9[%c89, %c0_817, %c0_818] : memref<100x8x1xf32, #tpu.memory_space<vmem>>, vector<1x8x1xf32>
    %1206 = vector.shape_cast %1205 : vector<1x8x1xf32> to vector<8x1xf32>
    %1207 = vector.broadcast %1206 : vector<8x1xf32> to vector<8x384xf32>
    %1208 = arith.mulf %1207, %1204 : vector<8x384xf32>
    %1209 = arith.addf %1202, %1208 : vector<8x384xf32>
    %c3_819 = arith.constant 3 : index
    %c0_820 = arith.constant 0 : index
    %c150_821 = arith.constant 150 : index
    %1210 = vector.load %arg19[%c3_819, %c0_820, %c150_821] : memref<4x8x640xf32, #tpu.memory_space<vmem>>, vector<1x8x384xf32>
    %1211 = vector.shape_cast %1210 : vector<1x8x384xf32> to vector<8x384xf32>
    %c90 = arith.constant 90 : index
    %c0_822 = arith.constant 0 : index
    %c0_823 = arith.constant 0 : index
    %1212 = vector.load %arg9[%c90, %c0_822, %c0_823] : memref<100x8x1xf32, #tpu.memory_space<vmem>>, vector<1x8x1xf32>
    %1213 = vector.shape_cast %1212 : vector<1x8x1xf32> to vector<8x1xf32>
    %1214 = vector.broadcast %1213 : vector<8x1xf32> to vector<8x384xf32>
    %1215 = arith.mulf %1214, %1211 : vector<8x384xf32>
    %1216 = arith.addf %1209, %1215 : vector<8x384xf32>
    %c3_824 = arith.constant 3 : index
    %c0_825 = arith.constant 0 : index
    %c151_826 = arith.constant 151 : index
    %1217 = vector.load %arg19[%c3_824, %c0_825, %c151_826] : memref<4x8x640xf32, #tpu.memory_space<vmem>>, vector<1x8x384xf32>
    %1218 = vector.shape_cast %1217 : vector<1x8x384xf32> to vector<8x384xf32>
    %c91 = arith.constant 91 : index
    %c0_827 = arith.constant 0 : index
    %c0_828 = arith.constant 0 : index
    %1219 = vector.load %arg9[%c91, %c0_827, %c0_828] : memref<100x8x1xf32, #tpu.memory_space<vmem>>, vector<1x8x1xf32>
    %1220 = vector.shape_cast %1219 : vector<1x8x1xf32> to vector<8x1xf32>
    %1221 = vector.broadcast %1220 : vector<8x1xf32> to vector<8x384xf32>
    %1222 = arith.mulf %1221, %1218 : vector<8x384xf32>
    %1223 = arith.addf %1216, %1222 : vector<8x384xf32>
    %c3_829 = arith.constant 3 : index
    %c0_830 = arith.constant 0 : index
    %c152_831 = arith.constant 152 : index
    %1224 = vector.load %arg19[%c3_829, %c0_830, %c152_831] : memref<4x8x640xf32, #tpu.memory_space<vmem>>, vector<1x8x384xf32>
    %1225 = vector.shape_cast %1224 : vector<1x8x384xf32> to vector<8x384xf32>
    %c92 = arith.constant 92 : index
    %c0_832 = arith.constant 0 : index
    %c0_833 = arith.constant 0 : index
    %1226 = vector.load %arg9[%c92, %c0_832, %c0_833] : memref<100x8x1xf32, #tpu.memory_space<vmem>>, vector<1x8x1xf32>
    %1227 = vector.shape_cast %1226 : vector<1x8x1xf32> to vector<8x1xf32>
    %1228 = vector.broadcast %1227 : vector<8x1xf32> to vector<8x384xf32>
    %1229 = arith.mulf %1228, %1225 : vector<8x384xf32>
    %1230 = arith.addf %1223, %1229 : vector<8x384xf32>
    %c3_834 = arith.constant 3 : index
    %c0_835 = arith.constant 0 : index
    %c153_836 = arith.constant 153 : index
    %1231 = vector.load %arg19[%c3_834, %c0_835, %c153_836] : memref<4x8x640xf32, #tpu.memory_space<vmem>>, vector<1x8x384xf32>
    %1232 = vector.shape_cast %1231 : vector<1x8x384xf32> to vector<8x384xf32>
    %c93 = arith.constant 93 : index
    %c0_837 = arith.constant 0 : index
    %c0_838 = arith.constant 0 : index
    %1233 = vector.load %arg9[%c93, %c0_837, %c0_838] : memref<100x8x1xf32, #tpu.memory_space<vmem>>, vector<1x8x1xf32>
    %1234 = vector.shape_cast %1233 : vector<1x8x1xf32> to vector<8x1xf32>
    %1235 = vector.broadcast %1234 : vector<8x1xf32> to vector<8x384xf32>
    %1236 = arith.mulf %1235, %1232 : vector<8x384xf32>
    %1237 = arith.addf %1230, %1236 : vector<8x384xf32>
    %c3_839 = arith.constant 3 : index
    %c0_840 = arith.constant 0 : index
    %c154_841 = arith.constant 154 : index
    %1238 = vector.load %arg19[%c3_839, %c0_840, %c154_841] : memref<4x8x640xf32, #tpu.memory_space<vmem>>, vector<1x8x384xf32>
    %1239 = vector.shape_cast %1238 : vector<1x8x384xf32> to vector<8x384xf32>
    %c94 = arith.constant 94 : index
    %c0_842 = arith.constant 0 : index
    %c0_843 = arith.constant 0 : index
    %1240 = vector.load %arg9[%c94, %c0_842, %c0_843] : memref<100x8x1xf32, #tpu.memory_space<vmem>>, vector<1x8x1xf32>
    %1241 = vector.shape_cast %1240 : vector<1x8x1xf32> to vector<8x1xf32>
    %1242 = vector.broadcast %1241 : vector<8x1xf32> to vector<8x384xf32>
    %1243 = arith.mulf %1242, %1239 : vector<8x384xf32>
    %1244 = arith.addf %1237, %1243 : vector<8x384xf32>
    %c3_844 = arith.constant 3 : index
    %c0_845 = arith.constant 0 : index
    %c174_846 = arith.constant 174 : index
    %1245 = vector.load %arg19[%c3_844, %c0_845, %c174_846] : memref<4x8x640xf32, #tpu.memory_space<vmem>>, vector<1x8x384xf32>
    %1246 = vector.shape_cast %1245 : vector<1x8x384xf32> to vector<8x384xf32>
    %c95 = arith.constant 95 : index
    %c0_847 = arith.constant 0 : index
    %c0_848 = arith.constant 0 : index
    %1247 = vector.load %arg9[%c95, %c0_847, %c0_848] : memref<100x8x1xf32, #tpu.memory_space<vmem>>, vector<1x8x1xf32>
    %1248 = vector.shape_cast %1247 : vector<1x8x1xf32> to vector<8x1xf32>
    %1249 = vector.broadcast %1248 : vector<8x1xf32> to vector<8x384xf32>
    %1250 = arith.mulf %1249, %1246 : vector<8x384xf32>
    %1251 = arith.addf %1244, %1250 : vector<8x384xf32>
    %c3_849 = arith.constant 3 : index
    %c0_850 = arith.constant 0 : index
    %c175_851 = arith.constant 175 : index
    %1252 = vector.load %arg19[%c3_849, %c0_850, %c175_851] : memref<4x8x640xf32, #tpu.memory_space<vmem>>, vector<1x8x384xf32>
    %1253 = vector.shape_cast %1252 : vector<1x8x384xf32> to vector<8x384xf32>
    %c96 = arith.constant 96 : index
    %c0_852 = arith.constant 0 : index
    %c0_853 = arith.constant 0 : index
    %1254 = vector.load %arg9[%c96, %c0_852, %c0_853] : memref<100x8x1xf32, #tpu.memory_space<vmem>>, vector<1x8x1xf32>
    %1255 = vector.shape_cast %1254 : vector<1x8x1xf32> to vector<8x1xf32>
    %1256 = vector.broadcast %1255 : vector<8x1xf32> to vector<8x384xf32>
    %1257 = arith.mulf %1256, %1253 : vector<8x384xf32>
    %1258 = arith.addf %1251, %1257 : vector<8x384xf32>
    %c3_854 = arith.constant 3 : index
    %c0_855 = arith.constant 0 : index
    %c176_856 = arith.constant 176 : index
    %1259 = vector.load %arg19[%c3_854, %c0_855, %c176_856] : memref<4x8x640xf32, #tpu.memory_space<vmem>>, vector<1x8x384xf32>
    %1260 = vector.shape_cast %1259 : vector<1x8x384xf32> to vector<8x384xf32>
    %c97 = arith.constant 97 : index
    %c0_857 = arith.constant 0 : index
    %c0_858 = arith.constant 0 : index
    %1261 = vector.load %arg9[%c97, %c0_857, %c0_858] : memref<100x8x1xf32, #tpu.memory_space<vmem>>, vector<1x8x1xf32>
    %1262 = vector.shape_cast %1261 : vector<1x8x1xf32> to vector<8x1xf32>
    %1263 = vector.broadcast %1262 : vector<8x1xf32> to vector<8x384xf32>
    %1264 = arith.mulf %1263, %1260 : vector<8x384xf32>
    %1265 = arith.addf %1258, %1264 : vector<8x384xf32>
    %c3_859 = arith.constant 3 : index
    %c0_860 = arith.constant 0 : index
    %c177_861 = arith.constant 177 : index
    %1266 = vector.load %arg19[%c3_859, %c0_860, %c177_861] : memref<4x8x640xf32, #tpu.memory_space<vmem>>, vector<1x8x384xf32>
    %1267 = vector.shape_cast %1266 : vector<1x8x384xf32> to vector<8x384xf32>
    %c98 = arith.constant 98 : index
    %c0_862 = arith.constant 0 : index
    %c0_863 = arith.constant 0 : index
    %1268 = vector.load %arg9[%c98, %c0_862, %c0_863] : memref<100x8x1xf32, #tpu.memory_space<vmem>>, vector<1x8x1xf32>
    %1269 = vector.shape_cast %1268 : vector<1x8x1xf32> to vector<8x1xf32>
    %1270 = vector.broadcast %1269 : vector<8x1xf32> to vector<8x384xf32>
    %1271 = arith.mulf %1270, %1267 : vector<8x384xf32>
    %1272 = arith.addf %1265, %1271 : vector<8x384xf32>
    %c3_864 = arith.constant 3 : index
    %c0_865 = arith.constant 0 : index
    %c178_866 = arith.constant 178 : index
    %1273 = vector.load %arg19[%c3_864, %c0_865, %c178_866] : memref<4x8x640xf32, #tpu.memory_space<vmem>>, vector<1x8x384xf32>
    %1274 = vector.shape_cast %1273 : vector<1x8x384xf32> to vector<8x384xf32>
    %c99 = arith.constant 99 : index
    %c0_867 = arith.constant 0 : index
    %c0_868 = arith.constant 0 : index
    %1275 = vector.load %arg9[%c99, %c0_867, %c0_868] : memref<100x8x1xf32, #tpu.memory_space<vmem>>, vector<1x8x1xf32>
    %1276 = vector.shape_cast %1275 : vector<1x8x1xf32> to vector<8x1xf32>
    %1277 = vector.broadcast %1276 : vector<8x1xf32> to vector<8x384xf32>
    %1278 = arith.mulf %1277, %1274 : vector<8x384xf32>
    %1279 = arith.addf %1272, %1278 : vector<8x384xf32>
    %1280 = arith.addf %1105, %1279 : vector<8x384xf32>
    %c0_869 = arith.constant 0 : index
    %c0_870 = arith.constant 0 : index
    %1281 = vector.load %arg10[%c0_869, %c0_870] : memref<8x1xf32, #tpu.memory_space<vmem>>, vector<8x1xf32>
    %1282 = vector.broadcast %1281 : vector<8x1xf32> to vector<8x384xf32>
    %1283 = arith.addf %1280, %1282 : vector<8x384xf32>
    %1284 = vector.broadcast %1 : vector<1x384xf32> to vector<8x384xf32>
    %1285 = arith.mulf %1283, %1284 : vector<8x384xf32>
    %1286 = arith.mulf %1285, %1285 : vector<8x384xf32>
    %cst_871 = arith.constant dense<0.000000e+00> : vector<8xf32>
    %1287 = vector.multi_reduction <add>, %1285, %cst_871 [1] : vector<8x384xf32> to vector<8xf32>
    %1288 = vector.shape_cast %1287 : vector<8xf32> to vector<8x1xf32>
    %cst_872 = arith.constant dense<0.000000e+00> : vector<8xf32>
    %1289 = vector.multi_reduction <add>, %1286, %cst_872 [1] : vector<8x384xf32> to vector<8xf32>
    %1290 = vector.shape_cast %1289 : vector<8xf32> to vector<8x1xf32>
    %1291 = vector.extract_strided_slice %1288 {offsets = [0, 0], sizes = [4, 1], strides = [1, 1]} : vector<8x1xf32> to vector<4x1xf32>
    %1292 = vector.extract_strided_slice %1288 {offsets = [4, 0], sizes = [4, 1], strides = [1, 1]} : vector<8x1xf32> to vector<4x1xf32>
    %1293 = arith.addf %1291, %1292 : vector<4x1xf32>
    %1294 = tpu.concatenate %1293, %1293 in 0 : vector<4x1xf32>, vector<4x1xf32> -> vector<8x1xf32>
    %cst_873 = arith.constant 0.001953125 : f32
    %1295 = vector.broadcast %cst_873 : f32 to vector<8x1xf32>
    %1296 = arith.mulf %1294, %1295 : vector<8x1xf32>
    %1297 = vector.extract_strided_slice %1290 {offsets = [0, 0], sizes = [4, 1], strides = [1, 1]} : vector<8x1xf32> to vector<4x1xf32>
    %1298 = vector.extract_strided_slice %1290 {offsets = [4, 0], sizes = [4, 1], strides = [1, 1]} : vector<8x1xf32> to vector<4x1xf32>
    %1299 = arith.addf %1297, %1298 : vector<4x1xf32>
    %1300 = tpu.concatenate %1299, %1299 in 0 : vector<4x1xf32>, vector<4x1xf32> -> vector<8x1xf32>
    %cst_874 = arith.constant 0.001953125 : f32
    %1301 = vector.broadcast %cst_874 : f32 to vector<8x1xf32>
    %1302 = arith.mulf %1300, %1301 : vector<8x1xf32>
    %1303 = arith.mulf %1296, %1296 : vector<8x1xf32>
    %1304 = arith.subf %1302, %1303 : vector<8x1xf32>
    %cst_875 = arith.constant 1.000000e-03 : f32
    %1305 = vector.broadcast %cst_875 : f32 to vector<8x1xf32>
    %1306 = arith.addf %1304, %1305 : vector<8x1xf32>
    %1307 = math.rsqrt %1306 : vector<8x1xf32>
    %c2_876 = arith.constant 2 : index
    %c0_877 = arith.constant 0 : index
    %c0_878 = arith.constant 0 : index
    %1308 = vector.load %arg11[%c2_876, %c0_877, %c0_878] : memref<4x8x1xf32, #tpu.memory_space<vmem>>, vector<1x8x1xf32>
    %1309 = vector.shape_cast %1308 : vector<1x8x1xf32> to vector<8x1xf32>
    %1310 = arith.mulf %1307, %1309 : vector<8x1xf32>
    %c2_879 = arith.constant 2 : index
    %c0_880 = arith.constant 0 : index
    %c0_881 = arith.constant 0 : index
    %1311 = vector.load %arg12[%c2_879, %c0_880, %c0_881] : memref<4x8x1xf32, #tpu.memory_space<vmem>>, vector<1x8x1xf32>
    %1312 = vector.shape_cast %1311 : vector<1x8x1xf32> to vector<8x1xf32>
    %1313 = arith.mulf %1296, %1310 : vector<8x1xf32>
    %1314 = arith.subf %1312, %1313 : vector<8x1xf32>
    %1315 = vector.broadcast %1310 : vector<8x1xf32> to vector<8x384xf32>
    %1316 = arith.mulf %1283, %1315 : vector<8x384xf32>
    %1317 = vector.broadcast %1314 : vector<8x1xf32> to vector<8x384xf32>
    %1318 = arith.addf %1316, %1317 : vector<8x384xf32>
    %cst_882 = arith.constant 0.000000e+00 : f32
    %1319 = vector.broadcast %cst_882 : f32 to vector<8x384xf32>
    %1320 = arith.maximumf %1318, %1319 : vector<8x384xf32>
    %c2_883 = arith.constant 2 : index
    %c0_884 = arith.constant 0 : index
    %c0_885 = arith.constant 0 : index
    %1321 = vector.load %arg17[%c2_883, %c0_884, %c0_885] : memref<4x8x384xf32, #tpu.memory_space<vmem>>, vector<1x8x384xf32>
    %1322 = vector.shape_cast %1321 : vector<1x8x384xf32> to vector<8x384xf32>
    %1323 = vector.shape_cast %1320 : vector<8x384xf32> to vector<1x8x384xf32>
    tpu.vector_store %arg17[%c2_883, %c0_884, %c0_885], %1323 {strides = array<i32>} : memref<4x8x384xf32, #tpu.memory_space<vmem>>, vector<1x8x384xf32>,
    %c0_886 = arith.constant 0 : index
    %c0_887 = arith.constant 0 : index
    %c103_888 = arith.constant 103 : index
    %1324 = vector.load %arg2[%c0_886, %c0_887, %c103_888] : memref<4x8x640xf32, #tpu.memory_space<vmem>>, vector<1x8x384xf32>
    %1325 = vector.shape_cast %1324 : vector<1x8x384xf32> to vector<8x384xf32>
    %c0_889 = arith.constant 0 : index
    %c0_890 = arith.constant 0 : index
    %c104_891 = arith.constant 104 : index
    %1326 = vector.load %arg2[%c0_889, %c0_890, %c104_891] : memref<4x8x640xf32, #tpu.memory_space<vmem>>, vector<1x8x384xf32>
    %1327 = vector.shape_cast %1326 : vector<1x8x384xf32> to vector<8x384xf32>
    %1328 = arith.maximumf %1325, %1327 : vector<8x384xf32>
    %c0_892 = arith.constant 0 : index
    %c0_893 = arith.constant 0 : index
    %c105_894 = arith.constant 105 : index
    %1329 = vector.load %arg2[%c0_892, %c0_893, %c105_894] : memref<4x8x640xf32, #tpu.memory_space<vmem>>, vector<1x8x384xf32>
    %1330 = vector.shape_cast %1329 : vector<1x8x384xf32> to vector<8x384xf32>
    %1331 = arith.maximumf %1328, %1330 : vector<8x384xf32>
    %c0_895 = arith.constant 0 : index
    %c0_896 = arith.constant 0 : index
    %c127_897 = arith.constant 127 : index
    %1332 = vector.load %arg2[%c0_895, %c0_896, %c127_897] : memref<4x8x640xf32, #tpu.memory_space<vmem>>, vector<1x8x384xf32>
    %1333 = vector.shape_cast %1332 : vector<1x8x384xf32> to vector<8x384xf32>
    %1334 = arith.maximumf %1331, %1333 : vector<8x384xf32>
    %c0_898 = arith.constant 0 : index
    %c0_899 = arith.constant 0 : index
    %c128_900 = arith.constant 128 : index
    %1335 = vector.load %arg2[%c0_898, %c0_899, %c128_900] : memref<4x8x640xf32, #tpu.memory_space<vmem>>, vector<1x8x384xf32>
    %1336 = vector.shape_cast %1335 : vector<1x8x384xf32> to vector<8x384xf32>
    %1337 = arith.maximumf %1334, %1336 : vector<8x384xf32>
    %c0_901 = arith.constant 0 : index
    %c0_902 = arith.constant 0 : index
    %c129_903 = arith.constant 129 : index
    %1338 = vector.load %arg2[%c0_901, %c0_902, %c129_903] : memref<4x8x640xf32, #tpu.memory_space<vmem>>, vector<1x8x384xf32>
    %1339 = vector.shape_cast %1338 : vector<1x8x384xf32> to vector<8x384xf32>
    %1340 = arith.maximumf %1337, %1339 : vector<8x384xf32>
    %c0_904 = arith.constant 0 : index
    %c0_905 = arith.constant 0 : index
    %c151_906 = arith.constant 151 : index
    %1341 = vector.load %arg2[%c0_904, %c0_905, %c151_906] : memref<4x8x640xf32, #tpu.memory_space<vmem>>, vector<1x8x384xf32>
    %1342 = vector.shape_cast %1341 : vector<1x8x384xf32> to vector<8x384xf32>
    %1343 = arith.maximumf %1340, %1342 : vector<8x384xf32>
    %c0_907 = arith.constant 0 : index
    %c0_908 = arith.constant 0 : index
    %c152_909 = arith.constant 152 : index
    %1344 = vector.load %arg2[%c0_907, %c0_908, %c152_909] : memref<4x8x640xf32, #tpu.memory_space<vmem>>, vector<1x8x384xf32>
    %1345 = vector.shape_cast %1344 : vector<1x8x384xf32> to vector<8x384xf32>
    %1346 = arith.maximumf %1343, %1345 : vector<8x384xf32>
    %c0_910 = arith.constant 0 : index
    %c0_911 = arith.constant 0 : index
    %c153_912 = arith.constant 153 : index
    %1347 = vector.load %arg2[%c0_910, %c0_911, %c153_912] : memref<4x8x640xf32, #tpu.memory_space<vmem>>, vector<1x8x384xf32>
    %1348 = vector.shape_cast %1347 : vector<1x8x384xf32> to vector<8x384xf32>
    %1349 = arith.maximumf %1346, %1348 : vector<8x384xf32>
    %1350 = vector.broadcast %1 : vector<1x384xf32> to vector<8x384xf32>
    %1351 = arith.mulf %1349, %1350 : vector<8x384xf32>
    %c0_913 = arith.constant 0 : index
    %c0_914 = arith.constant 0 : index
    %c0_915 = arith.constant 0 : index
    %1352 = vector.load %arg5[%c0_913, %c0_914, %c0_915] : memref<4x8x1xf32, #tpu.memory_space<vmem>>, vector<1x8x1xf32>
    %1353 = vector.shape_cast %1352 : vector<1x8x1xf32> to vector<8x1xf32>
    %1354 = vector.broadcast %1353 : vector<8x1xf32> to vector<8x384xf32>
    %1355 = arith.mulf %1354, %1351 : vector<8x384xf32>
    %c1_916 = arith.constant 1 : index
    %c0_917 = arith.constant 0 : index
    %c103_918 = arith.constant 103 : index
    %1356 = vector.load %arg2[%c1_916, %c0_917, %c103_918] : memref<4x8x640xf32, #tpu.memory_space<vmem>>, vector<1x8x384xf32>
    %1357 = vector.shape_cast %1356 : vector<1x8x384xf32> to vector<8x384xf32>
    %c1_919 = arith.constant 1 : index
    %c0_920 = arith.constant 0 : index
    %c104_921 = arith.constant 104 : index
    %1358 = vector.load %arg2[%c1_919, %c0_920, %c104_921] : memref<4x8x640xf32, #tpu.memory_space<vmem>>, vector<1x8x384xf32>
    %1359 = vector.shape_cast %1358 : vector<1x8x384xf32> to vector<8x384xf32>
    %1360 = arith.maximumf %1357, %1359 : vector<8x384xf32>
    %c1_922 = arith.constant 1 : index
    %c0_923 = arith.constant 0 : index
    %c105_924 = arith.constant 105 : index
    %1361 = vector.load %arg2[%c1_922, %c0_923, %c105_924] : memref<4x8x640xf32, #tpu.memory_space<vmem>>, vector<1x8x384xf32>
    %1362 = vector.shape_cast %1361 : vector<1x8x384xf32> to vector<8x384xf32>
    %1363 = arith.maximumf %1360, %1362 : vector<8x384xf32>
    %c1_925 = arith.constant 1 : index
    %c0_926 = arith.constant 0 : index
    %c127_927 = arith.constant 127 : index
    %1364 = vector.load %arg2[%c1_925, %c0_926, %c127_927] : memref<4x8x640xf32, #tpu.memory_space<vmem>>, vector<1x8x384xf32>
    %1365 = vector.shape_cast %1364 : vector<1x8x384xf32> to vector<8x384xf32>
    %1366 = arith.maximumf %1363, %1365 : vector<8x384xf32>
    %c1_928 = arith.constant 1 : index
    %c0_929 = arith.constant 0 : index
    %c128_930 = arith.constant 128 : index
    %1367 = vector.load %arg2[%c1_928, %c0_929, %c128_930] : memref<4x8x640xf32, #tpu.memory_space<vmem>>, vector<1x8x384xf32>
    %1368 = vector.shape_cast %1367 : vector<1x8x384xf32> to vector<8x384xf32>
    %1369 = arith.maximumf %1366, %1368 : vector<8x384xf32>
    %c1_931 = arith.constant 1 : index
    %c0_932 = arith.constant 0 : index
    %c129_933 = arith.constant 129 : index
    %1370 = vector.load %arg2[%c1_931, %c0_932, %c129_933] : memref<4x8x640xf32, #tpu.memory_space<vmem>>, vector<1x8x384xf32>
    %1371 = vector.shape_cast %1370 : vector<1x8x384xf32> to vector<8x384xf32>
    %1372 = arith.maximumf %1369, %1371 : vector<8x384xf32>
    %c1_934 = arith.constant 1 : index
    %c0_935 = arith.constant 0 : index
    %c151_936 = arith.constant 151 : index
    %1373 = vector.load %arg2[%c1_934, %c0_935, %c151_936] : memref<4x8x640xf32, #tpu.memory_space<vmem>>, vector<1x8x384xf32>
    %1374 = vector.shape_cast %1373 : vector<1x8x384xf32> to vector<8x384xf32>
    %1375 = arith.maximumf %1372, %1374 : vector<8x384xf32>
    %c1_937 = arith.constant 1 : index
    %c0_938 = arith.constant 0 : index
    %c152_939 = arith.constant 152 : index
    %1376 = vector.load %arg2[%c1_937, %c0_938, %c152_939] : memref<4x8x640xf32, #tpu.memory_space<vmem>>, vector<1x8x384xf32>
    %1377 = vector.shape_cast %1376 : vector<1x8x384xf32> to vector<8x384xf32>
    %1378 = arith.maximumf %1375, %1377 : vector<8x384xf32>
    %c1_940 = arith.constant 1 : index
    %c0_941 = arith.constant 0 : index
    %c153_942 = arith.constant 153 : index
    %1379 = vector.load %arg2[%c1_940, %c0_941, %c153_942] : memref<4x8x640xf32, #tpu.memory_space<vmem>>, vector<1x8x384xf32>
    %1380 = vector.shape_cast %1379 : vector<1x8x384xf32> to vector<8x384xf32>
    %1381 = arith.maximumf %1378, %1380 : vector<8x384xf32>
    %1382 = vector.broadcast %1 : vector<1x384xf32> to vector<8x384xf32>
    %1383 = arith.mulf %1381, %1382 : vector<8x384xf32>
    %c1_943 = arith.constant 1 : index
    %c0_944 = arith.constant 0 : index
    %c0_945 = arith.constant 0 : index
    %1384 = vector.load %arg5[%c1_943, %c0_944, %c0_945] : memref<4x8x1xf32, #tpu.memory_space<vmem>>, vector<1x8x1xf32>
    %1385 = vector.shape_cast %1384 : vector<1x8x1xf32> to vector<8x1xf32>
    %1386 = vector.broadcast %1385 : vector<8x1xf32> to vector<8x384xf32>
    %1387 = arith.mulf %1386, %1383 : vector<8x384xf32>
    %1388 = arith.addf %1355, %1387 : vector<8x384xf32>
    %c2_946 = arith.constant 2 : index
    %c0_947 = arith.constant 0 : index
    %c103_948 = arith.constant 103 : index
    %1389 = vector.load %arg2[%c2_946, %c0_947, %c103_948] : memref<4x8x640xf32, #tpu.memory_space<vmem>>, vector<1x8x384xf32>
    %1390 = vector.shape_cast %1389 : vector<1x8x384xf32> to vector<8x384xf32>
    %c2_949 = arith.constant 2 : index
    %c0_950 = arith.constant 0 : index
    %c104_951 = arith.constant 104 : index
    %1391 = vector.load %arg2[%c2_949, %c0_950, %c104_951] : memref<4x8x640xf32, #tpu.memory_space<vmem>>, vector<1x8x384xf32>
    %1392 = vector.shape_cast %1391 : vector<1x8x384xf32> to vector<8x384xf32>
    %1393 = arith.maximumf %1390, %1392 : vector<8x384xf32>
    %c2_952 = arith.constant 2 : index
    %c0_953 = arith.constant 0 : index
    %c105_954 = arith.constant 105 : index
    %1394 = vector.load %arg2[%c2_952, %c0_953, %c105_954] : memref<4x8x640xf32, #tpu.memory_space<vmem>>, vector<1x8x384xf32>
    %1395 = vector.shape_cast %1394 : vector<1x8x384xf32> to vector<8x384xf32>
    %1396 = arith.maximumf %1393, %1395 : vector<8x384xf32>
    %c2_955 = arith.constant 2 : index
    %c0_956 = arith.constant 0 : index
    %c127_957 = arith.constant 127 : index
    %1397 = vector.load %arg2[%c2_955, %c0_956, %c127_957] : memref<4x8x640xf32, #tpu.memory_space<vmem>>, vector<1x8x384xf32>
    %1398 = vector.shape_cast %1397 : vector<1x8x384xf32> to vector<8x384xf32>
    %1399 = arith.maximumf %1396, %1398 : vector<8x384xf32>
    %c2_958 = arith.constant 2 : index
    %c0_959 = arith.constant 0 : index
    %c128_960 = arith.constant 128 : index
    %1400 = vector.load %arg2[%c2_958, %c0_959, %c128_960] : memref<4x8x640xf32, #tpu.memory_space<vmem>>, vector<1x8x384xf32>
    %1401 = vector.shape_cast %1400 : vector<1x8x384xf32> to vector<8x384xf32>
    %1402 = arith.maximumf %1399, %1401 : vector<8x384xf32>
    %c2_961 = arith.constant 2 : index
    %c0_962 = arith.constant 0 : index
    %c129_963 = arith.constant 129 : index
    %1403 = vector.load %arg2[%c2_961, %c0_962, %c129_963] : memref<4x8x640xf32, #tpu.memory_space<vmem>>, vector<1x8x384xf32>
    %1404 = vector.shape_cast %1403 : vector<1x8x384xf32> to vector<8x384xf32>
    %1405 = arith.maximumf %1402, %1404 : vector<8x384xf32>
    %c2_964 = arith.constant 2 : index
    %c0_965 = arith.constant 0 : index
    %c151_966 = arith.constant 151 : index
    %1406 = vector.load %arg2[%c2_964, %c0_965, %c151_966] : memref<4x8x640xf32, #tpu.memory_space<vmem>>, vector<1x8x384xf32>
    %1407 = vector.shape_cast %1406 : vector<1x8x384xf32> to vector<8x384xf32>
    %1408 = arith.maximumf %1405, %1407 : vector<8x384xf32>
    %c2_967 = arith.constant 2 : index
    %c0_968 = arith.constant 0 : index
    %c152_969 = arith.constant 152 : index
    %1409 = vector.load %arg2[%c2_967, %c0_968, %c152_969] : memref<4x8x640xf32, #tpu.memory_space<vmem>>, vector<1x8x384xf32>
    %1410 = vector.shape_cast %1409 : vector<1x8x384xf32> to vector<8x384xf32>
    %1411 = arith.maximumf %1408, %1410 : vector<8x384xf32>
    %c2_970 = arith.constant 2 : index
    %c0_971 = arith.constant 0 : index
    %c153_972 = arith.constant 153 : index
    %1412 = vector.load %arg2[%c2_970, %c0_971, %c153_972] : memref<4x8x640xf32, #tpu.memory_space<vmem>>, vector<1x8x384xf32>
    %1413 = vector.shape_cast %1412 : vector<1x8x384xf32> to vector<8x384xf32>
    %1414 = arith.maximumf %1411, %1413 : vector<8x384xf32>
    %1415 = vector.broadcast %1 : vector<1x384xf32> to vector<8x384xf32>
    %1416 = arith.mulf %1414, %1415 : vector<8x384xf32>
    %c2_973 = arith.constant 2 : index
    %c0_974 = arith.constant 0 : index
    %c0_975 = arith.constant 0 : index
    %1417 = vector.load %arg5[%c2_973, %c0_974, %c0_975] : memref<4x8x1xf32, #tpu.memory_space<vmem>>, vector<1x8x1xf32>
    %1418 = vector.shape_cast %1417 : vector<1x8x1xf32> to vector<8x1xf32>
    %1419 = vector.broadcast %1418 : vector<8x1xf32> to vector<8x384xf32>
    %1420 = arith.mulf %1419, %1416 : vector<8x384xf32>
    %1421 = arith.addf %1388, %1420 : vector<8x384xf32>
    %c3_976 = arith.constant 3 : index
    %c0_977 = arith.constant 0 : index
    %c103_978 = arith.constant 103 : index
    %1422 = vector.load %arg2[%c3_976, %c0_977, %c103_978] : memref<4x8x640xf32, #tpu.memory_space<vmem>>, vector<1x8x384xf32>
    %1423 = vector.shape_cast %1422 : vector<1x8x384xf32> to vector<8x384xf32>
    %c3_979 = arith.constant 3 : index
    %c0_980 = arith.constant 0 : index
    %c104_981 = arith.constant 104 : index
    %1424 = vector.load %arg2[%c3_979, %c0_980, %c104_981] : memref<4x8x640xf32, #tpu.memory_space<vmem>>, vector<1x8x384xf32>
    %1425 = vector.shape_cast %1424 : vector<1x8x384xf32> to vector<8x384xf32>
    %1426 = arith.maximumf %1423, %1425 : vector<8x384xf32>
    %c3_982 = arith.constant 3 : index
    %c0_983 = arith.constant 0 : index
    %c105_984 = arith.constant 105 : index
    %1427 = vector.load %arg2[%c3_982, %c0_983, %c105_984] : memref<4x8x640xf32, #tpu.memory_space<vmem>>, vector<1x8x384xf32>
    %1428 = vector.shape_cast %1427 : vector<1x8x384xf32> to vector<8x384xf32>
    %1429 = arith.maximumf %1426, %1428 : vector<8x384xf32>
    %c3_985 = arith.constant 3 : index
    %c0_986 = arith.constant 0 : index
    %c127_987 = arith.constant 127 : index
    %1430 = vector.load %arg2[%c3_985, %c0_986, %c127_987] : memref<4x8x640xf32, #tpu.memory_space<vmem>>, vector<1x8x384xf32>
    %1431 = vector.shape_cast %1430 : vector<1x8x384xf32> to vector<8x384xf32>
    %1432 = arith.maximumf %1429, %1431 : vector<8x384xf32>
    %c3_988 = arith.constant 3 : index
    %c0_989 = arith.constant 0 : index
    %c128_990 = arith.constant 128 : index
    %1433 = vector.load %arg2[%c3_988, %c0_989, %c128_990] : memref<4x8x640xf32, #tpu.memory_space<vmem>>, vector<1x8x384xf32>
    %1434 = vector.shape_cast %1433 : vector<1x8x384xf32> to vector<8x384xf32>
    %1435 = arith.maximumf %1432, %1434 : vector<8x384xf32>
    %c3_991 = arith.constant 3 : index
    %c0_992 = arith.constant 0 : index
    %c129_993 = arith.constant 129 : index
    %1436 = vector.load %arg2[%c3_991, %c0_992, %c129_993] : memref<4x8x640xf32, #tpu.memory_space<vmem>>, vector<1x8x384xf32>
    %1437 = vector.shape_cast %1436 : vector<1x8x384xf32> to vector<8x384xf32>
    %1438 = arith.maximumf %1435, %1437 : vector<8x384xf32>
    %c3_994 = arith.constant 3 : index
    %c0_995 = arith.constant 0 : index
    %c151_996 = arith.constant 151 : index
    %1439 = vector.load %arg2[%c3_994, %c0_995, %c151_996] : memref<4x8x640xf32, #tpu.memory_space<vmem>>, vector<1x8x384xf32>
    %1440 = vector.shape_cast %1439 : vector<1x8x384xf32> to vector<8x384xf32>
    %1441 = arith.maximumf %1438, %1440 : vector<8x384xf32>
    %c3_997 = arith.constant 3 : index
    %c0_998 = arith.constant 0 : index
    %c152_999 = arith.constant 152 : index
    %1442 = vector.load %arg2[%c3_997, %c0_998, %c152_999] : memref<4x8x640xf32, #tpu.memory_space<vmem>>, vector<1x8x384xf32>
    %1443 = vector.shape_cast %1442 : vector<1x8x384xf32> to vector<8x384xf32>
    %1444 = arith.maximumf %1441, %1443 : vector<8x384xf32>
    %c3_1000 = arith.constant 3 : index
    %c0_1001 = arith.constant 0 : index
    %c153_1002 = arith.constant 153 : index
    %1445 = vector.load %arg2[%c3_1000, %c0_1001, %c153_1002] : memref<4x8x640xf32, #tpu.memory_space<vmem>>, vector<1x8x384xf32>
    %1446 = vector.shape_cast %1445 : vector<1x8x384xf32> to vector<8x384xf32>
    %1447 = arith.maximumf %1444, %1446 : vector<8x384xf32>
    %1448 = vector.broadcast %1 : vector<1x384xf32> to vector<8x384xf32>
    %1449 = arith.mulf %1447, %1448 : vector<8x384xf32>
    %c3_1003 = arith.constant 3 : index
    %c0_1004 = arith.constant 0 : index
    %c0_1005 = arith.constant 0 : index
    %1450 = vector.load %arg5[%c3_1003, %c0_1004, %c0_1005] : memref<4x8x1xf32, #tpu.memory_space<vmem>>, vector<1x8x1xf32>
    %1451 = vector.shape_cast %1450 : vector<1x8x1xf32> to vector<8x1xf32>
    %1452 = vector.broadcast %1451 : vector<8x1xf32> to vector<8x384xf32>
    %1453 = arith.mulf %1452, %1449 : vector<8x384xf32>
    %1454 = arith.addf %1421, %1453 : vector<8x384xf32>
    %c0_1006 = arith.constant 0 : index
    %c0_1007 = arith.constant 0 : index
    %1455 = vector.load %arg6[%c0_1006, %c0_1007] : memref<8x1xf32, #tpu.memory_space<vmem>>, vector<8x1xf32>
    %1456 = vector.broadcast %1455 : vector<8x1xf32> to vector<8x384xf32>
    %1457 = arith.addf %1454, %1456 : vector<8x384xf32>
    %1458 = vector.broadcast %1 : vector<1x384xf32> to vector<8x384xf32>
    %1459 = arith.mulf %1457, %1458 : vector<8x384xf32>
    %1460 = arith.mulf %1459, %1459 : vector<8x384xf32>
    %cst_1008 = arith.constant dense<0.000000e+00> : vector<8xf32>
    %1461 = vector.multi_reduction <add>, %1459, %cst_1008 [1] : vector<8x384xf32> to vector<8xf32>
    %1462 = vector.shape_cast %1461 : vector<8xf32> to vector<8x1xf32>
    %cst_1009 = arith.constant dense<0.000000e+00> : vector<8xf32>
    %1463 = vector.multi_reduction <add>, %1460, %cst_1009 [1] : vector<8x384xf32> to vector<8xf32>
    %1464 = vector.shape_cast %1463 : vector<8xf32> to vector<8x1xf32>
    %1465 = vector.extract_strided_slice %1462 {offsets = [0, 0], sizes = [4, 1], strides = [1, 1]} : vector<8x1xf32> to vector<4x1xf32>
    %1466 = vector.extract_strided_slice %1462 {offsets = [4, 0], sizes = [4, 1], strides = [1, 1]} : vector<8x1xf32> to vector<4x1xf32>
    %1467 = arith.addf %1465, %1466 : vector<4x1xf32>
    %1468 = tpu.concatenate %1467, %1467 in 0 : vector<4x1xf32>, vector<4x1xf32> -> vector<8x1xf32>
    %cst_1010 = arith.constant 0.001953125 : f32
    %1469 = vector.broadcast %cst_1010 : f32 to vector<8x1xf32>
    %1470 = arith.mulf %1468, %1469 : vector<8x1xf32>
    %1471 = vector.extract_strided_slice %1464 {offsets = [0, 0], sizes = [4, 1], strides = [1, 1]} : vector<8x1xf32> to vector<4x1xf32>
    %1472 = vector.extract_strided_slice %1464 {offsets = [4, 0], sizes = [4, 1], strides = [1, 1]} : vector<8x1xf32> to vector<4x1xf32>
    %1473 = arith.addf %1471, %1472 : vector<4x1xf32>
    %1474 = tpu.concatenate %1473, %1473 in 0 : vector<4x1xf32>, vector<4x1xf32> -> vector<8x1xf32>
    %cst_1011 = arith.constant 0.001953125 : f32
    %1475 = vector.broadcast %cst_1011 : f32 to vector<8x1xf32>
    %1476 = arith.mulf %1474, %1475 : vector<8x1xf32>
    %1477 = arith.mulf %1470, %1470 : vector<8x1xf32>
    %1478 = arith.subf %1476, %1477 : vector<8x1xf32>
    %cst_1012 = arith.constant 1.000000e-03 : f32
    %1479 = vector.broadcast %cst_1012 : f32 to vector<8x1xf32>
    %1480 = arith.addf %1478, %1479 : vector<8x1xf32>
    %1481 = math.rsqrt %1480 : vector<8x1xf32>
    %c3_1013 = arith.constant 3 : index
    %c0_1014 = arith.constant 0 : index
    %c0_1015 = arith.constant 0 : index
    %1482 = vector.load %arg11[%c3_1013, %c0_1014, %c0_1015] : memref<4x8x1xf32, #tpu.memory_space<vmem>>, vector<1x8x1xf32>
    %1483 = vector.shape_cast %1482 : vector<1x8x1xf32> to vector<8x1xf32>
    %1484 = arith.mulf %1481, %1483 : vector<8x1xf32>
    %c3_1016 = arith.constant 3 : index
    %c0_1017 = arith.constant 0 : index
    %c0_1018 = arith.constant 0 : index
    %1485 = vector.load %arg12[%c3_1016, %c0_1017, %c0_1018] : memref<4x8x1xf32, #tpu.memory_space<vmem>>, vector<1x8x1xf32>
    %1486 = vector.shape_cast %1485 : vector<1x8x1xf32> to vector<8x1xf32>
    %1487 = arith.mulf %1470, %1484 : vector<8x1xf32>
    %1488 = arith.subf %1486, %1487 : vector<8x1xf32>
    %1489 = vector.broadcast %1484 : vector<8x1xf32> to vector<8x384xf32>
    %1490 = arith.mulf %1457, %1489 : vector<8x384xf32>
    %1491 = vector.broadcast %1488 : vector<8x1xf32> to vector<8x384xf32>
    %1492 = arith.addf %1490, %1491 : vector<8x384xf32>
    %cst_1019 = arith.constant 0.000000e+00 : f32
    %1493 = vector.broadcast %cst_1019 : f32 to vector<8x384xf32>
    %1494 = arith.maximumf %1492, %1493 : vector<8x384xf32>
    %c3_1020 = arith.constant 3 : index
    %c0_1021 = arith.constant 0 : index
    %c0_1022 = arith.constant 0 : index
    %1495 = vector.load %arg17[%c3_1020, %c0_1021, %c0_1022] : memref<4x8x384xf32, #tpu.memory_space<vmem>>, vector<1x8x384xf32>
    %1496 = vector.shape_cast %1495 : vector<1x8x384xf32> to vector<8x384xf32>
    %1497 = vector.shape_cast %1494 : vector<8x384xf32> to vector<1x8x384xf32>
    tpu.vector_store %arg17[%c3_1020, %c0_1021, %c0_1022], %1497 {strides = array<i32>} : memref<4x8x384xf32, #tpu.memory_space<vmem>>, vector<1x8x384xf32>,
    return
  }
}

</mosaic_0001>

<llo_original>
// kernel: tpu_custom_call.1
$region0: #{tpu_custom_call.1}
  #allocation0 [shape = 'u32[]', space=smem, size = 0x4, offset = 0x4, fixed_abs, tag = 'smem constant byte address 0x4 - core index']
  #allocation1 [shape = 'u32[144,128]{1,0:T(1,128)}', space=vmem, size = 0x12000, scoped, tag = 'internal scratch']
  #allocation2 [shape = 'f32[4,8,640]{2,1,0:T(8,128)}', space=vmem, size = 0x14000, scoped, tag = 'scratch operand']
  #allocation3 [shape = 'f32[4,8,640]{2,1,0:T(8,128)}', space=vmem, size = 0x14000, scoped, tag = 'scratch operand']
  %s0 = inlined_call_operand.vmem [shape: f32[1,640], index: 0, kind: input, shape index: {}]
  %s1 = inlined_call_operand.vmem [shape: f32[4,8,640], index: 1, kind: input, shape index: {}]
  %s2 = inlined_call_operand.vmem [shape: f32[4,8,640], index: 2, kind: input, shape index: {}]
  %s3 = inlined_call_operand.vmem [shape: f32[4,8,1], index: 3, kind: input, shape index: {}]
  %s4 = inlined_call_operand.vmem [shape: f32[8,1], index: 4, kind: input, shape index: {}]
  %s5 = inlined_call_operand.vmem [shape: f32[4,8,1], index: 5, kind: input, shape index: {}]
  %s6 = inlined_call_operand.vmem [shape: f32[8,1], index: 6, kind: input, shape index: {}]
  %s7 = inlined_call_operand.vmem [shape: f32[36,8,1], index: 7, kind: input, shape index: {}]
  %s8 = inlined_call_operand.vmem [shape: f32[8,1], index: 8, kind: input, shape index: {}]
  %s9 = inlined_call_operand.vmem [shape: f32[100,8,1], index: 9, kind: input, shape index: {}]
  %s10 = inlined_call_operand.vmem [shape: f32[8,1], index: 10, kind: input, shape index: {}]
  %s11 = inlined_call_operand.vmem [shape: f32[4,8,1], index: 11, kind: input, shape index: {}]
  %s12 = inlined_call_operand.vmem [shape: f32[4,8,1], index: 12, kind: input, shape index: {}]
  %s13 = inlined_call_operand.vmem [shape: f32[16], index: 13, kind: input, shape index: {}]
  %s14 = inlined_call_operand.vmem [shape: f32[4], index: 14, kind: input, shape index: {}]
  %s15 = inlined_call_operand.vmem [shape: f32[16], index: 15, kind: input, shape index: {}]
  %s16 = inlined_call_operand.vmem [shape: f32[4], index: 16, kind: input, shape index: {}]
  %s17 = inlined_call_operand.hbm [shape: f32[4,8,384], index: 17, kind: output, shape index: {}]
  %s18 = sld [smem:[#allocation0]]
  $region94: #{tpu_custom_call.1} parent=0
    _
  %s20 = ssub.s32 1, %s18
  %s21 = scalar_select 0, %s20, %s18
  $region1: #{tpu_custom_call.1} parent=0
    #allocation4 [shape = 'u8[512]{0}', space=smem, size = 0x200, scoped, tag = 'input window, operand 13, single buffered']
    #allocation5 [shape = 's32[1]{0}', space=sflag, size = 0x4, scoped, tag = 'scoped memory for tpu_custom_call.1']
    #allocation6 [shape = 's32[1]{0}', space=sflag, size = 0x4, scoped, tag = 'scoped memory for tpu_custom_call.1']
    #allocation7 [shape = 'u8[512]{0}', space=smem, size = 0x200, scoped, tag = 'input window, operand 14, single buffered']
    #allocation8 [shape = 's32[1]{0}', space=sflag, size = 0x4, scoped, tag = 'scoped memory for tpu_custom_call.1']
    #allocation9 [shape = 'u8[512]{0}', space=smem, size = 0x200, scoped, tag = 'input window, operand 15, single buffered']
    #allocation10 [shape = 'u8[512]{0}', space=smem, size = 0x200, scoped, tag = 'input window, operand 16, single buffered']
    #allocation11 [shape = 's32[1]{0}', space=sflag, size = 0x4, scoped, tag = 'scoped memory for tpu_custom_call.1']
    #allocation12 [shape = 'u8[49152]{0}', space=vmem, size = 0xc000, scoped, tag = 'output window, operand 0, single buffered']
    %22 = vsyncpa [#allocation6], 0
    %23 = vsyncpa [#allocation8], 0
    %24 = vsyncpa [#allocation11], 0
    %25 = vsyncpa [#allocation5], 0
    // Predicated region
    $region2: #{tpu_custom_call.1} parent=1 // pred_check
      _
    $region3: #{tpu_custom_call.1} parent=1 // pred_check_branch
      %27 = sbr.rel (0) target = $region5
    $region4: #{tpu_custom_call.1} parent=1 // pred_region
      _
    $region5: #{tpu_custom_call.1} parent=1 // pred_fallthru
      _
    // Predicated region
    $region6: #{tpu_custom_call.1} parent=1 // pred_check
      _
    $region7: #{tpu_custom_call.1} parent=1 // pred_check_branch
      %29 = sbr.rel (0) target = $region9
    $region8: #{tpu_custom_call.1} parent=1 // pred_region
      _
    $region9: #{tpu_custom_call.1} parent=1 // pred_fallthru
      _
    // Predicated region
    $region10: #{tpu_custom_call.1} parent=1 // pred_check
      _
    $region11: #{tpu_custom_call.1} parent=1 // pred_check_branch
      %31 = sbr.rel (0) target = $region13
    $region12: #{tpu_custom_call.1} parent=1 // pred_region
      _
    $region13: #{tpu_custom_call.1} parent=1 // pred_fallthru
      _
    // Predicated region
    $region14: #{tpu_custom_call.1} parent=1 // pred_check
      _
    $region15: #{tpu_custom_call.1} parent=1 // pred_check_branch
      %33 = sbr.rel (0) target = $region17
    $region16: #{tpu_custom_call.1} parent=1 // pred_region
      _
    $region17: #{tpu_custom_call.1} parent=1 // pred_fallthru
      _
    // Predicated region
    $region18: #{tpu_custom_call.1} parent=1 // pred_check
      _
    $region19: #{tpu_custom_call.1} parent=1 // pred_check_branch
      %35 = sbr.rel (0) target = $region21
    $region20: #{tpu_custom_call.1} parent=1 // pred_region
      _
    $region21: #{tpu_custom_call.1} parent=1 // pred_fallthru
      _
    // Predicated region
    $region22: #{tpu_custom_call.1} parent=1 // pred_check
      _
    $region23: #{tpu_custom_call.1} parent=1 // pred_check_branch
      %37 = sbr.rel (0) target = $region25
    $region24: #{tpu_custom_call.1} parent=1 // pred_region
      _
    $region25: #{tpu_custom_call.1} parent=1 // pred_fallthru
      _
    // Predicated region
    $region26: #{tpu_custom_call.1} parent=1 // pred_check
      _
    $region27: #{tpu_custom_call.1} parent=1 // pred_check_branch
      %39 = sbr.rel (0) target = $region29
    $region28: #{tpu_custom_call.1} parent=1 // pred_region
      _
    $region29: #{tpu_custom_call.1} parent=1 // pred_fallthru
      _
    // Predicated region
    $region30: #{tpu_custom_call.1} parent=1 // pred_check
      _
    $region31: #{tpu_custom_call.1} parent=1 // pred_check_branch
      %41 = sbr.rel (0) target = $region33
    $region32: #{tpu_custom_call.1} parent=1 // pred_region
      _
    $region33: #{tpu_custom_call.1} parent=1 // pred_fallthru
      _
    // Predicated region
    $region34: #{tpu_custom_call.1} parent=1 // pred_check
      _
    $region35: #{tpu_custom_call.1} parent=1 // pred_check_branch
      %43 = sbr.rel (0) target = $region37
    $region36: #{tpu_custom_call.1} parent=1 // pred_region
      _
    $region37: #{tpu_custom_call.1} parent=1 // pred_fallthru
      _
    // Predicated region
    $region38: #{tpu_custom_call.1} parent=1 // pred_check
      _
    $region39: #{tpu_custom_call.1} parent=1 // pred_check_branch
      %45 = sbr.rel (0) target = $region41
    $region40: #{tpu_custom_call.1} parent=1 // pred_region
      _
    $region41: #{tpu_custom_call.1} parent=1 // pred_fallthru
      _
    // Predicated region
    $region42: #{tpu_custom_call.1} parent=1 // pred_check
      _
    $region43: #{tpu_custom_call.1} parent=1 // pred_check_branch
      %47 = sbr.rel (0) target = $region45
    $region44: #{tpu_custom_call.1} parent=1 // pred_region
      _
    $region45: #{tpu_custom_call.1} parent=1 // pred_fallthru
      _
    // Predicated region
    $region46: #{tpu_custom_call.1} parent=1 // pred_check
      _
    $region47: #{tpu_custom_call.1} parent=1 // pred_check_branch
      %49 = sbr.rel (0) target = $region49
    $region48: #{tpu_custom_call.1} parent=1 // pred_region
      _
    $region49: #{tpu_custom_call.1} parent=1 // pred_fallthru
      _
    // Predicated region
    $region50: #{tpu_custom_call.1} parent=1 // pred_check
      _
    $region51: #{tpu_custom_call.1} parent=1 // pred_check_branch
      %51 = sbr.rel (0) target = $region53
    $region52: #{tpu_custom_call.1} parent=1 // pred_region
      _
    $region53: #{tpu_custom_call.1} parent=1 // pred_fallthru
      _
    // Predicated region
    $region54: #{tpu_custom_call.1} parent=1 // pred_check
      _
    $region55: #{tpu_custom_call.1} parent=1 // pred_check_branch
      %53 = sbr.rel (0) target = $region57
    $region56: #{tpu_custom_call.1} parent=1 // pred_region
      %s55 = ssub.s32 16, 16
      %56 = vsyncadd [#allocation6], %s55
      %s58 = sshll.u32 %s13, 4
      %s59 = int_to_ptr.vmem [resolvable:$true] %s58
      %61 = dma.vmem_to_smem %s59, 16, [#allocation4], [#allocation6]
    $region57: #{tpu_custom_call.1} parent=1 // pred_fallthru
      _
    // Predicated region
    $region58: #{tpu_custom_call.1} parent=1 // pred_check
      _
    $region59: #{tpu_custom_call.1} parent=1 // pred_check_branch
      %63 = sbr.rel (0) target = $region61
    $region60: #{tpu_custom_call.1} parent=1 // pred_region
      %s65 = ssub.s32 16, 16
      %66 = vsyncadd [#allocation8], %s65
      %s68 = sshll.u32 %s14, 4
      %s69 = int_to_ptr.vmem [resolvable:$true] %s68
      %71 = dma.vmem_to_smem %s69, 16, [#allocation7], [#allocation8]
    $region61: #{tpu_custom_call.1} parent=1 // pred_fallthru
      _
    // Predicated region
    $region62: #{tpu_custom_call.1} parent=1 // pred_check
      _
    $region63: #{tpu_custom_call.1} parent=1 // pred_check_branch
      %73 = sbr.rel (0) target = $region65
    $region64: #{tpu_custom_call.1} parent=1 // pred_region
      %s75 = ssub.s32 16, 16
      %76 = vsyncadd [#allocation8], %s75
      %s78 = sshll.u32 %s15, 4
      %s79 = int_to_ptr.vmem [resolvable:$true] %s78
      %81 = dma.vmem_to_smem %s79, 16, [#allocation9], [#allocation8]
    $region65: #{tpu_custom_call.1} parent=1 // pred_fallthru
      _
    // Predicated region
    $region66: #{tpu_custom_call.1} parent=1 // pred_check
      _
    $region67: #{tpu_custom_call.1} parent=1 // pred_check_branch
      %83 = sbr.rel (0) target = $region69
    $region68: #{tpu_custom_call.1} parent=1 // pred_region
      %s85 = ssub.s32 16, 16
      %86 = vsyncadd [#allocation11], %s85
      %s88 = sshll.u32 %s16, 4
      %s89 = int_to_ptr.vmem [resolvable:$true] %s88
      %91 = dma.vmem_to_smem %s89, 16, [#allocation10], [#allocation11]
    $region69: #{tpu_custom_call.1} parent=1 // pred_fallthru
      _
    // Predicated region
    $region70: #{tpu_custom_call.1} parent=1 // pred_check
      _
    $region71: #{tpu_custom_call.1} parent=1 // pred_check_branch
      %93 = sbr.rel (0) target = $region73
    $region72: #{tpu_custom_call.1} parent=1 // pred_region
      %94 = dma.done [#allocation6], 16
    $region73: #{tpu_custom_call.1} parent=1 // pred_fallthru
      _
    // Predicated region
    $region74: #{tpu_custom_call.1} parent=1 // pred_check
      _
    $region75: #{tpu_custom_call.1} parent=1 // pred_check_branch
      %96 = sbr.rel (0) target = $region77
    $region76: #{tpu_custom_call.1} parent=1 // pred_region
      %97 = dma.done [#allocation8], 16
    $region77: #{tpu_custom_call.1} parent=1 // pred_fallthru
      _
    // Predicated region
    $region78: #{tpu_custom_call.1} parent=1 // pred_check
      _
    $region79: #{tpu_custom_call.1} parent=1 // pred_check_branch
      %99 = sbr.rel (0) target = $region81
    $region80: #{tpu_custom_call.1} parent=1 // pred_region
      %100 = dma.done [#allocation8], 16
    $region81: #{tpu_custom_call.1} parent=1 // pred_fallthru
      _
    // Predicated region
    $region82: #{tpu_custom_call.1} parent=1 // pred_check
      _
    $region83: #{tpu_custom_call.1} parent=1 // pred_check_branch
      %102 = sbr.rel (0) target = $region85
    $region84: #{tpu_custom_call.1} parent=1 // pred_region
      %103 = dma.done [#allocation11], 16
    $region85: #{tpu_custom_call.1} parent=1 // pred_fallthru
      _
    %104 = sfence
    %v105 = vld [vmem:[%s0] sm:$0x1f]
    %v106 = vld [vmem:[%s0 + $0x1] sm:$0x7]
    %v107 = vld [vmem:[%s1] sm:$0xff]
    %v108 = vld [vmem:[%s1 + $0x8] sm:$0xff]
    %v109 = vld [vmem:[%s1 + $0x10] sm:$0xff]
    %v110 = vld [vmem:[%s1 + $0x18] sm:$0xff]
    %v111 = vld [vmem:[%s1 + $0x20] sm:$0xff]
    %s112 = sld [smem:[#allocation4]]
    %v113 = vstv %s112
    %v114 = vmul.f32 %v113, %v107
    %v115 = vmul.f32 %v113, %v108
    %v116 = vmul.f32 %v113, %v109
    %v117 = vmul.f32 %v113, %v110
    %v118 = vmul.f32 %v113, %v111
    %s119 = sld [smem:[#allocation9]]
    %v120 = vstv %s119
    %v121 = vmul.f32 %v120, %v107
    %v122 = vmul.f32 %v120, %v108
    %v123 = vmul.f32 %v120, %v109
    %v124 = vmul.f32 %v120, %v110
    %v125 = vmul.f32 %v120, %v111
    %s126 = scalar_lea.vmem %s1, 40
    %v127 = vld [vmem:[%s126] sm:$0xff]
    %v128 = vld [vmem:[%s126 + $0x8] sm:$0xff]
    %v129 = vld [vmem:[%s126 + $0x10] sm:$0xff]
    %v130 = vld [vmem:[%s126 + $0x18] sm:$0xff]
    %v131 = vld [vmem:[%s126 + $0x20] sm:$0xff]
    %s132 = sld [smem:[#allocation4 + $0x1]]
    %v133 = vstv %s132
    %v134 = vmul.f32 %v133, %v127
    %v135 = vmul.f32 %v133, %v128
    %v136 = vmul.f32 %v133, %v129
    %v137 = vmul.f32 %v133, %v130
    %v138 = vmul.f32 %v133, %v131
    %v139 = vadd.f32 %v114, %v134
    %v140 = vadd.f32 %v115, %v135
    %v141 = vadd.f32 %v116, %v136
    %v142 = vadd.f32 %v117, %v137
    %v143 = vadd.f32 %v118, %v138
    %s144 = sld [smem:[#allocation9 + $0x1]]
    %v145 = vstv %s144
    %v146 = vmul.f32 %v145, %v127
    %v147 = vmul.f32 %v145, %v128
    %v148 = vmul.f32 %v145, %v129
    %v149 = vmul.f32 %v145, %v130
    %v150 = vmul.f32 %v145, %v131
    %v151 = vadd.f32 %v121, %v146
    %v152 = vadd.f32 %v122, %v147
    %v153 = vadd.f32 %v123, %v148
    %v154 = vadd.f32 %v124, %v149
    %v155 = vadd.f32 %v125, %v150
    %s156 = scalar_lea.vmem %s1, 80
    %v157 = vld [vmem:[%s156] sm:$0xff]
    %v158 = vld [vmem:[%s156 + $0x8] sm:$0xff]
    %v159 = vld [vmem:[%s156 + $0x10] sm:$0xff]
    %v160 = vld [vmem:[%s156 + $0x18] sm:$0xff]
    %v161 = vld [vmem:[%s156 + $0x20] sm:$0xff]
    %s162 = sld [smem:[#allocation4 + $0x2]]
    %v163 = vstv %s162
    %v164 = vmul.f32 %v163, %v157
    %v165 = vmul.f32 %v163, %v158
    %v166 = vmul.f32 %v163, %v159
    %v167 = vmul.f32 %v163, %v160
    %v168 = vmul.f32 %v163, %v161
    %v169 = vadd.f32 %v139, %v164
    %v170 = vadd.f32 %v140, %v165
    %v171 = vadd.f32 %v141, %v166
    %v172 = vadd.f32 %v142, %v167
    %v173 = vadd.f32 %v143, %v168
    %s174 = sld [smem:[#allocation9 + $0x2]]
    %v175 = vstv %s174
    %v176 = vmul.f32 %v175, %v157
    %v177 = vmul.f32 %v175, %v158
    %v178 = vmul.f32 %v175, %v159
    %v179 = vmul.f32 %v175, %v160
    %v180 = vmul.f32 %v175, %v161
    %v181 = vadd.f32 %v151, %v176
    %v182 = vadd.f32 %v152, %v177
    %v183 = vadd.f32 %v153, %v178
    %v184 = vadd.f32 %v154, %v179
    %v185 = vadd.f32 %v155, %v180
    %s186 = scalar_lea.vmem %s1, 120
    %v187 = vld [vmem:[%s186] sm:$0xff]
    %v188 = vld [vmem:[%s186 + $0x8] sm:$0xff]
    %v189 = vld [vmem:[%s186 + $0x10] sm:$0xff]
    %v190 = vld [vmem:[%s186 + $0x18] sm:$0xff]
    %v191 = vld [vmem:[%s186 + $0x20] sm:$0xff]
    %s192 = sld [smem:[#allocation4 + $0x3]]
    %v193 = vstv %s192
    %v194 = vmul.f32 %v193, %v187
    %v195 = vmul.f32 %v193, %v188
    %v196 = vmul.f32 %v193, %v189
    %v197 = vmul.f32 %v193, %v190
    %v198 = vmul.f32 %v193, %v191
    %v199 = vadd.f32 %v169, %v194
    %v200 = vadd.f32 %v170, %v195
    %v201 = vadd.f32 %v171, %v196
    %v202 = vadd.f32 %v172, %v197
    %v203 = vadd.f32 %v173, %v198
    %s204 = sld [smem:[#allocation9 + $0x3]]
    %v205 = vstv %s204
    %v206 = vmul.f32 %v205, %v187
    %v207 = vmul.f32 %v205, %v188
    %v208 = vmul.f32 %v205, %v189
    %v209 = vmul.f32 %v205, %v190
    %v210 = vmul.f32 %v205, %v191
    %v211 = vadd.f32 %v181, %v206
    %v212 = vadd.f32 %v182, %v207
    %v213 = vadd.f32 %v183, %v208
    %v214 = vadd.f32 %v184, %v209
    %v215 = vadd.f32 %v185, %v210
    %s216 = sld [smem:[#allocation7]]
    %v217 = vstv %s216
    %v218 = vadd.f32 %v199, %v217
    %v219 = vadd.f32 %v200, %v217
    %v220 = vadd.f32 %v201, %v217
    %v221 = vadd.f32 %v202, %v217
    %v222 = vadd.f32 %v203, %v217
    %v224 = vlaneseq
    %v225 = vshrl.u32 %v224, 7
    %v226 = vsub.s32 0, %v225
    %v227 = vrot.slane %v105, %v226
    %v228 = vlaneseq
    %v229 = vshrl.u32 %v228, 7
    %v230 = vsub.s32 1, %v229
    %v231 = vrot.slane %v105, %v230
    %v232 = vlaneseq
    %v233 = vshrl.u32 %v232, 7
    %v234 = vsub.s32 2, %v233
    %v235 = vrot.slane %v105, %v234
    %v236 = vlaneseq
    %v237 = vshrl.u32 %v236, 7
    %v238 = vsub.s32 3, %v237
    %v239 = vrot.slane %v105, %v238
    %v240 = vlaneseq
    %v241 = vshrl.u32 %v240, 7
    %v242 = vsub.s32 4, %v241
    %v243 = vrot.slane %v105, %v242
    %v249 = vmul.f32 %v218, %v227
    %v250 = vmul.f32 %v219, %v231
    %v251 = vmul.f32 %v220, %v235
    %v252 = vmul.f32 %v221, %v239
    %v253 = vmul.f32 %v222, %v243
    %254 = vst [vmem:[#allocation2] sm:$0xff] %v249
    %255 = vst [vmem:[#allocation2 + $0x8] sm:$0xff] %v250
    %256 = vst [vmem:[#allocation2 + $0x10] sm:$0xff] %v251
    %257 = vst [vmem:[#allocation2 + $0x18] sm:$0xff] %v252
    %258 = vst [vmem:[#allocation2 + $0x20] sm:$0xff] %v253
    %s259 = sld [smem:[#allocation10]]
    %v260 = vstv %s259
    %v261 = vadd.f32 %v211, %v260
    %v262 = vadd.f32 %v212, %v260
    %v263 = vadd.f32 %v213, %v260
    %v264 = vadd.f32 %v214, %v260
    %v265 = vadd.f32 %v215, %v260
    %v266 = vmul.f32 %v261, %v227
    %v267 = vmul.f32 %v262, %v231
    %v268 = vmul.f32 %v263, %v235
    %v269 = vmul.f32 %v264, %v239
    %v270 = vmul.f32 %v265, %v243
    %271 = vst [vmem:[#allocation3] sm:$0xff] %v266
    %272 = vst [vmem:[#allocation3 + $0x8] sm:$0xff] %v267
    %273 = vst [vmem:[#allocation3 + $0x10] sm:$0xff] %v268
    %274 = vst [vmem:[#allocation3 + $0x18] sm:$0xff] %v269
    %275 = vst [vmem:[#allocation3 + $0x20] sm:$0xff] %v270
    %v276 = vld [vmem:[%s1] sm:$0xff]
    %v277 = vld [vmem:[%s1 + $0x8] sm:$0xff]
    %v278 = vld [vmem:[%s1 + $0x10] sm:$0xff]
    %v279 = vld [vmem:[%s1 + $0x18] sm:$0xff]
    %v280 = vld [vmem:[%s1 + $0x20] sm:$0xff]
    %s281 = sld [smem:[#allocation4 + $0x4]]
    %v282 = vstv %s281
    %v283 = vmul.f32 %v282, %v276
    %v284 = vmul.f32 %v282, %v277
    %v285 = vmul.f32 %v282, %v278
    %v286 = vmul.f32 %v282, %v279
    %v287 = vmul.f32 %v282, %v280
    %s288 = sld [smem:[#allocation9 + $0x4]]
    %v289 = vstv %s288
    %v290 = vmul.f32 %v289, %v276
    %v291 = vmul.f32 %v289, %v277
    %v292 = vmul.f32 %v289, %v278
    %v293 = vmul.f32 %v289, %v279
    %v294 = vmul.f32 %v289, %v280
    %v295 = vld [vmem:[%s126] sm:$0xff]
    %v296 = vld [vmem:[%s126 + $0x8] sm:$0xff]
    %v297 = vld [vmem:[%s126 + $0x10] sm:$0xff]
    %v298 = vld [vmem:[%s126 + $0x18] sm:$0xff]
    %v299 = vld [vmem:[%s126 + $0x20] sm:$0xff]
    %s300 = sld [smem:[#allocation4 + $0x5]]
    %v301 = vstv %s300
    %v302 = vmul.f32 %v301, %v295
    %v303 = vmul.f32 %v301, %v296
    %v304 = vmul.f32 %v301, %v297
    %v305 = vmul.f32 %v301, %v298
    %v306 = vmul.f32 %v301, %v299
    %v307 = vadd.f32 %v283, %v302
    %v308 = vadd.f32 %v284, %v303
    %v309 = vadd.f32 %v285, %v304
    %v310 = vadd.f32 %v286, %v305
    %v311 = vadd.f32 %v287, %v306
    %s312 = sld [smem:[#allocation9 + $0x5]]
    %v313 = vstv %s312
    %v314 = vmul.f32 %v313, %v295
    %v315 = vmul.f32 %v313, %v296
    %v316 = vmul.f32 %v313, %v297
    %v317 = vmul.f32 %v313, %v298
    %v318 = vmul.f32 %v313, %v299
    %v319 = vadd.f32 %v290, %v314
    %v320 = vadd.f32 %v291, %v315
    %v321 = vadd.f32 %v292, %v316
    %v322 = vadd.f32 %v293, %v317
    %v323 = vadd.f32 %v294, %v318
    %v324 = vld [vmem:[%s156] sm:$0xff]
    %v325 = vld [vmem:[%s156 + $0x8] sm:$0xff]
    %v326 = vld [vmem:[%s156 + $0x10] sm:$0xff]
    %v327 = vld [vmem:[%s156 + $0x18] sm:$0xff]
    %v328 = vld [vmem:[%s156 + $0x20] sm:$0xff]
    %s329 = sld [smem:[#allocation4 + $0x6]]
    %v330 = vstv %s329
    %v331 = vmul.f32 %v330, %v324
    %v332 = vmul.f32 %v330, %v325
    %v333 = vmul.f32 %v330, %v326
    %v334 = vmul.f32 %v330, %v327
    %v335 = vmul.f32 %v330, %v328
    %v336 = vadd.f32 %v307, %v331
    %v337 = vadd.f32 %v308, %v332
    %v338 = vadd.f32 %v309, %v333
    %v339 = vadd.f32 %v310, %v334
    %v340 = vadd.f32 %v311, %v335
    %s341 = sld [smem:[#allocation9 + $0x6]]
    %v342 = vstv %s341
    %v343 = vmul.f32 %v342, %v324
    %v344 = vmul.f32 %v342, %v325
    %v345 = vmul.f32 %v342, %v326
    %v346 = vmul.f32 %v342, %v327
    %v347 = vmul.f32 %v342, %v328
    %v348 = vadd.f32 %v319, %v343
    %v349 = vadd.f32 %v320, %v344
    %v350 = vadd.f32 %v321, %v345
    %v351 = vadd.f32 %v322, %v346
    %v352 = vadd.f32 %v323, %v347
    %v353 = vld [vmem:[%s186] sm:$0xff]
    %v354 = vld [vmem:[%s186 + $0x8] sm:$0xff]
    %v355 = vld [vmem:[%s186 + $0x10] sm:$0xff]
    %v356 = vld [vmem:[%s186 + $0x18] sm:$0xff]
    %v357 = vld [vmem:[%s186 + $0x20] sm:$0xff]
    %s358 = sld [smem:[#allocation4 + $0x7]]
    %v359 = vstv %s358
    %v360 = vmul.f32 %v359, %v353
    %v361 = vmul.f32 %v359, %v354
    %v362 = vmul.f32 %v359, %v355
    %v363 = vmul.f32 %v359, %v356
    %v364 = vmul.f32 %v359, %v357
    %v365 = vadd.f32 %v336, %v360
    %v366 = vadd.f32 %v337, %v361
    %v367 = vadd.f32 %v338, %v362
    %v368 = vadd.f32 %v339, %v363
    %v369 = vadd.f32 %v340, %v364
    %s370 = sld [smem:[#allocation9 + $0x7]]
    %v371 = vstv %s370
    %v372 = vmul.f32 %v371, %v353
    %v373 = vmul.f32 %v371, %v354
    %v374 = vmul.f32 %v371, %v355
    %v375 = vmul.f32 %v371, %v356
    %v376 = vmul.f32 %v371, %v357
    %v377 = vadd.f32 %v348, %v372
    %v378 = vadd.f32 %v349, %v373
    %v379 = vadd.f32 %v350, %v374
    %v380 = vadd.f32 %v351, %v375
    %v381 = vadd.f32 %v352, %v376
    %s382 = sld [smem:[#allocation7 + $0x1]]
    %v383 = vstv %s382
    %v384 = vadd.f32 %v365, %v383
    %v385 = vadd.f32 %v366, %v383
    %v386 = vadd.f32 %v367, %v383
    %v387 = vadd.f32 %v368, %v383
    %v388 = vadd.f32 %v369, %v383
    %v389 = vmul.f32 %v384, %v227
    %v390 = vmul.f32 %v385, %v231
    %v391 = vmul.f32 %v386, %v235
    %v392 = vmul.f32 %v387, %v239
    %v393 = vmul.f32 %v388, %v243
    %s394 = scalar_lea.vmem [#allocation2], 40
    %395 = vst [vmem:[%s394] sm:$0xff] %v389
    %396 = vst [vmem:[%s394 + $0x8] sm:$0xff] %v390
    %397 = vst [vmem:[%s394 + $0x10] sm:$0xff] %v391
    %398 = vst [vmem:[%s394 + $0x18] sm:$0xff] %v392
    %399 = vst [vmem:[%s394 + $0x20] sm:$0xff] %v393
    %s400 = sld [smem:[#allocation10 + $0x1]]
    %v401 = vstv %s400
    %v402 = vadd.f32 %v377, %v401
    %v403 = vadd.f32 %v378, %v401
    %v404 = vadd.f32 %v379, %v401
    %v405 = vadd.f32 %v380, %v401
    %v406 = vadd.f32 %v381, %v401
    %v407 = vmul.f32 %v402, %v227
    %v408 = vmul.f32 %v403, %v231
    %v409 = vmul.f32 %v404, %v235
    %v410 = vmul.f32 %v405, %v239
    %v411 = vmul.f32 %v406, %v243
    %s412 = scalar_lea.vmem [#allocation3], 40
    %413 = vst [vmem:[%s412] sm:$0xff] %v407
    %414 = vst [vmem:[%s412 + $0x8] sm:$0xff] %v408
    %415 = vst [vmem:[%s412 + $0x10] sm:$0xff] %v409
    %416 = vst [vmem:[%s412 + $0x18] sm:$0xff] %v410
    %417 = vst [vmem:[%s412 + $0x20] sm:$0xff] %v411
    %v418 = vld [vmem:[%s1] sm:$0xff]
    %v419 = vld [vmem:[%s1 + $0x8] sm:$0xff]
    %v420 = vld [vmem:[%s1 + $0x10] sm:$0xff]
    %v421 = vld [vmem:[%s1 + $0x18] sm:$0xff]
    %v422 = vld [vmem:[%s1 + $0x20] sm:$0xff]
    %s423 = sld [smem:[#allocation4 + $0x8]]
    %v424 = vstv %s423
    %v425 = vmul.f32 %v424, %v418
    %v426 = vmul.f32 %v424, %v419
    %v427 = vmul.f32 %v424, %v420
    %v428 = vmul.f32 %v424, %v421
    %v429 = vmul.f32 %v424, %v422
    %s430 = sld [smem:[#allocation9 + $0x8]]
    %v431 = vstv %s430
    %v432 = vmul.f32 %v431, %v418
    %v433 = vmul.f32 %v431, %v419
    %v434 = vmul.f32 %v431, %v420
    %v435 = vmul.f32 %v431, %v421
    %v436 = vmul.f32 %v431, %v422
    %v437 = vld [vmem:[%s126] sm:$0xff]
    %v438 = vld [vmem:[%s126 + $0x8] sm:$0xff]
    %v439 = vld [vmem:[%s126 + $0x10] sm:$0xff]
    %v440 = vld [vmem:[%s126 + $0x18] sm:$0xff]
    %v441 = vld [vmem:[%s126 + $0x20] sm:$0xff]
    %s442 = sld [smem:[#allocation4 + $0x9]]
    %v443 = vstv %s442
    %v444 = vmul.f32 %v443, %v437
    %v445 = vmul.f32 %v443, %v438
    %v446 = vmul.f32 %v443, %v439
    %v447 = vmul.f32 %v443, %v440
    %v448 = vmul.f32 %v443, %v441
    %v449 = vadd.f32 %v425, %v444
    %v450 = vadd.f32 %v426, %v445
    %v451 = vadd.f32 %v427, %v446
    %v452 = vadd.f32 %v428, %v447
    %v453 = vadd.f32 %v429, %v448
    %s454 = sld [smem:[#allocation9 + $0x9]]
    %v455 = vstv %s454
    %v456 = vmul.f32 %v455, %v437
    %v457 = vmul.f32 %v455, %v438
    %v458 = vmul.f32 %v455, %v439
    %v459 = vmul.f32 %v455, %v440
    %v460 = vmul.f32 %v455, %v441
    %v461 = vadd.f32 %v432, %v456
    %v462 = vadd.f32 %v433, %v457
    %v463 = vadd.f32 %v434, %v458
    %v464 = vadd.f32 %v435, %v459
    %v465 = vadd.f32 %v436, %v460
    %v466 = vld [vmem:[%s156] sm:$0xff]
    %v467 = vld [vmem:[%s156 + $0x8] sm:$0xff]
    %v468 = vld [vmem:[%s156 + $0x10] sm:$0xff]
    %v469 = vld [vmem:[%s156 + $0x18] sm:$0xff]
    %v470 = vld [vmem:[%s156 + $0x20] sm:$0xff]
    %s471 = sld [smem:[#allocation4 + $0xa]]
    %v472 = vstv %s471
    %v473 = vmul.f32 %v472, %v466
    %v474 = vmul.f32 %v472, %v467
    %v475 = vmul.f32 %v472, %v468
    %v476 = vmul.f32 %v472, %v469
    %v477 = vmul.f32 %v472, %v470
    %v478 = vadd.f32 %v449, %v473
    %v479 = vadd.f32 %v450, %v474
    %v480 = vadd.f32 %v451, %v475
    %v481 = vadd.f32 %v452, %v476
    %v482 = vadd.f32 %v453, %v477
    %s483 = sld [smem:[#allocation9 + $0xa]]
    %v484 = vstv %s483
    %v485 = vmul.f32 %v484, %v466
    %v486 = vmul.f32 %v484, %v467
    %v487 = vmul.f32 %v484, %v468
    %v488 = vmul.f32 %v484, %v469
    %v489 = vmul.f32 %v484, %v470
    %v490 = vadd.f32 %v461, %v485
    %v491 = vadd.f32 %v462, %v486
    %v492 = vadd.f32 %v463, %v487
    %v493 = vadd.f32 %v464, %v488
    %v494 = vadd.f32 %v465, %v489
    %v495 = vld [vmem:[%s186] sm:$0xff]
    %v496 = vld [vmem:[%s186 + $0x8] sm:$0xff]
    %v497 = vld [vmem:[%s186 + $0x10] sm:$0xff]
    %v498 = vld [vmem:[%s186 + $0x18] sm:$0xff]
    %v499 = vld [vmem:[%s186 + $0x20] sm:$0xff]
    %s500 = sld [smem:[#allocation4 + $0xb]]
    %v501 = vstv %s500
    %v502 = vmul.f32 %v501, %v495
    %v503 = vmul.f32 %v501, %v496
    %v504 = vmul.f32 %v501, %v497
    %v505 = vmul.f32 %v501, %v498
    %v506 = vmul.f32 %v501, %v499
    %v507 = vadd.f32 %v478, %v502
    %v508 = vadd.f32 %v479, %v503
    %v509 = vadd.f32 %v480, %v504
    %v510 = vadd.f32 %v481, %v505
    %v511 = vadd.f32 %v482, %v506
    %s512 = sld [smem:[#allocation9 + $0xb]]
    %v513 = vstv %s512
    %v514 = vmul.f32 %v513, %v495
    %v515 = vmul.f32 %v513, %v496
    %v516 = vmul.f32 %v513, %v497
    %v517 = vmul.f32 %v513, %v498
    %v518 = vmul.f32 %v513, %v499
    %v519 = vadd.f32 %v490, %v514
    %v520 = vadd.f32 %v491, %v515
    %v521 = vadd.f32 %v492, %v516
    %v522 = vadd.f32 %v493, %v517
    %v523 = vadd.f32 %v494, %v518
    %s524 = sld [smem:[#allocation7 + $0x2]]
    %v525 = vstv %s524
    %v526 = vadd.f32 %v507, %v525
    %v527 = vadd.f32 %v508, %v525
    %v528 = vadd.f32 %v509, %v525
    %v529 = vadd.f32 %v510, %v525
    %v530 = vadd.f32 %v511, %v525
    %v531 = vmul.f32 %v526, %v227
    %v532 = vmul.f32 %v527, %v231
    %v533 = vmul.f32 %v528, %v235
    %v534 = vmul.f32 %v529, %v239
    %v535 = vmul.f32 %v530, %v243
    %s536 = scalar_lea.vmem [#allocation2], 80
    %537 = vst [vmem:[%s536] sm:$0xff] %v531
    %538 = vst [vmem:[%s536 + $0x8] sm:$0xff] %v532
    %539 = vst [vmem:[%s536 + $0x10] sm:$0xff] %v533
    %540 = vst [vmem:[%s536 + $0x18] sm:$0xff] %v534
    %541 = vst [vmem:[%s536 + $0x20] sm:$0xff] %v535
    %s542 = sld [smem:[#allocation10 + $0x2]]
    %v543 = vstv %s542
    %v544 = vadd.f32 %v519, %v543
    %v545 = vadd.f32 %v520, %v543
    %v546 = vadd.f32 %v521, %v543
    %v547 = vadd.f32 %v522, %v543
    %v548 = vadd.f32 %v523, %v543
    %v549 = vmul.f32 %v544, %v227
    %v550 = vmul.f32 %v545, %v231
    %v551 = vmul.f32 %v546, %v235
    %v552 = vmul.f32 %v547, %v239
    %v553 = vmul.f32 %v548, %v243
    %s554 = scalar_lea.vmem [#allocation3], 80
    %555 = vst [vmem:[%s554] sm:$0xff] %v549
    %556 = vst [vmem:[%s554 + $0x8] sm:$0xff] %v550
    %557 = vst [vmem:[%s554 + $0x10] sm:$0xff] %v551
    %558 = vst [vmem:[%s554 + $0x18] sm:$0xff] %v552
    %559 = vst [vmem:[%s554 + $0x20] sm:$0xff] %v553
    %v560 = vld [vmem:[%s1] sm:$0xff]
    %v561 = vld [vmem:[%s1 + $0x8] sm:$0xff]
    %v562 = vld [vmem:[%s1 + $0x10] sm:$0xff]
    %v563 = vld [vmem:[%s1 + $0x18] sm:$0xff]
    %v564 = vld [vmem:[%s1 + $0x20] sm:$0xff]
    %s565 = sld [smem:[#allocation4 + $0xc]]
    %v566 = vstv %s565
    %v567 = vmul.f32 %v566, %v560
    %v568 = vmul.f32 %v566, %v561
    %v569 = vmul.f32 %v566, %v562
    %v570 = vmul.f32 %v566, %v563
    %v571 = vmul.f32 %v566, %v564
    %s572 = sld [smem:[#allocation9 + $0xc]]
    %v573 = vstv %s572
    %v574 = vmul.f32 %v573, %v560
    %v575 = vmul.f32 %v573, %v561
    %v576 = vmul.f32 %v573, %v562
    %v577 = vmul.f32 %v573, %v563
    %v578 = vmul.f32 %v573, %v564
    %v579 = vld [vmem:[%s126] sm:$0xff]
    %v580 = vld [vmem:[%s126 + $0x8] sm:$0xff]
    %v581 = vld [vmem:[%s126 + $0x10] sm:$0xff]
    %v582 = vld [vmem:[%s126 + $0x18] sm:$0xff]
    %v583 = vld [vmem:[%s126 + $0x20] sm:$0xff]
    %s584 = sld [smem:[#allocation4 + $0xd]]
    %v585 = vstv %s584
    %v586 = vmul.f32 %v585, %v579
    %v587 = vmul.f32 %v585, %v580
    %v588 = vmul.f32 %v585, %v581
    %v589 = vmul.f32 %v585, %v582
    %v590 = vmul.f32 %v585, %v583
    %v591 = vadd.f32 %v567, %v586
    %v592 = vadd.f32 %v568, %v587
    %v593 = vadd.f32 %v569, %v588
    %v594 = vadd.f32 %v570, %v589
    %v595 = vadd.f32 %v571, %v590
    %s596 = sld [smem:[#allocation9 + $0xd]]
    %v597 = vstv %s596
    %v598 = vmul.f32 %v597, %v579
    %v599 = vmul.f32 %v597, %v580
    %v600 = vmul.f32 %v597, %v581
    %v601 = vmul.f32 %v597, %v582
    %v602 = vmul.f32 %v597, %v583
    %v603 = vadd.f32 %v574, %v598
    %v604 = vadd.f32 %v575, %v599
    %v605 = vadd.f32 %v576, %v600
    %v606 = vadd.f32 %v577, %v601
    %v607 = vadd.f32 %v578, %v602
    %v608 = vld [vmem:[%s156] sm:$0xff]
    %v609 = vld [vmem:[%s156 + $0x8] sm:$0xff]
    %v610 = vld [vmem:[%s156 + $0x10] sm:$0xff]
    %v611 = vld [vmem:[%s156 + $0x18] sm:$0xff]
    %v612 = vld [vmem:[%s156 + $0x20] sm:$0xff]
    %s613 = sld [smem:[#allocation4 + $0xe]]
    %v614 = vstv %s613
    %v615 = vmul.f32 %v614, %v608
    %v616 = vmul.f32 %v614, %v609
    %v617 = vmul.f32 %v614, %v610
    %v618 = vmul.f32 %v614, %v611
    %v619 = vmul.f32 %v614, %v612
    %v620 = vadd.f32 %v591, %v615
    %v621 = vadd.f32 %v592, %v616
    %v622 = vadd.f32 %v593, %v617
    %v623 = vadd.f32 %v594, %v618
    %v624 = vadd.f32 %v595, %v619
    %s625 = sld [smem:[#allocation9 + $0xe]]
    %v626 = vstv %s625
    %v627 = vmul.f32 %v626, %v608
    %v628 = vmul.f32 %v626, %v609
    %v629 = vmul.f32 %v626, %v610
    %v630 = vmul.f32 %v626, %v611
    %v631 = vmul.f32 %v626, %v612
    %v632 = vadd.f32 %v603, %v627
    %v633 = vadd.f32 %v604, %v628
    %v634 = vadd.f32 %v605, %v629
    %v635 = vadd.f32 %v606, %v630
    %v636 = vadd.f32 %v607, %v631
    %v637 = vld [vmem:[%s186] sm:$0xff]
    %v638 = vld [vmem:[%s186 + $0x8] sm:$0xff]
    %v639 = vld [vmem:[%s186 + $0x10] sm:$0xff]
    %v640 = vld [vmem:[%s186 + $0x18] sm:$0xff]
    %v641 = vld [vmem:[%s186 + $0x20] sm:$0xff]
    %s642 = sld [smem:[#allocation4 + $0xf]]
    %v643 = vstv %s642
    %v644 = vmul.f32 %v643, %v637
    %v645 = vmul.f32 %v643, %v638
    %v646 = vmul.f32 %v643, %v639
    %v647 = vmul.f32 %v643, %v640
    %v648 = vmul.f32 %v643, %v641
    %v649 = vadd.f32 %v620, %v644
    %v650 = vadd.f32 %v621, %v645
    %v651 = vadd.f32 %v622, %v646
    %v652 = vadd.f32 %v623, %v647
    %v653 = vadd.f32 %v624, %v648
    %s654 = sld [smem:[#allocation9 + $0xf]]
    %v655 = vstv %s654
    %v656 = vmul.f32 %v655, %v637
    %v657 = vmul.f32 %v655, %v638
    %v658 = vmul.f32 %v655, %v639
    %v659 = vmul.f32 %v655, %v640
    %v660 = vmul.f32 %v655, %v641
    %v661 = vadd.f32 %v632, %v656
    %v662 = vadd.f32 %v633, %v657
    %v663 = vadd.f32 %v634, %v658
    %v664 = vadd.f32 %v635, %v659
    %v665 = vadd.f32 %v636, %v660
    %s666 = sld [smem:[#allocation7 + $0x3]]
    %v667 = vstv %s666
    %v668 = vadd.f32 %v649, %v667
    %v669 = vadd.f32 %v650, %v667
    %v670 = vadd.f32 %v651, %v667
    %v671 = vadd.f32 %v652, %v667
    %v672 = vadd.f32 %v653, %v667
    %v673 = vmul.f32 %v668, %v227
    %v674 = vmul.f32 %v669, %v231
    %v675 = vmul.f32 %v670, %v235
    %v676 = vmul.f32 %v671, %v239
    %v677 = vmul.f32 %v672, %v243
    %s678 = scalar_lea.vmem [#allocation2], 120
    %679 = vst [vmem:[%s678] sm:$0xff] %v673
    %680 = vst [vmem:[%s678 + $0x8] sm:$0xff] %v674
    %681 = vst [vmem:[%s678 + $0x10] sm:$0xff] %v675
    %682 = vst [vmem:[%s678 + $0x18] sm:$0xff] %v676
    %683 = vst [vmem:[%s678 + $0x20] sm:$0xff] %v677
    %s684 = sld [smem:[#allocation10 + $0x3]]
    %v685 = vstv %s684
    %v686 = vadd.f32 %v661, %v685
    %v687 = vadd.f32 %v662, %v685
    %v688 = vadd.f32 %v663, %v685
    %v689 = vadd.f32 %v664, %v685
    %v690 = vadd.f32 %v665, %v685
    %v691 = vmul.f32 %v686, %v227
    %v692 = vmul.f32 %v687, %v231
    %v693 = vmul.f32 %v688, %v235
    %v694 = vmul.f32 %v689, %v239
    %v695 = vmul.f32 %v690, %v243
    %s696 = scalar_lea.vmem [#allocation3], 120
    %697 = vst [vmem:[%s696] sm:$0xff] %v691
    %698 = vst [vmem:[%s696 + $0x8] sm:$0xff] %v692
    %699 = vst [vmem:[%s696 + $0x10] sm:$0xff] %v693
    %700 = vst [vmem:[%s696 + $0x18] sm:$0xff] %v694
    %701 = vst [vmem:[%s696 + $0x20] sm:$0xff] %v695
    %v702 = vld [vmem:[%s3] sm:$0xff]
    %v703 = vld [vmem:[%s1 + $0x8] sm:$0xff]
    %v704 = vld [vmem:[%s1 + $0x10] sm:$0xff]
    %v705 = vld [vmem:[%s1 + $0x18] sm:$0xff]
    %707 = vset.pattern.permute.xlu0 0
    %708 = vperm.xlu0 %707, %v702
    %v709 = vpop.permute.xlu0 %708
    %v711 = vmul.f32 %v709, %v703
    %v712 = vmul.f32 %v709, %v704
    %v713 = vmul.f32 %v709, %v705
    %s714 = scalar_lea.vmem %s3, 8
    %v715 = vld [vmem:[%s714] sm:$0xff]
    %v716 = vld [vmem:[%s126 + $0x8] sm:$0xff]
    %v717 = vld [vmem:[%s126 + $0x10] sm:$0xff]
    %v718 = vld [vmem:[%s126 + $0x18] sm:$0xff]
    %720 = vset.pattern.permute.xlu0 0
    %721 = vperm.xlu0 %720, %v715
    %v722 = vpop.permute.xlu0 %721
    %v724 = vmul.f32 %v722, %v716
    %v725 = vmul.f32 %v722, %v717
    %v726 = vmul.f32 %v722, %v718
    %v727 = vadd.f32 %v711, %v724
    %v728 = vadd.f32 %v712, %v725
    %v729 = vadd.f32 %v713, %v726
    %s730 = scalar_lea.vmem %s3, 16
    %v731 = vld [vmem:[%s730] sm:$0xff]
    %v732 = vld [vmem:[%s156 + $0x8] sm:$0xff]
    %v733 = vld [vmem:[%s156 + $0x10] sm:$0xff]
    %v734 = vld [vmem:[%s156 + $0x18] sm:$0xff]
    %736 = vset.pattern.permute.xlu0 0
    %737 = vperm.xlu0 %736, %v731
    %v738 = vpop.permute.xlu0 %737
    %v740 = vmul.f32 %v738, %v732
    %v741 = vmul.f32 %v738, %v733
    %v742 = vmul.f32 %v738, %v734
    %v743 = vadd.f32 %v727, %v740
    %v744 = vadd.f32 %v728, %v741
    %v745 = vadd.f32 %v729, %v742
    %s746 = scalar_lea.vmem %s3, 24
    %v747 = vld [vmem:[%s746] sm:$0xff]
    %v748 = vld [vmem:[%s186 + $0x8] sm:$0xff]
    %v749 = vld [vmem:[%s186 + $0x10] sm:$0xff]
    %v750 = vld [vmem:[%s186 + $0x18] sm:$0xff]
    %752 = vset.pattern.permute.xlu0 0
    %753 = vperm.xlu0 %752, %v747
    %v754 = vpop.permute.xlu0 %753
    %v756 = vmul.f32 %v754, %v748
    %v757 = vmul.f32 %v754, %v749
    %v758 = vmul.f32 %v754, %v750
    %v759 = vadd.f32 %v743, %v756
    %v760 = vadd.f32 %v744, %v757
    %v761 = vadd.f32 %v745, %v758
    %v762 = vld [vmem:[%s4] sm:$0xff]
    %764 = vset.pattern.permute.xlu0 0
    %765 = vperm.xlu0 %764, %v762
    %v766 = vpop.permute.xlu0 %765
    %v768 = vadd.f32 %v759, %v766
    %v769 = vadd.f32 %v760, %v766
    %v770 = vadd.f32 %v761, %v766
    %v772 = vlaneseq
    %v773 = vshrl.u32 %v772, 7
    %v774 = vsub.s32 0, %v773
    %v775 = vrot.slane %v106, %v774
    %v776 = vlaneseq
    %v777 = vshrl.u32 %v776, 7
    %v778 = vsub.s32 1, %v777
    %v779 = vrot.slane %v106, %v778
    %v780 = vlaneseq
    %v781 = vshrl.u32 %v780, 7
    %v782 = vsub.s32 2, %v781
    %v783 = vrot.slane %v106, %v782
    %v787 = vmul.f32 %v768, %v775
    %v788 = vmul.f32 %v769, %v779
    %v789 = vmul.f32 %v770, %v783
    %v790 = vmul.f32 %v787, %v787
    %v791 = vmul.f32 %v788, %v788
    %v792 = vmul.f32 %v789, %v789
    %v793 = vadd.f32 %v787, %v788
    %v794 = vadd.f32 %v793, %v789
    %795 = vadd.xlane.f32.xlu0 %v794
    %v796 = vpop.xlane.xlu0 %795
    %v797 = vadd.f32 %v790, %v791
    %v798 = vadd.f32 %v797, %v792
    %799 = vadd.xlane.f32.xlu0 %v798
    %v800 = vpop.xlane.xlu0 %799
    %v802 = vrot.slane %v796, 4
    %v804 = vadd.f32 %v796, %v802
    %v806 = vrot.slane %v804, 4
    %vm808 = vcmask 1043456
    %v809 = vsel %vm808, %v804, %v806
    %v810 = vmul.f32 %v809, 0.001953125
    %v812 = vrot.slane %v800, 4
    %v814 = vadd.f32 %v800, %v812
    %v816 = vrot.slane %v814, 4
    %v818 = vsel %vm808, %v814, %v816
    %v819 = vmul.f32 %v818, 0.001953125
    %v820 = vmul.f32 %v810, %v810
    %v821 = vsub.f32 %v819, %v820
    %v822 = vadd.f32 %v821, 0.001
    %v823 = vrsqrt.pop %v822
    %v824 = vld [vmem:[%s11] sm:$0xff]
    %v825 = vmul.f32 %v823, %v824
    %v826 = vld [vmem:[%s12] sm:$0xff]
    %v827 = vmul.f32 %v810, %v825
    %v828 = vsub.f32 %v826, %v827
    %830 = vset.pattern.permute.xlu0 0
    %831 = vperm.xlu0 %830, %v825
    %v832 = vpop.permute.xlu0 %831
    %v834 = vmul.f32 %v768, %v832
    %v835 = vmul.f32 %v769, %v832
    %v836 = vmul.f32 %v770, %v832
    %838 = vset.pattern.permute.xlu0 0
    %839 = vperm.xlu0 %838, %v828
    %v840 = vpop.permute.xlu0 %839
    %v842 = vadd.f32 %v834, %v840
    %v843 = vadd.f32 %v835, %v840
    %v844 = vadd.f32 %v836, %v840
    %v845 = vmax.f32 %v842, 0.0
    %v846 = vmax.f32 %v843, 0.0
    %v847 = vmax.f32 %v844, 0.0
    %848 = vst [vmem:[#allocation12] sm:$0xff] %v845
    %849 = vst [vmem:[#allocation12 + $0x8] sm:$0xff] %v846
    %850 = vst [vmem:[#allocation12 + $0x10] sm:$0xff] %v847
    %v851 = vld [vmem:[#allocation2] sm:$0xff]
    %v852 = vld [vmem:[#allocation2 + $0x8] sm:$0xff]
    %v853 = vld [vmem:[#allocation2 + $0x10] sm:$0xff]
    %v854 = vld [vmem:[#allocation2 + $0x18] sm:$0xff]
    %v855 = vld [vmem:[%s7] sm:$0xff]
    %857 = vset.pattern.permute.xlu0 0
    %858 = vperm.xlu0 %857, %v855
    %v859 = vpop.permute.xlu0 %858
    %v861 = vmul.f32 %v859, %v851
    %v862 = vmul.f32 %v859, %v852
    %v863 = vmul.f32 %v859, %v853
    %v864 = vmul.f32 %v859, %v854
    %s865 = scalar_lea.vmem %s7, 8
    %v866 = vld [vmem:[%s865] sm:$0xff]
    %868 = vset.pattern.permute.xlu0 0
    %869 = vperm.xlu0 %868, %v866
    %v870 = vpop.permute.xlu0 %869
    %v872 = vmul.f32 %v870, %v851
    %v873 = vmul.f32 %v870, %v852
    %v874 = vmul.f32 %v870, %v853
    %v875 = vmul.f32 %v870, %v854
    %880 = vrot.lane.b32.xlu0 %v872, 127
    %v881 = vpop.permute.xlu0 %880
    %882 = vrot.lane.b32.xlu0 %v873, 127
    %v883 = vpop.permute.xlu0 %882
    %884 = vrot.lane.b32.xlu0 %v874, 127
    %v885 = vpop.permute.xlu0 %884
    %886 = vrot.lane.b32.xlu0 %v875, 127
    %v887 = vpop.permute.xlu0 %886
    %vm888 = vcmask 1039360
    %v889 = vsel %vm888, %v881, %v883
    %v890 = vsel %vm888, %v883, %v885
    %v891 = vsel %vm888, %v885, %v887
    %v896 = vadd.f32 %v861, %v889
    %v897 = vadd.f32 %v862, %v890
    %v898 = vadd.f32 %v863, %v891
    %v899 = vadd.f32 %v864, %v887
    %s900 = scalar_lea.vmem %s7, 16
    %v901 = vld [vmem:[%s900] sm:$0xff]
    %903 = vset.pattern.permute.xlu0 0
    %904 = vperm.xlu0 %903, %v901
    %v905 = vpop.permute.xlu0 %904
    %v907 = vmul.f32 %v905, %v851
    %v908 = vmul.f32 %v905, %v852
    %v909 = vmul.f32 %v905, %v853
    %v910 = vmul.f32 %v905, %v854
    %915 = vrot.lane.b32.xlu0 %v907, 126
    %v916 = vpop.permute.xlu0 %915
    %917 = vrot.lane.b32.xlu0 %v908, 126
    %v918 = vpop.permute.xlu0 %917
    %919 = vrot.lane.b32.xlu0 %v909, 126
    %v920 = vpop.permute.xlu0 %919
    %921 = vrot.lane.b32.xlu0 %v910, 126
    %v922 = vpop.permute.xlu0 %921
    %vm923 = vcmask 1031168
    %v924 = vsel %vm923, %v916, %v918
    %v925 = vsel %vm923, %v918, %v920
    %v926 = vsel %vm923, %v920, %v922
    %v931 = vadd.f32 %v896, %v924
    %v932 = vadd.f32 %v897, %v925
    %v933 = vadd.f32 %v898, %v926
    %v934 = vadd.f32 %v899, %v922
    %s935 = scalar_lea.vmem %s7, 24
    %v936 = vld [vmem:[%s935] sm:$0xff]
    %938 = vset.pattern.permute.xlu0 0
    %939 = vperm.xlu0 %938, %v936
    %v940 = vpop.permute.xlu0 %939
    %v942 = vmul.f32 %v940, %v851
    %v943 = vmul.f32 %v940, %v852
    %v944 = vmul.f32 %v940, %v853
    %v945 = vmul.f32 %v940, %v854
    %950 = vrot.lane.b32.xlu0 %v942, 104
    %v951 = vpop.permute.xlu0 %950
    %952 = vrot.lane.b32.xlu0 %v943, 104
    %v953 = vpop.permute.xlu0 %952
    %954 = vrot.lane.b32.xlu0 %v944, 104
    %v955 = vpop.permute.xlu0 %954
    %956 = vrot.lane.b32.xlu0 %v945, 104
    %v957 = vpop.permute.xlu0 %956
    %vm958 = vcmask 850944
    %v959 = vsel %vm958, %v951, %v953
    %v960 = vsel %vm958, %v953, %v955
    %v961 = vsel %vm958, %v955, %v957
    %v966 = vadd.f32 %v931, %v959
    %v967 = vadd.f32 %v932, %v960
    %v968 = vadd.f32 %v933, %v961
    %v969 = vadd.f32 %v934, %v957
    %s970 = scalar_lea.vmem %s7, 32
    %v971 = vld [vmem:[%s970] sm:$0xff]
    %973 = vset.pattern.permute.xlu0 0
    %974 = vperm.xlu0 %973, %v971
    %v975 = vpop.permute.xlu0 %974
    %v977 = vmul.f32 %v975, %v852
    %v978 = vmul.f32 %v975, %v853
    %v979 = vmul.f32 %v975, %v854
    %983 = vrot.lane.b32.xlu0 %v977, 103
    %v984 = vpop.permute.xlu0 %983
    %985 = vrot.lane.b32.xlu0 %v978, 103
    %v986 = vpop.permute.xlu0 %985
    %987 = vrot.lane.b32.xlu0 %v979, 103
    %v988 = vpop.permute.xlu0 %987
    %vm989 = vcmask 842752
    %v990 = vsel %vm989, %v984, %v986
    %v991 = vsel %vm989, %v986, %v988
    %v996 = vadd.f32 %v966, %v984
    %v997 = vadd.f32 %v967, %v990
    %v998 = vadd.f32 %v968, %v991
    %v999 = vadd.f32 %v969, %v988
    %v1000 = vld [vmem:[#allocation2 + $0x8] sm:$0xff]
    %v1001 = vld [vmem:[#allocation2 + $0x10] sm:$0xff]
    %v1002 = vld [vmem:[#allocation2 + $0x18] sm:$0xff]
    %v1003 = vld [vmem:[#allocation2 + $0x20] sm:$0xff]
    %s1004 = scalar_lea.vmem %s7, 40
    %v1005 = vld [vmem:[%s1004] sm:$0xff]
    %1007 = vset.pattern.permute.xlu0 0
    %1008 = vperm.xlu0 %1007, %v1005
    %v1009 = vpop.permute.xlu0 %1008
    %v1011 = vmul.f32 %v1009, %v1000
    %v1012 = vmul.f32 %v1009, %v1001
    %v1013 = vmul.f32 %v1009, %v1002
    %v1014 = vmul.f32 %v1009, %v1003
    %1019 = vrot.lane.b32.xlu0 %v1011, 102
    %v1020 = vpop.permute.xlu0 %1019
    %1021 = vrot.lane.b32.xlu0 %v1012, 102
    %v1022 = vpop.permute.xlu0 %1021
    %1023 = vrot.lane.b32.xlu0 %v1013, 102
    %v1024 = vpop.permute.xlu0 %1023
    %1025 = vrot.lane.b32.xlu0 %v1014, 102
    %v1026 = vpop.permute.xlu0 %1025
    %vm1027 = vcmask 834560
    %v1028 = vsel %vm1027, %v1020, %v1022
    %v1029 = vsel %vm1027, %v1022, %v1024
    %v1030 = vsel %vm1027, %v1024, %v1026
    %v1035 = vadd.f32 %v996, %v1020
    %v1036 = vadd.f32 %v997, %v1028
    %v1037 = vadd.f32 %v998, %v1029
    %v1038 = vadd.f32 %v999, %v1030
    %s1039 = scalar_lea.vmem %s7, 48
    %v1040 = vld [vmem:[%s1039] sm:$0xff]
    %1042 = vset.pattern.permute.xlu0 0
    %1043 = vperm.xlu0 %1042, %v1040
    %v1044 = vpop.permute.xlu0 %1043
    %v1046 = vmul.f32 %v1044, %v1000
    %v1047 = vmul.f32 %v1044, %v1001
    %v1048 = vmul.f32 %v1044, %v1002
    %v1049 = vmul.f32 %v1044, %v1003
    %1054 = vrot.lane.b32.xlu0 %v1046, 80
    %v1055 = vpop.permute.xlu0 %1054
    %1056 = vrot.lane.b32.xlu0 %v1047, 80
    %v1057 = vpop.permute.xlu0 %1056
    %1058 = vrot.lane.b32.xlu0 %v1048, 80
    %v1059 = vpop.permute.xlu0 %1058
    %1060 = vrot.lane.b32.xlu0 %v1049, 80
    %v1061 = vpop.permute.xlu0 %1060
    %vm1062 = vcmask 654336
    %v1063 = vsel %vm1062, %v1055, %v1057
    %v1064 = vsel %vm1062, %v1057, %v1059
    %v1065 = vsel %vm1062, %v1059, %v1061
    %v1070 = vadd.f32 %v1035, %v1055
    %v1071 = vadd.f32 %v1036, %v1063
    %v1072 = vadd.f32 %v1037, %v1064
    %v1073 = vadd.f32 %v1038, %v1065
    %s1074 = scalar_lea.vmem %s7, 56
    %v1075 = vld [vmem:[%s1074] sm:$0xff]
    %1077 = vset.pattern.permute.xlu0 0
    %1078 = vperm.xlu0 %1077, %v1075
    %v1079 = vpop.permute.xlu0 %1078
    %v1081 = vmul.f32 %v1079, %v1000
    %v1082 = vmul.f32 %v1079, %v1001
    %v1083 = vmul.f32 %v1079, %v1002
    %v1084 = vmul.f32 %v1079, %v1003
    %1089 = vrot.lane.b32.xlu0 %v1081, 79
    %v1090 = vpop.permute.xlu0 %1089
    %1091 = vrot.lane.b32.xlu0 %v1082, 79
    %v1092 = vpop.permute.xlu0 %1091
    %1093 = vrot.lane.b32.xlu0 %v1083, 79
    %v1094 = vpop.permute.xlu0 %1093
    %1095 = vrot.lane.b32.xlu0 %v1084, 79
    %v1096 = vpop.permute.xlu0 %1095
    %vm1097 = vcmask 646144
    %v1098 = vsel %vm1097, %v1090, %v1092
    %v1099 = vsel %vm1097, %v1092, %v1094
    %v1100 = vsel %vm1097, %v1094, %v1096
    %v1105 = vadd.f32 %v1070, %v1090
    %v1106 = vadd.f32 %v1071, %v1098
    %v1107 = vadd.f32 %v1072, %v1099
    %v1108 = vadd.f32 %v1073, %v1100
    %s1109 = scalar_lea.vmem %s7, 64
    %v1110 = vld [vmem:[%s1109] sm:$0xff]
    %1112 = vset.pattern.permute.xlu0 0
    %1113 = vperm.xlu0 %1112, %v1110
    %v1114 = vpop.permute.xlu0 %1113
    %v1116 = vmul.f32 %v1114, %v1000
    %v1117 = vmul.f32 %v1114, %v1001
    %v1118 = vmul.f32 %v1114, %v1002
    %v1119 = vmul.f32 %v1114, %v1003
    %1124 = vrot.lane.b32.xlu0 %v1116, 78
    %v1125 = vpop.permute.xlu0 %1124
    %1126 = vrot.lane.b32.xlu0 %v1117, 78
    %v1127 = vpop.permute.xlu0 %1126
    %1128 = vrot.lane.b32.xlu0 %v1118, 78
    %v1129 = vpop.permute.xlu0 %1128
    %1130 = vrot.lane.b32.xlu0 %v1119, 78
    %v1131 = vpop.permute.xlu0 %1130
    %vm1132 = vcmask 637952
    %v1133 = vsel %vm1132, %v1125, %v1127
    %v1134 = vsel %vm1132, %v1127, %v1129
    %v1135 = vsel %vm1132, %v1129, %v1131
    %v1140 = vadd.f32 %v1105, %v1125
    %v1141 = vadd.f32 %v1106, %v1133
    %v1142 = vadd.f32 %v1107, %v1134
    %v1143 = vadd.f32 %v1108, %v1135
    %v1144 = vld [vmem:[%s394] sm:$0xff]
    %v1145 = vld [vmem:[%s394 + $0x8] sm:$0xff]
    %v1146 = vld [vmem:[%s394 + $0x10] sm:$0xff]
    %v1147 = vld [vmem:[%s394 + $0x18] sm:$0xff]
    %s1148 = scalar_lea.vmem %s7, 72
    %v1149 = vld [vmem:[%s1148] sm:$0xff]
    %1151 = vset.pattern.permute.xlu0 0
    %1152 = vperm.xlu0 %1151, %v1149
    %v1153 = vpop.permute.xlu0 %1152
    %v1155 = vmul.f32 %v1153, %v1144
    %v1156 = vmul.f32 %v1153, %v1145
    %v1157 = vmul.f32 %v1153, %v1146
    %v1158 = vmul.f32 %v1153, %v1147
    %s1159 = scalar_lea.vmem %s7, 80
    %v1160 = vld [vmem:[%s1159] sm:$0xff]
    %1162 = vset.pattern.permute.xlu0 0
    %1163 = vperm.xlu0 %1162, %v1160
    %v1164 = vpop.permute.xlu0 %1163
    %v1166 = vmul.f32 %v1164, %v1144
    %v1167 = vmul.f32 %v1164, %v1145
    %v1168 = vmul.f32 %v1164, %v1146
    %v1169 = vmul.f32 %v1164, %v1147
    %1174 = vrot.lane.b32.xlu0 %v1166, 127
    %v1175 = vpop.permute.xlu0 %1174
    %1176 = vrot.lane.b32.xlu0 %v1167, 127
    %v1177 = vpop.permute.xlu0 %1176
    %1178 = vrot.lane.b32.xlu0 %v1168, 127
    %v1179 = vpop.permute.xlu0 %1178
    %1180 = vrot.lane.b32.xlu0 %v1169, 127
    %v1181 = vpop.permute.xlu0 %1180
    %v1182 = vsel %vm888, %v1175, %v1177
    %v1183 = vsel %vm888, %v1177, %v1179
    %v1184 = vsel %vm888, %v1179, %v1181
    %v1189 = vadd.f32 %v1155, %v1182
    %v1190 = vadd.f32 %v1156, %v1183
    %v1191 = vadd.f32 %v1157, %v1184
    %v1192 = vadd.f32 %v1158, %v1181
    %s1193 = scalar_lea.vmem %s7, 88
    %v1194 = vld [vmem:[%s1193] sm:$0xff]
    %1196 = vset.pattern.permute.xlu0 0
    %1197 = vperm.xlu0 %1196, %v1194
    %v1198 = vpop.permute.xlu0 %1197
    %v1200 = vmul.f32 %v1198, %v1144
    %v1201 = vmul.f32 %v1198, %v1145
    %v1202 = vmul.f32 %v1198, %v1146
    %v1203 = vmul.f32 %v1198, %v1147
    %1208 = vrot.lane.b32.xlu0 %v1200, 126
    %v1209 = vpop.permute.xlu0 %1208
    %1210 = vrot.lane.b32.xlu0 %v1201, 126
    %v1211 = vpop.permute.xlu0 %1210
    %1212 = vrot.lane.b32.xlu0 %v1202, 126
    %v1213 = vpop.permute.xlu0 %1212
    %1214 = vrot.lane.b32.xlu0 %v1203, 126
    %v1215 = vpop.permute.xlu0 %1214
    %v1216 = vsel %vm923, %v1209, %v1211
    %v1217 = vsel %vm923, %v1211, %v1213
    %v1218 = vsel %vm923, %v1213, %v1215
    %v1223 = vadd.f32 %v1189, %v1216
    %v1224 = vadd.f32 %v1190, %v1217
    %v1225 = vadd.f32 %v1191, %v1218
    %v1226 = vadd.f32 %v1192, %v1215
    %s1227 = scalar_lea.vmem %s7, 96
    %v1228 = vld [vmem:[%s1227] sm:$0xff]
    %1230 = vset.pattern.permute.xlu0 0
    %1231 = vperm.xlu0 %1230, %v1228
    %v1232 = vpop.permute.xlu0 %1231
    %v1234 = vmul.f32 %v1232, %v1144
    %v1235 = vmul.f32 %v1232, %v1145
    %v1236 = vmul.f32 %v1232, %v1146
    %v1237 = vmul.f32 %v1232, %v1147
    %1242 = vrot.lane.b32.xlu0 %v1234, 104
    %v1243 = vpop.permute.xlu0 %1242
    %1244 = vrot.lane.b32.xlu0 %v1235, 104
    %v1245 = vpop.permute.xlu0 %1244
    %1246 = vrot.lane.b32.xlu0 %v1236, 104
    %v1247 = vpop.permute.xlu0 %1246
    %1248 = vrot.lane.b32.xlu0 %v1237, 104
    %v1249 = vpop.permute.xlu0 %1248
    %v1250 = vsel %vm958, %v1243, %v1245
    %v1251 = vsel %vm958, %v1245, %v1247
    %v1252 = vsel %vm958, %v1247, %v1249
    %v1257 = vadd.f32 %v1223, %v1250
    %v1258 = vadd.f32 %v1224, %v1251
    %v1259 = vadd.f32 %v1225, %v1252
    %v1260 = vadd.f32 %v1226, %v1249
    %s1261 = scalar_lea.vmem %s7, 104
    %v1262 = vld [vmem:[%s1261] sm:$0xff]
    %1264 = vset.pattern.permute.xlu0 0
    %1265 = vperm.xlu0 %1264, %v1262
    %v1266 = vpop.permute.xlu0 %1265
    %v1268 = vmul.f32 %v1266, %v1145
    %v1269 = vmul.f32 %v1266, %v1146
    %v1270 = vmul.f32 %v1266, %v1147
    %1274 = vrot.lane.b32.xlu0 %v1268, 103
    %v1275 = vpop.permute.xlu0 %1274
    %1276 = vrot.lane.b32.xlu0 %v1269, 103
    %v1277 = vpop.permute.xlu0 %1276
    %1278 = vrot.lane.b32.xlu0 %v1270, 103
    %v1279 = vpop.permute.xlu0 %1278
    %v1280 = vsel %vm989, %v1275, %v1277
    %v1281 = vsel %vm989, %v1277, %v1279
    %v1286 = vadd.f32 %v1257, %v1275
    %v1287 = vadd.f32 %v1258, %v1280
    %v1288 = vadd.f32 %v1259, %v1281
    %v1289 = vadd.f32 %v1260, %v1279
    %v1290 = vld [vmem:[%s394 + $0x8] sm:$0xff]
    %v1291 = vld [vmem:[%s394 + $0x10] sm:$0xff]
    %v1292 = vld [vmem:[%s394 + $0x18] sm:$0xff]
    %v1293 = vld [vmem:[%s394 + $0x20] sm:$0xff]
    %s1294 = scalar_lea.vmem %s7, 112
    %v1295 = vld [vmem:[%s1294] sm:$0xff]
    %1297 = vset.pattern.permute.xlu0 0
    %1298 = vperm.xlu0 %1297, %v1295
    %v1299 = vpop.permute.xlu0 %1298
    %v1301 = vmul.f32 %v1299, %v1290
    %v1302 = vmul.f32 %v1299, %v1291
    %v1303 = vmul.f32 %v1299, %v1292
    %v1304 = vmul.f32 %v1299, %v1293
    %1309 = vrot.lane.b32.xlu0 %v1301, 102
    %v1310 = vpop.permute.xlu0 %1309
    %1311 = vrot.lane.b32.xlu0 %v1302, 102
    %v1312 = vpop.permute.xlu0 %1311
    %1313 = vrot.lane.b32.xlu0 %v1303, 102
    %v1314 = vpop.permute.xlu0 %1313
    %1315 = vrot.lane.b32.xlu0 %v1304, 102
    %v1316 = vpop.permute.xlu0 %1315
    %v1317 = vsel %vm1027, %v1310, %v1312
    %v1318 = vsel %vm1027, %v1312, %v1314
    %v1319 = vsel %vm1027, %v1314, %v1316
    %v1324 = vadd.f32 %v1286, %v1310
    %v1325 = vadd.f32 %v1287, %v1317
    %v1326 = vadd.f32 %v1288, %v1318
    %v1327 = vadd.f32 %v1289, %v1319
    %s1328 = scalar_lea.vmem %s7, 120
    %v1329 = vld [vmem:[%s1328] sm:$0xff]
    %1331 = vset.pattern.permute.xlu0 0
    %1332 = vperm.xlu0 %1331, %v1329
    %v1333 = vpop.permute.xlu0 %1332
    %v1335 = vmul.f32 %v1333, %v1290
    %v1336 = vmul.f32 %v1333, %v1291
    %v1337 = vmul.f32 %v1333, %v1292
    %v1338 = vmul.f32 %v1333, %v1293
    %1343 = vrot.lane.b32.xlu0 %v1335, 80
    %v1344 = vpop.permute.xlu0 %1343
    %1345 = vrot.lane.b32.xlu0 %v1336, 80
    %v1346 = vpop.permute.xlu0 %1345
    %1347 = vrot.lane.b32.xlu0 %v1337, 80
    %v1348 = vpop.permute.xlu0 %1347
    %1349 = vrot.lane.b32.xlu0 %v1338, 80
    %v1350 = vpop.permute.xlu0 %1349
    %v1351 = vsel %vm1062, %v1344, %v1346
    %v1352 = vsel %vm1062, %v1346, %v1348
    %v1353 = vsel %vm1062, %v1348, %v1350
    %v1358 = vadd.f32 %v1324, %v1344
    %v1359 = vadd.f32 %v1325, %v1351
    %v1360 = vadd.f32 %v1326, %v1352
    %v1361 = vadd.f32 %v1327, %v1353
    %s1362 = scalar_lea.vmem %s7, 128
    %v1363 = vld [vmem:[%s1362] sm:$0xff]
    %1365 = vset.pattern.permute.xlu0 0
    %1366 = vperm.xlu0 %1365, %v1363
    %v1367 = vpop.permute.xlu0 %1366
    %v1369 = vmul.f32 %v1367, %v1290
    %v1370 = vmul.f32 %v1367, %v1291
    %v1371 = vmul.f32 %v1367, %v1292
    %v1372 = vmul.f32 %v1367, %v1293
    %1377 = vrot.lane.b32.xlu0 %v1369, 79
    %v1378 = vpop.permute.xlu0 %1377
    %1379 = vrot.lane.b32.xlu0 %v1370, 79
    %v1380 = vpop.permute.xlu0 %1379
    %1381 = vrot.lane.b32.xlu0 %v1371, 79
    %v1382 = vpop.permute.xlu0 %1381
    %1383 = vrot.lane.b32.xlu0 %v1372, 79
    %v1384 = vpop.permute.xlu0 %1383
    %v1385 = vsel %vm1097, %v1378, %v1380
    %v1386 = vsel %vm1097, %v1380, %v1382
    %v1387 = vsel %vm1097, %v1382, %v1384
    %v1392 = vadd.f32 %v1358, %v1378
    %v1393 = vadd.f32 %v1359, %v1385
    %v1394 = vadd.f32 %v1360, %v1386
    %v1395 = vadd.f32 %v1361, %v1387
    %s1396 = scalar_lea.vmem %s7, 136
    %v1397 = vld [vmem:[%s1396] sm:$0xff]
    %1399 = vset.pattern.permute.xlu0 0
    %1400 = vperm.xlu0 %1399, %v1397
    %v1401 = vpop.permute.xlu0 %1400
    %v1403 = vmul.f32 %v1401, %v1290
    %v1404 = vmul.f32 %v1401, %v1291
    %v1405 = vmul.f32 %v1401, %v1292
    %v1406 = vmul.f32 %v1401, %v1293
    %1411 = vrot.lane.b32.xlu0 %v1403, 78
    %v1412 = vpop.permute.xlu0 %1411
    %1413 = vrot.lane.b32.xlu0 %v1404, 78
    %v1414 = vpop.permute.xlu0 %1413
    %1415 = vrot.lane.b32.xlu0 %v1405, 78
    %v1416 = vpop.permute.xlu0 %1415
    %1417 = vrot.lane.b32.xlu0 %v1406, 78
    %v1418 = vpop.permute.xlu0 %1417
    %v1419 = vsel %vm1132, %v1412, %v1414
    %v1420 = vsel %vm1132, %v1414, %v1416
    %v1421 = vsel %vm1132, %v1416, %v1418
    %v1426 = vadd.f32 %v1392, %v1412
    %v1427 = vadd.f32 %v1393, %v1419
    %v1428 = vadd.f32 %v1394, %v1420
    %v1429 = vadd.f32 %v1395, %v1421
    %v1430 = vadd.f32 %v1140, %v1426
    %v1431 = vadd.f32 %v1141, %v1427
    %v1432 = vadd.f32 %v1142, %v1428
    %v1433 = vadd.f32 %v1143, %v1429
    %v1434 = vld [vmem:[%s536] sm:$0xff]
    %v1435 = vld [vmem:[%s536 + $0x8] sm:$0xff]
    %v1436 = vld [vmem:[%s536 + $0x10] sm:$0xff]
    %v1437 = vld [vmem:[%s536 + $0x18] sm:$0xff]
    %s1438 = scalar_lea.vmem %s7, 144
    %v1439 = vld [vmem:[%s1438] sm:$0xff]
    %1441 = vset.pattern.permute.xlu0 0
    %1442 = vperm.xlu0 %1441, %v1439
    %v1443 = vpop.permute.xlu0 %1442
    %v1445 = vmul.f32 %v1443, %v1434
    %v1446 = vmul.f32 %v1443, %v1435
    %v1447 = vmul.f32 %v1443, %v1436
    %v1448 = vmul.f32 %v1443, %v1437
    %s1449 = scalar_lea.vmem %s7, 152
    %v1450 = vld [vmem:[%s1449] sm:$0xff]
    %1452 = vset.pattern.permute.xlu0 0
    %1453 = vperm.xlu0 %1452, %v1450
    %v1454 = vpop.permute.xlu0 %1453
    %v1456 = vmul.f32 %v1454, %v1434
    %v1457 = vmul.f32 %v1454, %v1435
    %v1458 = vmul.f32 %v1454, %v1436
    %v1459 = vmul.f32 %v1454, %v1437
    %1464 = vrot.lane.b32.xlu0 %v1456, 127
    %v1465 = vpop.permute.xlu0 %1464
    %1466 = vrot.lane.b32.xlu0 %v1457, 127
    %v1467 = vpop.permute.xlu0 %1466
    %1468 = vrot.lane.b32.xlu0 %v1458, 127
    %v1469 = vpop.permute.xlu0 %1468
    %1470 = vrot.lane.b32.xlu0 %v1459, 127
    %v1471 = vpop.permute.xlu0 %1470
    %v1472 = vsel %vm888, %v1465, %v1467
    %v1473 = vsel %vm888, %v1467, %v1469
    %v1474 = vsel %vm888, %v1469, %v1471
    %v1479 = vadd.f32 %v1445, %v1472
    %v1480 = vadd.f32 %v1446, %v1473
    %v1481 = vadd.f32 %v1447, %v1474
    %v1482 = vadd.f32 %v1448, %v1471
    %s1483 = scalar_lea.vmem %s7, 160
    %v1484 = vld [vmem:[%s1483] sm:$0xff]
    %1486 = vset.pattern.permute.xlu0 0
    %1487 = vperm.xlu0 %1486, %v1484
    %v1488 = vpop.permute.xlu0 %1487
    %v1490 = vmul.f32 %v1488, %v1434
    %v1491 = vmul.f32 %v1488, %v1435
    %v1492 = vmul.f32 %v1488, %v1436
    %v1493 = vmul.f32 %v1488, %v1437
    %1498 = vrot.lane.b32.xlu0 %v1490, 126
    %v1499 = vpop.permute.xlu0 %1498
    %1500 = vrot.lane.b32.xlu0 %v1491, 126
    %v1501 = vpop.permute.xlu0 %1500
    %1502 = vrot.lane.b32.xlu0 %v1492, 126
    %v1503 = vpop.permute.xlu0 %1502
    %1504 = vrot.lane.b32.xlu0 %v1493, 126
    %v1505 = vpop.permute.xlu0 %1504
    %v1506 = vsel %vm923, %v1499, %v1501
    %v1507 = vsel %vm923, %v1501, %v1503
    %v1508 = vsel %vm923, %v1503, %v1505
    %v1513 = vadd.f32 %v1479, %v1506
    %v1514 = vadd.f32 %v1480, %v1507
    %v1515 = vadd.f32 %v1481, %v1508
    %v1516 = vadd.f32 %v1482, %v1505
    %s1517 = scalar_lea.vmem %s7, 168
    %v1518 = vld [vmem:[%s1517] sm:$0xff]
    %1520 = vset.pattern.permute.xlu0 0
    %1521 = vperm.xlu0 %1520, %v1518
    %v1522 = vpop.permute.xlu0 %1521
    %v1524 = vmul.f32 %v1522, %v1434
    %v1525 = vmul.f32 %v1522, %v1435
    %v1526 = vmul.f32 %v1522, %v1436
    %v1527 = vmul.f32 %v1522, %v1437
    %1532 = vrot.lane.b32.xlu0 %v1524, 104
    %v1533 = vpop.permute.xlu0 %1532
    %1534 = vrot.lane.b32.xlu0 %v1525, 104
    %v1535 = vpop.permute.xlu0 %1534
    %1536 = vrot.lane.b32.xlu0 %v1526, 104
    %v1537 = vpop.permute.xlu0 %1536
    %1538 = vrot.lane.b32.xlu0 %v1527, 104
    %v1539 = vpop.permute.xlu0 %1538
    %v1540 = vsel %vm958, %v1533, %v1535
    %v1541 = vsel %vm958, %v1535, %v1537
    %v1542 = vsel %vm958, %v1537, %v1539
    %v1547 = vadd.f32 %v1513, %v1540
    %v1548 = vadd.f32 %v1514, %v1541
    %v1549 = vadd.f32 %v1515, %v1542
    %v1550 = vadd.f32 %v1516, %v1539
    %s1551 = scalar_lea.vmem %s7, 176
    %v1552 = vld [vmem:[%s1551] sm:$0xff]
    %1554 = vset.pattern.permute.xlu0 0
    %1555 = vperm.xlu0 %1554, %v1552
    %v1556 = vpop.permute.xlu0 %1555
    %v1558 = vmul.f32 %v1556, %v1435
    %v1559 = vmul.f32 %v1556, %v1436
    %v1560 = vmul.f32 %v1556, %v1437
    %1564 = vrot.lane.b32.xlu0 %v1558, 103
    %v1565 = vpop.permute.xlu0 %1564
    %1566 = vrot.lane.b32.xlu0 %v1559, 103
    %v1567 = vpop.permute.xlu0 %1566
    %1568 = vrot.lane.b32.xlu0 %v1560, 103
    %v1569 = vpop.permute.xlu0 %1568
    %v1570 = vsel %vm989, %v1565, %v1567
    %v1571 = vsel %vm989, %v1567, %v1569
    %v1576 = vadd.f32 %v1547, %v1565
    %v1577 = vadd.f32 %v1548, %v1570
    %v1578 = vadd.f32 %v1549, %v1571
    %v1579 = vadd.f32 %v1550, %v1569
    %v1580 = vld [vmem:[%s536 + $0x8] sm:$0xff]
    %v1581 = vld [vmem:[%s536 + $0x10] sm:$0xff]
    %v1582 = vld [vmem:[%s536 + $0x18] sm:$0xff]
    %v1583 = vld [vmem:[%s536 + $0x20] sm:$0xff]
    %s1584 = scalar_lea.vmem %s7, 184
    %v1585 = vld [vmem:[%s1584] sm:$0xff]
    %1587 = vset.pattern.permute.xlu0 0
    %1588 = vperm.xlu0 %1587, %v1585
    %v1589 = vpop.permute.xlu0 %1588
    %v1591 = vmul.f32 %v1589, %v1580
    %v1592 = vmul.f32 %v1589, %v1581
    %v1593 = vmul.f32 %v1589, %v1582
    %v1594 = vmul.f32 %v1589, %v1583
    %1599 = vrot.lane.b32.xlu0 %v1591, 102
    %v1600 = vpop.permute.xlu0 %1599
    %1601 = vrot.lane.b32.xlu0 %v1592, 102
    %v1602 = vpop.permute.xlu0 %1601
    %1603 = vrot.lane.b32.xlu0 %v1593, 102
    %v1604 = vpop.permute.xlu0 %1603
    %1605 = vrot.lane.b32.xlu0 %v1594, 102
    %v1606 = vpop.permute.xlu0 %1605
    %v1607 = vsel %vm1027, %v1600, %v1602
    %v1608 = vsel %vm1027, %v1602, %v1604
    %v1609 = vsel %vm1027, %v1604, %v1606
    %v1614 = vadd.f32 %v1576, %v1600
    %v1615 = vadd.f32 %v1577, %v1607
    %v1616 = vadd.f32 %v1578, %v1608
    %v1617 = vadd.f32 %v1579, %v1609
    %s1618 = scalar_lea.vmem %s7, 192
    %v1619 = vld [vmem:[%s1618] sm:$0xff]
    %1621 = vset.pattern.permute.xlu0 0
    %1622 = vperm.xlu0 %1621, %v1619
    %v1623 = vpop.permute.xlu0 %1622
    %v1625 = vmul.f32 %v1623, %v1580
    %v1626 = vmul.f32 %v1623, %v1581
    %v1627 = vmul.f32 %v1623, %v1582
    %v1628 = vmul.f32 %v1623, %v1583
    %1633 = vrot.lane.b32.xlu0 %v1625, 80
    %v1634 = vpop.permute.xlu0 %1633
    %1635 = vrot.lane.b32.xlu0 %v1626, 80
    %v1636 = vpop.permute.xlu0 %1635
    %1637 = vrot.lane.b32.xlu0 %v1627, 80
    %v1638 = vpop.permute.xlu0 %1637
    %1639 = vrot.lane.b32.xlu0 %v1628, 80
    %v1640 = vpop.permute.xlu0 %1639
    %v1641 = vsel %vm1062, %v1634, %v1636
    %v1642 = vsel %vm1062, %v1636, %v1638
    %v1643 = vsel %vm1062, %v1638, %v1640
    %v1648 = vadd.f32 %v1614, %v1634
    %v1649 = vadd.f32 %v1615, %v1641
    %v1650 = vadd.f32 %v1616, %v1642
    %v1651 = vadd.f32 %v1617, %v1643
    %s1652 = scalar_lea.vmem %s7, 200
    %v1653 = vld [vmem:[%s1652] sm:$0xff]
    %1655 = vset.pattern.permute.xlu0 0
    %1656 = vperm.xlu0 %1655, %v1653
    %v1657 = vpop.permute.xlu0 %1656
    %v1659 = vmul.f32 %v1657, %v1580
    %v1660 = vmul.f32 %v1657, %v1581
    %v1661 = vmul.f32 %v1657, %v1582
    %v1662 = vmul.f32 %v1657, %v1583
    %1667 = vrot.lane.b32.xlu0 %v1659, 79
    %v1668 = vpop.permute.xlu0 %1667
    %1669 = vrot.lane.b32.xlu0 %v1660, 79
    %v1670 = vpop.permute.xlu0 %1669
    %1671 = vrot.lane.b32.xlu0 %v1661, 79
    %v1672 = vpop.permute.xlu0 %1671
    %1673 = vrot.lane.b32.xlu0 %v1662, 79
    %v1674 = vpop.permute.xlu0 %1673
    %v1675 = vsel %vm1097, %v1668, %v1670
    %v1676 = vsel %vm1097, %v1670, %v1672
    %v1677 = vsel %vm1097, %v1672, %v1674
    %v1682 = vadd.f32 %v1648, %v1668
    %v1683 = vadd.f32 %v1649, %v1675
    %v1684 = vadd.f32 %v1650, %v1676
    %v1685 = vadd.f32 %v1651, %v1677
    %s1686 = scalar_lea.vmem %s7, 208
    %v1687 = vld [vmem:[%s1686] sm:$0xff]
    %1689 = vset.pattern.permute.xlu0 0
    %1690 = vperm.xlu0 %1689, %v1687
    %v1691 = vpop.permute.xlu0 %1690
    %v1693 = vmul.f32 %v1691, %v1580
    %v1694 = vmul.f32 %v1691, %v1581
    %v1695 = vmul.f32 %v1691, %v1582
    %v1696 = vmul.f32 %v1691, %v1583
    %1701 = vrot.lane.b32.xlu0 %v1693, 78
    %v1702 = vpop.permute.xlu0 %1701
    %1703 = vrot.lane.b32.xlu0 %v1694, 78
    %v1704 = vpop.permute.xlu0 %1703
    %1705 = vrot.lane.b32.xlu0 %v1695, 78
    %v1706 = vpop.permute.xlu0 %1705
    %1707 = vrot.lane.b32.xlu0 %v1696, 78
    %v1708 = vpop.permute.xlu0 %1707
    %v1709 = vsel %vm1132, %v1702, %v1704
    %v1710 = vsel %vm1132, %v1704, %v1706
    %v1711 = vsel %vm1132, %v1706, %v1708
    %v1716 = vadd.f32 %v1682, %v1702
    %v1717 = vadd.f32 %v1683, %v1709
    %v1718 = vadd.f32 %v1684, %v1710
    %v1719 = vadd.f32 %v1685, %v1711
    %v1720 = vadd.f32 %v1430, %v1716
    %v1721 = vadd.f32 %v1431, %v1717
    %v1722 = vadd.f32 %v1432, %v1718
    %v1723 = vadd.f32 %v1433, %v1719
    %v1724 = vld [vmem:[%s678] sm:$0xff]
    %v1725 = vld [vmem:[%s678 + $0x8] sm:$0xff]
    %v1726 = vld [vmem:[%s678 + $0x10] sm:$0xff]
    %v1727 = vld [vmem:[%s678 + $0x18] sm:$0xff]
    %s1728 = scalar_lea.vmem %s7, 216
    %v1729 = vld [vmem:[%s1728] sm:$0xff]
    %1731 = vset.pattern.permute.xlu0 0
    %1732 = vperm.xlu0 %1731, %v1729
    %v1733 = vpop.permute.xlu0 %1732
    %v1735 = vmul.f32 %v1733, %v1724
    %v1736 = vmul.f32 %v1733, %v1725
    %v1737 = vmul.f32 %v1733, %v1726
    %v1738 = vmul.f32 %v1733, %v1727
    %s1739 = scalar_lea.vmem %s7, 224
    %v1740 = vld [vmem:[%s1739] sm:$0xff]
    %1742 = vset.pattern.permute.xlu0 0
    %1743 = vperm.xlu0 %1742, %v1740
    %v1744 = vpop.permute.xlu0 %1743
    %v1746 = vmul.f32 %v1744, %v1724
    %v1747 = vmul.f32 %v1744, %v1725
    %v1748 = vmul.f32 %v1744, %v1726
    %v1749 = vmul.f32 %v1744, %v1727
    %1754 = vrot.lane.b32.xlu0 %v1746, 127
    %v1755 = vpop.permute.xlu0 %1754
    %1756 = vrot.lane.b32.xlu0 %v1747, 127
    %v1757 = vpop.permute.xlu0 %1756
    %1758 = vrot.lane.b32.xlu0 %v1748, 127
    %v1759 = vpop.permute.xlu0 %1758
    %1760 = vrot.lane.b32.xlu0 %v1749, 127
    %v1761 = vpop.permute.xlu0 %1760
    %v1762 = vsel %vm888, %v1755, %v1757
    %v1763 = vsel %vm888, %v1757, %v1759
    %v1764 = vsel %vm888, %v1759, %v1761
    %v1769 = vadd.f32 %v1735, %v1762
    %v1770 = vadd.f32 %v1736, %v1763
    %v1771 = vadd.f32 %v1737, %v1764
    %v1772 = vadd.f32 %v1738, %v1761
    %s1773 = scalar_lea.vmem %s7, 232
    %v1774 = vld [vmem:[%s1773] sm:$0xff]
    %1776 = vset.pattern.permute.xlu0 0
    %1777 = vperm.xlu0 %1776, %v1774
    %v1778 = vpop.permute.xlu0 %1777
    %v1780 = vmul.f32 %v1778, %v1724
    %v1781 = vmul.f32 %v1778, %v1725
    %v1782 = vmul.f32 %v1778, %v1726
    %v1783 = vmul.f32 %v1778, %v1727
    %1788 = vrot.lane.b32.xlu0 %v1780, 126
    %v1789 = vpop.permute.xlu0 %1788
    %1790 = vrot.lane.b32.xlu0 %v1781, 126
    %v1791 = vpop.permute.xlu0 %1790
    %1792 = vrot.lane.b32.xlu0 %v1782, 126
    %v1793 = vpop.permute.xlu0 %1792
    %1794 = vrot.lane.b32.xlu0 %v1783, 126
    %v1795 = vpop.permute.xlu0 %1794
    %v1796 = vsel %vm923, %v1789, %v1791
    %v1797 = vsel %vm923, %v1791, %v1793
    %v1798 = vsel %vm923, %v1793, %v1795
    %v1803 = vadd.f32 %v1769, %v1796
    %v1804 = vadd.f32 %v1770, %v1797
    %v1805 = vadd.f32 %v1771, %v1798
    %v1806 = vadd.f32 %v1772, %v1795
    %s1807 = scalar_lea.vmem %s7, 240
    %v1808 = vld [vmem:[%s1807] sm:$0xff]
    %1810 = vset.pattern.permute.xlu0 0
    %1811 = vperm.xlu0 %1810, %v1808
    %v1812 = vpop.permute.xlu0 %1811
    %v1814 = vmul.f32 %v1812, %v1724
    %v1815 = vmul.f32 %v1812, %v1725
    %v1816 = vmul.f32 %v1812, %v1726
    %v1817 = vmul.f32 %v1812, %v1727
    %1822 = vrot.lane.b32.xlu0 %v1814, 104
    %v1823 = vpop.permute.xlu0 %1822
    %1824 = vrot.lane.b32.xlu0 %v1815, 104
    %v1825 = vpop.permute.xlu0 %1824
    %1826 = vrot.lane.b32.xlu0 %v1816, 104
    %v1827 = vpop.permute.xlu0 %1826
    %1828 = vrot.lane.b32.xlu0 %v1817, 104
    %v1829 = vpop.permute.xlu0 %1828
    %v1830 = vsel %vm958, %v1823, %v1825
    %v1831 = vsel %vm958, %v1825, %v1827
    %v1832 = vsel %vm958, %v1827, %v1829
    %v1837 = vadd.f32 %v1803, %v1830
    %v1838 = vadd.f32 %v1804, %v1831
    %v1839 = vadd.f32 %v1805, %v1832
    %v1840 = vadd.f32 %v1806, %v1829
    %s1841 = scalar_lea.vmem %s7, 248
    %v1842 = vld [vmem:[%s1841] sm:$0xff]
    %1844 = vset.pattern.permute.xlu0 0
    %1845 = vperm.xlu0 %1844, %v1842
    %v1846 = vpop.permute.xlu0 %1845
    %v1848 = vmul.f32 %v1846, %v1725
    %v1849 = vmul.f32 %v1846, %v1726
    %v1850 = vmul.f32 %v1846, %v1727
    %1854 = vrot.lane.b32.xlu0 %v1848, 103
    %v1855 = vpop.permute.xlu0 %1854
    %1856 = vrot.lane.b32.xlu0 %v1849, 103
    %v1857 = vpop.permute.xlu0 %1856
    %1858 = vrot.lane.b32.xlu0 %v1850, 103
    %v1859 = vpop.permute.xlu0 %1858
    %v1860 = vsel %vm989, %v1855, %v1857
    %v1861 = vsel %vm989, %v1857, %v1859
    %v1866 = vadd.f32 %v1837, %v1855
    %v1867 = vadd.f32 %v1838, %v1860
    %v1868 = vadd.f32 %v1839, %v1861
    %v1869 = vadd.f32 %v1840, %v1859
    %v1870 = vld [vmem:[%s678 + $0x8] sm:$0xff]
    %v1871 = vld [vmem:[%s678 + $0x10] sm:$0xff]
    %v1872 = vld [vmem:[%s678 + $0x18] sm:$0xff]
    %v1873 = vld [vmem:[%s678 + $0x20] sm:$0xff]
    %s1874 = scalar_lea.vmem %s7, 256
    %v1875 = vld [vmem:[%s1874] sm:$0xff]
    %1877 = vset.pattern.permute.xlu0 0
    %1878 = vperm.xlu0 %1877, %v1875
    %v1879 = vpop.permute.xlu0 %1878
    %v1881 = vmul.f32 %v1879, %v1870
    %v1882 = vmul.f32 %v1879, %v1871
    %v1883 = vmul.f32 %v1879, %v1872
    %v1884 = vmul.f32 %v1879, %v1873
    %1889 = vrot.lane.b32.xlu0 %v1881, 102
    %v1890 = vpop.permute.xlu0 %1889
    %1891 = vrot.lane.b32.xlu0 %v1882, 102
    %v1892 = vpop.permute.xlu0 %1891
    %1893 = vrot.lane.b32.xlu0 %v1883, 102
    %v1894 = vpop.permute.xlu0 %1893
    %1895 = vrot.lane.b32.xlu0 %v1884, 102
    %v1896 = vpop.permute.xlu0 %1895
    %v1897 = vsel %vm1027, %v1890, %v1892
    %v1898 = vsel %vm1027, %v1892, %v1894
    %v1899 = vsel %vm1027, %v1894, %v1896
    %v1904 = vadd.f32 %v1866, %v1890
    %v1905 = vadd.f32 %v1867, %v1897
    %v1906 = vadd.f32 %v1868, %v1898
    %v1907 = vadd.f32 %v1869, %v1899
    %s1908 = scalar_lea.vmem %s7, 264
    %v1909 = vld [vmem:[%s1908] sm:$0xff]
    %1911 = vset.pattern.permute.xlu0 0
    %1912 = vperm.xlu0 %1911, %v1909
    %v1913 = vpop.permute.xlu0 %1912
    %v1915 = vmul.f32 %v1913, %v1870
    %v1916 = vmul.f32 %v1913, %v1871
    %v1917 = vmul.f32 %v1913, %v1872
    %v1918 = vmul.f32 %v1913, %v1873
    %1923 = vrot.lane.b32.xlu0 %v1915, 80
    %v1924 = vpop.permute.xlu0 %1923
    %1925 = vrot.lane.b32.xlu0 %v1916, 80
    %v1926 = vpop.permute.xlu0 %1925
    %1927 = vrot.lane.b32.xlu0 %v1917, 80
    %v1928 = vpop.permute.xlu0 %1927
    %1929 = vrot.lane.b32.xlu0 %v1918, 80
    %v1930 = vpop.permute.xlu0 %1929
    %v1931 = vsel %vm1062, %v1924, %v1926
    %v1932 = vsel %vm1062, %v1926, %v1928
    %v1933 = vsel %vm1062, %v1928, %v1930
    %v1938 = vadd.f32 %v1904, %v1924
    %v1939 = vadd.f32 %v1905, %v1931
    %v1940 = vadd.f32 %v1906, %v1932
    %v1941 = vadd.f32 %v1907, %v1933
    %s1942 = scalar_lea.vmem %s7, 272
    %v1943 = vld [vmem:[%s1942] sm:$0xff]
    %1945 = vset.pattern.permute.xlu0 0
    %1946 = vperm.xlu0 %1945, %v1943
    %v1947 = vpop.permute.xlu0 %1946
    %v1949 = vmul.f32 %v1947, %v1870
    %v1950 = vmul.f32 %v1947, %v1871
    %v1951 = vmul.f32 %v1947, %v1872
    %v1952 = vmul.f32 %v1947, %v1873
    %1957 = vrot.lane.b32.xlu0 %v1949, 79
    %v1958 = vpop.permute.xlu0 %1957
    %1959 = vrot.lane.b32.xlu0 %v1950, 79
    %v1960 = vpop.permute.xlu0 %1959
    %1961 = vrot.lane.b32.xlu0 %v1951, 79
    %v1962 = vpop.permute.xlu0 %1961
    %1963 = vrot.lane.b32.xlu0 %v1952, 79
    %v1964 = vpop.permute.xlu0 %1963
    %v1965 = vsel %vm1097, %v1958, %v1960
    %v1966 = vsel %vm1097, %v1960, %v1962
    %v1967 = vsel %vm1097, %v1962, %v1964
    %v1972 = vadd.f32 %v1938, %v1958
    %v1973 = vadd.f32 %v1939, %v1965
    %v1974 = vadd.f32 %v1940, %v1966
    %v1975 = vadd.f32 %v1941, %v1967
    %s1976 = scalar_lea.vmem %s7, 280
    %v1977 = vld [vmem:[%s1976] sm:$0xff]
    %1979 = vset.pattern.permute.xlu0 0
    %1980 = vperm.xlu0 %1979, %v1977
    %v1981 = vpop.permute.xlu0 %1980
    %v1983 = vmul.f32 %v1981, %v1870
    %v1984 = vmul.f32 %v1981, %v1871
    %v1985 = vmul.f32 %v1981, %v1872
    %v1986 = vmul.f32 %v1981, %v1873
    %1991 = vrot.lane.b32.xlu0 %v1983, 78
    %v1992 = vpop.permute.xlu0 %1991
    %1993 = vrot.lane.b32.xlu0 %v1984, 78
    %v1994 = vpop.permute.xlu0 %1993
    %1995 = vrot.lane.b32.xlu0 %v1985, 78
    %v1996 = vpop.permute.xlu0 %1995
    %1997 = vrot.lane.b32.xlu0 %v1986, 78
    %v1998 = vpop.permute.xlu0 %1997
    %v1999 = vsel %vm1132, %v1992, %v1994
    %v2000 = vsel %vm1132, %v1994, %v1996
    %v2001 = vsel %vm1132, %v1996, %v1998
    %v2006 = vadd.f32 %v1972, %v1992
    %v2007 = vadd.f32 %v1973, %v1999
    %v2008 = vadd.f32 %v1974, %v2000
    %v2009 = vadd.f32 %v1975, %v2001
    %v2010 = vadd.f32 %v1720, %v2006
    %v2011 = vadd.f32 %v1721, %v2007
    %v2012 = vadd.f32 %v1722, %v2008
    %v2013 = vadd.f32 %v1723, %v2009
    %v2014 = vld [vmem:[%s8] sm:$0xff]
    %2016 = vset.pattern.permute.xlu0 0
    %2017 = vperm.xlu0 %2016, %v2014
    %v2018 = vpop.permute.xlu0 %2017
    %v2020 = vadd.f32 %v2010, %v2018
    %v2021 = vadd.f32 %v2011, %v2018
    %v2022 = vadd.f32 %v2012, %v2018
    %v2023 = vadd.f32 %v2013, %v2018
    %2024 = vrot.lane.b32.xlu0 %v775, 103
    %v2025 = vpop.permute.xlu0 %2024
    %2026 = vrot.lane.b32.xlu0 %v779, 103
    %v2027 = vpop.permute.xlu0 %2026
    %2028 = vrot.lane.b32.xlu0 %v783, 103
    %v2029 = vpop.permute.xlu0 %2028
    %v2030 = vsel %vm989, %v2025, %v2027
    %v2031 = vsel %vm989, %v2027, %v2029
    %v2036 = vmul.f32 %v2020, %v2025
    %v2037 = vmul.f32 %v2021, %v2030
    %v2038 = vmul.f32 %v2022, %v2031
    %v2039 = vmul.f32 %v2023, %v2029
    %v2040 = vmul.f32 %v2036, %v2036
    %v2041 = vmul.f32 %v2037, %v2037
    %v2042 = vmul.f32 %v2038, %v2038
    %v2043 = vmul.f32 %v2039, %v2039
    %2048 = vrot.lane.b32.xlu0 %v2036, 25
    %v2049 = vpop.permute.xlu0 %2048
    %2050 = vrot.lane.b32.xlu0 %v2037, 25
    %v2051 = vpop.permute.xlu0 %2050
    %2052 = vrot.lane.b32.xlu0 %v2038, 25
    %v2053 = vpop.permute.xlu0 %2052
    %2054 = vrot.lane.b32.xlu0 %v2039, 25
    %v2055 = vpop.permute.xlu0 %2054
    %vm2056 = vcmask 203776
    %v2057 = vsel %vm2056, %v2049, %v2051
    %v2058 = vsel %vm2056, %v2051, %v2053
    %v2059 = vsel %vm2056, %v2053, %v2055
    %v2063 = vadd.f32 %v2057, %v2058
    %v2064 = vadd.f32 %v2063, %v2059
    %2065 = vadd.xlane.f32.xlu0 %v2064
    %v2066 = vpop.xlane.xlu0 %2065
    %2071 = vrot.lane.b32.xlu0 %v2040, 25
    %v2072 = vpop.permute.xlu0 %2071
    %2073 = vrot.lane.b32.xlu0 %v2041, 25
    %v2074 = vpop.permute.xlu0 %2073
    %2075 = vrot.lane.b32.xlu0 %v2042, 25
    %v2076 = vpop.permute.xlu0 %2075
    %2077 = vrot.lane.b32.xlu0 %v2043, 25
    %v2078 = vpop.permute.xlu0 %2077
    %v2079 = vsel %vm2056, %v2072, %v2074
    %v2080 = vsel %vm2056, %v2074, %v2076
    %v2081 = vsel %vm2056, %v2076, %v2078
    %v2085 = vadd.f32 %v2079, %v2080
    %v2086 = vadd.f32 %v2085, %v2081
    %2087 = vadd.xlane.f32.xlu0 %v2086
    %v2088 = vpop.xlane.xlu0 %2087
    %v2090 = vrot.slane %v2066, 4
    %v2092 = vadd.f32 %v2066, %v2090
    %v2094 = vrot.slane %v2092, 4
    %v2096 = vsel %vm808, %v2092, %v2094
    %v2097 = vmul.f32 %v2096, 0.001953125
    %v2099 = vrot.slane %v2088, 4
    %v2101 = vadd.f32 %v2088, %v2099
    %v2103 = vrot.slane %v2101, 4
    %v2105 = vsel %vm808, %v2101, %v2103
    %v2106 = vmul.f32 %v2105, 0.001953125
    %v2107 = vmul.f32 %v2097, %v2097
    %v2108 = vsub.f32 %v2106, %v2107
    %v2109 = vadd.f32 %v2108, 0.001
    %v2110 = vrsqrt.pop %v2109
    %s2111 = scalar_lea.vmem %s11, 8
    %v2112 = vld [vmem:[%s2111] sm:$0xff]
    %v2113 = vmul.f32 %v2110, %v2112
    %s2114 = scalar_lea.vmem %s12, 8
    %v2115 = vld [vmem:[%s2114] sm:$0xff]
    %v2116 = vmul.f32 %v2097, %v2113
    %v2117 = vsub.f32 %v2115, %v2116
    %2119 = vset.pattern.permute.xlu0 0
    %2120 = vperm.xlu0 %2119, %v2113
    %v2121 = vpop.permute.xlu0 %2120
    %v2123 = vmul.f32 %v2020, %v2121
    %v2124 = vmul.f32 %v2021, %v2121
    %v2125 = vmul.f32 %v2022, %v2121
    %v2126 = vmul.f32 %v2023, %v2121
    %2128 = vset.pattern.permute.xlu0 0
    %2129 = vperm.xlu0 %2128, %v2117
    %v2130 = vpop.permute.xlu0 %2129
    %v2132 = vadd.f32 %v2123, %v2130
    %v2133 = vadd.f32 %v2124, %v2130
    %v2134 = vadd.f32 %v2125, %v2130
    %v2135 = vadd.f32 %v2126, %v2130
    %v2136 = vmax.f32 %v2132, 0.0
    %v2137 = vmax.f32 %v2133, 0.0
    %v2138 = vmax.f32 %v2134, 0.0
    %v2139 = vmax.f32 %v2135, 0.0
    %2144 = vrot.lane.b32.xlu0 %v2136, 25
    %v2145 = vpop.permute.xlu0 %2144
    %2146 = vrot.lane.b32.xlu0 %v2137, 25
    %v2147 = vpop.permute.xlu0 %2146
    %2148 = vrot.lane.b32.xlu0 %v2138, 25
    %v2149 = vpop.permute.xlu0 %2148
    %2150 = vrot.lane.b32.xlu0 %v2139, 25
    %v2151 = vpop.permute.xlu0 %2150
    %v2152 = vsel %vm2056, %v2145, %v2147
    %v2153 = vsel %vm2056, %v2147, %v2149
    %v2154 = vsel %vm2056, %v2149, %v2151
    %s2158 = scalar_lea.vmem [#allocation12], 24
    %2159 = vst [vmem:[%s2158] sm:$0xff] %v2152
    %2160 = vst [vmem:[%s2158 + $0x8] sm:$0xff] %v2153
    %2161 = vst [vmem:[%s2158 + $0x10] sm:$0xff] %v2154
    %v2162 = vld [vmem:[#allocation3] sm:$0xff]
    %v2163 = vld [vmem:[#allocation3 + $0x8] sm:$0xff]
    %v2164 = vld [vmem:[#allocation3 + $0x10] sm:$0xff]
    %v2165 = vld [vmem:[#allocation3 + $0x18] sm:$0xff]
    %v2166 = vld [vmem:[%s9] sm:$0xff]
    %2168 = vset.pattern.permute.xlu0 0
    %2169 = vperm.xlu0 %2168, %v2166
    %v2170 = vpop.permute.xlu0 %2169
    %v2172 = vmul.f32 %v2170, %v2162
    %v2173 = vmul.f32 %v2170, %v2163
    %v2174 = vmul.f32 %v2170, %v2164
    %v2175 = vmul.f32 %v2170, %v2165
    %s2176 = scalar_lea.vmem %s9, 8
    %v2177 = vld [vmem:[%s2176] sm:$0xff]
    %2179 = vset.pattern.permute.xlu0 0
    %2180 = vperm.xlu0 %2179, %v2177
    %v2181 = vpop.permute.xlu0 %2180
    %v2183 = vmul.f32 %v2181, %v2162
    %v2184 = vmul.f32 %v2181, %v2163
    %v2185 = vmul.f32 %v2181, %v2164
    %v2186 = vmul.f32 %v2181, %v2165
    %2191 = vrot.lane.b32.xlu0 %v2183, 127
    %v2192 = vpop.permute.xlu0 %2191
    %2193 = vrot.lane.b32.xlu0 %v2184, 127
    %v2194 = vpop.permute.xlu0 %2193
    %2195 = vrot.lane.b32.xlu0 %v2185, 127
    %v2196 = vpop.permute.xlu0 %2195
    %2197 = vrot.lane.b32.xlu0 %v2186, 127
    %v2198 = vpop.permute.xlu0 %2197
    %v2199 = vsel %vm888, %v2192, %v2194
    %v2200 = vsel %vm888, %v2194, %v2196
    %v2201 = vsel %vm888, %v2196, %v2198
    %v2206 = vadd.f32 %v2172, %v2199
    %v2207 = vadd.f32 %v2173, %v2200
    %v2208 = vadd.f32 %v2174, %v2201
    %v2209 = vadd.f32 %v2175, %v2198
    %s2210 = scalar_lea.vmem %s9, 16
    %v2211 = vld [vmem:[%s2210] sm:$0xff]
    %2213 = vset.pattern.permute.xlu0 0
    %2214 = vperm.xlu0 %2213, %v2211
    %v2215 = vpop.permute.xlu0 %2214
    %v2217 = vmul.f32 %v2215, %v2162
    %v2218 = vmul.f32 %v2215, %v2163
    %v2219 = vmul.f32 %v2215, %v2164
    %v2220 = vmul.f32 %v2215, %v2165
    %2225 = vrot.lane.b32.xlu0 %v2217, 126
    %v2226 = vpop.permute.xlu0 %2225
    %2227 = vrot.lane.b32.xlu0 %v2218, 126
    %v2228 = vpop.permute.xlu0 %2227
    %2229 = vrot.lane.b32.xlu0 %v2219, 126
    %v2230 = vpop.permute.xlu0 %2229
    %2231 = vrot.lane.b32.xlu0 %v2220, 126
    %v2232 = vpop.permute.xlu0 %2231
    %v2233 = vsel %vm923, %v2226, %v2228
    %v2234 = vsel %vm923, %v2228, %v2230
    %v2235 = vsel %vm923, %v2230, %v2232
    %v2240 = vadd.f32 %v2206, %v2233
    %v2241 = vadd.f32 %v2207, %v2234
    %v2242 = vadd.f32 %v2208, %v2235
    %v2243 = vadd.f32 %v2209, %v2232
    %s2244 = scalar_lea.vmem %s9, 24
    %v2245 = vld [vmem:[%s2244] sm:$0xff]
    %2247 = vset.pattern.permute.xlu0 0
    %2248 = vperm.xlu0 %2247, %v2245
    %v2249 = vpop.permute.xlu0 %2248
    %v2251 = vmul.f32 %v2249, %v2162
    %v2252 = vmul.f32 %v2249, %v2163
    %v2253 = vmul.f32 %v2249, %v2164
    %v2254 = vmul.f32 %v2249, %v2165
    %2259 = vrot.lane.b32.xlu0 %v2251, 125
    %v2260 = vpop.permute.xlu0 %2259
    %2261 = vrot.lane.b32.xlu0 %v2252, 125
    %v2262 = vpop.permute.xlu0 %2261
    %2263 = vrot.lane.b32.xlu0 %v2253, 125
    %v2264 = vpop.permute.xlu0 %2263
    %2265 = vrot.lane.b32.xlu0 %v2254, 125
    %v2266 = vpop.permute.xlu0 %2265
    %vm2267 = vcmask 1022976
    %v2268 = vsel %vm2267, %v2260, %v2262
    %v2269 = vsel %vm2267, %v2262, %v2264
    %v2270 = vsel %vm2267, %v2264, %v2266
    %v2275 = vadd.f32 %v2240, %v2268
    %v2276 = vadd.f32 %v2241, %v2269
    %v2277 = vadd.f32 %v2242, %v2270
    %v2278 = vadd.f32 %v2243, %v2266
    %s2279 = scalar_lea.vmem %s9, 32
    %v2280 = vld [vmem:[%s2279] sm:$0xff]
    %2282 = vset.pattern.permute.xlu0 0
    %2283 = vperm.xlu0 %2282, %v2280
    %v2284 = vpop.permute.xlu0 %2283
    %v2286 = vmul.f32 %v2284, %v2162
    %v2287 = vmul.f32 %v2284, %v2163
    %v2288 = vmul.f32 %v2284, %v2164
    %v2289 = vmul.f32 %v2284, %v2165
    %2294 = vrot.lane.b32.xlu0 %v2286, 124
    %v2295 = vpop.permute.xlu0 %2294
    %2296 = vrot.lane.b32.xlu0 %v2287, 124
    %v2297 = vpop.permute.xlu0 %2296
    %2298 = vrot.lane.b32.xlu0 %v2288, 124
    %v2299 = vpop.permute.xlu0 %2298
    %2300 = vrot.lane.b32.xlu0 %v2289, 124
    %v2301 = vpop.permute.xlu0 %2300
    %vm2302 = vcmask 1014784
    %v2303 = vsel %vm2302, %v2295, %v2297
    %v2304 = vsel %vm2302, %v2297, %v2299
    %v2305 = vsel %vm2302, %v2299, %v2301
    %v2310 = vadd.f32 %v2275, %v2303
    %v2311 = vadd.f32 %v2276, %v2304
    %v2312 = vadd.f32 %v2277, %v2305
    %v2313 = vadd.f32 %v2278, %v2301
    %s2314 = scalar_lea.vmem %s9, 40
    %v2315 = vld [vmem:[%s2314] sm:$0xff]
    %2317 = vset.pattern.permute.xlu0 0
    %2318 = vperm.xlu0 %2317, %v2315
    %v2319 = vpop.permute.xlu0 %2318
    %v2321 = vmul.f32 %v2319, %v2162
    %v2322 = vmul.f32 %v2319, %v2163
    %v2323 = vmul.f32 %v2319, %v2164
    %v2324 = vmul.f32 %v2319, %v2165
    %2329 = vrot.lane.b32.xlu0 %v2321, 104
    %v2330 = vpop.permute.xlu0 %2329
    %2331 = vrot.lane.b32.xlu0 %v2322, 104
    %v2332 = vpop.permute.xlu0 %2331
    %2333 = vrot.lane.b32.xlu0 %v2323, 104
    %v2334 = vpop.permute.xlu0 %2333
    %2335 = vrot.lane.b32.xlu0 %v2324, 104
    %v2336 = vpop.permute.xlu0 %2335
    %v2337 = vsel %vm958, %v2330, %v2332
    %v2338 = vsel %vm958, %v2332, %v2334
    %v2339 = vsel %vm958, %v2334, %v2336
    %v2344 = vadd.f32 %v2310, %v2337
    %v2345 = vadd.f32 %v2311, %v2338
    %v2346 = vadd.f32 %v2312, %v2339
    %v2347 = vadd.f32 %v2313, %v2336
    %s2348 = scalar_lea.vmem %s9, 48
    %v2349 = vld [vmem:[%s2348] sm:$0xff]
    %2351 = vset.pattern.permute.xlu0 0
    %2352 = vperm.xlu0 %2351, %v2349
    %v2353 = vpop.permute.xlu0 %2352
    %v2355 = vmul.f32 %v2353, %v2162
    %v2356 = vmul.f32 %v2353, %v2163
    %v2357 = vmul.f32 %v2353, %v2164
    %v2358 = vmul.f32 %v2353, %v2165
    %2363 = vrot.lane.b32.xlu0 %v2355, 103
    %v2364 = vpop.permute.xlu0 %2363
    %2365 = vrot.lane.b32.xlu0 %v2356, 103
    %v2366 = vpop.permute.xlu0 %2365
    %2367 = vrot.lane.b32.xlu0 %v2357, 103
    %v2368 = vpop.permute.xlu0 %2367
    %2369 = vrot.lane.b32.xlu0 %v2358, 103
    %v2370 = vpop.permute.xlu0 %2369
    %v2371 = vsel %vm989, %v2364, %v2366
    %v2372 = vsel %vm989, %v2366, %v2368
    %v2373 = vsel %vm989, %v2368, %v2370
    %v2378 = vadd.f32 %v2344, %v2371
    %v2379 = vadd.f32 %v2345, %v2372
    %v2380 = vadd.f32 %v2346, %v2373
    %v2381 = vadd.f32 %v2347, %v2370
    %s2382 = scalar_lea.vmem %s9, 56
    %v2383 = vld [vmem:[%s2382] sm:$0xff]
    %2385 = vset.pattern.permute.xlu0 0
    %2386 = vperm.xlu0 %2385, %v2383
    %v2387 = vpop.permute.xlu0 %2386
    %v2389 = vmul.f32 %v2387, %v2162
    %v2390 = vmul.f32 %v2387, %v2163
    %v2391 = vmul.f32 %v2387, %v2164
    %v2392 = vmul.f32 %v2387, %v2165
    %2397 = vrot.lane.b32.xlu0 %v2389, 102
    %v2398 = vpop.permute.xlu0 %2397
    %2399 = vrot.lane.b32.xlu0 %v2390, 102
    %v2400 = vpop.permute.xlu0 %2399
    %2401 = vrot.lane.b32.xlu0 %v2391, 102
    %v2402 = vpop.permute.xlu0 %2401
    %2403 = vrot.lane.b32.xlu0 %v2392, 102
    %v2404 = vpop.permute.xlu0 %2403
    %v2405 = vsel %vm1027, %v2398, %v2400
    %v2406 = vsel %vm1027, %v2400, %v2402
    %v2407 = vsel %vm1027, %v2402, %v2404
    %v2412 = vadd.f32 %v2378, %v2405
    %v2413 = vadd.f32 %v2379, %v2406
    %v2414 = vadd.f32 %v2380, %v2407
    %v2415 = vadd.f32 %v2381, %v2404
    %s2416 = scalar_lea.vmem %s9, 64
    %v2417 = vld [vmem:[%s2416] sm:$0xff]
    %2419 = vset.pattern.permute.xlu0 0
    %2420 = vperm.xlu0 %2419, %v2417
    %v2421 = vpop.permute.xlu0 %2420
    %v2423 = vmul.f32 %v2421, %v2162
    %v2424 = vmul.f32 %v2421, %v2163
    %v2425 = vmul.f32 %v2421, %v2164
    %v2426 = vmul.f32 %v2421, %v2165
    %2431 = vrot.lane.b32.xlu0 %v2423, 101
    %v2432 = vpop.permute.xlu0 %2431
    %2433 = vrot.lane.b32.xlu0 %v2424, 101
    %v2434 = vpop.permute.xlu0 %2433
    %2435 = vrot.lane.b32.xlu0 %v2425, 101
    %v2436 = vpop.permute.xlu0 %2435
    %2437 = vrot.lane.b32.xlu0 %v2426, 101
    %v2438 = vpop.permute.xlu0 %2437
    %vm2439 = vcmask 826368
    %v2440 = vsel %vm2439, %v2432, %v2434
    %v2441 = vsel %vm2439, %v2434, %v2436
    %v2442 = vsel %vm2439, %v2436, %v2438
    %v2447 = vadd.f32 %v2412, %v2440
    %v2448 = vadd.f32 %v2413, %v2441
    %v2449 = vadd.f32 %v2414, %v2442
    %v2450 = vadd.f32 %v2415, %v2438
    %s2451 = scalar_lea.vmem %s9, 72
    %v2452 = vld [vmem:[%s2451] sm:$0xff]
    %2454 = vset.pattern.permute.xlu0 0
    %2455 = vperm.xlu0 %2454, %v2452
    %v2456 = vpop.permute.xlu0 %2455
    %v2458 = vmul.f32 %v2456, %v2162
    %v2459 = vmul.f32 %v2456, %v2163
    %v2460 = vmul.f32 %v2456, %v2164
    %v2461 = vmul.f32 %v2456, %v2165
    %2466 = vrot.lane.b32.xlu0 %v2458, 100
    %v2467 = vpop.permute.xlu0 %2466
    %2468 = vrot.lane.b32.xlu0 %v2459, 100
    %v2469 = vpop.permute.xlu0 %2468
    %2470 = vrot.lane.b32.xlu0 %v2460, 100
    %v2471 = vpop.permute.xlu0 %2470
    %2472 = vrot.lane.b32.xlu0 %v2461, 100
    %v2473 = vpop.permute.xlu0 %2472
    %vm2474 = vcmask 818176
    %v2475 = vsel %vm2474, %v2467, %v2469
    %v2476 = vsel %vm2474, %v2469, %v2471
    %v2477 = vsel %vm2474, %v2471, %v2473
    %v2482 = vadd.f32 %v2447, %v2475
    %v2483 = vadd.f32 %v2448, %v2476
    %v2484 = vadd.f32 %v2449, %v2477
    %v2485 = vadd.f32 %v2450, %v2473
    %s2486 = scalar_lea.vmem %s9, 80
    %v2487 = vld [vmem:[%s2486] sm:$0xff]
    %2489 = vset.pattern.permute.xlu0 0
    %2490 = vperm.xlu0 %2489, %v2487
    %v2491 = vpop.permute.xlu0 %2490
    %v2493 = vmul.f32 %v2491, %v2162
    %v2494 = vmul.f32 %v2491, %v2163
    %v2495 = vmul.f32 %v2491, %v2164
    %v2496 = vmul.f32 %v2491, %v2165
    %2501 = vrot.lane.b32.xlu0 %v2493, 80
    %v2502 = vpop.permute.xlu0 %2501
    %2503 = vrot.lane.b32.xlu0 %v2494, 80
    %v2504 = vpop.permute.xlu0 %2503
    %2505 = vrot.lane.b32.xlu0 %v2495, 80
    %v2506 = vpop.permute.xlu0 %2505
    %2507 = vrot.lane.b32.xlu0 %v2496, 80
    %v2508 = vpop.permute.xlu0 %2507
    %v2509 = vsel %vm1062, %v2502, %v2504
    %v2510 = vsel %vm1062, %v2504, %v2506
    %v2511 = vsel %vm1062, %v2506, %v2508
    %v2516 = vadd.f32 %v2482, %v2509
    %v2517 = vadd.f32 %v2483, %v2510
    %v2518 = vadd.f32 %v2484, %v2511
    %v2519 = vadd.f32 %v2485, %v2508
    %s2520 = scalar_lea.vmem %s9, 88
    %v2521 = vld [vmem:[%s2520] sm:$0xff]
    %2523 = vset.pattern.permute.xlu0 0
    %2524 = vperm.xlu0 %2523, %v2521
    %v2525 = vpop.permute.xlu0 %2524
    %v2527 = vmul.f32 %v2525, %v2162
    %v2528 = vmul.f32 %v2525, %v2163
    %v2529 = vmul.f32 %v2525, %v2164
    %v2530 = vmul.f32 %v2525, %v2165
    %2535 = vrot.lane.b32.xlu0 %v2527, 79
    %v2536 = vpop.permute.xlu0 %2535
    %2537 = vrot.lane.b32.xlu0 %v2528, 79
    %v2538 = vpop.permute.xlu0 %2537
    %2539 = vrot.lane.b32.xlu0 %v2529, 79
    %v2540 = vpop.permute.xlu0 %2539
    %2541 = vrot.lane.b32.xlu0 %v2530, 79
    %v2542 = vpop.permute.xlu0 %2541
    %v2543 = vsel %vm1097, %v2536, %v2538
    %v2544 = vsel %vm1097, %v2538, %v2540
    %v2545 = vsel %vm1097, %v2540, %v2542
    %v2550 = vadd.f32 %v2516, %v2543
    %v2551 = vadd.f32 %v2517, %v2544
    %v2552 = vadd.f32 %v2518, %v2545
    %v2553 = vadd.f32 %v2519, %v2542
    %s2554 = scalar_lea.vmem %s9, 96
    %v2555 = vld [vmem:[%s2554] sm:$0xff]
    %2557 = vset.pattern.permute.xlu0 0
    %2558 = vperm.xlu0 %2557, %v2555
    %v2559 = vpop.permute.xlu0 %2558
    %v2561 = vmul.f32 %v2559, %v2163
    %v2562 = vmul.f32 %v2559, %v2164
    %v2563 = vmul.f32 %v2559, %v2165
    %2567 = vrot.lane.b32.xlu0 %v2561, 78
    %v2568 = vpop.permute.xlu0 %2567
    %2569 = vrot.lane.b32.xlu0 %v2562, 78
    %v2570 = vpop.permute.xlu0 %2569
    %2571 = vrot.lane.b32.xlu0 %v2563, 78
    %v2572 = vpop.permute.xlu0 %2571
    %v2573 = vsel %vm1132, %v2568, %v2570
    %v2574 = vsel %vm1132, %v2570, %v2572
    %v2579 = vadd.f32 %v2550, %v2568
    %v2580 = vadd.f32 %v2551, %v2573
    %v2581 = vadd.f32 %v2552, %v2574
    %v2582 = vadd.f32 %v2553, %v2572
    %v2583 = vld [vmem:[#allocation3 + $0x8] sm:$0xff]
    %v2584 = vld [vmem:[#allocation3 + $0x10] sm:$0xff]
    %v2585 = vld [vmem:[#allocation3 + $0x18] sm:$0xff]
    %v2586 = vld [vmem:[#allocation3 + $0x20] sm:$0xff]
    %s2587 = scalar_lea.vmem %s9, 104
    %v2588 = vld [vmem:[%s2587] sm:$0xff]
    %2590 = vset.pattern.permute.xlu0 0
    %2591 = vperm.xlu0 %2590, %v2588
    %v2592 = vpop.permute.xlu0 %2591
    %v2594 = vmul.f32 %v2592, %v2583
    %v2595 = vmul.f32 %v2592, %v2584
    %v2596 = vmul.f32 %v2592, %v2585
    %v2597 = vmul.f32 %v2592, %v2586
    %2602 = vrot.lane.b32.xlu0 %v2594, 77
    %v2603 = vpop.permute.xlu0 %2602
    %2604 = vrot.lane.b32.xlu0 %v2595, 77
    %v2605 = vpop.permute.xlu0 %2604
    %2606 = vrot.lane.b32.xlu0 %v2596, 77
    %v2607 = vpop.permute.xlu0 %2606
    %2608 = vrot.lane.b32.xlu0 %v2597, 77
    %v2609 = vpop.permute.xlu0 %2608
    %vm2610 = vcmask 629760
    %v2611 = vsel %vm2610, %v2603, %v2605
    %v2612 = vsel %vm2610, %v2605, %v2607
    %v2613 = vsel %vm2610, %v2607, %v2609
    %v2618 = vadd.f32 %v2579, %v2603
    %v2619 = vadd.f32 %v2580, %v2611
    %v2620 = vadd.f32 %v2581, %v2612
    %v2621 = vadd.f32 %v2582, %v2613
    %s2622 = scalar_lea.vmem %s9, 112
    %v2623 = vld [vmem:[%s2622] sm:$0xff]
    %2625 = vset.pattern.permute.xlu0 0
    %2626 = vperm.xlu0 %2625, %v2623
    %v2627 = vpop.permute.xlu0 %2626
    %v2629 = vmul.f32 %v2627, %v2583
    %v2630 = vmul.f32 %v2627, %v2584
    %v2631 = vmul.f32 %v2627, %v2585
    %v2632 = vmul.f32 %v2627, %v2586
    %2637 = vrot.lane.b32.xlu0 %v2629, 76
    %v2638 = vpop.permute.xlu0 %2637
    %2639 = vrot.lane.b32.xlu0 %v2630, 76
    %v2640 = vpop.permute.xlu0 %2639
    %2641 = vrot.lane.b32.xlu0 %v2631, 76
    %v2642 = vpop.permute.xlu0 %2641
    %2643 = vrot.lane.b32.xlu0 %v2632, 76
    %v2644 = vpop.permute.xlu0 %2643
    %vm2645 = vcmask 621568
    %v2646 = vsel %vm2645, %v2638, %v2640
    %v2647 = vsel %vm2645, %v2640, %v2642
    %v2648 = vsel %vm2645, %v2642, %v2644
    %v2653 = vadd.f32 %v2618, %v2638
    %v2654 = vadd.f32 %v2619, %v2646
    %v2655 = vadd.f32 %v2620, %v2647
    %v2656 = vadd.f32 %v2621, %v2648
    %s2657 = scalar_lea.vmem %s9, 120
    %v2658 = vld [vmem:[%s2657] sm:$0xff]
    %2660 = vset.pattern.permute.xlu0 0
    %2661 = vperm.xlu0 %2660, %v2658
    %v2662 = vpop.permute.xlu0 %2661
    %v2664 = vmul.f32 %v2662, %v2583
    %v2665 = vmul.f32 %v2662, %v2584
    %v2666 = vmul.f32 %v2662, %v2585
    %v2667 = vmul.f32 %v2662, %v2586
    %2672 = vrot.lane.b32.xlu0 %v2664, 56
    %v2673 = vpop.permute.xlu0 %2672
    %2674 = vrot.lane.b32.xlu0 %v2665, 56
    %v2675 = vpop.permute.xlu0 %2674
    %2676 = vrot.lane.b32.xlu0 %v2666, 56
    %v2677 = vpop.permute.xlu0 %2676
    %2678 = vrot.lane.b32.xlu0 %v2667, 56
    %v2679 = vpop.permute.xlu0 %2678
    %vm2680 = vcmask 457728
    %v2681 = vsel %vm2680, %v2673, %v2675
    %v2682 = vsel %vm2680, %v2675, %v2677
    %v2683 = vsel %vm2680, %v2677, %v2679
    %v2688 = vadd.f32 %v2653, %v2673
    %v2689 = vadd.f32 %v2654, %v2681
    %v2690 = vadd.f32 %v2655, %v2682
    %v2691 = vadd.f32 %v2656, %v2683
    %s2692 = scalar_lea.vmem %s9, 128
    %v2693 = vld [vmem:[%s2692] sm:$0xff]
    %2695 = vset.pattern.permute.xlu0 0
    %2696 = vperm.xlu0 %2695, %v2693
    %v2697 = vpop.permute.xlu0 %2696
    %v2699 = vmul.f32 %v2697, %v2583
    %v2700 = vmul.f32 %v2697, %v2584
    %v2701 = vmul.f32 %v2697, %v2585
    %v2702 = vmul.f32 %v2697, %v2586
    %2707 = vrot.lane.b32.xlu0 %v2699, 55
    %v2708 = vpop.permute.xlu0 %2707
    %2709 = vrot.lane.b32.xlu0 %v2700, 55
    %v2710 = vpop.permute.xlu0 %2709
    %2711 = vrot.lane.b32.xlu0 %v2701, 55
    %v2712 = vpop.permute.xlu0 %2711
    %2713 = vrot.lane.b32.xlu0 %v2702, 55
    %v2714 = vpop.permute.xlu0 %2713
    %vm2715 = vcmask 449536
    %v2716 = vsel %vm2715, %v2708, %v2710
    %v2717 = vsel %vm2715, %v2710, %v2712
    %v2718 = vsel %vm2715, %v2712, %v2714
    %v2723 = vadd.f32 %v2688, %v2708
    %v2724 = vadd.f32 %v2689, %v2716
    %v2725 = vadd.f32 %v2690, %v2717
    %v2726 = vadd.f32 %v2691, %v2718
    %s2727 = scalar_lea.vmem %s9, 136
    %v2728 = vld [vmem:[%s2727] sm:$0xff]
    %2730 = vset.pattern.permute.xlu0 0
    %2731 = vperm.xlu0 %2730, %v2728
    %v2732 = vpop.permute.xlu0 %2731
    %v2734 = vmul.f32 %v2732, %v2583
    %v2735 = vmul.f32 %v2732, %v2584
    %v2736 = vmul.f32 %v2732, %v2585
    %v2737 = vmul.f32 %v2732, %v2586
    %2742 = vrot.lane.b32.xlu0 %v2734, 54
    %v2743 = vpop.permute.xlu0 %2742
    %2744 = vrot.lane.b32.xlu0 %v2735, 54
    %v2745 = vpop.permute.xlu0 %2744
    %2746 = vrot.lane.b32.xlu0 %v2736, 54
    %v2747 = vpop.permute.xlu0 %2746
    %2748 = vrot.lane.b32.xlu0 %v2737, 54
    %v2749 = vpop.permute.xlu0 %2748
    %vm2750 = vcmask 441344
    %v2751 = vsel %vm2750, %v2743, %v2745
    %v2752 = vsel %vm2750, %v2745, %v2747
    %v2753 = vsel %vm2750, %v2747, %v2749
    %v2758 = vadd.f32 %v2723, %v2743
    %v2759 = vadd.f32 %v2724, %v2751
    %v2760 = vadd.f32 %v2725, %v2752
    %v2761 = vadd.f32 %v2726, %v2753
    %s2762 = scalar_lea.vmem %s9, 144
    %v2763 = vld [vmem:[%s2762] sm:$0xff]
    %2765 = vset.pattern.permute.xlu0 0
    %2766 = vperm.xlu0 %2765, %v2763
    %v2767 = vpop.permute.xlu0 %2766
    %v2769 = vmul.f32 %v2767, %v2583
    %v2770 = vmul.f32 %v2767, %v2584
    %v2771 = vmul.f32 %v2767, %v2585
    %v2772 = vmul.f32 %v2767, %v2586
    %2777 = vrot.lane.b32.xlu0 %v2769, 53
    %v2778 = vpop.permute.xlu0 %2777
    %2779 = vrot.lane.b32.xlu0 %v2770, 53
    %v2780 = vpop.permute.xlu0 %2779
    %2781 = vrot.lane.b32.xlu0 %v2771, 53
    %v2782 = vpop.permute.xlu0 %2781
    %2783 = vrot.lane.b32.xlu0 %v2772, 53
    %v2784 = vpop.permute.xlu0 %2783
    %vm2785 = vcmask 433152
    %v2786 = vsel %vm2785, %v2778, %v2780
    %v2787 = vsel %vm2785, %v2780, %v2782
    %v2788 = vsel %vm2785, %v2782, %v2784
    %v2793 = vadd.f32 %v2758, %v2778
    %v2794 = vadd.f32 %v2759, %v2786
    %v2795 = vadd.f32 %v2760, %v2787
    %v2796 = vadd.f32 %v2761, %v2788
    %s2797 = scalar_lea.vmem %s9, 152
    %v2798 = vld [vmem:[%s2797] sm:$0xff]
    %2800 = vset.pattern.permute.xlu0 0
    %2801 = vperm.xlu0 %2800, %v2798
    %v2802 = vpop.permute.xlu0 %2801
    %v2804 = vmul.f32 %v2802, %v2583
    %v2805 = vmul.f32 %v2802, %v2584
    %v2806 = vmul.f32 %v2802, %v2585
    %v2807 = vmul.f32 %v2802, %v2586
    %2812 = vrot.lane.b32.xlu0 %v2804, 52
    %v2813 = vpop.permute.xlu0 %2812
    %2814 = vrot.lane.b32.xlu0 %v2805, 52
    %v2815 = vpop.permute.xlu0 %2814
    %2816 = vrot.lane.b32.xlu0 %v2806, 52
    %v2817 = vpop.permute.xlu0 %2816
    %2818 = vrot.lane.b32.xlu0 %v2807, 52
    %v2819 = vpop.permute.xlu0 %2818
    %vm2820 = vcmask 424960
    %v2821 = vsel %vm2820, %v2813, %v2815
    %v2822 = vsel %vm2820, %v2815, %v2817
    %v2823 = vsel %vm2820, %v2817, %v2819
    %v2828 = vadd.f32 %v2793, %v2813
    %v2829 = vadd.f32 %v2794, %v2821
    %v2830 = vadd.f32 %v2795, %v2822
    %v2831 = vadd.f32 %v2796, %v2823
    %s2832 = scalar_lea.vmem %s9, 160
    %v2833 = vld [vmem:[%s2832] sm:$0xff]
    %2835 = vset.pattern.permute.xlu0 0
    %2836 = vperm.xlu0 %2835, %v2833
    %v2837 = vpop.permute.xlu0 %2836
    %v2839 = vmul.f32 %v2837, %v2583
    %v2840 = vmul.f32 %v2837, %v2584
    %v2841 = vmul.f32 %v2837, %v2585
    %v2842 = vmul.f32 %v2837, %v2586
    %2847 = vrot.lane.b32.xlu0 %v2839, 32
    %v2848 = vpop.permute.xlu0 %2847
    %2849 = vrot.lane.b32.xlu0 %v2840, 32
    %v2850 = vpop.permute.xlu0 %2849
    %2851 = vrot.lane.b32.xlu0 %v2841, 32
    %v2852 = vpop.permute.xlu0 %2851
    %2853 = vrot.lane.b32.xlu0 %v2842, 32
    %v2854 = vpop.permute.xlu0 %2853
    %vm2855 = vcmask 261120
    %v2856 = vsel %vm2855, %v2848, %v2850
    %v2857 = vsel %vm2855, %v2850, %v2852
    %v2858 = vsel %vm2855, %v2852, %v2854
    %v2863 = vadd.f32 %v2828, %v2848
    %v2864 = vadd.f32 %v2829, %v2856
    %v2865 = vadd.f32 %v2830, %v2857
    %v2866 = vadd.f32 %v2831, %v2858
    %s2867 = scalar_lea.vmem %s9, 168
    %v2868 = vld [vmem:[%s2867] sm:$0xff]
    %2870 = vset.pattern.permute.xlu0 0
    %2871 = vperm.xlu0 %2870, %v2868
    %v2872 = vpop.permute.xlu0 %2871
    %v2874 = vmul.f32 %v2872, %v2583
    %v2875 = vmul.f32 %v2872, %v2584
    %v2876 = vmul.f32 %v2872, %v2585
    %v2877 = vmul.f32 %v2872, %v2586
    %2882 = vrot.lane.b32.xlu0 %v2874, 31
    %v2883 = vpop.permute.xlu0 %2882
    %2884 = vrot.lane.b32.xlu0 %v2875, 31
    %v2885 = vpop.permute.xlu0 %2884
    %2886 = vrot.lane.b32.xlu0 %v2876, 31
    %v2887 = vpop.permute.xlu0 %2886
    %2888 = vrot.lane.b32.xlu0 %v2877, 31
    %v2889 = vpop.permute.xlu0 %2888
    %vm2890 = vcmask 252928
    %v2891 = vsel %vm2890, %v2883, %v2885
    %v2892 = vsel %vm2890, %v2885, %v2887
    %v2893 = vsel %vm2890, %v2887, %v2889
    %v2898 = vadd.f32 %v2863, %v2883
    %v2899 = vadd.f32 %v2864, %v2891
    %v2900 = vadd.f32 %v2865, %v2892
    %v2901 = vadd.f32 %v2866, %v2893
    %s2902 = scalar_lea.vmem %s9, 176
    %v2903 = vld [vmem:[%s2902] sm:$0xff]
    %2905 = vset.pattern.permute.xlu0 0
    %2906 = vperm.xlu0 %2905, %v2903
    %v2907 = vpop.permute.xlu0 %2906
    %v2909 = vmul.f32 %v2907, %v2583
    %v2910 = vmul.f32 %v2907, %v2584
    %v2911 = vmul.f32 %v2907, %v2585
    %v2912 = vmul.f32 %v2907, %v2586
    %2917 = vrot.lane.b32.xlu0 %v2909, 30
    %v2918 = vpop.permute.xlu0 %2917
    %2919 = vrot.lane.b32.xlu0 %v2910, 30
    %v2920 = vpop.permute.xlu0 %2919
    %2921 = vrot.lane.b32.xlu0 %v2911, 30
    %v2922 = vpop.permute.xlu0 %2921
    %2923 = vrot.lane.b32.xlu0 %v2912, 30
    %v2924 = vpop.permute.xlu0 %2923
    %vm2925 = vcmask 244736
    %v2926 = vsel %vm2925, %v2918, %v2920
    %v2927 = vsel %vm2925, %v2920, %v2922
    %v2928 = vsel %vm2925, %v2922, %v2924
    %v2933 = vadd.f32 %v2898, %v2918
    %v2934 = vadd.f32 %v2899, %v2926
    %v2935 = vadd.f32 %v2900, %v2927
    %v2936 = vadd.f32 %v2901, %v2928
    %s2937 = scalar_lea.vmem %s9, 184
    %v2938 = vld [vmem:[%s2937] sm:$0xff]
    %2940 = vset.pattern.permute.xlu0 0
    %2941 = vperm.xlu0 %2940, %v2938
    %v2942 = vpop.permute.xlu0 %2941
    %v2944 = vmul.f32 %v2942, %v2583
    %v2945 = vmul.f32 %v2942, %v2584
    %v2946 = vmul.f32 %v2942, %v2585
    %v2947 = vmul.f32 %v2942, %v2586
    %2952 = vrot.lane.b32.xlu0 %v2944, 29
    %v2953 = vpop.permute.xlu0 %2952
    %2954 = vrot.lane.b32.xlu0 %v2945, 29
    %v2955 = vpop.permute.xlu0 %2954
    %2956 = vrot.lane.b32.xlu0 %v2946, 29
    %v2957 = vpop.permute.xlu0 %2956
    %2958 = vrot.lane.b32.xlu0 %v2947, 29
    %v2959 = vpop.permute.xlu0 %2958
    %vm2960 = vcmask 236544
    %v2961 = vsel %vm2960, %v2953, %v2955
    %v2962 = vsel %vm2960, %v2955, %v2957
    %v2963 = vsel %vm2960, %v2957, %v2959
    %v2968 = vadd.f32 %v2933, %v2953
    %v2969 = vadd.f32 %v2934, %v2961
    %v2970 = vadd.f32 %v2935, %v2962
    %v2971 = vadd.f32 %v2936, %v2963
    %s2972 = scalar_lea.vmem %s9, 192
    %v2973 = vld [vmem:[%s2972] sm:$0xff]
    %2975 = vset.pattern.permute.xlu0 0
    %2976 = vperm.xlu0 %2975, %v2973
    %v2977 = vpop.permute.xlu0 %2976
    %v2979 = vmul.f32 %v2977, %v2583
    %v2980 = vmul.f32 %v2977, %v2584
    %v2981 = vmul.f32 %v2977, %v2585
    %v2982 = vmul.f32 %v2977, %v2586
    %2987 = vrot.lane.b32.xlu0 %v2979, 28
    %v2988 = vpop.permute.xlu0 %2987
    %2989 = vrot.lane.b32.xlu0 %v2980, 28
    %v2990 = vpop.permute.xlu0 %2989
    %2991 = vrot.lane.b32.xlu0 %v2981, 28
    %v2992 = vpop.permute.xlu0 %2991
    %2993 = vrot.lane.b32.xlu0 %v2982, 28
    %v2994 = vpop.permute.xlu0 %2993
    %vm2995 = vcmask 228352
    %v2996 = vsel %vm2995, %v2988, %v2990
    %v2997 = vsel %vm2995, %v2990, %v2992
    %v2998 = vsel %vm2995, %v2992, %v2994
    %v3003 = vadd.f32 %v2968, %v2988
    %v3004 = vadd.f32 %v2969, %v2996
    %v3005 = vadd.f32 %v2970, %v2997
    %v3006 = vadd.f32 %v2971, %v2998
    %v3007 = vld [vmem:[%s412] sm:$0xff]
    %v3008 = vld [vmem:[%s412 + $0x8] sm:$0xff]
    %v3009 = vld [vmem:[%s412 + $0x10] sm:$0xff]
    %v3010 = vld [vmem:[%s412 + $0x18] sm:$0xff]
    %s3011 = scalar_lea.vmem %s9, 200
    %v3012 = vld [vmem:[%s3011] sm:$0xff]
    %3014 = vset.pattern.permute.xlu0 0
    %3015 = vperm.xlu0 %3014, %v3012
    %v3016 = vpop.permute.xlu0 %3015
    %v3018 = vmul.f32 %v3016, %v3007
    %v3019 = vmul.f32 %v3016, %v3008
    %v3020 = vmul.f32 %v3016, %v3009
    %v3021 = vmul.f32 %v3016, %v3010
    %s3022 = scalar_lea.vmem %s9, 208
    %v3023 = vld [vmem:[%s3022] sm:$0xff]
    %3025 = vset.pattern.permute.xlu0 0
    %3026 = vperm.xlu0 %3025, %v3023
    %v3027 = vpop.permute.xlu0 %3026
    %v3029 = vmul.f32 %v3027, %v3007
    %v3030 = vmul.f32 %v3027, %v3008
    %v3031 = vmul.f32 %v3027, %v3009
    %v3032 = vmul.f32 %v3027, %v3010
    %3037 = vrot.lane.b32.xlu0 %v3029, 127
    %v3038 = vpop.permute.xlu0 %3037
    %3039 = vrot.lane.b32.xlu0 %v3030, 127
    %v3040 = vpop.permute.xlu0 %3039
    %3041 = vrot.lane.b32.xlu0 %v3031, 127
    %v3042 = vpop.permute.xlu0 %3041
    %3043 = vrot.lane.b32.xlu0 %v3032, 127
    %v3044 = vpop.permute.xlu0 %3043
    %v3045 = vsel %vm888, %v3038, %v3040
    %v3046 = vsel %vm888, %v3040, %v3042
    %v3047 = vsel %vm888, %v3042, %v3044
    %v3052 = vadd.f32 %v3018, %v3045
    %v3053 = vadd.f32 %v3019, %v3046
    %v3054 = vadd.f32 %v3020, %v3047
    %v3055 = vadd.f32 %v3021, %v3044
    %s3056 = scalar_lea.vmem %s9, 216
    %v3057 = vld [vmem:[%s3056] sm:$0xff]
    %3059 = vset.pattern.permute.xlu0 0
    %3060 = vperm.xlu0 %3059, %v3057
    %v3061 = vpop.permute.xlu0 %3060
    %v3063 = vmul.f32 %v3061, %v3007
    %v3064 = vmul.f32 %v3061, %v3008
    %v3065 = vmul.f32 %v3061, %v3009
    %v3066 = vmul.f32 %v3061, %v3010
    %3071 = vrot.lane.b32.xlu0 %v3063, 126
    %v3072 = vpop.permute.xlu0 %3071
    %3073 = vrot.lane.b32.xlu0 %v3064, 126
    %v3074 = vpop.permute.xlu0 %3073
    %3075 = vrot.lane.b32.xlu0 %v3065, 126
    %v3076 = vpop.permute.xlu0 %3075
    %3077 = vrot.lane.b32.xlu0 %v3066, 126
    %v3078 = vpop.permute.xlu0 %3077
    %v3079 = vsel %vm923, %v3072, %v3074
    %v3080 = vsel %vm923, %v3074, %v3076
    %v3081 = vsel %vm923, %v3076, %v3078
    %v3086 = vadd.f32 %v3052, %v3079
    %v3087 = vadd.f32 %v3053, %v3080
    %v3088 = vadd.f32 %v3054, %v3081
    %v3089 = vadd.f32 %v3055, %v3078
    %s3090 = scalar_lea.vmem %s9, 224
    %v3091 = vld [vmem:[%s3090] sm:$0xff]
    %3093 = vset.pattern.permute.xlu0 0
    %3094 = vperm.xlu0 %3093, %v3091
    %v3095 = vpop.permute.xlu0 %3094
    %v3097 = vmul.f32 %v3095, %v3007
    %v3098 = vmul.f32 %v3095, %v3008
    %v3099 = vmul.f32 %v3095, %v3009
    %v3100 = vmul.f32 %v3095, %v3010
    %3105 = vrot.lane.b32.xlu0 %v3097, 125
    %v3106 = vpop.permute.xlu0 %3105
    %3107 = vrot.lane.b32.xlu0 %v3098, 125
    %v3108 = vpop.permute.xlu0 %3107
    %3109 = vrot.lane.b32.xlu0 %v3099, 125
    %v3110 = vpop.permute.xlu0 %3109
    %3111 = vrot.lane.b32.xlu0 %v3100, 125
    %v3112 = vpop.permute.xlu0 %3111
    %v3113 = vsel %vm2267, %v3106, %v3108
    %v3114 = vsel %vm2267, %v3108, %v3110
    %v3115 = vsel %vm2267, %v3110, %v3112
    %v3120 = vadd.f32 %v3086, %v3113
    %v3121 = vadd.f32 %v3087, %v3114
    %v3122 = vadd.f32 %v3088, %v3115
    %v3123 = vadd.f32 %v3089, %v3112
    %s3124 = scalar_lea.vmem %s9, 232
    %v3125 = vld [vmem:[%s3124] sm:$0xff]
    %3127 = vset.pattern.permute.xlu0 0
    %3128 = vperm.xlu0 %3127, %v3125
    %v3129 = vpop.permute.xlu0 %3128
    %v3131 = vmul.f32 %v3129, %v3007
    %v3132 = vmul.f32 %v3129, %v3008
    %v3133 = vmul.f32 %v3129, %v3009
    %v3134 = vmul.f32 %v3129, %v3010
    %3139 = vrot.lane.b32.xlu0 %v3131, 124
    %v3140 = vpop.permute.xlu0 %3139
    %3141 = vrot.lane.b32.xlu0 %v3132, 124
    %v3142 = vpop.permute.xlu0 %3141
    %3143 = vrot.lane.b32.xlu0 %v3133, 124
    %v3144 = vpop.permute.xlu0 %3143
    %3145 = vrot.lane.b32.xlu0 %v3134, 124
    %v3146 = vpop.permute.xlu0 %3145
    %v3147 = vsel %vm2302, %v3140, %v3142
    %v3148 = vsel %vm2302, %v3142, %v3144
    %v3149 = vsel %vm2302, %v3144, %v3146
    %v3154 = vadd.f32 %v3120, %v3147
    %v3155 = vadd.f32 %v3121, %v3148
    %v3156 = vadd.f32 %v3122, %v3149
    %v3157 = vadd.f32 %v3123, %v3146
    %s3158 = scalar_lea.vmem %s9, 240
    %v3159 = vld [vmem:[%s3158] sm:$0xff]
    %3161 = vset.pattern.permute.xlu0 0
    %3162 = vperm.xlu0 %3161, %v3159
    %v3163 = vpop.permute.xlu0 %3162
    %v3165 = vmul.f32 %v3163, %v3007
    %v3166 = vmul.f32 %v3163, %v3008
    %v3167 = vmul.f32 %v3163, %v3009
    %v3168 = vmul.f32 %v3163, %v3010
    %3173 = vrot.lane.b32.xlu0 %v3165, 104
    %v3174 = vpop.permute.xlu0 %3173
    %3175 = vrot.lane.b32.xlu0 %v3166, 104
    %v3176 = vpop.permute.xlu0 %3175
    %3177 = vrot.lane.b32.xlu0 %v3167, 104
    %v3178 = vpop.permute.xlu0 %3177
    %3179 = vrot.lane.b32.xlu0 %v3168, 104
    %v3180 = vpop.permute.xlu0 %3179
    %v3181 = vsel %vm958, %v3174, %v3176
    %v3182 = vsel %vm958, %v3176, %v3178
    %v3183 = vsel %vm958, %v3178, %v3180
    %v3188 = vadd.f32 %v3154, %v3181
    %v3189 = vadd.f32 %v3155, %v3182
    %v3190 = vadd.f32 %v3156, %v3183
    %v3191 = vadd.f32 %v3157, %v3180
    %s3192 = scalar_lea.vmem %s9, 248
    %v3193 = vld [vmem:[%s3192] sm:$0xff]
    %3195 = vset.pattern.permute.xlu0 0
    %3196 = vperm.xlu0 %3195, %v3193
    %v3197 = vpop.permute.xlu0 %3196
    %v3199 = vmul.f32 %v3197, %v3007
    %v3200 = vmul.f32 %v3197, %v3008
    %v3201 = vmul.f32 %v3197, %v3009
    %v3202 = vmul.f32 %v3197, %v3010
    %3207 = vrot.lane.b32.xlu0 %v3199, 103
    %v3208 = vpop.permute.xlu0 %3207
    %3209 = vrot.lane.b32.xlu0 %v3200, 103
    %v3210 = vpop.permute.xlu0 %3209
    %3211 = vrot.lane.b32.xlu0 %v3201, 103
    %v3212 = vpop.permute.xlu0 %3211
    %3213 = vrot.lane.b32.xlu0 %v3202, 103
    %v3214 = vpop.permute.xlu0 %3213
    %v3215 = vsel %vm989, %v3208, %v3210
    %v3216 = vsel %vm989, %v3210, %v3212
    %v3217 = vsel %vm989, %v3212, %v3214
    %v3222 = vadd.f32 %v3188, %v3215
    %v3223 = vadd.f32 %v3189, %v3216
    %v3224 = vadd.f32 %v3190, %v3217
    %v3225 = vadd.f32 %v3191, %v3214
    %s3226 = scalar_lea.vmem %s9, 256
    %v3227 = vld [vmem:[%s3226] sm:$0xff]
    %3229 = vset.pattern.permute.xlu0 0
    %3230 = vperm.xlu0 %3229, %v3227
    %v3231 = vpop.permute.xlu0 %3230
    %v3233 = vmul.f32 %v3231, %v3007
    %v3234 = vmul.f32 %v3231, %v3008
    %v3235 = vmul.f32 %v3231, %v3009
    %v3236 = vmul.f32 %v3231, %v3010
    %3241 = vrot.lane.b32.xlu0 %v3233, 102
    %v3242 = vpop.permute.xlu0 %3241
    %3243 = vrot.lane.b32.xlu0 %v3234, 102
    %v3244 = vpop.permute.xlu0 %3243
    %3245 = vrot.lane.b32.xlu0 %v3235, 102
    %v3246 = vpop.permute.xlu0 %3245
    %3247 = vrot.lane.b32.xlu0 %v3236, 102
    %v3248 = vpop.permute.xlu0 %3247
    %v3249 = vsel %vm1027, %v3242, %v3244
    %v3250 = vsel %vm1027, %v3244, %v3246
    %v3251 = vsel %vm1027, %v3246, %v3248
    %v3256 = vadd.f32 %v3222, %v3249
    %v3257 = vadd.f32 %v3223, %v3250
    %v3258 = vadd.f32 %v3224, %v3251
    %v3259 = vadd.f32 %v3225, %v3248
    %s3260 = scalar_lea.vmem %s9, 264
    %v3261 = vld [vmem:[%s3260] sm:$0xff]
    %3263 = vset.pattern.permute.xlu0 0
    %3264 = vperm.xlu0 %3263, %v3261
    %v3265 = vpop.permute.xlu0 %3264
    %v3267 = vmul.f32 %v3265, %v3007
    %v3268 = vmul.f32 %v3265, %v3008
    %v3269 = vmul.f32 %v3265, %v3009
    %v3270 = vmul.f32 %v3265, %v3010
    %3275 = vrot.lane.b32.xlu0 %v3267, 101
    %v3276 = vpop.permute.xlu0 %3275
    %3277 = vrot.lane.b32.xlu0 %v3268, 101
    %v3278 = vpop.permute.xlu0 %3277
    %3279 = vrot.lane.b32.xlu0 %v3269, 101
    %v3280 = vpop.permute.xlu0 %3279
    %3281 = vrot.lane.b32.xlu0 %v3270, 101
    %v3282 = vpop.permute.xlu0 %3281
    %v3283 = vsel %vm2439, %v3276, %v3278
    %v3284 = vsel %vm2439, %v3278, %v3280
    %v3285 = vsel %vm2439, %v3280, %v3282
    %v3290 = vadd.f32 %v3256, %v3283
    %v3291 = vadd.f32 %v3257, %v3284
    %v3292 = vadd.f32 %v3258, %v3285
    %v3293 = vadd.f32 %v3259, %v3282
    %s3294 = scalar_lea.vmem %s9, 272
    %v3295 = vld [vmem:[%s3294] sm:$0xff]
    %3297 = vset.pattern.permute.xlu0 0
    %3298 = vperm.xlu0 %3297, %v3295
    %v3299 = vpop.permute.xlu0 %3298
    %v3301 = vmul.f32 %v3299, %v3007
    %v3302 = vmul.f32 %v3299, %v3008
    %v3303 = vmul.f32 %v3299, %v3009
    %v3304 = vmul.f32 %v3299, %v3010
    %3309 = vrot.lane.b32.xlu0 %v3301, 100
    %v3310 = vpop.permute.xlu0 %3309
    %3311 = vrot.lane.b32.xlu0 %v3302, 100
    %v3312 = vpop.permute.xlu0 %3311
    %3313 = vrot.lane.b32.xlu0 %v3303, 100
    %v3314 = vpop.permute.xlu0 %3313
    %3315 = vrot.lane.b32.xlu0 %v3304, 100
    %v3316 = vpop.permute.xlu0 %3315
    %v3317 = vsel %vm2474, %v3310, %v3312
    %v3318 = vsel %vm2474, %v3312, %v3314
    %v3319 = vsel %vm2474, %v3314, %v3316
    %v3324 = vadd.f32 %v3290, %v3317
    %v3325 = vadd.f32 %v3291, %v3318
    %v3326 = vadd.f32 %v3292, %v3319
    %v3327 = vadd.f32 %v3293, %v3316
    %s3328 = scalar_lea.vmem %s9, 280
    %v3329 = vld [vmem:[%s3328] sm:$0xff]
    %3331 = vset.pattern.permute.xlu0 0
    %3332 = vperm.xlu0 %3331, %v3329
    %v3333 = vpop.permute.xlu0 %3332
    %v3335 = vmul.f32 %v3333, %v3007
    %v3336 = vmul.f32 %v3333, %v3008
    %v3337 = vmul.f32 %v3333, %v3009
    %v3338 = vmul.f32 %v3333, %v3010
    %3343 = vrot.lane.b32.xlu0 %v3335, 80
    %v3344 = vpop.permute.xlu0 %3343
    %3345 = vrot.lane.b32.xlu0 %v3336, 80
    %v3346 = vpop.permute.xlu0 %3345
    %3347 = vrot.lane.b32.xlu0 %v3337, 80
    %v3348 = vpop.permute.xlu0 %3347
    %3349 = vrot.lane.b32.xlu0 %v3338, 80
    %v3350 = vpop.permute.xlu0 %3349
    %v3351 = vsel %vm1062, %v3344, %v3346
    %v3352 = vsel %vm1062, %v3346, %v3348
    %v3353 = vsel %vm1062, %v3348, %v3350
    %v3358 = vadd.f32 %v3324, %v3351
    %v3359 = vadd.f32 %v3325, %v3352
    %v3360 = vadd.f32 %v3326, %v3353
    %v3361 = vadd.f32 %v3327, %v3350
    %s3362 = scalar_lea.vmem %s9, 288
    %v3363 = vld [vmem:[%s3362] sm:$0xff]
    %3365 = vset.pattern.permute.xlu0 0
    %3366 = vperm.xlu0 %3365, %v3363
    %v3367 = vpop.permute.xlu0 %3366
    %v3369 = vmul.f32 %v3367, %v3007
    %v3370 = vmul.f32 %v3367, %v3008
    %v3371 = vmul.f32 %v3367, %v3009
    %v3372 = vmul.f32 %v3367, %v3010
    %3377 = vrot.lane.b32.xlu0 %v3369, 79
    %v3378 = vpop.permute.xlu0 %3377
    %3379 = vrot.lane.b32.xlu0 %v3370, 79
    %v3380 = vpop.permute.xlu0 %3379
    %3381 = vrot.lane.b32.xlu0 %v3371, 79
    %v3382 = vpop.permute.xlu0 %3381
    %3383 = vrot.lane.b32.xlu0 %v3372, 79
    %v3384 = vpop.permute.xlu0 %3383
    %v3385 = vsel %vm1097, %v3378, %v3380
    %v3386 = vsel %vm1097, %v3380, %v3382
    %v3387 = vsel %vm1097, %v3382, %v3384
    %v3392 = vadd.f32 %v3358, %v3385
    %v3393 = vadd.f32 %v3359, %v3386
    %v3394 = vadd.f32 %v3360, %v3387
    %v3395 = vadd.f32 %v3361, %v3384
    %s3396 = scalar_lea.vmem %s9, 296
    %v3397 = vld [vmem:[%s3396] sm:$0xff]
    %3399 = vset.pattern.permute.xlu0 0
    %3400 = vperm.xlu0 %3399, %v3397
    %v3401 = vpop.permute.xlu0 %3400
    %v3403 = vmul.f32 %v3401, %v3008
    %v3404 = vmul.f32 %v3401, %v3009
    %v3405 = vmul.f32 %v3401, %v3010
    %3409 = vrot.lane.b32.xlu0 %v3403, 78
    %v3410 = vpop.permute.xlu0 %3409
    %3411 = vrot.lane.b32.xlu0 %v3404, 78
    %v3412 = vpop.permute.xlu0 %3411
    %3413 = vrot.lane.b32.xlu0 %v3405, 78
    %v3414 = vpop.permute.xlu0 %3413
    %v3415 = vsel %vm1132, %v3410, %v3412
    %v3416 = vsel %vm1132, %v3412, %v3414
    %v3421 = vadd.f32 %v3392, %v3410
    %v3422 = vadd.f32 %v3393, %v3415
    %v3423 = vadd.f32 %v3394, %v3416
    %v3424 = vadd.f32 %v3395, %v3414
    %v3425 = vld [vmem:[%s412 + $0x8] sm:$0xff]
    %v3426 = vld [vmem:[%s412 + $0x10] sm:$0xff]
    %v3427 = vld [vmem:[%s412 + $0x18] sm:$0xff]
    %v3428 = vld [vmem:[%s412 + $0x20] sm:$0xff]
    %s3429 = scalar_lea.vmem %s9, 304
    %v3430 = vld [vmem:[%s3429] sm:$0xff]
    %3432 = vset.pattern.permute.xlu0 0
    %3433 = vperm.xlu0 %3432, %v3430
    %v3434 = vpop.permute.xlu0 %3433
    %v3436 = vmul.f32 %v3434, %v3425
    %v3437 = vmul.f32 %v3434, %v3426
    %v3438 = vmul.f32 %v3434, %v3427
    %v3439 = vmul.f32 %v3434, %v3428
    %3444 = vrot.lane.b32.xlu0 %v3436, 77
    %v3445 = vpop.permute.xlu0 %3444
    %3446 = vrot.lane.b32.xlu0 %v3437, 77
    %v3447 = vpop.permute.xlu0 %3446
    %3448 = vrot.lane.b32.xlu0 %v3438, 77
    %v3449 = vpop.permute.xlu0 %3448
    %3450 = vrot.lane.b32.xlu0 %v3439, 77
    %v3451 = vpop.permute.xlu0 %3450
    %v3452 = vsel %vm2610, %v3445, %v3447
    %v3453 = vsel %vm2610, %v3447, %v3449
    %v3454 = vsel %vm2610, %v3449, %v3451
    %v3459 = vadd.f32 %v3421, %v3445
    %v3460 = vadd.f32 %v3422, %v3452
    %v3461 = vadd.f32 %v3423, %v3453
    %v3462 = vadd.f32 %v3424, %v3454
    %s3463 = scalar_lea.vmem %s9, 312
    %v3464 = vld [vmem:[%s3463] sm:$0xff]
    %3466 = vset.pattern.permute.xlu0 0
    %3467 = vperm.xlu0 %3466, %v3464
    %v3468 = vpop.permute.xlu0 %3467
    %v3470 = vmul.f32 %v3468, %v3425
    %v3471 = vmul.f32 %v3468, %v3426
    %v3472 = vmul.f32 %v3468, %v3427
    %v3473 = vmul.f32 %v3468, %v3428
    %3478 = vrot.lane.b32.xlu0 %v3470, 76
    %v3479 = vpop.permute.xlu0 %3478
    %3480 = vrot.lane.b32.xlu0 %v3471, 76
    %v3481 = vpop.permute.xlu0 %3480
    %3482 = vrot.lane.b32.xlu0 %v3472, 76
    %v3483 = vpop.permute.xlu0 %3482
    %3484 = vrot.lane.b32.xlu0 %v3473, 76
    %v3485 = vpop.permute.xlu0 %3484
    %v3486 = vsel %vm2645, %v3479, %v3481
    %v3487 = vsel %vm2645, %v3481, %v3483
    %v3488 = vsel %vm2645, %v3483, %v3485
    %v3493 = vadd.f32 %v3459, %v3479
    %v3494 = vadd.f32 %v3460, %v3486
    %v3495 = vadd.f32 %v3461, %v3487
    %v3496 = vadd.f32 %v3462, %v3488
    %s3497 = scalar_lea.vmem %s9, 320
    %v3498 = vld [vmem:[%s3497] sm:$0xff]
    %3500 = vset.pattern.permute.xlu0 0
    %3501 = vperm.xlu0 %3500, %v3498
    %v3502 = vpop.permute.xlu0 %3501
    %v3504 = vmul.f32 %v3502, %v3425
    %v3505 = vmul.f32 %v3502, %v3426
    %v3506 = vmul.f32 %v3502, %v3427
    %v3507 = vmul.f32 %v3502, %v3428
    %3512 = vrot.lane.b32.xlu0 %v3504, 56
    %v3513 = vpop.permute.xlu0 %3512
    %3514 = vrot.lane.b32.xlu0 %v3505, 56
    %v3515 = vpop.permute.xlu0 %3514
    %3516 = vrot.lane.b32.xlu0 %v3506, 56
    %v3517 = vpop.permute.xlu0 %3516
    %3518 = vrot.lane.b32.xlu0 %v3507, 56
    %v3519 = vpop.permute.xlu0 %3518
    %v3520 = vsel %vm2680, %v3513, %v3515
    %v3521 = vsel %vm2680, %v3515, %v3517
    %v3522 = vsel %vm2680, %v3517, %v3519
    %v3527 = vadd.f32 %v3493, %v3513
    %v3528 = vadd.f32 %v3494, %v3520
    %v3529 = vadd.f32 %v3495, %v3521
    %v3530 = vadd.f32 %v3496, %v3522
    %s3531 = scalar_lea.vmem %s9, 328
    %v3532 = vld [vmem:[%s3531] sm:$0xff]
    %3534 = vset.pattern.permute.xlu0 0
    %3535 = vperm.xlu0 %3534, %v3532
    %v3536 = vpop.permute.xlu0 %3535
    %v3538 = vmul.f32 %v3536, %v3425
    %v3539 = vmul.f32 %v3536, %v3426
    %v3540 = vmul.f32 %v3536, %v3427
    %v3541 = vmul.f32 %v3536, %v3428
    %3546 = vrot.lane.b32.xlu0 %v3538, 55
    %v3547 = vpop.permute.xlu0 %3546
    %3548 = vrot.lane.b32.xlu0 %v3539, 55
    %v3549 = vpop.permute.xlu0 %3548
    %3550 = vrot.lane.b32.xlu0 %v3540, 55
    %v3551 = vpop.permute.xlu0 %3550
    %3552 = vrot.lane.b32.xlu0 %v3541, 55
    %v3553 = vpop.permute.xlu0 %3552
    %v3554 = vsel %vm2715, %v3547, %v3549
    %v3555 = vsel %vm2715, %v3549, %v3551
    %v3556 = vsel %vm2715, %v3551, %v3553
    %v3561 = vadd.f32 %v3527, %v3547
    %v3562 = vadd.f32 %v3528, %v3554
    %v3563 = vadd.f32 %v3529, %v3555
    %v3564 = vadd.f32 %v3530, %v3556
    %s3565 = scalar_lea.vmem %s9, 336
    %v3566 = vld [vmem:[%s3565] sm:$0xff]
    %3568 = vset.pattern.permute.xlu0 0
    %3569 = vperm.xlu0 %3568, %v3566
    %v3570 = vpop.permute.xlu0 %3569
    %v3572 = vmul.f32 %v3570, %v3425
    %v3573 = vmul.f32 %v3570, %v3426
    %v3574 = vmul.f32 %v3570, %v3427
    %v3575 = vmul.f32 %v3570, %v3428
    %3580 = vrot.lane.b32.xlu0 %v3572, 54
    %v3581 = vpop.permute.xlu0 %3580
    %3582 = vrot.lane.b32.xlu0 %v3573, 54
    %v3583 = vpop.permute.xlu0 %3582
    %3584 = vrot.lane.b32.xlu0 %v3574, 54
    %v3585 = vpop.permute.xlu0 %3584
    %3586 = vrot.lane.b32.xlu0 %v3575, 54
    %v3587 = vpop.permute.xlu0 %3586
    %v3588 = vsel %vm2750, %v3581, %v3583
    %v3589 = vsel %vm2750, %v3583, %v3585
    %v3590 = vsel %vm2750, %v3585, %v3587
    %v3595 = vadd.f32 %v3561, %v3581
    %v3596 = vadd.f32 %v3562, %v3588
    %v3597 = vadd.f32 %v3563, %v3589
    %v3598 = vadd.f32 %v3564, %v3590
    %s3599 = scalar_lea.vmem %s9, 344
    %v3600 = vld [vmem:[%s3599] sm:$0xff]
    %3602 = vset.pattern.permute.xlu0 0
    %3603 = vperm.xlu0 %3602, %v3600
    %v3604 = vpop.permute.xlu0 %3603
    %v3606 = vmul.f32 %v3604, %v3425
    %v3607 = vmul.f32 %v3604, %v3426
    %v3608 = vmul.f32 %v3604, %v3427
    %v3609 = vmul.f32 %v3604, %v3428
    %3614 = vrot.lane.b32.xlu0 %v3606, 53
    %v3615 = vpop.permute.xlu0 %3614
    %3616 = vrot.lane.b32.xlu0 %v3607, 53
    %v3617 = vpop.permute.xlu0 %3616
    %3618 = vrot.lane.b32.xlu0 %v3608, 53
    %v3619 = vpop.permute.xlu0 %3618
    %3620 = vrot.lane.b32.xlu0 %v3609, 53
    %v3621 = vpop.permute.xlu0 %3620
    %v3622 = vsel %vm2785, %v3615, %v3617
    %v3623 = vsel %vm2785, %v3617, %v3619
    %v3624 = vsel %vm2785, %v3619, %v3621
    %v3629 = vadd.f32 %v3595, %v3615
    %v3630 = vadd.f32 %v3596, %v3622
    %v3631 = vadd.f32 %v3597, %v3623
    %v3632 = vadd.f32 %v3598, %v3624
    %s3633 = scalar_lea.vmem %s9, 352
    %v3634 = vld [vmem:[%s3633] sm:$0xff]
    %3636 = vset.pattern.permute.xlu0 0
    %3637 = vperm.xlu0 %3636, %v3634
    %v3638 = vpop.permute.xlu0 %3637
    %v3640 = vmul.f32 %v3638, %v3425
    %v3641 = vmul.f32 %v3638, %v3426
    %v3642 = vmul.f32 %v3638, %v3427
    %v3643 = vmul.f32 %v3638, %v3428
    %3648 = vrot.lane.b32.xlu0 %v3640, 52
    %v3649 = vpop.permute.xlu0 %3648
    %3650 = vrot.lane.b32.xlu0 %v3641, 52
    %v3651 = vpop.permute.xlu0 %3650
    %3652 = vrot.lane.b32.xlu0 %v3642, 52
    %v3653 = vpop.permute.xlu0 %3652
    %3654 = vrot.lane.b32.xlu0 %v3643, 52
    %v3655 = vpop.permute.xlu0 %3654
    %v3656 = vsel %vm2820, %v3649, %v3651
    %v3657 = vsel %vm2820, %v3651, %v3653
    %v3658 = vsel %vm2820, %v3653, %v3655
    %v3663 = vadd.f32 %v3629, %v3649
    %v3664 = vadd.f32 %v3630, %v3656
    %v3665 = vadd.f32 %v3631, %v3657
    %v3666 = vadd.f32 %v3632, %v3658
    %s3667 = scalar_lea.vmem %s9, 360
    %v3668 = vld [vmem:[%s3667] sm:$0xff]
    %3670 = vset.pattern.permute.xlu0 0
    %3671 = vperm.xlu0 %3670, %v3668
    %v3672 = vpop.permute.xlu0 %3671
    %v3674 = vmul.f32 %v3672, %v3425
    %v3675 = vmul.f32 %v3672, %v3426
    %v3676 = vmul.f32 %v3672, %v3427
    %v3677 = vmul.f32 %v3672, %v3428
    %3682 = vrot.lane.b32.xlu0 %v3674, 32
    %v3683 = vpop.permute.xlu0 %3682
    %3684 = vrot.lane.b32.xlu0 %v3675, 32
    %v3685 = vpop.permute.xlu0 %3684
    %3686 = vrot.lane.b32.xlu0 %v3676, 32
    %v3687 = vpop.permute.xlu0 %3686
    %3688 = vrot.lane.b32.xlu0 %v3677, 32
    %v3689 = vpop.permute.xlu0 %3688
    %v3690 = vsel %vm2855, %v3683, %v3685
    %v3691 = vsel %vm2855, %v3685, %v3687
    %v3692 = vsel %vm2855, %v3687, %v3689
    %v3697 = vadd.f32 %v3663, %v3683
    %v3698 = vadd.f32 %v3664, %v3690
    %v3699 = vadd.f32 %v3665, %v3691
    %v3700 = vadd.f32 %v3666, %v3692
    %s3701 = scalar_lea.vmem %s9, 368
    %v3702 = vld [vmem:[%s3701] sm:$0xff]
    %3704 = vset.pattern.permute.xlu0 0
    %3705 = vperm.xlu0 %3704, %v3702
    %v3706 = vpop.permute.xlu0 %3705
    %v3708 = vmul.f32 %v3706, %v3425
    %v3709 = vmul.f32 %v3706, %v3426
    %v3710 = vmul.f32 %v3706, %v3427
    %v3711 = vmul.f32 %v3706, %v3428
    %3716 = vrot.lane.b32.xlu0 %v3708, 31
    %v3717 = vpop.permute.xlu0 %3716
    %3718 = vrot.lane.b32.xlu0 %v3709, 31
    %v3719 = vpop.permute.xlu0 %3718
    %3720 = vrot.lane.b32.xlu0 %v3710, 31
    %v3721 = vpop.permute.xlu0 %3720
    %3722 = vrot.lane.b32.xlu0 %v3711, 31
    %v3723 = vpop.permute.xlu0 %3722
    %v3724 = vsel %vm2890, %v3717, %v3719
    %v3725 = vsel %vm2890, %v3719, %v3721
    %v3726 = vsel %vm2890, %v3721, %v3723
    %v3731 = vadd.f32 %v3697, %v3717
    %v3732 = vadd.f32 %v3698, %v3724
    %v3733 = vadd.f32 %v3699, %v3725
    %v3734 = vadd.f32 %v3700, %v3726
    %s3735 = scalar_lea.vmem %s9, 376
    %v3736 = vld [vmem:[%s3735] sm:$0xff]
    %3738 = vset.pattern.permute.xlu0 0
    %3739 = vperm.xlu0 %3738, %v3736
    %v3740 = vpop.permute.xlu0 %3739
    %v3742 = vmul.f32 %v3740, %v3425
    %v3743 = vmul.f32 %v3740, %v3426
    %v3744 = vmul.f32 %v3740, %v3427
    %v3745 = vmul.f32 %v3740, %v3428
    %3750 = vrot.lane.b32.xlu0 %v3742, 30
    %v3751 = vpop.permute.xlu0 %3750
    %3752 = vrot.lane.b32.xlu0 %v3743, 30
    %v3753 = vpop.permute.xlu0 %3752
    %3754 = vrot.lane.b32.xlu0 %v3744, 30
    %v3755 = vpop.permute.xlu0 %3754
    %3756 = vrot.lane.b32.xlu0 %v3745, 30
    %v3757 = vpop.permute.xlu0 %3756
    %v3758 = vsel %vm2925, %v3751, %v3753
    %v3759 = vsel %vm2925, %v3753, %v3755
    %v3760 = vsel %vm2925, %v3755, %v3757
    %v3765 = vadd.f32 %v3731, %v3751
    %v3766 = vadd.f32 %v3732, %v3758
    %v3767 = vadd.f32 %v3733, %v3759
    %v3768 = vadd.f32 %v3734, %v3760
    %s3769 = scalar_lea.vmem %s9, 384
    %v3770 = vld [vmem:[%s3769] sm:$0xff]
    %3772 = vset.pattern.permute.xlu0 0
    %3773 = vperm.xlu0 %3772, %v3770
    %v3774 = vpop.permute.xlu0 %3773
    %v3776 = vmul.f32 %v3774, %v3425
    %v3777 = vmul.f32 %v3774, %v3426
    %v3778 = vmul.f32 %v3774, %v3427
    %v3779 = vmul.f32 %v3774, %v3428
    %3784 = vrot.lane.b32.xlu0 %v3776, 29
    %v3785 = vpop.permute.xlu0 %3784
    %3786 = vrot.lane.b32.xlu0 %v3777, 29
    %v3787 = vpop.permute.xlu0 %3786
    %3788 = vrot.lane.b32.xlu0 %v3778, 29
    %v3789 = vpop.permute.xlu0 %3788
    %3790 = vrot.lane.b32.xlu0 %v3779, 29
    %v3791 = vpop.permute.xlu0 %3790
    %v3792 = vsel %vm2960, %v3785, %v3787
    %v3793 = vsel %vm2960, %v3787, %v3789
    %v3794 = vsel %vm2960, %v3789, %v3791
    %v3799 = vadd.f32 %v3765, %v3785
    %v3800 = vadd.f32 %v3766, %v3792
    %v3801 = vadd.f32 %v3767, %v3793
    %v3802 = vadd.f32 %v3768, %v3794
    %s3803 = scalar_lea.vmem %s9, 392
    %v3804 = vld [vmem:[%s3803] sm:$0xff]
    %3806 = vset.pattern.permute.xlu0 0
    %3807 = vperm.xlu0 %3806, %v3804
    %v3808 = vpop.permute.xlu0 %3807
    %v3810 = vmul.f32 %v3808, %v3425
    %v3811 = vmul.f32 %v3808, %v3426
    %v3812 = vmul.f32 %v3808, %v3427
    %v3813 = vmul.f32 %v3808, %v3428
    %3818 = vrot.lane.b32.xlu0 %v3810, 28
    %v3819 = vpop.permute.xlu0 %3818
    %3820 = vrot.lane.b32.xlu0 %v3811, 28
    %v3821 = vpop.permute.xlu0 %3820
    %3822 = vrot.lane.b32.xlu0 %v3812, 28
    %v3823 = vpop.permute.xlu0 %3822
    %3824 = vrot.lane.b32.xlu0 %v3813, 28
    %v3825 = vpop.permute.xlu0 %3824
    %v3826 = vsel %vm2995, %v3819, %v3821
    %v3827 = vsel %vm2995, %v3821, %v3823
    %v3828 = vsel %vm2995, %v3823, %v3825
    %v3833 = vadd.f32 %v3799, %v3819
    %v3834 = vadd.f32 %v3800, %v3826
    %v3835 = vadd.f32 %v3801, %v3827
    %v3836 = vadd.f32 %v3802, %v3828
    %v3837 = vadd.f32 %v3003, %v3833
    %v3838 = vadd.f32 %v3004, %v3834
    %v3839 = vadd.f32 %v3005, %v3835
    %v3840 = vadd.f32 %v3006, %v3836
    %v3841 = vld [vmem:[%s554] sm:$0xff]
    %v3842 = vld [vmem:[%s554 + $0x8] sm:$0xff]
    %v3843 = vld [vmem:[%s554 + $0x10] sm:$0xff]
    %v3844 = vld [vmem:[%s554 + $0x18] sm:$0xff]
    %s3845 = scalar_lea.vmem %s9, 400
    %v3846 = vld [vmem:[%s3845] sm:$0xff]
    %3848 = vset.pattern.permute.xlu0 0
    %3849 = vperm.xlu0 %3848, %v3846
    %v3850 = vpop.permute.xlu0 %3849
    %v3852 = vmul.f32 %v3850, %v3841
    %v3853 = vmul.f32 %v3850, %v3842
    %v3854 = vmul.f32 %v3850, %v3843
    %v3855 = vmul.f32 %v3850, %v3844
    %s3856 = scalar_lea.vmem %s9, 408
    %v3857 = vld [vmem:[%s3856] sm:$0xff]
    %3859 = vset.pattern.permute.xlu0 0
    %3860 = vperm.xlu0 %3859, %v3857
    %v3861 = vpop.permute.xlu0 %3860
    %v3863 = vmul.f32 %v3861, %v3841
    %v3864 = vmul.f32 %v3861, %v3842
    %v3865 = vmul.f32 %v3861, %v3843
    %v3866 = vmul.f32 %v3861, %v3844
    %3871 = vrot.lane.b32.xlu0 %v3863, 127
    %v3872 = vpop.permute.xlu0 %3871
    %3873 = vrot.lane.b32.xlu0 %v3864, 127
    %v3874 = vpop.permute.xlu0 %3873
    %3875 = vrot.lane.b32.xlu0 %v3865, 127
    %v3876 = vpop.permute.xlu0 %3875
    %3877 = vrot.lane.b32.xlu0 %v3866, 127
    %v3878 = vpop.permute.xlu0 %3877
    %v3879 = vsel %vm888, %v3872, %v3874
    %v3880 = vsel %vm888, %v3874, %v3876
    %v3881 = vsel %vm888, %v3876, %v3878
    %v3886 = vadd.f32 %v3852, %v3879
    %v3887 = vadd.f32 %v3853, %v3880
    %v3888 = vadd.f32 %v3854, %v3881
    %v3889 = vadd.f32 %v3855, %v3878
    %s3890 = scalar_lea.vmem %s9, 416
    %v3891 = vld [vmem:[%s3890] sm:$0xff]
    %3893 = vset.pattern.permute.xlu0 0
    %3894 = vperm.xlu0 %3893, %v3891
    %v3895 = vpop.permute.xlu0 %3894
    %v3897 = vmul.f32 %v3895, %v3841
    %v3898 = vmul.f32 %v3895, %v3842
    %v3899 = vmul.f32 %v3895, %v3843
    %v3900 = vmul.f32 %v3895, %v3844
    %3905 = vrot.lane.b32.xlu0 %v3897, 126
    %v3906 = vpop.permute.xlu0 %3905
    %3907 = vrot.lane.b32.xlu0 %v3898, 126
    %v3908 = vpop.permute.xlu0 %3907
    %3909 = vrot.lane.b32.xlu0 %v3899, 126
    %v3910 = vpop.permute.xlu0 %3909
    %3911 = vrot.lane.b32.xlu0 %v3900, 126
    %v3912 = vpop.permute.xlu0 %3911
    %v3913 = vsel %vm923, %v3906, %v3908
    %v3914 = vsel %vm923, %v3908, %v3910
    %v3915 = vsel %vm923, %v3910, %v3912
    %v3920 = vadd.f32 %v3886, %v3913
    %v3921 = vadd.f32 %v3887, %v3914
    %v3922 = vadd.f32 %v3888, %v3915
    %v3923 = vadd.f32 %v3889, %v3912
    %s3924 = scalar_lea.vmem %s9, 424
    %v3925 = vld [vmem:[%s3924] sm:$0xff]
    %3927 = vset.pattern.permute.xlu0 0
    %3928 = vperm.xlu0 %3927, %v3925
    %v3929 = vpop.permute.xlu0 %3928
    %v3931 = vmul.f32 %v3929, %v3841
    %v3932 = vmul.f32 %v3929, %v3842
    %v3933 = vmul.f32 %v3929, %v3843
    %v3934 = vmul.f32 %v3929, %v3844
    %3939 = vrot.lane.b32.xlu0 %v3931, 125
    %v3940 = vpop.permute.xlu0 %3939
    %3941 = vrot.lane.b32.xlu0 %v3932, 125
    %v3942 = vpop.permute.xlu0 %3941
    %3943 = vrot.lane.b32.xlu0 %v3933, 125
    %v3944 = vpop.permute.xlu0 %3943
    %3945 = vrot.lane.b32.xlu0 %v3934, 125
    %v3946 = vpop.permute.xlu0 %3945
    %v3947 = vsel %vm2267, %v3940, %v3942
    %v3948 = vsel %vm2267, %v3942, %v3944
    %v3949 = vsel %vm2267, %v3944, %v3946
    %v3954 = vadd.f32 %v3920, %v3947
    %v3955 = vadd.f32 %v3921, %v3948
    %v3956 = vadd.f32 %v3922, %v3949
    %v3957 = vadd.f32 %v3923, %v3946
    %s3958 = scalar_lea.vmem %s9, 432
    %v3959 = vld [vmem:[%s3958] sm:$0xff]
    %3961 = vset.pattern.permute.xlu0 0
    %3962 = vperm.xlu0 %3961, %v3959
    %v3963 = vpop.permute.xlu0 %3962
    %v3965 = vmul.f32 %v3963, %v3841
    %v3966 = vmul.f32 %v3963, %v3842
    %v3967 = vmul.f32 %v3963, %v3843
    %v3968 = vmul.f32 %v3963, %v3844
    %3973 = vrot.lane.b32.xlu0 %v3965, 124
    %v3974 = vpop.permute.xlu0 %3973
    %3975 = vrot.lane.b32.xlu0 %v3966, 124
    %v3976 = vpop.permute.xlu0 %3975
    %3977 = vrot.lane.b32.xlu0 %v3967, 124
    %v3978 = vpop.permute.xlu0 %3977
    %3979 = vrot.lane.b32.xlu0 %v3968, 124
    %v3980 = vpop.permute.xlu0 %3979
    %v3981 = vsel %vm2302, %v3974, %v3976
    %v3982 = vsel %vm2302, %v3976, %v3978
    %v3983 = vsel %vm2302, %v3978, %v3980
    %v3988 = vadd.f32 %v3954, %v3981
    %v3989 = vadd.f32 %v3955, %v3982
    %v3990 = vadd.f32 %v3956, %v3983
    %v3991 = vadd.f32 %v3957, %v3980
    %s3992 = scalar_lea.vmem %s9, 440
    %v3993 = vld [vmem:[%s3992] sm:$0xff]
    %3995 = vset.pattern.permute.xlu0 0
    %3996 = vperm.xlu0 %3995, %v3993
    %v3997 = vpop.permute.xlu0 %3996
    %v3999 = vmul.f32 %v3997, %v3841
    %v4000 = vmul.f32 %v3997, %v3842
    %v4001 = vmul.f32 %v3997, %v3843
    %v4002 = vmul.f32 %v3997, %v3844
    %4007 = vrot.lane.b32.xlu0 %v3999, 104
    %v4008 = vpop.permute.xlu0 %4007
    %4009 = vrot.lane.b32.xlu0 %v4000, 104
    %v4010 = vpop.permute.xlu0 %4009
    %4011 = vrot.lane.b32.xlu0 %v4001, 104
    %v4012 = vpop.permute.xlu0 %4011
    %4013 = vrot.lane.b32.xlu0 %v4002, 104
    %v4014 = vpop.permute.xlu0 %4013
    %v4015 = vsel %vm958, %v4008, %v4010
    %v4016 = vsel %vm958, %v4010, %v4012
    %v4017 = vsel %vm958, %v4012, %v4014
    %v4022 = vadd.f32 %v3988, %v4015
    %v4023 = vadd.f32 %v3989, %v4016
    %v4024 = vadd.f32 %v3990, %v4017
    %v4025 = vadd.f32 %v3991, %v4014
    %s4026 = scalar_lea.vmem %s9, 448
    %v4027 = vld [vmem:[%s4026] sm:$0xff]
    %4029 = vset.pattern.permute.xlu0 0
    %4030 = vperm.xlu0 %4029, %v4027
    %v4031 = vpop.permute.xlu0 %4030
    %v4033 = vmul.f32 %v4031, %v3841
    %v4034 = vmul.f32 %v4031, %v3842
    %v4035 = vmul.f32 %v4031, %v3843
    %v4036 = vmul.f32 %v4031, %v3844
    %4041 = vrot.lane.b32.xlu0 %v4033, 103
    %v4042 = vpop.permute.xlu0 %4041
    %4043 = vrot.lane.b32.xlu0 %v4034, 103
    %v4044 = vpop.permute.xlu0 %4043
    %4045 = vrot.lane.b32.xlu0 %v4035, 103
    %v4046 = vpop.permute.xlu0 %4045
    %4047 = vrot.lane.b32.xlu0 %v4036, 103
    %v4048 = vpop.permute.xlu0 %4047
    %v4049 = vsel %vm989, %v4042, %v4044
    %v4050 = vsel %vm989, %v4044, %v4046
    %v4051 = vsel %vm989, %v4046, %v4048
    %v4056 = vadd.f32 %v4022, %v4049
    %v4057 = vadd.f32 %v4023, %v4050
    %v4058 = vadd.f32 %v4024, %v4051
    %v4059 = vadd.f32 %v4025, %v4048
    %s4060 = scalar_lea.vmem %s9, 456
    %v4061 = vld [vmem:[%s4060] sm:$0xff]
    %4063 = vset.pattern.permute.xlu0 0
    %4064 = vperm.xlu0 %4063, %v4061
    %v4065 = vpop.permute.xlu0 %4064
    %v4067 = vmul.f32 %v4065, %v3841
    %v4068 = vmul.f32 %v4065, %v3842
    %v4069 = vmul.f32 %v4065, %v3843
    %v4070 = vmul.f32 %v4065, %v3844
    %4075 = vrot.lane.b32.xlu0 %v4067, 102
    %v4076 = vpop.permute.xlu0 %4075
    %4077 = vrot.lane.b32.xlu0 %v4068, 102
    %v4078 = vpop.permute.xlu0 %4077
    %4079 = vrot.lane.b32.xlu0 %v4069, 102
    %v4080 = vpop.permute.xlu0 %4079
    %4081 = vrot.lane.b32.xlu0 %v4070, 102
    %v4082 = vpop.permute.xlu0 %4081
    %v4083 = vsel %vm1027, %v4076, %v4078
    %v4084 = vsel %vm1027, %v4078, %v4080
    %v4085 = vsel %vm1027, %v4080, %v4082
    %v4090 = vadd.f32 %v4056, %v4083
    %v4091 = vadd.f32 %v4057, %v4084
    %v4092 = vadd.f32 %v4058, %v4085
    %v4093 = vadd.f32 %v4059, %v4082
    %s4094 = scalar_lea.vmem %s9, 464
    %v4095 = vld [vmem:[%s4094] sm:$0xff]
    %4097 = vset.pattern.permute.xlu0 0
    %4098 = vperm.xlu0 %4097, %v4095
    %v4099 = vpop.permute.xlu0 %4098
    %v4101 = vmul.f32 %v4099, %v3841
    %v4102 = vmul.f32 %v4099, %v3842
    %v4103 = vmul.f32 %v4099, %v3843
    %v4104 = vmul.f32 %v4099, %v3844
    %4109 = vrot.lane.b32.xlu0 %v4101, 101
    %v4110 = vpop.permute.xlu0 %4109
    %4111 = vrot.lane.b32.xlu0 %v4102, 101
    %v4112 = vpop.permute.xlu0 %4111
    %4113 = vrot.lane.b32.xlu0 %v4103, 101
    %v4114 = vpop.permute.xlu0 %4113
    %4115 = vrot.lane.b32.xlu0 %v4104, 101
    %v4116 = vpop.permute.xlu0 %4115
    %v4117 = vsel %vm2439, %v4110, %v4112
    %v4118 = vsel %vm2439, %v4112, %v4114
    %v4119 = vsel %vm2439, %v4114, %v4116
    %v4124 = vadd.f32 %v4090, %v4117
    %v4125 = vadd.f32 %v4091, %v4118
    %v4126 = vadd.f32 %v4092, %v4119
    %v4127 = vadd.f32 %v4093, %v4116
    %s4128 = scalar_lea.vmem %s9, 472
    %v4129 = vld [vmem:[%s4128] sm:$0xff]
    %4131 = vset.pattern.permute.xlu0 0
    %4132 = vperm.xlu0 %4131, %v4129
    %v4133 = vpop.permute.xlu0 %4132
    %v4135 = vmul.f32 %v4133, %v3841
    %v4136 = vmul.f32 %v4133, %v3842
    %v4137 = vmul.f32 %v4133, %v3843
    %v4138 = vmul.f32 %v4133, %v3844
    %4143 = vrot.lane.b32.xlu0 %v4135, 100
    %v4144 = vpop.permute.xlu0 %4143
    %4145 = vrot.lane.b32.xlu0 %v4136, 100
    %v4146 = vpop.permute.xlu0 %4145
    %4147 = vrot.lane.b32.xlu0 %v4137, 100
    %v4148 = vpop.permute.xlu0 %4147
    %4149 = vrot.lane.b32.xlu0 %v4138, 100
    %v4150 = vpop.permute.xlu0 %4149
    %v4151 = vsel %vm2474, %v4144, %v4146
    %v4152 = vsel %vm2474, %v4146, %v4148
    %v4153 = vsel %vm2474, %v4148, %v4150
    %v4158 = vadd.f32 %v4124, %v4151
    %v4159 = vadd.f32 %v4125, %v4152
    %v4160 = vadd.f32 %v4126, %v4153
    %v4161 = vadd.f32 %v4127, %v4150
    %s4162 = scalar_lea.vmem %s9, 480
    %v4163 = vld [vmem:[%s4162] sm:$0xff]
    %4165 = vset.pattern.permute.xlu0 0
    %4166 = vperm.xlu0 %4165, %v4163
    %v4167 = vpop.permute.xlu0 %4166
    %v4169 = vmul.f32 %v4167, %v3841
    %v4170 = vmul.f32 %v4167, %v3842
    %v4171 = vmul.f32 %v4167, %v3843
    %v4172 = vmul.f32 %v4167, %v3844
    %4177 = vrot.lane.b32.xlu0 %v4169, 80
    %v4178 = vpop.permute.xlu0 %4177
    %4179 = vrot.lane.b32.xlu0 %v4170, 80
    %v4180 = vpop.permute.xlu0 %4179
    %4181 = vrot.lane.b32.xlu0 %v4171, 80
    %v4182 = vpop.permute.xlu0 %4181
    %4183 = vrot.lane.b32.xlu0 %v4172, 80
    %v4184 = vpop.permute.xlu0 %4183
    %v4185 = vsel %vm1062, %v4178, %v4180
    %v4186 = vsel %vm1062, %v4180, %v4182
    %v4187 = vsel %vm1062, %v4182, %v4184
    %v4192 = vadd.f32 %v4158, %v4185
    %v4193 = vadd.f32 %v4159, %v4186
    %v4194 = vadd.f32 %v4160, %v4187
    %v4195 = vadd.f32 %v4161, %v4184
    %s4196 = scalar_lea.vmem %s9, 488
    %v4197 = vld [vmem:[%s4196] sm:$0xff]
    %4199 = vset.pattern.permute.xlu0 0
    %4200 = vperm.xlu0 %4199, %v4197
    %v4201 = vpop.permute.xlu0 %4200
    %v4203 = vmul.f32 %v4201, %v3841
    %v4204 = vmul.f32 %v4201, %v3842
    %v4205 = vmul.f32 %v4201, %v3843
    %v4206 = vmul.f32 %v4201, %v3844
    %4211 = vrot.lane.b32.xlu0 %v4203, 79
    %v4212 = vpop.permute.xlu0 %4211
    %4213 = vrot.lane.b32.xlu0 %v4204, 79
    %v4214 = vpop.permute.xlu0 %4213
    %4215 = vrot.lane.b32.xlu0 %v4205, 79
    %v4216 = vpop.permute.xlu0 %4215
    %4217 = vrot.lane.b32.xlu0 %v4206, 79
    %v4218 = vpop.permute.xlu0 %4217
    %v4219 = vsel %vm1097, %v4212, %v4214
    %v4220 = vsel %vm1097, %v4214, %v4216
    %v4221 = vsel %vm1097, %v4216, %v4218
    %v4226 = vadd.f32 %v4192, %v4219
    %v4227 = vadd.f32 %v4193, %v4220
    %v4228 = vadd.f32 %v4194, %v4221
    %v4229 = vadd.f32 %v4195, %v4218
    %s4230 = scalar_lea.vmem %s9, 496
    %v4231 = vld [vmem:[%s4230] sm:$0xff]
    %4233 = vset.pattern.permute.xlu0 0
    %4234 = vperm.xlu0 %4233, %v4231
    %v4235 = vpop.permute.xlu0 %4234
    %v4237 = vmul.f32 %v4235, %v3842
    %v4238 = vmul.f32 %v4235, %v3843
    %v4239 = vmul.f32 %v4235, %v3844
    %4243 = vrot.lane.b32.xlu0 %v4237, 78
    %v4244 = vpop.permute.xlu0 %4243
    %4245 = vrot.lane.b32.xlu0 %v4238, 78
    %v4246 = vpop.permute.xlu0 %4245
    %4247 = vrot.lane.b32.xlu0 %v4239, 78
    %v4248 = vpop.permute.xlu0 %4247
    %v4249 = vsel %vm1132, %v4244, %v4246
    %v4250 = vsel %vm1132, %v4246, %v4248
    %v4255 = vadd.f32 %v4226, %v4244
    %v4256 = vadd.f32 %v4227, %v4249
    %v4257 = vadd.f32 %v4228, %v4250
    %v4258 = vadd.f32 %v4229, %v4248
    %v4259 = vld [vmem:[%s554 + $0x8] sm:$0xff]
    %v4260 = vld [vmem:[%s554 + $0x10] sm:$0xff]
    %v4261 = vld [vmem:[%s554 + $0x18] sm:$0xff]
    %v4262 = vld [vmem:[%s554 + $0x20] sm:$0xff]
    %s4263 = scalar_lea.vmem %s9, 504
    %v4264 = vld [vmem:[%s4263] sm:$0xff]
    %4266 = vset.pattern.permute.xlu0 0
    %4267 = vperm.xlu0 %4266, %v4264
    %v4268 = vpop.permute.xlu0 %4267
    %v4270 = vmul.f32 %v4268, %v4259
    %v4271 = vmul.f32 %v4268, %v4260
    %v4272 = vmul.f32 %v4268, %v4261
    %v4273 = vmul.f32 %v4268, %v4262
    %4278 = vrot.lane.b32.xlu0 %v4270, 77
    %v4279 = vpop.permute.xlu0 %4278
    %4280 = vrot.lane.b32.xlu0 %v4271, 77
    %v4281 = vpop.permute.xlu0 %4280
    %4282 = vrot.lane.b32.xlu0 %v4272, 77
    %v4283 = vpop.permute.xlu0 %4282
    %4284 = vrot.lane.b32.xlu0 %v4273, 77
    %v4285 = vpop.permute.xlu0 %4284
    %v4286 = vsel %vm2610, %v4279, %v4281
    %v4287 = vsel %vm2610, %v4281, %v4283
    %v4288 = vsel %vm2610, %v4283, %v4285
    %v4293 = vadd.f32 %v4255, %v4279
    %v4294 = vadd.f32 %v4256, %v4286
    %v4295 = vadd.f32 %v4257, %v4287
    %v4296 = vadd.f32 %v4258, %v4288
    %s4297 = scalar_lea.vmem %s9, 512
    %v4298 = vld [vmem:[%s4297] sm:$0xff]
    %4300 = vset.pattern.permute.xlu0 0
    %4301 = vperm.xlu0 %4300, %v4298
    %v4302 = vpop.permute.xlu0 %4301
    %v4304 = vmul.f32 %v4302, %v4259
    %v4305 = vmul.f32 %v4302, %v4260
    %v4306 = vmul.f32 %v4302, %v4261
    %v4307 = vmul.f32 %v4302, %v4262
    %4312 = vrot.lane.b32.xlu0 %v4304, 76
    %v4313 = vpop.permute.xlu0 %4312
    %4314 = vrot.lane.b32.xlu0 %v4305, 76
    %v4315 = vpop.permute.xlu0 %4314
    %4316 = vrot.lane.b32.xlu0 %v4306, 76
    %v4317 = vpop.permute.xlu0 %4316
    %4318 = vrot.lane.b32.xlu0 %v4307, 76
    %v4319 = vpop.permute.xlu0 %4318
    %v4320 = vsel %vm2645, %v4313, %v4315
    %v4321 = vsel %vm2645, %v4315, %v4317
    %v4322 = vsel %vm2645, %v4317, %v4319
    %v4327 = vadd.f32 %v4293, %v4313
    %v4328 = vadd.f32 %v4294, %v4320
    %v4329 = vadd.f32 %v4295, %v4321
    %v4330 = vadd.f32 %v4296, %v4322
    %s4331 = scalar_lea.vmem %s9, 520
    %v4332 = vld [vmem:[%s4331] sm:$0xff]
    %4334 = vset.pattern.permute.xlu0 0
    %4335 = vperm.xlu0 %4334, %v4332
    %v4336 = vpop.permute.xlu0 %4335
    %v4338 = vmul.f32 %v4336, %v4259
    %v4339 = vmul.f32 %v4336, %v4260
    %v4340 = vmul.f32 %v4336, %v4261
    %v4341 = vmul.f32 %v4336, %v4262
    %4346 = vrot.lane.b32.xlu0 %v4338, 56
    %v4347 = vpop.permute.xlu0 %4346
    %4348 = vrot.lane.b32.xlu0 %v4339, 56
    %v4349 = vpop.permute.xlu0 %4348
    %4350 = vrot.lane.b32.xlu0 %v4340, 56
    %v4351 = vpop.permute.xlu0 %4350
    %4352 = vrot.lane.b32.xlu0 %v4341, 56
    %v4353 = vpop.permute.xlu0 %4352
    %v4354 = vsel %vm2680, %v4347, %v4349
    %v4355 = vsel %vm2680, %v4349, %v4351
    %v4356 = vsel %vm2680, %v4351, %v4353
    %v4361 = vadd.f32 %v4327, %v4347
    %v4362 = vadd.f32 %v4328, %v4354
    %v4363 = vadd.f32 %v4329, %v4355
    %v4364 = vadd.f32 %v4330, %v4356
    %s4365 = scalar_lea.vmem %s9, 528
    %v4366 = vld [vmem:[%s4365] sm:$0xff]
    %4368 = vset.pattern.permute.xlu0 0
    %4369 = vperm.xlu0 %4368, %v4366
    %v4370 = vpop.permute.xlu0 %4369
    %v4372 = vmul.f32 %v4370, %v4259
    %v4373 = vmul.f32 %v4370, %v4260
    %v4374 = vmul.f32 %v4370, %v4261
    %v4375 = vmul.f32 %v4370, %v4262
    %4380 = vrot.lane.b32.xlu0 %v4372, 55
    %v4381 = vpop.permute.xlu0 %4380
    %4382 = vrot.lane.b32.xlu0 %v4373, 55
    %v4383 = vpop.permute.xlu0 %4382
    %4384 = vrot.lane.b32.xlu0 %v4374, 55
    %v4385 = vpop.permute.xlu0 %4384
    %4386 = vrot.lane.b32.xlu0 %v4375, 55
    %v4387 = vpop.permute.xlu0 %4386
    %v4388 = vsel %vm2715, %v4381, %v4383
    %v4389 = vsel %vm2715, %v4383, %v4385
    %v4390 = vsel %vm2715, %v4385, %v4387
    %v4395 = vadd.f32 %v4361, %v4381
    %v4396 = vadd.f32 %v4362, %v4388
    %v4397 = vadd.f32 %v4363, %v4389
    %v4398 = vadd.f32 %v4364, %v4390
    %s4399 = scalar_lea.vmem %s9, 536
    %v4400 = vld [vmem:[%s4399] sm:$0xff]
    %4402 = vset.pattern.permute.xlu0 0
    %4403 = vperm.xlu0 %4402, %v4400
    %v4404 = vpop.permute.xlu0 %4403
    %v4406 = vmul.f32 %v4404, %v4259
    %v4407 = vmul.f32 %v4404, %v4260
    %v4408 = vmul.f32 %v4404, %v4261
    %v4409 = vmul.f32 %v4404, %v4262
    %4414 = vrot.lane.b32.xlu0 %v4406, 54
    %v4415 = vpop.permute.xlu0 %4414
    %4416 = vrot.lane.b32.xlu0 %v4407, 54
    %v4417 = vpop.permute.xlu0 %4416
    %4418 = vrot.lane.b32.xlu0 %v4408, 54
    %v4419 = vpop.permute.xlu0 %4418
    %4420 = vrot.lane.b32.xlu0 %v4409, 54
    %v4421 = vpop.permute.xlu0 %4420
    %v4422 = vsel %vm2750, %v4415, %v4417
    %v4423 = vsel %vm2750, %v4417, %v4419
    %v4424 = vsel %vm2750, %v4419, %v4421
    %v4429 = vadd.f32 %v4395, %v4415
    %v4430 = vadd.f32 %v4396, %v4422
    %v4431 = vadd.f32 %v4397, %v4423
    %v4432 = vadd.f32 %v4398, %v4424
    %s4433 = scalar_lea.vmem %s9, 544
    %v4434 = vld [vmem:[%s4433] sm:$0xff]
    %4436 = vset.pattern.permute.xlu0 0
    %4437 = vperm.xlu0 %4436, %v4434
    %v4438 = vpop.permute.xlu0 %4437
    %v4440 = vmul.f32 %v4438, %v4259
    %v4441 = vmul.f32 %v4438, %v4260
    %v4442 = vmul.f32 %v4438, %v4261
    %v4443 = vmul.f32 %v4438, %v4262
    %4448 = vrot.lane.b32.xlu0 %v4440, 53
    %v4449 = vpop.permute.xlu0 %4448
    %4450 = vrot.lane.b32.xlu0 %v4441, 53
    %v4451 = vpop.permute.xlu0 %4450
    %4452 = vrot.lane.b32.xlu0 %v4442, 53
    %v4453 = vpop.permute.xlu0 %4452
    %4454 = vrot.lane.b32.xlu0 %v4443, 53
    %v4455 = vpop.permute.xlu0 %4454
    %v4456 = vsel %vm2785, %v4449, %v4451
    %v4457 = vsel %vm2785, %v4451, %v4453
    %v4458 = vsel %vm2785, %v4453, %v4455
    %v4463 = vadd.f32 %v4429, %v4449
    %v4464 = vadd.f32 %v4430, %v4456
    %v4465 = vadd.f32 %v4431, %v4457
    %v4466 = vadd.f32 %v4432, %v4458
    %s4467 = scalar_lea.vmem %s9, 552
    %v4468 = vld [vmem:[%s4467] sm:$0xff]
    %4470 = vset.pattern.permute.xlu0 0
    %4471 = vperm.xlu0 %4470, %v4468
    %v4472 = vpop.permute.xlu0 %4471
    %v4474 = vmul.f32 %v4472, %v4259
    %v4475 = vmul.f32 %v4472, %v4260
    %v4476 = vmul.f32 %v4472, %v4261
    %v4477 = vmul.f32 %v4472, %v4262
    %4482 = vrot.lane.b32.xlu0 %v4474, 52
    %v4483 = vpop.permute.xlu0 %4482
    %4484 = vrot.lane.b32.xlu0 %v4475, 52
    %v4485 = vpop.permute.xlu0 %4484
    %4486 = vrot.lane.b32.xlu0 %v4476, 52
    %v4487 = vpop.permute.xlu0 %4486
    %4488 = vrot.lane.b32.xlu0 %v4477, 52
    %v4489 = vpop.permute.xlu0 %4488
    %v4490 = vsel %vm2820, %v4483, %v4485
    %v4491 = vsel %vm2820, %v4485, %v4487
    %v4492 = vsel %vm2820, %v4487, %v4489
    %v4497 = vadd.f32 %v4463, %v4483
    %v4498 = vadd.f32 %v4464, %v4490
    %v4499 = vadd.f32 %v4465, %v4491
    %v4500 = vadd.f32 %v4466, %v4492
    %s4501 = scalar_lea.vmem %s9, 560
    %v4502 = vld [vmem:[%s4501] sm:$0xff]
    %4504 = vset.pattern.permute.xlu0 0
    %4505 = vperm.xlu0 %4504, %v4502
    %v4506 = vpop.permute.xlu0 %4505
    %v4508 = vmul.f32 %v4506, %v4259
    %v4509 = vmul.f32 %v4506, %v4260
    %v4510 = vmul.f32 %v4506, %v4261
    %v4511 = vmul.f32 %v4506, %v4262
    %4516 = vrot.lane.b32.xlu0 %v4508, 32
    %v4517 = vpop.permute.xlu0 %4516
    %4518 = vrot.lane.b32.xlu0 %v4509, 32
    %v4519 = vpop.permute.xlu0 %4518
    %4520 = vrot.lane.b32.xlu0 %v4510, 32
    %v4521 = vpop.permute.xlu0 %4520
    %4522 = vrot.lane.b32.xlu0 %v4511, 32
    %v4523 = vpop.permute.xlu0 %4522
    %v4524 = vsel %vm2855, %v4517, %v4519
    %v4525 = vsel %vm2855, %v4519, %v4521
    %v4526 = vsel %vm2855, %v4521, %v4523
    %v4531 = vadd.f32 %v4497, %v4517
    %v4532 = vadd.f32 %v4498, %v4524
    %v4533 = vadd.f32 %v4499, %v4525
    %v4534 = vadd.f32 %v4500, %v4526
    %s4535 = scalar_lea.vmem %s9, 568
    %v4536 = vld [vmem:[%s4535] sm:$0xff]
    %4538 = vset.pattern.permute.xlu0 0
    %4539 = vperm.xlu0 %4538, %v4536
    %v4540 = vpop.permute.xlu0 %4539
    %v4542 = vmul.f32 %v4540, %v4259
    %v4543 = vmul.f32 %v4540, %v4260
    %v4544 = vmul.f32 %v4540, %v4261
    %v4545 = vmul.f32 %v4540, %v4262
    %4550 = vrot.lane.b32.xlu0 %v4542, 31
    %v4551 = vpop.permute.xlu0 %4550
    %4552 = vrot.lane.b32.xlu0 %v4543, 31
    %v4553 = vpop.permute.xlu0 %4552
    %4554 = vrot.lane.b32.xlu0 %v4544, 31
    %v4555 = vpop.permute.xlu0 %4554
    %4556 = vrot.lane.b32.xlu0 %v4545, 31
    %v4557 = vpop.permute.xlu0 %4556
    %v4558 = vsel %vm2890, %v4551, %v4553
    %v4559 = vsel %vm2890, %v4553, %v4555
    %v4560 = vsel %vm2890, %v4555, %v4557
    %v4565 = vadd.f32 %v4531, %v4551
    %v4566 = vadd.f32 %v4532, %v4558
    %v4567 = vadd.f32 %v4533, %v4559
    %v4568 = vadd.f32 %v4534, %v4560
    %s4569 = scalar_lea.vmem %s9, 576
    %v4570 = vld [vmem:[%s4569] sm:$0xff]
    %4572 = vset.pattern.permute.xlu0 0
    %4573 = vperm.xlu0 %4572, %v4570
    %v4574 = vpop.permute.xlu0 %4573
    %v4576 = vmul.f32 %v4574, %v4259
    %v4577 = vmul.f32 %v4574, %v4260
    %v4578 = vmul.f32 %v4574, %v4261
    %v4579 = vmul.f32 %v4574, %v4262
    %4584 = vrot.lane.b32.xlu0 %v4576, 30
    %v4585 = vpop.permute.xlu0 %4584
    %4586 = vrot.lane.b32.xlu0 %v4577, 30
    %v4587 = vpop.permute.xlu0 %4586
    %4588 = vrot.lane.b32.xlu0 %v4578, 30
    %v4589 = vpop.permute.xlu0 %4588
    %4590 = vrot.lane.b32.xlu0 %v4579, 30
    %v4591 = vpop.permute.xlu0 %4590
    %v4592 = vsel %vm2925, %v4585, %v4587
    %v4593 = vsel %vm2925, %v4587, %v4589
    %v4594 = vsel %vm2925, %v4589, %v4591
    %v4599 = vadd.f32 %v4565, %v4585
    %v4600 = vadd.f32 %v4566, %v4592
    %v4601 = vadd.f32 %v4567, %v4593
    %v4602 = vadd.f32 %v4568, %v4594
    %s4603 = scalar_lea.vmem %s9, 584
    %v4604 = vld [vmem:[%s4603] sm:$0xff]
    %4606 = vset.pattern.permute.xlu0 0
    %4607 = vperm.xlu0 %4606, %v4604
    %v4608 = vpop.permute.xlu0 %4607
    %v4610 = vmul.f32 %v4608, %v4259
    %v4611 = vmul.f32 %v4608, %v4260
    %v4612 = vmul.f32 %v4608, %v4261
    %v4613 = vmul.f32 %v4608, %v4262
    %4618 = vrot.lane.b32.xlu0 %v4610, 29
    %v4619 = vpop.permute.xlu0 %4618
    %4620 = vrot.lane.b32.xlu0 %v4611, 29
    %v4621 = vpop.permute.xlu0 %4620
    %4622 = vrot.lane.b32.xlu0 %v4612, 29
    %v4623 = vpop.permute.xlu0 %4622
    %4624 = vrot.lane.b32.xlu0 %v4613, 29
    %v4625 = vpop.permute.xlu0 %4624
    %v4626 = vsel %vm2960, %v4619, %v4621
    %v4627 = vsel %vm2960, %v4621, %v4623
    %v4628 = vsel %vm2960, %v4623, %v4625
    %v4633 = vadd.f32 %v4599, %v4619
    %v4634 = vadd.f32 %v4600, %v4626
    %v4635 = vadd.f32 %v4601, %v4627
    %v4636 = vadd.f32 %v4602, %v4628
    %s4637 = scalar_lea.vmem %s9, 592
    %v4638 = vld [vmem:[%s4637] sm:$0xff]
    %4640 = vset.pattern.permute.xlu0 0
    %4641 = vperm.xlu0 %4640, %v4638
    %v4642 = vpop.permute.xlu0 %4641
    %v4644 = vmul.f32 %v4642, %v4259
    %v4645 = vmul.f32 %v4642, %v4260
    %v4646 = vmul.f32 %v4642, %v4261
    %v4647 = vmul.f32 %v4642, %v4262
    %4652 = vrot.lane.b32.xlu0 %v4644, 28
    %v4653 = vpop.permute.xlu0 %4652
    %4654 = vrot.lane.b32.xlu0 %v4645, 28
    %v4655 = vpop.permute.xlu0 %4654
    %4656 = vrot.lane.b32.xlu0 %v4646, 28
    %v4657 = vpop.permute.xlu0 %4656
    %4658 = vrot.lane.b32.xlu0 %v4647, 28
    %v4659 = vpop.permute.xlu0 %4658
    %v4660 = vsel %vm2995, %v4653, %v4655
    %v4661 = vsel %vm2995, %v4655, %v4657
    %v4662 = vsel %vm2995, %v4657, %v4659
    %v4667 = vadd.f32 %v4633, %v4653
    %v4668 = vadd.f32 %v4634, %v4660
    %v4669 = vadd.f32 %v4635, %v4661
    %v4670 = vadd.f32 %v4636, %v4662
    %v4671 = vadd.f32 %v3837, %v4667
    %v4672 = vadd.f32 %v3838, %v4668
    %v4673 = vadd.f32 %v3839, %v4669
    %v4674 = vadd.f32 %v3840, %v4670
    %v4675 = vld [vmem:[%s696] sm:$0xff]
    %v4676 = vld [vmem:[%s696 + $0x8] sm:$0xff]
    %v4677 = vld [vmem:[%s696 + $0x10] sm:$0xff]
    %v4678 = vld [vmem:[%s696 + $0x18] sm:$0xff]
    %s4679 = scalar_lea.vmem %s9, 600
    %v4680 = vld [vmem:[%s4679] sm:$0xff]
    %4682 = vset.pattern.permute.xlu0 0
    %4683 = vperm.xlu0 %4682, %v4680
    %v4684 = vpop.permute.xlu0 %4683
    %v4686 = vmul.f32 %v4684, %v4675
    %v4687 = vmul.f32 %v4684, %v4676
    %v4688 = vmul.f32 %v4684, %v4677
    %v4689 = vmul.f32 %v4684, %v4678
    %s4690 = scalar_lea.vmem %s9, 608
    %v4691 = vld [vmem:[%s4690] sm:$0xff]
    %4693 = vset.pattern.permute.xlu0 0
    %4694 = vperm.xlu0 %4693, %v4691
    %v4695 = vpop.permute.xlu0 %4694
    %v4697 = vmul.f32 %v4695, %v4675
    %v4698 = vmul.f32 %v4695, %v4676
    %v4699 = vmul.f32 %v4695, %v4677
    %v4700 = vmul.f32 %v4695, %v4678
    %4705 = vrot.lane.b32.xlu0 %v4697, 127
    %v4706 = vpop.permute.xlu0 %4705
    %4707 = vrot.lane.b32.xlu0 %v4698, 127
    %v4708 = vpop.permute.xlu0 %4707
    %4709 = vrot.lane.b32.xlu0 %v4699, 127
    %v4710 = vpop.permute.xlu0 %4709
    %4711 = vrot.lane.b32.xlu0 %v4700, 127
    %v4712 = vpop.permute.xlu0 %4711
    %v4713 = vsel %vm888, %v4706, %v4708
    %v4714 = vsel %vm888, %v4708, %v4710
    %v4715 = vsel %vm888, %v4710, %v4712
    %v4720 = vadd.f32 %v4686, %v4713
    %v4721 = vadd.f32 %v4687, %v4714
    %v4722 = vadd.f32 %v4688, %v4715
    %v4723 = vadd.f32 %v4689, %v4712
    %s4724 = scalar_lea.vmem %s9, 616
    %v4725 = vld [vmem:[%s4724] sm:$0xff]
    %4727 = vset.pattern.permute.xlu0 0
    %4728 = vperm.xlu0 %4727, %v4725
    %v4729 = vpop.permute.xlu0 %4728
    %v4731 = vmul.f32 %v4729, %v4675
    %v4732 = vmul.f32 %v4729, %v4676
    %v4733 = vmul.f32 %v4729, %v4677
    %v4734 = vmul.f32 %v4729, %v4678
    %4739 = vrot.lane.b32.xlu0 %v4731, 126
    %v4740 = vpop.permute.xlu0 %4739
    %4741 = vrot.lane.b32.xlu0 %v4732, 126
    %v4742 = vpop.permute.xlu0 %4741
    %4743 = vrot.lane.b32.xlu0 %v4733, 126
    %v4744 = vpop.permute.xlu0 %4743
    %4745 = vrot.lane.b32.xlu0 %v4734, 126
    %v4746 = vpop.permute.xlu0 %4745
    %v4747 = vsel %vm923, %v4740, %v4742
    %v4748 = vsel %vm923, %v4742, %v4744
    %v4749 = vsel %vm923, %v4744, %v4746
    %v4754 = vadd.f32 %v4720, %v4747
    %v4755 = vadd.f32 %v4721, %v4748
    %v4756 = vadd.f32 %v4722, %v4749
    %v4757 = vadd.f32 %v4723, %v4746
    %s4758 = scalar_lea.vmem %s9, 624
    %v4759 = vld [vmem:[%s4758] sm:$0xff]
    %4761 = vset.pattern.permute.xlu0 0
    %4762 = vperm.xlu0 %4761, %v4759
    %v4763 = vpop.permute.xlu0 %4762
    %v4765 = vmul.f32 %v4763, %v4675
    %v4766 = vmul.f32 %v4763, %v4676
    %v4767 = vmul.f32 %v4763, %v4677
    %v4768 = vmul.f32 %v4763, %v4678
    %4773 = vrot.lane.b32.xlu0 %v4765, 125
    %v4774 = vpop.permute.xlu0 %4773
    %4775 = vrot.lane.b32.xlu0 %v4766, 125
    %v4776 = vpop.permute.xlu0 %4775
    %4777 = vrot.lane.b32.xlu0 %v4767, 125
    %v4778 = vpop.permute.xlu0 %4777
    %4779 = vrot.lane.b32.xlu0 %v4768, 125
    %v4780 = vpop.permute.xlu0 %4779
    %v4781 = vsel %vm2267, %v4774, %v4776
    %v4782 = vsel %vm2267, %v4776, %v4778
    %v4783 = vsel %vm2267, %v4778, %v4780
    %v4788 = vadd.f32 %v4754, %v4781
    %v4789 = vadd.f32 %v4755, %v4782
    %v4790 = vadd.f32 %v4756, %v4783
    %v4791 = vadd.f32 %v4757, %v4780
    %s4792 = scalar_lea.vmem %s9, 632
    %v4793 = vld [vmem:[%s4792] sm:$0xff]
    %4795 = vset.pattern.permute.xlu0 0
    %4796 = vperm.xlu0 %4795, %v4793
    %v4797 = vpop.permute.xlu0 %4796
    %v4799 = vmul.f32 %v4797, %v4675
    %v4800 = vmul.f32 %v4797, %v4676
    %v4801 = vmul.f32 %v4797, %v4677
    %v4802 = vmul.f32 %v4797, %v4678
    %4807 = vrot.lane.b32.xlu0 %v4799, 124
    %v4808 = vpop.permute.xlu0 %4807
    %4809 = vrot.lane.b32.xlu0 %v4800, 124
    %v4810 = vpop.permute.xlu0 %4809
    %4811 = vrot.lane.b32.xlu0 %v4801, 124
    %v4812 = vpop.permute.xlu0 %4811
    %4813 = vrot.lane.b32.xlu0 %v4802, 124
    %v4814 = vpop.permute.xlu0 %4813
    %v4815 = vsel %vm2302, %v4808, %v4810
    %v4816 = vsel %vm2302, %v4810, %v4812
    %v4817 = vsel %vm2302, %v4812, %v4814
    %v4822 = vadd.f32 %v4788, %v4815
    %v4823 = vadd.f32 %v4789, %v4816
    %v4824 = vadd.f32 %v4790, %v4817
    %v4825 = vadd.f32 %v4791, %v4814
    %s4826 = scalar_lea.vmem %s9, 640
    %v4827 = vld [vmem:[%s4826] sm:$0xff]
    %4829 = vset.pattern.permute.xlu0 0
    %4830 = vperm.xlu0 %4829, %v4827
    %v4831 = vpop.permute.xlu0 %4830
    %v4833 = vmul.f32 %v4831, %v4675
    %v4834 = vmul.f32 %v4831, %v4676
    %v4835 = vmul.f32 %v4831, %v4677
    %v4836 = vmul.f32 %v4831, %v4678
    %4841 = vrot.lane.b32.xlu0 %v4833, 104
    %v4842 = vpop.permute.xlu0 %4841
    %4843 = vrot.lane.b32.xlu0 %v4834, 104
    %v4844 = vpop.permute.xlu0 %4843
    %4845 = vrot.lane.b32.xlu0 %v4835, 104
    %v4846 = vpop.permute.xlu0 %4845
    %4847 = vrot.lane.b32.xlu0 %v4836, 104
    %v4848 = vpop.permute.xlu0 %4847
    %v4849 = vsel %vm958, %v4842, %v4844
    %v4850 = vsel %vm958, %v4844, %v4846
    %v4851 = vsel %vm958, %v4846, %v4848
    %v4856 = vadd.f32 %v4822, %v4849
    %v4857 = vadd.f32 %v4823, %v4850
    %v4858 = vadd.f32 %v4824, %v4851
    %v4859 = vadd.f32 %v4825, %v4848
    %s4860 = scalar_lea.vmem %s9, 648
    %v4861 = vld [vmem:[%s4860] sm:$0xff]
    %4863 = vset.pattern.permute.xlu0 0
    %4864 = vperm.xlu0 %4863, %v4861
    %v4865 = vpop.permute.xlu0 %4864
    %v4867 = vmul.f32 %v4865, %v4675
    %v4868 = vmul.f32 %v4865, %v4676
    %v4869 = vmul.f32 %v4865, %v4677
    %v4870 = vmul.f32 %v4865, %v4678
    %4875 = vrot.lane.b32.xlu0 %v4867, 103
    %v4876 = vpop.permute.xlu0 %4875
    %4877 = vrot.lane.b32.xlu0 %v4868, 103
    %v4878 = vpop.permute.xlu0 %4877
    %4879 = vrot.lane.b32.xlu0 %v4869, 103
    %v4880 = vpop.permute.xlu0 %4879
    %4881 = vrot.lane.b32.xlu0 %v4870, 103
    %v4882 = vpop.permute.xlu0 %4881
    %v4883 = vsel %vm989, %v4876, %v4878
    %v4884 = vsel %vm989, %v4878, %v4880
    %v4885 = vsel %vm989, %v4880, %v4882
    %v4890 = vadd.f32 %v4856, %v4883
    %v4891 = vadd.f32 %v4857, %v4884
    %v4892 = vadd.f32 %v4858, %v4885
    %v4893 = vadd.f32 %v4859, %v4882
    %s4894 = scalar_lea.vmem %s9, 656
    %v4895 = vld [vmem:[%s4894] sm:$0xff]
    %4897 = vset.pattern.permute.xlu0 0
    %4898 = vperm.xlu0 %4897, %v4895
    %v4899 = vpop.permute.xlu0 %4898
    %v4901 = vmul.f32 %v4899, %v4675
    %v4902 = vmul.f32 %v4899, %v4676
    %v4903 = vmul.f32 %v4899, %v4677
    %v4904 = vmul.f32 %v4899, %v4678
    %4909 = vrot.lane.b32.xlu0 %v4901, 102
    %v4910 = vpop.permute.xlu0 %4909
    %4911 = vrot.lane.b32.xlu0 %v4902, 102
    %v4912 = vpop.permute.xlu0 %4911
    %4913 = vrot.lane.b32.xlu0 %v4903, 102
    %v4914 = vpop.permute.xlu0 %4913
    %4915 = vrot.lane.b32.xlu0 %v4904, 102
    %v4916 = vpop.permute.xlu0 %4915
    %v4917 = vsel %vm1027, %v4910, %v4912
    %v4918 = vsel %vm1027, %v4912, %v4914
    %v4919 = vsel %vm1027, %v4914, %v4916
    %v4924 = vadd.f32 %v4890, %v4917
    %v4925 = vadd.f32 %v4891, %v4918
    %v4926 = vadd.f32 %v4892, %v4919
    %v4927 = vadd.f32 %v4893, %v4916
    %s4928 = scalar_lea.vmem %s9, 664
    %v4929 = vld [vmem:[%s4928] sm:$0xff]
    %4931 = vset.pattern.permute.xlu0 0
    %4932 = vperm.xlu0 %4931, %v4929
    %v4933 = vpop.permute.xlu0 %4932
    %v4935 = vmul.f32 %v4933, %v4675
    %v4936 = vmul.f32 %v4933, %v4676
    %v4937 = vmul.f32 %v4933, %v4677
    %v4938 = vmul.f32 %v4933, %v4678
    %4943 = vrot.lane.b32.xlu0 %v4935, 101
    %v4944 = vpop.permute.xlu0 %4943
    %4945 = vrot.lane.b32.xlu0 %v4936, 101
    %v4946 = vpop.permute.xlu0 %4945
    %4947 = vrot.lane.b32.xlu0 %v4937, 101
    %v4948 = vpop.permute.xlu0 %4947
    %4949 = vrot.lane.b32.xlu0 %v4938, 101
    %v4950 = vpop.permute.xlu0 %4949
    %v4951 = vsel %vm2439, %v4944, %v4946
    %v4952 = vsel %vm2439, %v4946, %v4948
    %v4953 = vsel %vm2439, %v4948, %v4950
    %v4958 = vadd.f32 %v4924, %v4951
    %v4959 = vadd.f32 %v4925, %v4952
    %v4960 = vadd.f32 %v4926, %v4953
    %v4961 = vadd.f32 %v4927, %v4950
    %s4962 = scalar_lea.vmem %s9, 672
    %v4963 = vld [vmem:[%s4962] sm:$0xff]
    %4965 = vset.pattern.permute.xlu0 0
    %4966 = vperm.xlu0 %4965, %v4963
    %v4967 = vpop.permute.xlu0 %4966
    %v4969 = vmul.f32 %v4967, %v4675
    %v4970 = vmul.f32 %v4967, %v4676
    %v4971 = vmul.f32 %v4967, %v4677
    %v4972 = vmul.f32 %v4967, %v4678
    %4977 = vrot.lane.b32.xlu0 %v4969, 100
    %v4978 = vpop.permute.xlu0 %4977
    %4979 = vrot.lane.b32.xlu0 %v4970, 100
    %v4980 = vpop.permute.xlu0 %4979
    %4981 = vrot.lane.b32.xlu0 %v4971, 100
    %v4982 = vpop.permute.xlu0 %4981
    %4983 = vrot.lane.b32.xlu0 %v4972, 100
    %v4984 = vpop.permute.xlu0 %4983
    %v4985 = vsel %vm2474, %v4978, %v4980
    %v4986 = vsel %vm2474, %v4980, %v4982
    %v4987 = vsel %vm2474, %v4982, %v4984
    %v4992 = vadd.f32 %v4958, %v4985
    %v4993 = vadd.f32 %v4959, %v4986
    %v4994 = vadd.f32 %v4960, %v4987
    %v4995 = vadd.f32 %v4961, %v4984
    %s4996 = scalar_lea.vmem %s9, 680
    %v4997 = vld [vmem:[%s4996] sm:$0xff]
    %4999 = vset.pattern.permute.xlu0 0
    %5000 = vperm.xlu0 %4999, %v4997
    %v5001 = vpop.permute.xlu0 %5000
    %v5003 = vmul.f32 %v5001, %v4675
    %v5004 = vmul.f32 %v5001, %v4676
    %v5005 = vmul.f32 %v5001, %v4677
    %v5006 = vmul.f32 %v5001, %v4678
    %5011 = vrot.lane.b32.xlu0 %v5003, 80
    %v5012 = vpop.permute.xlu0 %5011
    %5013 = vrot.lane.b32.xlu0 %v5004, 80
    %v5014 = vpop.permute.xlu0 %5013
    %5015 = vrot.lane.b32.xlu0 %v5005, 80
    %v5016 = vpop.permute.xlu0 %5015
    %5017 = vrot.lane.b32.xlu0 %v5006, 80
    %v5018 = vpop.permute.xlu0 %5017
    %v5019 = vsel %vm1062, %v5012, %v5014
    %v5020 = vsel %vm1062, %v5014, %v5016
    %v5021 = vsel %vm1062, %v5016, %v5018
    %v5026 = vadd.f32 %v4992, %v5019
    %v5027 = vadd.f32 %v4993, %v5020
    %v5028 = vadd.f32 %v4994, %v5021
    %v5029 = vadd.f32 %v4995, %v5018
    %s5030 = scalar_lea.vmem %s9, 688
    %v5031 = vld [vmem:[%s5030] sm:$0xff]
    %5033 = vset.pattern.permute.xlu0 0
    %5034 = vperm.xlu0 %5033, %v5031
    %v5035 = vpop.permute.xlu0 %5034
    %v5037 = vmul.f32 %v5035, %v4675
    %v5038 = vmul.f32 %v5035, %v4676
    %v5039 = vmul.f32 %v5035, %v4677
    %v5040 = vmul.f32 %v5035, %v4678
    %5045 = vrot.lane.b32.xlu0 %v5037, 79
    %v5046 = vpop.permute.xlu0 %5045
    %5047 = vrot.lane.b32.xlu0 %v5038, 79
    %v5048 = vpop.permute.xlu0 %5047
    %5049 = vrot.lane.b32.xlu0 %v5039, 79
    %v5050 = vpop.permute.xlu0 %5049
    %5051 = vrot.lane.b32.xlu0 %v5040, 79
    %v5052 = vpop.permute.xlu0 %5051
    %v5053 = vsel %vm1097, %v5046, %v5048
    %v5054 = vsel %vm1097, %v5048, %v5050
    %v5055 = vsel %vm1097, %v5050, %v5052
    %v5060 = vadd.f32 %v5026, %v5053
    %v5061 = vadd.f32 %v5027, %v5054
    %v5062 = vadd.f32 %v5028, %v5055
    %v5063 = vadd.f32 %v5029, %v5052
    %s5064 = scalar_lea.vmem %s9, 696
    %v5065 = vld [vmem:[%s5064] sm:$0xff]
    %5067 = vset.pattern.permute.xlu0 0
    %5068 = vperm.xlu0 %5067, %v5065
    %v5069 = vpop.permute.xlu0 %5068
    %v5071 = vmul.f32 %v5069, %v4676
    %v5072 = vmul.f32 %v5069, %v4677
    %v5073 = vmul.f32 %v5069, %v4678
    %5077 = vrot.lane.b32.xlu0 %v5071, 78
    %v5078 = vpop.permute.xlu0 %5077
    %5079 = vrot.lane.b32.xlu0 %v5072, 78
    %v5080 = vpop.permute.xlu0 %5079
    %5081 = vrot.lane.b32.xlu0 %v5073, 78
    %v5082 = vpop.permute.xlu0 %5081
    %v5083 = vsel %vm1132, %v5078, %v5080
    %v5084 = vsel %vm1132, %v5080, %v5082
    %v5089 = vadd.f32 %v5060, %v5078
    %v5090 = vadd.f32 %v5061, %v5083
    %v5091 = vadd.f32 %v5062, %v5084
    %v5092 = vadd.f32 %v5063, %v5082
    %v5093 = vld [vmem:[%s696 + $0x8] sm:$0xff]
    %v5094 = vld [vmem:[%s696 + $0x10] sm:$0xff]
    %v5095 = vld [vmem:[%s696 + $0x18] sm:$0xff]
    %v5096 = vld [vmem:[%s696 + $0x20] sm:$0xff]
    %s5097 = scalar_lea.vmem %s9, 704
    %v5098 = vld [vmem:[%s5097] sm:$0xff]
    %5100 = vset.pattern.permute.xlu0 0
    %5101 = vperm.xlu0 %5100, %v5098
    %v5102 = vpop.permute.xlu0 %5101
    %v5104 = vmul.f32 %v5102, %v5093
    %v5105 = vmul.f32 %v5102, %v5094
    %v5106 = vmul.f32 %v5102, %v5095
    %v5107 = vmul.f32 %v5102, %v5096
    %5112 = vrot.lane.b32.xlu0 %v5104, 77
    %v5113 = vpop.permute.xlu0 %5112
    %5114 = vrot.lane.b32.xlu0 %v5105, 77
    %v5115 = vpop.permute.xlu0 %5114
    %5116 = vrot.lane.b32.xlu0 %v5106, 77
    %v5117 = vpop.permute.xlu0 %5116
    %5118 = vrot.lane.b32.xlu0 %v5107, 77
    %v5119 = vpop.permute.xlu0 %5118
    %v5120 = vsel %vm2610, %v5113, %v5115
    %v5121 = vsel %vm2610, %v5115, %v5117
    %v5122 = vsel %vm2610, %v5117, %v5119
    %v5127 = vadd.f32 %v5089, %v5113
    %v5128 = vadd.f32 %v5090, %v5120
    %v5129 = vadd.f32 %v5091, %v5121
    %v5130 = vadd.f32 %v5092, %v5122
    %s5131 = scalar_lea.vmem %s9, 712
    %v5132 = vld [vmem:[%s5131] sm:$0xff]
    %5134 = vset.pattern.permute.xlu0 0
    %5135 = vperm.xlu0 %5134, %v5132
    %v5136 = vpop.permute.xlu0 %5135
    %v5138 = vmul.f32 %v5136, %v5093
    %v5139 = vmul.f32 %v5136, %v5094
    %v5140 = vmul.f32 %v5136, %v5095
    %v5141 = vmul.f32 %v5136, %v5096
    %5146 = vrot.lane.b32.xlu0 %v5138, 76
    %v5147 = vpop.permute.xlu0 %5146
    %5148 = vrot.lane.b32.xlu0 %v5139, 76
    %v5149 = vpop.permute.xlu0 %5148
    %5150 = vrot.lane.b32.xlu0 %v5140, 76
    %v5151 = vpop.permute.xlu0 %5150
    %5152 = vrot.lane.b32.xlu0 %v5141, 76
    %v5153 = vpop.permute.xlu0 %5152
    %v5154 = vsel %vm2645, %v5147, %v5149
    %v5155 = vsel %vm2645, %v5149, %v5151
    %v5156 = vsel %vm2645, %v5151, %v5153
    %v5161 = vadd.f32 %v5127, %v5147
    %v5162 = vadd.f32 %v5128, %v5154
    %v5163 = vadd.f32 %v5129, %v5155
    %v5164 = vadd.f32 %v5130, %v5156
    %s5165 = scalar_lea.vmem %s9, 720
    %v5166 = vld [vmem:[%s5165] sm:$0xff]
    %5168 = vset.pattern.permute.xlu0 0
    %5169 = vperm.xlu0 %5168, %v5166
    %v5170 = vpop.permute.xlu0 %5169
    %v5172 = vmul.f32 %v5170, %v5093
    %v5173 = vmul.f32 %v5170, %v5094
    %v5174 = vmul.f32 %v5170, %v5095
    %v5175 = vmul.f32 %v5170, %v5096
    %5180 = vrot.lane.b32.xlu0 %v5172, 56
    %v5181 = vpop.permute.xlu0 %5180
    %5182 = vrot.lane.b32.xlu0 %v5173, 56
    %v5183 = vpop.permute.xlu0 %5182
    %5184 = vrot.lane.b32.xlu0 %v5174, 56
    %v5185 = vpop.permute.xlu0 %5184
    %5186 = vrot.lane.b32.xlu0 %v5175, 56
    %v5187 = vpop.permute.xlu0 %5186
    %v5188 = vsel %vm2680, %v5181, %v5183
    %v5189 = vsel %vm2680, %v5183, %v5185
    %v5190 = vsel %vm2680, %v5185, %v5187
    %v5195 = vadd.f32 %v5161, %v5181
    %v5196 = vadd.f32 %v5162, %v5188
    %v5197 = vadd.f32 %v5163, %v5189
    %v5198 = vadd.f32 %v5164, %v5190
    %s5199 = scalar_lea.vmem %s9, 728
    %v5200 = vld [vmem:[%s5199] sm:$0xff]
    %5202 = vset.pattern.permute.xlu0 0
    %5203 = vperm.xlu0 %5202, %v5200
    %v5204 = vpop.permute.xlu0 %5203
    %v5206 = vmul.f32 %v5204, %v5093
    %v5207 = vmul.f32 %v5204, %v5094
    %v5208 = vmul.f32 %v5204, %v5095
    %v5209 = vmul.f32 %v5204, %v5096
    %5214 = vrot.lane.b32.xlu0 %v5206, 55
    %v5215 = vpop.permute.xlu0 %5214
    %5216 = vrot.lane.b32.xlu0 %v5207, 55
    %v5217 = vpop.permute.xlu0 %5216
    %5218 = vrot.lane.b32.xlu0 %v5208, 55
    %v5219 = vpop.permute.xlu0 %5218
    %5220 = vrot.lane.b32.xlu0 %v5209, 55
    %v5221 = vpop.permute.xlu0 %5220
    %v5222 = vsel %vm2715, %v5215, %v5217
    %v5223 = vsel %vm2715, %v5217, %v5219
    %v5224 = vsel %vm2715, %v5219, %v5221
    %v5229 = vadd.f32 %v5195, %v5215
    %v5230 = vadd.f32 %v5196, %v5222
    %v5231 = vadd.f32 %v5197, %v5223
    %v5232 = vadd.f32 %v5198, %v5224
    %s5233 = scalar_lea.vmem %s9, 736
    %v5234 = vld [vmem:[%s5233] sm:$0xff]
    %5236 = vset.pattern.permute.xlu0 0
    %5237 = vperm.xlu0 %5236, %v5234
    %v5238 = vpop.permute.xlu0 %5237
    %v5240 = vmul.f32 %v5238, %v5093
    %v5241 = vmul.f32 %v5238, %v5094
    %v5242 = vmul.f32 %v5238, %v5095
    %v5243 = vmul.f32 %v5238, %v5096
    %5248 = vrot.lane.b32.xlu0 %v5240, 54
    %v5249 = vpop.permute.xlu0 %5248
    %5250 = vrot.lane.b32.xlu0 %v5241, 54
    %v5251 = vpop.permute.xlu0 %5250
    %5252 = vrot.lane.b32.xlu0 %v5242, 54
    %v5253 = vpop.permute.xlu0 %5252
    %5254 = vrot.lane.b32.xlu0 %v5243, 54
    %v5255 = vpop.permute.xlu0 %5254
    %v5256 = vsel %vm2750, %v5249, %v5251
    %v5257 = vsel %vm2750, %v5251, %v5253
    %v5258 = vsel %vm2750, %v5253, %v5255
    %v5263 = vadd.f32 %v5229, %v5249
    %v5264 = vadd.f32 %v5230, %v5256
    %v5265 = vadd.f32 %v5231, %v5257
    %v5266 = vadd.f32 %v5232, %v5258
    %s5267 = scalar_lea.vmem %s9, 744
    %v5268 = vld [vmem:[%s5267] sm:$0xff]
    %5270 = vset.pattern.permute.xlu0 0
    %5271 = vperm.xlu0 %5270, %v5268
    %v5272 = vpop.permute.xlu0 %5271
    %v5274 = vmul.f32 %v5272, %v5093
    %v5275 = vmul.f32 %v5272, %v5094
    %v5276 = vmul.f32 %v5272, %v5095
    %v5277 = vmul.f32 %v5272, %v5096
    %5282 = vrot.lane.b32.xlu0 %v5274, 53
    %v5283 = vpop.permute.xlu0 %5282
    %5284 = vrot.lane.b32.xlu0 %v5275, 53
    %v5285 = vpop.permute.xlu0 %5284
    %5286 = vrot.lane.b32.xlu0 %v5276, 53
    %v5287 = vpop.permute.xlu0 %5286
    %5288 = vrot.lane.b32.xlu0 %v5277, 53
    %v5289 = vpop.permute.xlu0 %5288
    %v5290 = vsel %vm2785, %v5283, %v5285
    %v5291 = vsel %vm2785, %v5285, %v5287
    %v5292 = vsel %vm2785, %v5287, %v5289
    %v5297 = vadd.f32 %v5263, %v5283
    %v5298 = vadd.f32 %v5264, %v5290
    %v5299 = vadd.f32 %v5265, %v5291
    %v5300 = vadd.f32 %v5266, %v5292
    %s5301 = scalar_lea.vmem %s9, 752
    %v5302 = vld [vmem:[%s5301] sm:$0xff]
    %5304 = vset.pattern.permute.xlu0 0
    %5305 = vperm.xlu0 %5304, %v5302
    %v5306 = vpop.permute.xlu0 %5305
    %v5308 = vmul.f32 %v5306, %v5093
    %v5309 = vmul.f32 %v5306, %v5094
    %v5310 = vmul.f32 %v5306, %v5095
    %v5311 = vmul.f32 %v5306, %v5096
    %5316 = vrot.lane.b32.xlu0 %v5308, 52
    %v5317 = vpop.permute.xlu0 %5316
    %5318 = vrot.lane.b32.xlu0 %v5309, 52
    %v5319 = vpop.permute.xlu0 %5318
    %5320 = vrot.lane.b32.xlu0 %v5310, 52
    %v5321 = vpop.permute.xlu0 %5320
    %5322 = vrot.lane.b32.xlu0 %v5311, 52
    %v5323 = vpop.permute.xlu0 %5322
    %v5324 = vsel %vm2820, %v5317, %v5319
    %v5325 = vsel %vm2820, %v5319, %v5321
    %v5326 = vsel %vm2820, %v5321, %v5323
    %v5331 = vadd.f32 %v5297, %v5317
    %v5332 = vadd.f32 %v5298, %v5324
    %v5333 = vadd.f32 %v5299, %v5325
    %v5334 = vadd.f32 %v5300, %v5326
    %s5335 = scalar_lea.vmem %s9, 760
    %v5336 = vld [vmem:[%s5335] sm:$0xff]
    %5338 = vset.pattern.permute.xlu0 0
    %5339 = vperm.xlu0 %5338, %v5336
    %v5340 = vpop.permute.xlu0 %5339
    %v5342 = vmul.f32 %v5340, %v5093
    %v5343 = vmul.f32 %v5340, %v5094
    %v5344 = vmul.f32 %v5340, %v5095
    %v5345 = vmul.f32 %v5340, %v5096
    %5350 = vrot.lane.b32.xlu0 %v5342, 32
    %v5351 = vpop.permute.xlu0 %5350
    %5352 = vrot.lane.b32.xlu0 %v5343, 32
    %v5353 = vpop.permute.xlu0 %5352
    %5354 = vrot.lane.b32.xlu0 %v5344, 32
    %v5355 = vpop.permute.xlu0 %5354
    %5356 = vrot.lane.b32.xlu0 %v5345, 32
    %v5357 = vpop.permute.xlu0 %5356
    %v5358 = vsel %vm2855, %v5351, %v5353
    %v5359 = vsel %vm2855, %v5353, %v5355
    %v5360 = vsel %vm2855, %v5355, %v5357
    %v5365 = vadd.f32 %v5331, %v5351
    %v5366 = vadd.f32 %v5332, %v5358
    %v5367 = vadd.f32 %v5333, %v5359
    %v5368 = vadd.f32 %v5334, %v5360
    %s5369 = scalar_lea.vmem %s9, 768
    %v5370 = vld [vmem:[%s5369] sm:$0xff]
    %5372 = vset.pattern.permute.xlu0 0
    %5373 = vperm.xlu0 %5372, %v5370
    %v5374 = vpop.permute.xlu0 %5373
    %v5376 = vmul.f32 %v5374, %v5093
    %v5377 = vmul.f32 %v5374, %v5094
    %v5378 = vmul.f32 %v5374, %v5095
    %v5379 = vmul.f32 %v5374, %v5096
    %5384 = vrot.lane.b32.xlu0 %v5376, 31
    %v5385 = vpop.permute.xlu0 %5384
    %5386 = vrot.lane.b32.xlu0 %v5377, 31
    %v5387 = vpop.permute.xlu0 %5386
    %5388 = vrot.lane.b32.xlu0 %v5378, 31
    %v5389 = vpop.permute.xlu0 %5388
    %5390 = vrot.lane.b32.xlu0 %v5379, 31
    %v5391 = vpop.permute.xlu0 %5390
    %v5392 = vsel %vm2890, %v5385, %v5387
    %v5393 = vsel %vm2890, %v5387, %v5389
    %v5394 = vsel %vm2890, %v5389, %v5391
    %v5399 = vadd.f32 %v5365, %v5385
    %v5400 = vadd.f32 %v5366, %v5392
    %v5401 = vadd.f32 %v5367, %v5393
    %v5402 = vadd.f32 %v5368, %v5394
    %s5403 = scalar_lea.vmem %s9, 776
    %v5404 = vld [vmem:[%s5403] sm:$0xff]
    %5406 = vset.pattern.permute.xlu0 0
    %5407 = vperm.xlu0 %5406, %v5404
    %v5408 = vpop.permute.xlu0 %5407
    %v5410 = vmul.f32 %v5408, %v5093
    %v5411 = vmul.f32 %v5408, %v5094
    %v5412 = vmul.f32 %v5408, %v5095
    %v5413 = vmul.f32 %v5408, %v5096
    %5418 = vrot.lane.b32.xlu0 %v5410, 30
    %v5419 = vpop.permute.xlu0 %5418
    %5420 = vrot.lane.b32.xlu0 %v5411, 30
    %v5421 = vpop.permute.xlu0 %5420
    %5422 = vrot.lane.b32.xlu0 %v5412, 30
    %v5423 = vpop.permute.xlu0 %5422
    %5424 = vrot.lane.b32.xlu0 %v5413, 30
    %v5425 = vpop.permute.xlu0 %5424
    %v5426 = vsel %vm2925, %v5419, %v5421
    %v5427 = vsel %vm2925, %v5421, %v5423
    %v5428 = vsel %vm2925, %v5423, %v5425
    %v5433 = vadd.f32 %v5399, %v5419
    %v5434 = vadd.f32 %v5400, %v5426
    %v5435 = vadd.f32 %v5401, %v5427
    %v5436 = vadd.f32 %v5402, %v5428
    %s5437 = scalar_lea.vmem %s9, 784
    %v5438 = vld [vmem:[%s5437] sm:$0xff]
    %5440 = vset.pattern.permute.xlu0 0
    %5441 = vperm.xlu0 %5440, %v5438
    %v5442 = vpop.permute.xlu0 %5441
    %v5444 = vmul.f32 %v5442, %v5093
    %v5445 = vmul.f32 %v5442, %v5094
    %v5446 = vmul.f32 %v5442, %v5095
    %v5447 = vmul.f32 %v5442, %v5096
    %5452 = vrot.lane.b32.xlu0 %v5444, 29
    %v5453 = vpop.permute.xlu0 %5452
    %5454 = vrot.lane.b32.xlu0 %v5445, 29
    %v5455 = vpop.permute.xlu0 %5454
    %5456 = vrot.lane.b32.xlu0 %v5446, 29
    %v5457 = vpop.permute.xlu0 %5456
    %5458 = vrot.lane.b32.xlu0 %v5447, 29
    %v5459 = vpop.permute.xlu0 %5458
    %v5460 = vsel %vm2960, %v5453, %v5455
    %v5461 = vsel %vm2960, %v5455, %v5457
    %v5462 = vsel %vm2960, %v5457, %v5459
    %v5467 = vadd.f32 %v5433, %v5453
    %v5468 = vadd.f32 %v5434, %v5460
    %v5469 = vadd.f32 %v5435, %v5461
    %v5470 = vadd.f32 %v5436, %v5462
    %s5471 = scalar_lea.vmem %s9, 792
    %v5472 = vld [vmem:[%s5471] sm:$0xff]
    %5474 = vset.pattern.permute.xlu0 0
    %5475 = vperm.xlu0 %5474, %v5472
    %v5476 = vpop.permute.xlu0 %5475
    %v5478 = vmul.f32 %v5476, %v5093
    %v5479 = vmul.f32 %v5476, %v5094
    %v5480 = vmul.f32 %v5476, %v5095
    %v5481 = vmul.f32 %v5476, %v5096
    %5486 = vrot.lane.b32.xlu0 %v5478, 28
    %v5487 = vpop.permute.xlu0 %5486
    %5488 = vrot.lane.b32.xlu0 %v5479, 28
    %v5489 = vpop.permute.xlu0 %5488
    %5490 = vrot.lane.b32.xlu0 %v5480, 28
    %v5491 = vpop.permute.xlu0 %5490
    %5492 = vrot.lane.b32.xlu0 %v5481, 28
    %v5493 = vpop.permute.xlu0 %5492
    %v5494 = vsel %vm2995, %v5487, %v5489
    %v5495 = vsel %vm2995, %v5489, %v5491
    %v5496 = vsel %vm2995, %v5491, %v5493
    %v5501 = vadd.f32 %v5467, %v5487
    %v5502 = vadd.f32 %v5468, %v5494
    %v5503 = vadd.f32 %v5469, %v5495
    %v5504 = vadd.f32 %v5470, %v5496
    %v5505 = vadd.f32 %v4671, %v5501
    %v5506 = vadd.f32 %v4672, %v5502
    %v5507 = vadd.f32 %v4673, %v5503
    %v5508 = vadd.f32 %v4674, %v5504
    %v5509 = vld [vmem:[%s10] sm:$0xff]
    %5511 = vset.pattern.permute.xlu0 0
    %5512 = vperm.xlu0 %5511, %v5509
    %v5513 = vpop.permute.xlu0 %5512
    %v5515 = vadd.f32 %v5505, %v5513
    %v5516 = vadd.f32 %v5506, %v5513
    %v5517 = vadd.f32 %v5507, %v5513
    %v5518 = vadd.f32 %v5508, %v5513
    %5519 = vrot.lane.b32.xlu0 %v775, 78
    %v5520 = vpop.permute.xlu0 %5519
    %5521 = vrot.lane.b32.xlu0 %v779, 78
    %v5522 = vpop.permute.xlu0 %5521
    %5523 = vrot.lane.b32.xlu0 %v783, 78
    %v5524 = vpop.permute.xlu0 %5523
    %v5525 = vsel %vm1132, %v5520, %v5522
    %v5526 = vsel %vm1132, %v5522, %v5524
    %v5531 = vmul.f32 %v5515, %v5520
    %v5532 = vmul.f32 %v5516, %v5525
    %v5533 = vmul.f32 %v5517, %v5526
    %v5534 = vmul.f32 %v5518, %v5524
    %v5535 = vmul.f32 %v5531, %v5531
    %v5536 = vmul.f32 %v5532, %v5532
    %v5537 = vmul.f32 %v5533, %v5533
    %v5538 = vmul.f32 %v5534, %v5534
    %5543 = vrot.lane.b32.xlu0 %v5531, 50
    %v5544 = vpop.permute.xlu0 %5543
    %5545 = vrot.lane.b32.xlu0 %v5532, 50
    %v5546 = vpop.permute.xlu0 %5545
    %5547 = vrot.lane.b32.xlu0 %v5533, 50
    %v5548 = vpop.permute.xlu0 %5547
    %5549 = vrot.lane.b32.xlu0 %v5534, 50
    %v5550 = vpop.permute.xlu0 %5549
    %vm5551 = vcmask 408576
    %v5552 = vsel %vm5551, %v5544, %v5546
    %v5553 = vsel %vm5551, %v5546, %v5548
    %v5554 = vsel %vm5551, %v5548, %v5550
    %v5558 = vadd.f32 %v5552, %v5553
    %v5559 = vadd.f32 %v5558, %v5554
    %5560 = vadd.xlane.f32.xlu0 %v5559
    %v5561 = vpop.xlane.xlu0 %5560
    %5566 = vrot.lane.b32.xlu0 %v5535, 50
    %v5567 = vpop.permute.xlu0 %5566
    %5568 = vrot.lane.b32.xlu0 %v5536, 50
    %v5569 = vpop.permute.xlu0 %5568
    %5570 = vrot.lane.b32.xlu0 %v5537, 50
    %v5571 = vpop.permute.xlu0 %5570
    %5572 = vrot.lane.b32.xlu0 %v5538, 50
    %v5573 = vpop.permute.xlu0 %5572
    %v5574 = vsel %vm5551, %v5567, %v5569
    %v5575 = vsel %vm5551, %v5569, %v5571
    %v5576 = vsel %vm5551, %v5571, %v5573
    %v5580 = vadd.f32 %v5574, %v5575
    %v5581 = vadd.f32 %v5580, %v5576
    %5582 = vadd.xlane.f32.xlu0 %v5581
    %v5583 = vpop.xlane.xlu0 %5582
    %v5585 = vrot.slane %v5561, 4
    %v5587 = vadd.f32 %v5561, %v5585
    %v5589 = vrot.slane %v5587, 4
    %v5591 = vsel %vm808, %v5587, %v5589
    %v5592 = vmul.f32 %v5591, 0.001953125
    %v5594 = vrot.slane %v5583, 4
    %v5596 = vadd.f32 %v5583, %v5594
    %v5598 = vrot.slane %v5596, 4
    %v5600 = vsel %vm808, %v5596, %v5598
    %v5601 = vmul.f32 %v5600, 0.001953125
    %v5602 = vmul.f32 %v5592, %v5592
    %v5603 = vsub.f32 %v5601, %v5602
    %v5604 = vadd.f32 %v5603, 0.001
    %v5605 = vrsqrt.pop %v5604
    %s5606 = scalar_lea.vmem %s11, 16
    %v5607 = vld [vmem:[%s5606] sm:$0xff]
    %v5608 = vmul.f32 %v5605, %v5607
    %s5609 = scalar_lea.vmem %s12, 16
    %v5610 = vld [vmem:[%s5609] sm:$0xff]
    %v5611 = vmul.f32 %v5592, %v5608
    %v5612 = vsub.f32 %v5610, %v5611
    %5614 = vset.pattern.permute.xlu0 0
    %5615 = vperm.xlu0 %5614, %v5608
    %v5616 = vpop.permute.xlu0 %5615
    %v5618 = vmul.f32 %v5515, %v5616
    %v5619 = vmul.f32 %v5516, %v5616
    %v5620 = vmul.f32 %v5517, %v5616
    %v5621 = vmul.f32 %v5518, %v5616
    %5623 = vset.pattern.permute.xlu0 0
    %5624 = vperm.xlu0 %5623, %v5612
    %v5625 = vpop.permute.xlu0 %5624
    %v5627 = vadd.f32 %v5618, %v5625
    %v5628 = vadd.f32 %v5619, %v5625
    %v5629 = vadd.f32 %v5620, %v5625
    %v5630 = vadd.f32 %v5621, %v5625
    %v5631 = vmax.f32 %v5627, 0.0
    %v5632 = vmax.f32 %v5628, 0.0
    %v5633 = vmax.f32 %v5629, 0.0
    %v5634 = vmax.f32 %v5630, 0.0
    %5639 = vrot.lane.b32.xlu0 %v5631, 50
    %v5640 = vpop.permute.xlu0 %5639
    %5641 = vrot.lane.b32.xlu0 %v5632, 50
    %v5642 = vpop.permute.xlu0 %5641
    %5643 = vrot.lane.b32.xlu0 %v5633, 50
    %v5644 = vpop.permute.xlu0 %5643
    %5645 = vrot.lane.b32.xlu0 %v5634, 50
    %v5646 = vpop.permute.xlu0 %5645
    %v5647 = vsel %vm5551, %v5640, %v5642
    %v5648 = vsel %vm5551, %v5642, %v5644
    %v5649 = vsel %vm5551, %v5644, %v5646
    %s5653 = scalar_lea.vmem [#allocation12], 48
    %5654 = vst [vmem:[%s5653] sm:$0xff] %v5647
    %5655 = vst [vmem:[%s5653 + $0x8] sm:$0xff] %v5648
    %5656 = vst [vmem:[%s5653 + $0x10] sm:$0xff] %v5649
    %v5657 = vld [vmem:[%s2] sm:$0xff]
    %v5658 = vld [vmem:[%s2 + $0x8] sm:$0xff]
    %v5659 = vld [vmem:[%s2 + $0x10] sm:$0xff]
    %v5660 = vld [vmem:[%s2 + $0x18] sm:$0xff]
    %5665 = vrot.lane.b32.xlu0 %v5657, 127
    %v5666 = vpop.permute.xlu0 %5665
    %5667 = vrot.lane.b32.xlu0 %v5658, 127
    %v5668 = vpop.permute.xlu0 %5667
    %5669 = vrot.lane.b32.xlu0 %v5659, 127
    %v5670 = vpop.permute.xlu0 %5669
    %5671 = vrot.lane.b32.xlu0 %v5660, 127
    %v5672 = vpop.permute.xlu0 %5671
    %v5673 = vsel %vm888, %v5666, %v5668
    %v5674 = vsel %vm888, %v5668, %v5670
    %v5675 = vsel %vm888, %v5670, %v5672
    %v5680 = vmax.f32 %v5657, %v5673
    %v5681 = vmax.f32 %v5658, %v5674
    %v5682 = vmax.f32 %v5659, %v5675
    %v5683 = vmax.f32 %v5660, %v5672
    %5684 = vrot.lane.b32.xlu0 %v5657, 126
    %v5685 = vpop.permute.xlu0 %5684
    %5686 = vrot.lane.b32.xlu0 %v5658, 126
    %v5687 = vpop.permute.xlu0 %5686
    %5688 = vrot.lane.b32.xlu0 %v5659, 126
    %v5689 = vpop.permute.xlu0 %5688
    %5690 = vrot.lane.b32.xlu0 %v5660, 126
    %v5691 = vpop.permute.xlu0 %5690
    %v5692 = vsel %vm923, %v5685, %v5687
    %v5693 = vsel %vm923, %v5687, %v5689
    %v5694 = vsel %vm923, %v5689, %v5691
    %v5699 = vmax.f32 %v5680, %v5692
    %v5700 = vmax.f32 %v5681, %v5693
    %v5701 = vmax.f32 %v5682, %v5694
    %v5702 = vmax.f32 %v5683, %v5691
    %5703 = vrot.lane.b32.xlu0 %v5657, 104
    %v5704 = vpop.permute.xlu0 %5703
    %5705 = vrot.lane.b32.xlu0 %v5658, 104
    %v5706 = vpop.permute.xlu0 %5705
    %5707 = vrot.lane.b32.xlu0 %v5659, 104
    %v5708 = vpop.permute.xlu0 %5707
    %5709 = vrot.lane.b32.xlu0 %v5660, 104
    %v5710 = vpop.permute.xlu0 %5709
    %v5711 = vsel %vm958, %v5704, %v5706
    %v5712 = vsel %vm958, %v5706, %v5708
    %v5713 = vsel %vm958, %v5708, %v5710
    %v5718 = vmax.f32 %v5699, %v5711
    %v5719 = vmax.f32 %v5700, %v5712
    %v5720 = vmax.f32 %v5701, %v5713
    %v5721 = vmax.f32 %v5702, %v5710
    %5722 = vrot.lane.b32.xlu0 %v5658, 103
    %v5723 = vpop.permute.xlu0 %5722
    %5724 = vrot.lane.b32.xlu0 %v5659, 103
    %v5725 = vpop.permute.xlu0 %5724
    %5726 = vrot.lane.b32.xlu0 %v5660, 103
    %v5727 = vpop.permute.xlu0 %5726
    %v5728 = vsel %vm989, %v5723, %v5725
    %v5729 = vsel %vm989, %v5725, %v5727
    %v5734 = vmax.f32 %v5718, %v5723
    %v5735 = vmax.f32 %v5719, %v5728
    %v5736 = vmax.f32 %v5720, %v5729
    %v5737 = vmax.f32 %v5721, %v5727
    %v5738 = vld [vmem:[%s2 + $0x20] sm:$0xff]
    %5740 = vrot.lane.b32.xlu0 %v5658, 102
    %v5741 = vpop.permute.xlu0 %5740
    %5742 = vrot.lane.b32.xlu0 %v5659, 102
    %v5743 = vpop.permute.xlu0 %5742
    %5744 = vrot.lane.b32.xlu0 %v5660, 102
    %v5745 = vpop.permute.xlu0 %5744
    %5746 = vrot.lane.b32.xlu0 %v5738, 102
    %v5747 = vpop.permute.xlu0 %5746
    %v5748 = vsel %vm1027, %v5741, %v5743
    %v5749 = vsel %vm1027, %v5743, %v5745
    %v5750 = vsel %vm1027, %v5745, %v5747
    %v5755 = vmax.f32 %v5734, %v5741
    %v5756 = vmax.f32 %v5735, %v5748
    %v5757 = vmax.f32 %v5736, %v5749
    %v5758 = vmax.f32 %v5737, %v5750
    %5759 = vrot.lane.b32.xlu0 %v5658, 80
    %v5760 = vpop.permute.xlu0 %5759
    %5761 = vrot.lane.b32.xlu0 %v5659, 80
    %v5762 = vpop.permute.xlu0 %5761
    %5763 = vrot.lane.b32.xlu0 %v5660, 80
    %v5764 = vpop.permute.xlu0 %5763
    %5765 = vrot.lane.b32.xlu0 %v5738, 80
    %v5766 = vpop.permute.xlu0 %5765
    %v5767 = vsel %vm1062, %v5760, %v5762
    %v5768 = vsel %vm1062, %v5762, %v5764
    %v5769 = vsel %vm1062, %v5764, %v5766
    %v5774 = vmax.f32 %v5755, %v5760
    %v5775 = vmax.f32 %v5756, %v5767
    %v5776 = vmax.f32 %v5757, %v5768
    %v5777 = vmax.f32 %v5758, %v5769
    %5778 = vrot.lane.b32.xlu0 %v5658, 79
    %v5779 = vpop.permute.xlu0 %5778
    %5780 = vrot.lane.b32.xlu0 %v5659, 79
    %v5781 = vpop.permute.xlu0 %5780
    %5782 = vrot.lane.b32.xlu0 %v5660, 79
    %v5783 = vpop.permute.xlu0 %5782
    %5784 = vrot.lane.b32.xlu0 %v5738, 79
    %v5785 = vpop.permute.xlu0 %5784
    %v5786 = vsel %vm1097, %v5779, %v5781
    %v5787 = vsel %vm1097, %v5781, %v5783
    %v5788 = vsel %vm1097, %v5783, %v5785
    %v5793 = vmax.f32 %v5774, %v5779
    %v5794 = vmax.f32 %v5775, %v5786
    %v5795 = vmax.f32 %v5776, %v5787
    %v5796 = vmax.f32 %v5777, %v5788
    %5797 = vrot.lane.b32.xlu0 %v5658, 78
    %v5798 = vpop.permute.xlu0 %5797
    %5799 = vrot.lane.b32.xlu0 %v5659, 78
    %v5800 = vpop.permute.xlu0 %5799
    %5801 = vrot.lane.b32.xlu0 %v5660, 78
    %v5802 = vpop.permute.xlu0 %5801
    %5803 = vrot.lane.b32.xlu0 %v5738, 78
    %v5804 = vpop.permute.xlu0 %5803
    %v5805 = vsel %vm1132, %v5798, %v5800
    %v5806 = vsel %vm1132, %v5800, %v5802
    %v5807 = vsel %vm1132, %v5802, %v5804
    %v5812 = vmax.f32 %v5793, %v5798
    %v5813 = vmax.f32 %v5794, %v5805
    %v5814 = vmax.f32 %v5795, %v5806
    %v5815 = vmax.f32 %v5796, %v5807
    %v5816 = vmul.f32 %v5812, %v2025
    %v5817 = vmul.f32 %v5813, %v2030
    %v5818 = vmul.f32 %v5814, %v2031
    %v5819 = vmul.f32 %v5815, %v2029
    %v5820 = vld [vmem:[%s5] sm:$0xff]
    %5822 = vset.pattern.permute.xlu0 0
    %5823 = vperm.xlu0 %5822, %v5820
    %v5824 = vpop.permute.xlu0 %5823
    %v5826 = vmul.f32 %v5824, %v5816
    %v5827 = vmul.f32 %v5824, %v5817
    %v5828 = vmul.f32 %v5824, %v5818
    %v5829 = vmul.f32 %v5824, %v5819
    %s5830 = scalar_lea.vmem %s2, 40
    %v5831 = vld [vmem:[%s5830] sm:$0xff]
    %v5832 = vld [vmem:[%s5830 + $0x8] sm:$0xff]
    %v5833 = vld [vmem:[%s5830 + $0x10] sm:$0xff]
    %v5834 = vld [vmem:[%s5830 + $0x18] sm:$0xff]
    %5839 = vrot.lane.b32.xlu0 %v5831, 127
    %v5840 = vpop.permute.xlu0 %5839
    %5841 = vrot.lane.b32.xlu0 %v5832, 127
    %v5842 = vpop.permute.xlu0 %5841
    %5843 = vrot.lane.b32.xlu0 %v5833, 127
    %v5844 = vpop.permute.xlu0 %5843
    %5845 = vrot.lane.b32.xlu0 %v5834, 127
    %v5846 = vpop.permute.xlu0 %5845
    %v5847 = vsel %vm888, %v5840, %v5842
    %v5848 = vsel %vm888, %v5842, %v5844
    %v5849 = vsel %vm888, %v5844, %v5846
    %v5854 = vmax.f32 %v5831, %v5847
    %v5855 = vmax.f32 %v5832, %v5848
    %v5856 = vmax.f32 %v5833, %v5849
    %v5857 = vmax.f32 %v5834, %v5846
    %5858 = vrot.lane.b32.xlu0 %v5831, 126
    %v5859 = vpop.permute.xlu0 %5858
    %5860 = vrot.lane.b32.xlu0 %v5832, 126
    %v5861 = vpop.permute.xlu0 %5860
    %5862 = vrot.lane.b32.xlu0 %v5833, 126
    %v5863 = vpop.permute.xlu0 %5862
    %5864 = vrot.lane.b32.xlu0 %v5834, 126
    %v5865 = vpop.permute.xlu0 %5864
    %v5866 = vsel %vm923, %v5859, %v5861
    %v5867 = vsel %vm923, %v5861, %v5863
    %v5868 = vsel %vm923, %v5863, %v5865
    %v5873 = vmax.f32 %v5854, %v5866
    %v5874 = vmax.f32 %v5855, %v5867
    %v5875 = vmax.f32 %v5856, %v5868
    %v5876 = vmax.f32 %v5857, %v5865
    %5877 = vrot.lane.b32.xlu0 %v5831, 104
    %v5878 = vpop.permute.xlu0 %5877
    %5879 = vrot.lane.b32.xlu0 %v5832, 104
    %v5880 = vpop.permute.xlu0 %5879
    %5881 = vrot.lane.b32.xlu0 %v5833, 104
    %v5882 = vpop.permute.xlu0 %5881
    %5883 = vrot.lane.b32.xlu0 %v5834, 104
    %v5884 = vpop.permute.xlu0 %5883
    %v5885 = vsel %vm958, %v5878, %v5880
    %v5886 = vsel %vm958, %v5880, %v5882
    %v5887 = vsel %vm958, %v5882, %v5884
    %v5892 = vmax.f32 %v5873, %v5885
    %v5893 = vmax.f32 %v5874, %v5886
    %v5894 = vmax.f32 %v5875, %v5887
    %v5895 = vmax.f32 %v5876, %v5884
    %5896 = vrot.lane.b32.xlu0 %v5832, 103
    %v5897 = vpop.permute.xlu0 %5896
    %5898 = vrot.lane.b32.xlu0 %v5833, 103
    %v5899 = vpop.permute.xlu0 %5898
    %5900 = vrot.lane.b32.xlu0 %v5834, 103
    %v5901 = vpop.permute.xlu0 %5900
    %v5902 = vsel %vm989, %v5897, %v5899
    %v5903 = vsel %vm989, %v5899, %v5901
    %v5908 = vmax.f32 %v5892, %v5897
    %v5909 = vmax.f32 %v5893, %v5902
    %v5910 = vmax.f32 %v5894, %v5903
    %v5911 = vmax.f32 %v5895, %v5901
    %v5912 = vld [vmem:[%s5830 + $0x20] sm:$0xff]
    %5914 = vrot.lane.b32.xlu0 %v5832, 102
    %v5915 = vpop.permute.xlu0 %5914
    %5916 = vrot.lane.b32.xlu0 %v5833, 102
    %v5917 = vpop.permute.xlu0 %5916
    %5918 = vrot.lane.b32.xlu0 %v5834, 102
    %v5919 = vpop.permute.xlu0 %5918
    %5920 = vrot.lane.b32.xlu0 %v5912, 102
    %v5921 = vpop.permute.xlu0 %5920
    %v5922 = vsel %vm1027, %v5915, %v5917
    %v5923 = vsel %vm1027, %v5917, %v5919
    %v5924 = vsel %vm1027, %v5919, %v5921
    %v5929 = vmax.f32 %v5908, %v5915
    %v5930 = vmax.f32 %v5909, %v5922
    %v5931 = vmax.f32 %v5910, %v5923
    %v5932 = vmax.f32 %v5911, %v5924
    %5933 = vrot.lane.b32.xlu0 %v5832, 80
    %v5934 = vpop.permute.xlu0 %5933
    %5935 = vrot.lane.b32.xlu0 %v5833, 80
    %v5936 = vpop.permute.xlu0 %5935
    %5937 = vrot.lane.b32.xlu0 %v5834, 80
    %v5938 = vpop.permute.xlu0 %5937
    %5939 = vrot.lane.b32.xlu0 %v5912, 80
    %v5940 = vpop.permute.xlu0 %5939
    %v5941 = vsel %vm1062, %v5934, %v5936
    %v5942 = vsel %vm1062, %v5936, %v5938
    %v5943 = vsel %vm1062, %v5938, %v5940
    %v5948 = vmax.f32 %v5929, %v5934
    %v5949 = vmax.f32 %v5930, %v5941
    %v5950 = vmax.f32 %v5931, %v5942
    %v5951 = vmax.f32 %v5932, %v5943
    %5952 = vrot.lane.b32.xlu0 %v5832, 79
    %v5953 = vpop.permute.xlu0 %5952
    %5954 = vrot.lane.b32.xlu0 %v5833, 79
    %v5955 = vpop.permute.xlu0 %5954
    %5956 = vrot.lane.b32.xlu0 %v5834, 79
    %v5957 = vpop.permute.xlu0 %5956
    %5958 = vrot.lane.b32.xlu0 %v5912, 79
    %v5959 = vpop.permute.xlu0 %5958
    %v5960 = vsel %vm1097, %v5953, %v5955
    %v5961 = vsel %vm1097, %v5955, %v5957
    %v5962 = vsel %vm1097, %v5957, %v5959
    %v5967 = vmax.f32 %v5948, %v5953
    %v5968 = vmax.f32 %v5949, %v5960
    %v5969 = vmax.f32 %v5950, %v5961
    %v5970 = vmax.f32 %v5951, %v5962
    %5971 = vrot.lane.b32.xlu0 %v5832, 78
    %v5972 = vpop.permute.xlu0 %5971
    %5973 = vrot.lane.b32.xlu0 %v5833, 78
    %v5974 = vpop.permute.xlu0 %5973
    %5975 = vrot.lane.b32.xlu0 %v5834, 78
    %v5976 = vpop.permute.xlu0 %5975
    %5977 = vrot.lane.b32.xlu0 %v5912, 78
    %v5978 = vpop.permute.xlu0 %5977
    %v5979 = vsel %vm1132, %v5972, %v5974
    %v5980 = vsel %vm1132, %v5974, %v5976
    %v5981 = vsel %vm1132, %v5976, %v5978
    %v5986 = vmax.f32 %v5967, %v5972
    %v5987 = vmax.f32 %v5968, %v5979
    %v5988 = vmax.f32 %v5969, %v5980
    %v5989 = vmax.f32 %v5970, %v5981
    %v5990 = vmul.f32 %v5986, %v2025
    %v5991 = vmul.f32 %v5987, %v2030
    %v5992 = vmul.f32 %v5988, %v2031
    %v5993 = vmul.f32 %v5989, %v2029
    %s5994 = scalar_lea.vmem %s5, 8
    %v5995 = vld [vmem:[%s5994] sm:$0xff]
    %5997 = vset.pattern.permute.xlu0 0
    %5998 = vperm.xlu0 %5997, %v5995
    %v5999 = vpop.permute.xlu0 %5998
    %v6001 = vmul.f32 %v5999, %v5990
    %v6002 = vmul.f32 %v5999, %v5991
    %v6003 = vmul.f32 %v5999, %v5992
    %v6004 = vmul.f32 %v5999, %v5993
    %v6005 = vadd.f32 %v5826, %v6001
    %v6006 = vadd.f32 %v5827, %v6002
    %v6007 = vadd.f32 %v5828, %v6003
    %v6008 = vadd.f32 %v5829, %v6004
    %s6009 = scalar_lea.vmem %s2, 80
    %v6010 = vld [vmem:[%s6009] sm:$0xff]
    %v6011 = vld [vmem:[%s6009 + $0x8] sm:$0xff]
    %v6012 = vld [vmem:[%s6009 + $0x10] sm:$0xff]
    %v6013 = vld [vmem:[%s6009 + $0x18] sm:$0xff]
    %6018 = vrot.lane.b32.xlu0 %v6010, 127
    %v6019 = vpop.permute.xlu0 %6018
    %6020 = vrot.lane.b32.xlu0 %v6011, 127
    %v6021 = vpop.permute.xlu0 %6020
    %6022 = vrot.lane.b32.xlu0 %v6012, 127
    %v6023 = vpop.permute.xlu0 %6022
    %6024 = vrot.lane.b32.xlu0 %v6013, 127
    %v6025 = vpop.permute.xlu0 %6024
    %v6026 = vsel %vm888, %v6019, %v6021
    %v6027 = vsel %vm888, %v6021, %v6023
    %v6028 = vsel %vm888, %v6023, %v6025
    %v6033 = vmax.f32 %v6010, %v6026
    %v6034 = vmax.f32 %v6011, %v6027
    %v6035 = vmax.f32 %v6012, %v6028
    %v6036 = vmax.f32 %v6013, %v6025
    %6037 = vrot.lane.b32.xlu0 %v6010, 126
    %v6038 = vpop.permute.xlu0 %6037
    %6039 = vrot.lane.b32.xlu0 %v6011, 126
    %v6040 = vpop.permute.xlu0 %6039
    %6041 = vrot.lane.b32.xlu0 %v6012, 126
    %v6042 = vpop.permute.xlu0 %6041
    %6043 = vrot.lane.b32.xlu0 %v6013, 126
    %v6044 = vpop.permute.xlu0 %6043
    %v6045 = vsel %vm923, %v6038, %v6040
    %v6046 = vsel %vm923, %v6040, %v6042
    %v6047 = vsel %vm923, %v6042, %v6044
    %v6052 = vmax.f32 %v6033, %v6045
    %v6053 = vmax.f32 %v6034, %v6046
    %v6054 = vmax.f32 %v6035, %v6047
    %v6055 = vmax.f32 %v6036, %v6044
    %6056 = vrot.lane.b32.xlu0 %v6010, 104
    %v6057 = vpop.permute.xlu0 %6056
    %6058 = vrot.lane.b32.xlu0 %v6011, 104
    %v6059 = vpop.permute.xlu0 %6058
    %6060 = vrot.lane.b32.xlu0 %v6012, 104
    %v6061 = vpop.permute.xlu0 %6060
    %6062 = vrot.lane.b32.xlu0 %v6013, 104
    %v6063 = vpop.permute.xlu0 %6062
    %v6064 = vsel %vm958, %v6057, %v6059
    %v6065 = vsel %vm958, %v6059, %v6061
    %v6066 = vsel %vm958, %v6061, %v6063
    %v6071 = vmax.f32 %v6052, %v6064
    %v6072 = vmax.f32 %v6053, %v6065
    %v6073 = vmax.f32 %v6054, %v6066
    %v6074 = vmax.f32 %v6055, %v6063
    %6075 = vrot.lane.b32.xlu0 %v6011, 103
    %v6076 = vpop.permute.xlu0 %6075
    %6077 = vrot.lane.b32.xlu0 %v6012, 103
    %v6078 = vpop.permute.xlu0 %6077
    %6079 = vrot.lane.b32.xlu0 %v6013, 103
    %v6080 = vpop.permute.xlu0 %6079
    %v6081 = vsel %vm989, %v6076, %v6078
    %v6082 = vsel %vm989, %v6078, %v6080
    %v6087 = vmax.f32 %v6071, %v6076
    %v6088 = vmax.f32 %v6072, %v6081
    %v6089 = vmax.f32 %v6073, %v6082
    %v6090 = vmax.f32 %v6074, %v6080
    %v6091 = vld [vmem:[%s6009 + $0x20] sm:$0xff]
    %6093 = vrot.lane.b32.xlu0 %v6011, 102
    %v6094 = vpop.permute.xlu0 %6093
    %6095 = vrot.lane.b32.xlu0 %v6012, 102
    %v6096 = vpop.permute.xlu0 %6095
    %6097 = vrot.lane.b32.xlu0 %v6013, 102
    %v6098 = vpop.permute.xlu0 %6097
    %6099 = vrot.lane.b32.xlu0 %v6091, 102
    %v6100 = vpop.permute.xlu0 %6099
    %v6101 = vsel %vm1027, %v6094, %v6096
    %v6102 = vsel %vm1027, %v6096, %v6098
    %v6103 = vsel %vm1027, %v6098, %v6100
    %v6108 = vmax.f32 %v6087, %v6094
    %v6109 = vmax.f32 %v6088, %v6101
    %v6110 = vmax.f32 %v6089, %v6102
    %v6111 = vmax.f32 %v6090, %v6103
    %6112 = vrot.lane.b32.xlu0 %v6011, 80
    %v6113 = vpop.permute.xlu0 %6112
    %6114 = vrot.lane.b32.xlu0 %v6012, 80
    %v6115 = vpop.permute.xlu0 %6114
    %6116 = vrot.lane.b32.xlu0 %v6013, 80
    %v6117 = vpop.permute.xlu0 %6116
    %6118 = vrot.lane.b32.xlu0 %v6091, 80
    %v6119 = vpop.permute.xlu0 %6118
    %v6120 = vsel %vm1062, %v6113, %v6115
    %v6121 = vsel %vm1062, %v6115, %v6117
    %v6122 = vsel %vm1062, %v6117, %v6119
    %v6127 = vmax.f32 %v6108, %v6113
    %v6128 = vmax.f32 %v6109, %v6120
    %v6129 = vmax.f32 %v6110, %v6121
    %v6130 = vmax.f32 %v6111, %v6122
    %6131 = vrot.lane.b32.xlu0 %v6011, 79
    %v6132 = vpop.permute.xlu0 %6131
    %6133 = vrot.lane.b32.xlu0 %v6012, 79
    %v6134 = vpop.permute.xlu0 %6133
    %6135 = vrot.lane.b32.xlu0 %v6013, 79
    %v6136 = vpop.permute.xlu0 %6135
    %6137 = vrot.lane.b32.xlu0 %v6091, 79
    %v6138 = vpop.permute.xlu0 %6137
    %v6139 = vsel %vm1097, %v6132, %v6134
    %v6140 = vsel %vm1097, %v6134, %v6136
    %v6141 = vsel %vm1097, %v6136, %v6138
    %v6146 = vmax.f32 %v6127, %v6132
    %v6147 = vmax.f32 %v6128, %v6139
    %v6148 = vmax.f32 %v6129, %v6140
    %v6149 = vmax.f32 %v6130, %v6141
    %6150 = vrot.lane.b32.xlu0 %v6011, 78
    %v6151 = vpop.permute.xlu0 %6150
    %6152 = vrot.lane.b32.xlu0 %v6012, 78
    %v6153 = vpop.permute.xlu0 %6152
    %6154 = vrot.lane.b32.xlu0 %v6013, 78
    %v6155 = vpop.permute.xlu0 %6154
    %6156 = vrot.lane.b32.xlu0 %v6091, 78
    %v6157 = vpop.permute.xlu0 %6156
    %v6158 = vsel %vm1132, %v6151, %v6153
    %v6159 = vsel %vm1132, %v6153, %v6155
    %v6160 = vsel %vm1132, %v6155, %v6157
    %v6165 = vmax.f32 %v6146, %v6151
    %v6166 = vmax.f32 %v6147, %v6158
    %v6167 = vmax.f32 %v6148, %v6159
    %v6168 = vmax.f32 %v6149, %v6160
    %v6169 = vmul.f32 %v6165, %v2025
    %v6170 = vmul.f32 %v6166, %v2030
    %v6171 = vmul.f32 %v6167, %v2031
    %v6172 = vmul.f32 %v6168, %v2029
    %s6173 = scalar_lea.vmem %s5, 16
    %v6174 = vld [vmem:[%s6173] sm:$0xff]
    %6176 = vset.pattern.permute.xlu0 0
    %6177 = vperm.xlu0 %6176, %v6174
    %v6178 = vpop.permute.xlu0 %6177
    %v6180 = vmul.f32 %v6178, %v6169
    %v6181 = vmul.f32 %v6178, %v6170
    %v6182 = vmul.f32 %v6178, %v6171
    %v6183 = vmul.f32 %v6178, %v6172
    %v6184 = vadd.f32 %v6005, %v6180
    %v6185 = vadd.f32 %v6006, %v6181
    %v6186 = vadd.f32 %v6007, %v6182
    %v6187 = vadd.f32 %v6008, %v6183
    %s6188 = scalar_lea.vmem %s2, 120
    %v6189 = vld [vmem:[%s6188] sm:$0xff]
    %v6190 = vld [vmem:[%s6188 + $0x8] sm:$0xff]
    %v6191 = vld [vmem:[%s6188 + $0x10] sm:$0xff]
    %v6192 = vld [vmem:[%s6188 + $0x18] sm:$0xff]
    %6197 = vrot.lane.b32.xlu0 %v6189, 127
    %v6198 = vpop.permute.xlu0 %6197
    %6199 = vrot.lane.b32.xlu0 %v6190, 127
    %v6200 = vpop.permute.xlu0 %6199
    %6201 = vrot.lane.b32.xlu0 %v6191, 127
    %v6202 = vpop.permute.xlu0 %6201
    %6203 = vrot.lane.b32.xlu0 %v6192, 127
    %v6204 = vpop.permute.xlu0 %6203
    %v6205 = vsel %vm888, %v6198, %v6200
    %v6206 = vsel %vm888, %v6200, %v6202
    %v6207 = vsel %vm888, %v6202, %v6204
    %v6212 = vmax.f32 %v6189, %v6205
    %v6213 = vmax.f32 %v6190, %v6206
    %v6214 = vmax.f32 %v6191, %v6207
    %v6215 = vmax.f32 %v6192, %v6204
    %6216 = vrot.lane.b32.xlu0 %v6189, 126
    %v6217 = vpop.permute.xlu0 %6216
    %6218 = vrot.lane.b32.xlu0 %v6190, 126
    %v6219 = vpop.permute.xlu0 %6218
    %6220 = vrot.lane.b32.xlu0 %v6191, 126
    %v6221 = vpop.permute.xlu0 %6220
    %6222 = vrot.lane.b32.xlu0 %v6192, 126
    %v6223 = vpop.permute.xlu0 %6222
    %v6224 = vsel %vm923, %v6217, %v6219
    %v6225 = vsel %vm923, %v6219, %v6221
    %v6226 = vsel %vm923, %v6221, %v6223
    %v6231 = vmax.f32 %v6212, %v6224
    %v6232 = vmax.f32 %v6213, %v6225
    %v6233 = vmax.f32 %v6214, %v6226
    %v6234 = vmax.f32 %v6215, %v6223
    %6235 = vrot.lane.b32.xlu0 %v6189, 104
    %v6236 = vpop.permute.xlu0 %6235
    %6237 = vrot.lane.b32.xlu0 %v6190, 104
    %v6238 = vpop.permute.xlu0 %6237
    %6239 = vrot.lane.b32.xlu0 %v6191, 104
    %v6240 = vpop.permute.xlu0 %6239
    %6241 = vrot.lane.b32.xlu0 %v6192, 104
    %v6242 = vpop.permute.xlu0 %6241
    %v6243 = vsel %vm958, %v6236, %v6238
    %v6244 = vsel %vm958, %v6238, %v6240
    %v6245 = vsel %vm958, %v6240, %v6242
    %v6250 = vmax.f32 %v6231, %v6243
    %v6251 = vmax.f32 %v6232, %v6244
    %v6252 = vmax.f32 %v6233, %v6245
    %v6253 = vmax.f32 %v6234, %v6242
    %6254 = vrot.lane.b32.xlu0 %v6190, 103
    %v6255 = vpop.permute.xlu0 %6254
    %6256 = vrot.lane.b32.xlu0 %v6191, 103
    %v6257 = vpop.permute.xlu0 %6256
    %6258 = vrot.lane.b32.xlu0 %v6192, 103
    %v6259 = vpop.permute.xlu0 %6258
    %v6260 = vsel %vm989, %v6255, %v6257
    %v6261 = vsel %vm989, %v6257, %v6259
    %v6266 = vmax.f32 %v6250, %v6255
    %v6267 = vmax.f32 %v6251, %v6260
    %v6268 = vmax.f32 %v6252, %v6261
    %v6269 = vmax.f32 %v6253, %v6259
    %v6270 = vld [vmem:[%s6188 + $0x20] sm:$0xff]
    %6272 = vrot.lane.b32.xlu0 %v6190, 102
    %v6273 = vpop.permute.xlu0 %6272
    %6274 = vrot.lane.b32.xlu0 %v6191, 102
    %v6275 = vpop.permute.xlu0 %6274
    %6276 = vrot.lane.b32.xlu0 %v6192, 102
    %v6277 = vpop.permute.xlu0 %6276
    %6278 = vrot.lane.b32.xlu0 %v6270, 102
    %v6279 = vpop.permute.xlu0 %6278
    %v6280 = vsel %vm1027, %v6273, %v6275
    %v6281 = vsel %vm1027, %v6275, %v6277
    %v6282 = vsel %vm1027, %v6277, %v6279
    %v6287 = vmax.f32 %v6266, %v6273
    %v6288 = vmax.f32 %v6267, %v6280
    %v6289 = vmax.f32 %v6268, %v6281
    %v6290 = vmax.f32 %v6269, %v6282
    %6291 = vrot.lane.b32.xlu0 %v6190, 80
    %v6292 = vpop.permute.xlu0 %6291
    %6293 = vrot.lane.b32.xlu0 %v6191, 80
    %v6294 = vpop.permute.xlu0 %6293
    %6295 = vrot.lane.b32.xlu0 %v6192, 80
    %v6296 = vpop.permute.xlu0 %6295
    %6297 = vrot.lane.b32.xlu0 %v6270, 80
    %v6298 = vpop.permute.xlu0 %6297
    %v6299 = vsel %vm1062, %v6292, %v6294
    %v6300 = vsel %vm1062, %v6294, %v6296
    %v6301 = vsel %vm1062, %v6296, %v6298
    %v6306 = vmax.f32 %v6287, %v6292
    %v6307 = vmax.f32 %v6288, %v6299
    %v6308 = vmax.f32 %v6289, %v6300
    %v6309 = vmax.f32 %v6290, %v6301
    %6310 = vrot.lane.b32.xlu0 %v6190, 79
    %v6311 = vpop.permute.xlu0 %6310
    %6312 = vrot.lane.b32.xlu0 %v6191, 79
    %v6313 = vpop.permute.xlu0 %6312
    %6314 = vrot.lane.b32.xlu0 %v6192, 79
    %v6315 = vpop.permute.xlu0 %6314
    %6316 = vrot.lane.b32.xlu0 %v6270, 79
    %v6317 = vpop.permute.xlu0 %6316
    %v6318 = vsel %vm1097, %v6311, %v6313
    %v6319 = vsel %vm1097, %v6313, %v6315
    %v6320 = vsel %vm1097, %v6315, %v6317
    %v6325 = vmax.f32 %v6306, %v6311
    %v6326 = vmax.f32 %v6307, %v6318
    %v6327 = vmax.f32 %v6308, %v6319
    %v6328 = vmax.f32 %v6309, %v6320
    %6329 = vrot.lane.b32.xlu0 %v6190, 78
    %v6330 = vpop.permute.xlu0 %6329
    %6331 = vrot.lane.b32.xlu0 %v6191, 78
    %v6332 = vpop.permute.xlu0 %6331
    %6333 = vrot.lane.b32.xlu0 %v6192, 78
    %v6334 = vpop.permute.xlu0 %6333
    %6335 = vrot.lane.b32.xlu0 %v6270, 78
    %v6336 = vpop.permute.xlu0 %6335
    %v6337 = vsel %vm1132, %v6330, %v6332
    %v6338 = vsel %vm1132, %v6332, %v6334
    %v6339 = vsel %vm1132, %v6334, %v6336
    %v6344 = vmax.f32 %v6325, %v6330
    %v6345 = vmax.f32 %v6326, %v6337
    %v6346 = vmax.f32 %v6327, %v6338
    %v6347 = vmax.f32 %v6328, %v6339
    %v6348 = vmul.f32 %v6344, %v2025
    %v6349 = vmul.f32 %v6345, %v2030
    %v6350 = vmul.f32 %v6346, %v2031
    %v6351 = vmul.f32 %v6347, %v2029
    %s6352 = scalar_lea.vmem %s5, 24
    %v6353 = vld [vmem:[%s6352] sm:$0xff]
    %6355 = vset.pattern.permute.xlu0 0
    %6356 = vperm.xlu0 %6355, %v6353
    %v6357 = vpop.permute.xlu0 %6356
    %v6359 = vmul.f32 %v6357, %v6348
    %v6360 = vmul.f32 %v6357, %v6349
    %v6361 = vmul.f32 %v6357, %v6350
    %v6362 = vmul.f32 %v6357, %v6351
    %v6363 = vadd.f32 %v6184, %v6359
    %v6364 = vadd.f32 %v6185, %v6360
    %v6365 = vadd.f32 %v6186, %v6361
    %v6366 = vadd.f32 %v6187, %v6362
    %v6367 = vld [vmem:[%s6] sm:$0xff]
    %6369 = vset.pattern.permute.xlu0 0
    %6370 = vperm.xlu0 %6369, %v6367
    %v6371 = vpop.permute.xlu0 %6370
    %v6373 = vadd.f32 %v6363, %v6371
    %v6374 = vadd.f32 %v6364, %v6371
    %v6375 = vadd.f32 %v6365, %v6371
    %v6376 = vadd.f32 %v6366, %v6371
    %v6377 = vmul.f32 %v6373, %v2025
    %v6378 = vmul.f32 %v6374, %v2030
    %v6379 = vmul.f32 %v6375, %v2031
    %v6380 = vmul.f32 %v6376, %v2029
    %v6381 = vmul.f32 %v6377, %v6377
    %v6382 = vmul.f32 %v6378, %v6378
    %v6383 = vmul.f32 %v6379, %v6379
    %v6384 = vmul.f32 %v6380, %v6380
    %6389 = vrot.lane.b32.xlu0 %v6377, 25
    %v6390 = vpop.permute.xlu0 %6389
    %6391 = vrot.lane.b32.xlu0 %v6378, 25
    %v6392 = vpop.permute.xlu0 %6391
    %6393 = vrot.lane.b32.xlu0 %v6379, 25
    %v6394 = vpop.permute.xlu0 %6393
    %6395 = vrot.lane.b32.xlu0 %v6380, 25
    %v6396 = vpop.permute.xlu0 %6395
    %v6397 = vsel %vm2056, %v6390, %v6392
    %v6398 = vsel %vm2056, %v6392, %v6394
    %v6399 = vsel %vm2056, %v6394, %v6396
    %v6403 = vadd.f32 %v6397, %v6398
    %v6404 = vadd.f32 %v6403, %v6399
    %6405 = vadd.xlane.f32.xlu0 %v6404
    %v6406 = vpop.xlane.xlu0 %6405
    %6411 = vrot.lane.b32.xlu0 %v6381, 25
    %v6412 = vpop.permute.xlu0 %6411
    %6413 = vrot.lane.b32.xlu0 %v6382, 25
    %v6414 = vpop.permute.xlu0 %6413
    %6415 = vrot.lane.b32.xlu0 %v6383, 25
    %v6416 = vpop.permute.xlu0 %6415
    %6417 = vrot.lane.b32.xlu0 %v6384, 25
    %v6418 = vpop.permute.xlu0 %6417
    %v6419 = vsel %vm2056, %v6412, %v6414
    %v6420 = vsel %vm2056, %v6414, %v6416
    %v6421 = vsel %vm2056, %v6416, %v6418
    %v6425 = vadd.f32 %v6419, %v6420
    %v6426 = vadd.f32 %v6425, %v6421
    %6427 = vadd.xlane.f32.xlu0 %v6426
    %v6428 = vpop.xlane.xlu0 %6427
    %v6430 = vrot.slane %v6406, 4
    %v6432 = vadd.f32 %v6406, %v6430
    %v6434 = vrot.slane %v6432, 4
    %v6436 = vsel %vm808, %v6432, %v6434
    %v6437 = vmul.f32 %v6436, 0.001953125
    %v6439 = vrot.slane %v6428, 4
    %v6441 = vadd.f32 %v6428, %v6439
    %v6443 = vrot.slane %v6441, 4
    %v6445 = vsel %vm808, %v6441, %v6443
    %v6446 = vmul.f32 %v6445, 0.001953125
    %v6447 = vmul.f32 %v6437, %v6437
    %v6448 = vsub.f32 %v6446, %v6447
    %v6449 = vadd.f32 %v6448, 0.001
    %v6450 = vrsqrt.pop %v6449
    %s6451 = scalar_lea.vmem %s11, 24
    %v6452 = vld [vmem:[%s6451] sm:$0xff]
    %v6453 = vmul.f32 %v6450, %v6452
    %s6454 = scalar_lea.vmem %s12, 24
    %v6455 = vld [vmem:[%s6454] sm:$0xff]
    %v6456 = vmul.f32 %v6437, %v6453
    %v6457 = vsub.f32 %v6455, %v6456
    %6459 = vset.pattern.permute.xlu0 0
    %6460 = vperm.xlu0 %6459, %v6453
    %v6461 = vpop.permute.xlu0 %6460
    %v6463 = vmul.f32 %v6373, %v6461
    %v6464 = vmul.f32 %v6374, %v6461
    %v6465 = vmul.f32 %v6375, %v6461
    %v6466 = vmul.f32 %v6376, %v6461
    %6468 = vset.pattern.permute.xlu0 0
    %6469 = vperm.xlu0 %6468, %v6457
    %v6470 = vpop.permute.xlu0 %6469
    %v6472 = vadd.f32 %v6463, %v6470
    %v6473 = vadd.f32 %v6464, %v6470
    %v6474 = vadd.f32 %v6465, %v6470
    %v6475 = vadd.f32 %v6466, %v6470
    %v6476 = vmax.f32 %v6472, 0.0
    %v6477 = vmax.f32 %v6473, 0.0
    %v6478 = vmax.f32 %v6474, 0.0
    %v6479 = vmax.f32 %v6475, 0.0
    %6484 = vrot.lane.b32.xlu0 %v6476, 25
    %v6485 = vpop.permute.xlu0 %6484
    %6486 = vrot.lane.b32.xlu0 %v6477, 25
    %v6487 = vpop.permute.xlu0 %6486
    %6488 = vrot.lane.b32.xlu0 %v6478, 25
    %v6489 = vpop.permute.xlu0 %6488
    %6490 = vrot.lane.b32.xlu0 %v6479, 25
    %v6491 = vpop.permute.xlu0 %6490
    %v6492 = vsel %vm2056, %v6485, %v6487
    %v6493 = vsel %vm2056, %v6487, %v6489
    %v6494 = vsel %vm2056, %v6489, %v6491
    %s6498 = scalar_lea.vmem [#allocation12], 72
    %6499 = vst [vmem:[%s6498] sm:$0xff] %v6492
    %6500 = vst [vmem:[%s6498 + $0x8] sm:$0xff] %v6493
    %6501 = vst [vmem:[%s6498 + $0x10] sm:$0xff] %v6494
    // Predicated region
    $region86: #{tpu_custom_call.1} parent=1 // pred_check
      _
    $region87: #{tpu_custom_call.1} parent=1 // pred_check_branch
      %6503 = sbr.rel (0) target = $region89
    $region88: #{tpu_custom_call.1} parent=1 // pred_region
      %s6505 = ssub.s32 1536, 1536
      %6506 = vsyncadd [#allocation5], %s6505
      %s6507 = sshll.u32 [#allocation12], 4
      %s6508 = int_to_ptr.vmem [resolvable:$true] %s6507
      %6513 = dma.vmem_to_hbm [thread:$0]  %s6508, 1536, %s17, [#allocation5], 384, 384, 24
    $region89: #{tpu_custom_call.1} parent=1 // pred_fallthru
      _
    // Predicated region
    $region90: #{tpu_custom_call.1} parent=1 // pred_check
      _
    $region91: #{tpu_custom_call.1} parent=1 // pred_check_branch
      %6515 = sbr.rel (0) target = $region93
    $region92: #{tpu_custom_call.1} parent=1 // pred_region
      %6516 = dma.done [#allocation5], 1536
    $region93: #{tpu_custom_call.1} parent=1 // pred_fallthru
      _
    %6517 = vsyncpa [#allocation5], 1
    %6518 = vsyncpa [#allocation6], 1
    %6519 = vsyncpa [#allocation8], 1
    %6520 = vsyncpa [#allocation11], 1

</llo_original>
